<compile_context>
chip_gen: v7x
topology: tpu7x:2x2x1
jax: 0.10.0
libtpu: 0.0.40
codegen_flags: <defaults>
</compile_context>

<pallas_src>
import jax
import jax.numpy as jnp
from jax.experimental import pallas as pl
from jax.experimental.pallas import tpu as pltpu

EMB_DIM = 36864          # nn.Linear(36864, 1024) in_features / embedding_dim
OUT_DIM = 1024           # output_dim
NUM_DBL = 5
MLP_IN = NUM_DBL * OUT_DIM   # 5120  (== inputDim of MyMLP)
VOCAB = 36
TK = 3072                # 36864 / 3072 = 12 reduction steps; bf16 Wx tile = 6 MiB


# ----------------------------------------------------------------------------
# Kernel: the 5 MyDBL blocks.
#   grid = (dbl_index i, k_tile); reduction axis (k) is innermost.
#   zx = tanh(fx @ Wx[i] + bx[i])   (accumulated over k tiles, f32 accumulator)
#   zi = tanh(T[i][f_list[:, i]])   (precomputed table row, passed in as ti)
#   out block i = zx * zi
# ----------------------------------------------------------------------------
def _dbl_kernel(fx_ref, ti_ref, wx_ref, bx_ref, out_ref, acc_ref):
    k = pl.program_id(1)

    @pl.when(k == 0)
    def _():
        acc_ref[...] = jnp.zeros_like(acc_ref)

    # bf16 x bf16 -> f32 accumulate on the MXU.
    acc_ref[...] += jnp.dot(fx_ref[...], wx_ref[...],
                            preferred_element_type=jnp.float32)

    @pl.when(k == pl.num_programs(1) - 1)
    def _():
        zx = jnp.tanh(acc_ref[...] + bx_ref[...])   # bias (1, OUT_DIM) broadcasts
        zi = jnp.tanh(ti_ref[...])                  # precomputed emb@Wi+bi rows
        out_ref[...] = (zx * zi).astype(out_ref.dtype)


def dbl_stage(fx_bf16, ti, wx_bf16, bx):
    B = fx_bf16.shape[0]
    kt = EMB_DIM // TK
    return pl.pallas_call(
        _dbl_kernel,
        out_shape=jax.ShapeDtypeStruct((B, NUM_DBL * OUT_DIM), jnp.float32),
        grid_spec=pltpu.PrefetchScalarGridSpec(
            num_scalar_prefetch=0,
            grid=(NUM_DBL, kt),
            in_specs=[
                pl.BlockSpec((B, TK), lambda i, k: (0, k)),                 # fx (bf16)
                pl.BlockSpec((None, B, OUT_DIM), lambda i, k: (i, 0, 0)),   # ti[i]
                pl.BlockSpec((None, TK, OUT_DIM), lambda i, k: (i, k, 0)),  # Wx[i] (bf16)
                pl.BlockSpec((None, 1, OUT_DIM), lambda i, k: (i, 0, 0)),   # bx[i]
            ],
            out_specs=pl.BlockSpec((B, OUT_DIM), lambda i, k: (0, i)),
            scratch_shapes=[pltpu.VMEM((B, OUT_DIM), jnp.float32)],
        ),
        compiler_params=pltpu.CompilerParams(
            # 5 independent DBL blocks -> shard across TCs on v7x; k carries the
            # accumulator so it stays "arbitrary".
            dimension_semantics=("parallel", "arbitrary"),
            # working set ~13 MiB; keep headroom below v7x's 64 MiB physical VMEM.
            vmem_limit_bytes=48 << 20,
        ),
    )(fx_bf16, ti, wx_bf16, bx)


# ----------------------------------------------------------------------------
# Parameter setup: f32 master params + one-time repack for the fast path.
# ----------------------------------------------------------------------------
def init_params(key):
    ks = jax.random.split(key, 11)
    s = 1.0 / jnp.sqrt(jnp.float32(EMB_DIM))
    return {
        # 5 MyDBL blocks stacked: linearOne -> wx/bx, linearTwo -> wi/bi
        "wx": jax.random.normal(ks[0], (NUM_DBL, EMB_DIM, OUT_DIM), jnp.float32) * s,
        "wi": jax.random.normal(ks[1], (NUM_DBL, EMB_DIM, OUT_DIM), jnp.float32) * s,
        "bx": jax.random.normal(ks[2], (NUM_DBL, 1, OUT_DIM), jnp.float32) * 0.01,
        "bi": jax.random.normal(ks[3], (NUM_DBL, 1, OUT_DIM), jnp.float32) * 0.01,
        # nn.Embedding(36, 36864)
        "embedding": jax.random.normal(ks[4], (VOCAB, EMB_DIM), jnp.float32),
        # MyMLP(5120)
        "w1": jax.random.normal(ks[5], (MLP_IN, 128), jnp.float32) / jnp.sqrt(jnp.float32(MLP_IN)),
        "b1": jax.random.normal(ks[6], (1, 128), jnp.float32) * 0.01,
        "w2": jax.random.normal(ks[7], (128, 64), jnp.float32) / jnp.sqrt(128.0),
        "b2": jax.random.normal(ks[8], (1, 64), jnp.float32) * 0.01,
        "w3": jax.random.normal(ks[9], (64, 5), jnp.float32) / jnp.sqrt(64.0),
        "b3": jax.random.normal(ks[10], (1, 5), jnp.float32) * 0.01,
    }


def prepare_params(params):
    """One-time weight repack: bf16 Wx stream + precomputed linearTwo table."""
    prepared = {k: params[k] for k in ("bx", "w1", "b1", "w2", "b2", "w3", "b3")}
    prepared["wx_bf16"] = params["wx"].astype(jnp.bfloat16)
    # T[i] = embedding @ Wi[i] + bi[i]  ->  (5, 36, 1024).
    # The whole image of the 36-row vocabulary under linearTwo (~740 KB) replaces
    # streaming 755 MB of Wi weights every forward.  Numerically identical up to
    # fp reassociation.
    prepared["wi_table"] = (
        jnp.einsum("ve,ieo->ivo", params["embedding"], params["wi"],
                   preferred_element_type=jnp.float32)
        + params["bi"])
    return prepared


# ----------------------------------------------------------------------------
# Full DBLANet forward
# ----------------------------------------------------------------------------
def dblanet_forward(prepared, fx, f_list):
    # torch.split(f_list, 1, dim=1) -> stack -> squeeze(-1)  ==  f_list.T  (5, B)
    idx = jnp.transpose(f_list, (1, 0))
    # Gather the precomputed (emb @ Wi[i] + bi[i]) rows: (5, B, 1024).
    ti = jnp.take_along_axis(prepared["wi_table"], idx[:, :, None], axis=1)
    final_f = dbl_stage(fx.astype(jnp.bfloat16), ti,
                        prepared["wx_bf16"], prepared["bx"])      # (B, 5120) == torch.hstack
    # MyMLP 5120->128->64->5: left to XLA per perf review (negligible compute,
    # narrow / masked output lanes make a dedicated Pallas kernel a net loss).
    h = jax.nn.relu(final_f @ prepared["w1"] + prepared["b1"][0])
    h = jax.nn.relu(h @ prepared["w2"] + prepared["b2"][0])
    return h @ prepared["w3"] + prepared["b3"][0]


# Pure-JAX f32 reference (matches the PyTorch module) for correctness checking.
def reference_forward(params, fx, f_list):
    idx = jnp.transpose(f_list, (1, 0))
    emb = params["embedding"][idx]
    outs = []
    for i in range(NUM_DBL):
        zx = jnp.tanh(fx @ params["wx"][i] + params["bx"][i, 0])
        zi = jnp.tanh(emb[i] @ params["wi"][i] + params["bi"][i, 0])
        outs.append(zx * zi)
    f = jnp.concatenate(outs, axis=1)
    h = jax.nn.relu(f @ params["w1"] + params["b1"][0])
    h = jax.nn.relu(h @ params["w2"] + params["b2"][0])
    return h @ params["w3"] + params["b3"][0]


if __name__ == "__main__":
    B = 2  # small batch; feature dims (36864 / 1024 / 5120) are fixed by the module
    root = jax.random.PRNGKey(0)
    kp, kfx, kfl = jax.random.split(root, 3)

    params = init_params(kp)
    prepared = prepare_params(params)
    fx = jax.random.normal(kfx, (B, EMB_DIM), jnp.float32)
    f_list = jax.random.randint(kfl, (B, NUM_DBL), 0, VOCAB, jnp.int32)

    out = jax.block_until_ready(jax.jit(dblanet_forward)(prepared, fx, f_list))
    ref = jax.block_until_ready(jax.jit(reference_forward)(params, fx, f_list))

    assert out.shape == (B, 5), out.shape
    max_diff = float(jnp.max(jnp.abs(out - ref)))
    assert jnp.all(jnp.isfinite(out)) and max_diff < 5e-2, f"max_diff={max_diff}"
    print("KERNEL_OK")
</pallas_src>

<mosaic_0001>
module attributes {stable_mosaic.version = 11 : i64} {
  func.func @_dbl_kernel(%arg0: i32, %arg1: i32, %arg2: memref<2x3072xbf16, #tpu.memory_space<vmem>>, %arg3: memref<1x2x1024xf32, #tpu.memory_space<vmem>>, %arg4: memref<1x3072x1024xbf16, #tpu.memory_space<vmem>>, %arg5: memref<1x1x1024xf32, #tpu.memory_space<vmem>>, %arg6: memref<2x1024xf32, #tpu.memory_space<vmem>>, %arg7: memref<2x1024xf32, #tpu.memory_space<vmem>>) attributes {dimension_semantics = [#tpu.dimension_semantics<parallel>, #tpu.dimension_semantics<arbitrary>], iteration_bounds = array<i64: 5, 12>, scalar_prefetch = 0 : i64, scratch_operands = 1 : i64, tpu.core_type = #tpu.core_type<tc>, window_params = [{transform_indices = @transform_0, window_bounds = array<i64: 2, 3072>}, {transform_indices = @transform_1, window_bounds = array<i64: 1, 2, 1024>}, {transform_indices = @transform_2, window_bounds = array<i64: 1, 3072, 1024>}, {transform_indices = @transform_3, window_bounds = array<i64: 1, 1, 1024>}, {transform_indices = @transform_4, window_bounds = array<i64: 2, 1024>}]} {
    %c0_i32 = arith.constant 0 : i32
    %0 = arith.cmpi eq, %arg1, %c0_i32 : i32
    %1 = arith.extui %0 : i1 to i32
    %c0_i32_0 = arith.constant 0 : i32
    %2 = arith.cmpi ne, %1, %c0_i32_0 : i32
    scf.if %2 {
      %cst_10 = arith.constant 0.000000e+00 : f32
      %13 = vector.broadcast %cst_10 : f32 to vector<2x1024xf32>
      %c0_11 = arith.constant 0 : index
      %c0_12 = arith.constant 0 : index
      %14 = vector.load %arg7[%c0_11, %c0_12] : memref<2x1024xf32, #tpu.memory_space<vmem>>, vector<2x1024xf32>
      tpu.vector_store %arg7[%c0_11, %c0_12], %13 {strides = array<i32>} : memref<2x1024xf32, #tpu.memory_space<vmem>>, vector<2x1024xf32>,
    } else {
    }
    %c0 = arith.constant 0 : index
    %c0_1 = arith.constant 0 : index
    %3 = vector.load %arg7[%c0, %c0_1] : memref<2x1024xf32, #tpu.memory_space<vmem>>, vector<2x1024xf32>
    %c0_2 = arith.constant 0 : index
    %c0_3 = arith.constant 0 : index
    %4 = vector.load %arg2[%c0_2, %c0_3] : memref<2x3072xbf16, #tpu.memory_space<vmem>>, vector<2x3072xbf16>
    %c0_4 = arith.constant 0 : index
    %c0_5 = arith.constant 0 : index
    %c0_6 = arith.constant 0 : index
    %5 = vector.load %arg4[%c0_4, %c0_5, %c0_6] : memref<1x3072x1024xbf16, #tpu.memory_space<vmem>>, vector<1x3072x1024xbf16>
    %6 = vector.shape_cast %5 : vector<1x3072x1024xbf16> to vector<3072x1024xbf16>
    %cst = arith.constant dense<0.000000e+00> : vector<2x1024xf32>
    %7 = tpu.matmul %4, %6, %cst {dimension_numbers = #tpu.dot_dimension_numbers<[1], [0], [0], [1], [0, 0, 1, 1], [], []>} : vector<2x3072xbf16>, vector<3072x1024xbf16>, vector<2x1024xf32> -> vector<2x1024xf32>
    %8 = arith.addf %3, %7 : vector<2x1024xf32>
    %c0_7 = arith.constant 0 : index
    %c0_8 = arith.constant 0 : index
    %9 = vector.load %arg7[%c0_7, %c0_8] : memref<2x1024xf32, #tpu.memory_space<vmem>>, vector<2x1024xf32>
    tpu.vector_store %arg7[%c0_7, %c0_8], %8 {strides = array<i32>} : memref<2x1024xf32, #tpu.memory_space<vmem>>, vector<2x1024xf32>,
    %c11_i32 = arith.constant 11 : i32
    %10 = arith.cmpi eq, %arg1, %c11_i32 : i32
    %11 = arith.extui %10 : i1 to i32
    %c0_i32_9 = arith.constant 0 : i32
    %12 = arith.cmpi ne, %11, %c0_i32_9 : i32
    scf.if %12 {
      %c0_10 = arith.constant 0 : index
      %c0_11 = arith.constant 0 : index
      %13 = vector.load %arg7[%c0_10, %c0_11] : memref<2x1024xf32, #tpu.memory_space<vmem>>, vector<2x1024xf32>
      %c0_12 = arith.constant 0 : index
      %c0_13 = arith.constant 0 : index
      %c0_14 = arith.constant 0 : index
      %14 = vector.load %arg5[%c0_12, %c0_13, %c0_14] : memref<1x1x1024xf32, #tpu.memory_space<vmem>>, vector<1x1x1024xf32>
      %15 = vector.shape_cast %14 : vector<1x1x1024xf32> to vector<1x1024xf32>
      %16 = vector.broadcast %15 : vector<1x1024xf32> to vector<2x1024xf32>
      %17 = arith.addf %13, %16 : vector<2x1024xf32>
      %18 = math.tanh %17 : vector<2x1024xf32>
      %c0_15 = arith.constant 0 : index
      %c0_16 = arith.constant 0 : index
      %c0_17 = arith.constant 0 : index
      %19 = vector.load %arg3[%c0_15, %c0_16, %c0_17] : memref<1x2x1024xf32, #tpu.memory_space<vmem>>, vector<1x2x1024xf32>
      %20 = vector.shape_cast %19 : vector<1x2x1024xf32> to vector<2x1024xf32>
      %21 = math.tanh %20 : vector<2x1024xf32>
      %22 = arith.mulf %18, %21 : vector<2x1024xf32>
      %c0_18 = arith.constant 0 : index
      %c0_19 = arith.constant 0 : index
      %23 = vector.load %arg6[%c0_18, %c0_19] : memref<2x1024xf32, #tpu.memory_space<vmem>>, vector<2x1024xf32>
      tpu.vector_store %arg6[%c0_18, %c0_19], %22 {strides = array<i32>} : memref<2x1024xf32, #tpu.memory_space<vmem>>, vector<2x1024xf32>,
    } else {
    }
    return
  }
  func.func @transform_0(%arg0: i32, %arg1: i32) -> (i32, i32) {
    %c0_i32 = arith.constant 0 : i32
    %c0_i32_0 = arith.constant 0 : i32
    return %c0_i32, %arg1 : i32, i32
  }
  func.func @transform_1(%arg0: i32, %arg1: i32) -> (i32, i32, i32) {
    %c0_i32 = arith.constant 0 : i32
    %c0_i32_0 = arith.constant 0 : i32
    %c0_i32_1 = arith.constant 0 : i32
    return %arg0, %c0_i32, %c0_i32_0 : i32, i32, i32
  }
  func.func @transform_2(%arg0: i32, %arg1: i32) -> (i32, i32, i32) {
    %c0_i32 = arith.constant 0 : i32
    %c0_i32_0 = arith.constant 0 : i32
    return %arg0, %arg1, %c0_i32 : i32, i32, i32
  }
  func.func @transform_3(%arg0: i32, %arg1: i32) -> (i32, i32, i32) {
    %c0_i32 = arith.constant 0 : i32
    %c0_i32_0 = arith.constant 0 : i32
    %c0_i32_1 = arith.constant 0 : i32
    return %arg0, %c0_i32, %c0_i32_0 : i32, i32, i32
  }
  func.func @transform_4(%arg0: i32, %arg1: i32) -> (i32, i32) {
    %c0_i32 = arith.constant 0 : i32
    %c0_i32_0 = arith.constant 0 : i32
    return %c0_i32, %arg0 : i32, i32
  }
}

</mosaic_0001>

<llo_original>
// kernel: dblanet_forward.1
$region0: #{dblanet_forward.1}
  #allocation0 [shape = 'u32[]', space=smem, size = 0x4, offset = 0x4, fixed_abs, tag = 'smem constant byte address 0x4 - core index']
  #allocation1 [shape = 'u32[144,128]{1,0:T(1,128)}', space=vmem, size = 0x12000, scoped, tag = 'internal scratch']
  #allocation2 [shape = 'f32[2,1024]{1,0:T(2,128)}', space=vmem, size = 0x2000, scoped, tag = 'scratch operand']
  %s0 = inlined_call_operand.vmem [shape: bf16[2,36864], index: 0, kind: input, shape index: {}]
  %s1 = inlined_call_operand.vmem [shape: f32[5,2,1024], index: 1, kind: input, shape index: {}]
  %s2 = inlined_call_operand.hbm [shape: bf16[5,36864,1024], index: 2, kind: input, shape index: {}]
  %s3 = inlined_call_operand.hbm [shape: f32[5,1,1024], index: 3, kind: input, shape index: {}]
  %s4 = inlined_call_operand.vmem [shape: f32[2,5120], index: 4, kind: output, shape index: {}]
  %s5 = sld [smem:[#allocation0]]
  $region65: #{dblanet_forward.1} parent=0
    _
  %s7 = ssub.s32 1, %s5
  %s8 = scalar_select 0, %s7, %s5
  $region1: #{dblanet_forward.1} parent=0
    #allocation3 [shape = 'u8[12582912]{0}', space=vmem, size = 0xc00000, scoped, tag = 'input window, operand 2']
    #allocation4 [shape = 's32[2]{0}', space=sflag, size = 0x8, scoped, tag = 'scoped memory for dblanet_forward.1']
    #allocation5 [shape = 'u8[8192]{0}', space=vmem, size = 0x2000, scoped, tag = 'input window, operand 3']
    #allocation6 [shape = 's32[2]{0}', space=sflag, size = 0x8, scoped, tag = 'scoped memory for dblanet_forward.1']
    %9 = vsyncpa [#allocation4], 0
    %s10 = scalar_lea.sflag [#allocation4], 1
    %11 = vsyncpa %s10, 0
    %12 = vsyncpa [#allocation6], 0
    %s13 = scalar_lea.sflag [#allocation6], 1
    %14 = vsyncpa %s13, 0
    loop: start=0, step=1, limit=62
    $region2: #{dblanet_forward.1} parent=1 // loop_pre_header
      _
    $region3: #{dblanet_forward.1} parent=1 // loop_header
      %s16 = sphi 0, %s20
      %p17 = scmp.ge.s32.totalorder %s16, 62
      %s23 = sphi 0, %s35
      %s24 = sphi 0, %s31
      %s25 = sphi 0, %s23
      %s26 = sphi 0, %s24
      %s27 = sphi 0, %s25
      %s28 = sphi 0, %s26
      %s38 = sphi 0, %s40
      %s41 = sphi 0, %s38
      %s42 = sphi 0, %s41
      %s58 = sphi 0, %s42
      %s64 = sphi 0, %s66
      %s67 = sphi 0, %s64
      %s68 = sphi 0, %s67
      %s84 = sphi 0, %s68
      %s92 = sphi 0, %s94
      %s95 = sphi 0, %s92
      %s96 = sphi 0, %s95
      %s112 = sphi 0, %s96
      %s118 = sphi 0, %s120
      %s121 = sphi 0, %s118
      %s122 = sphi 0, %s121
      %s138 = sphi 0, %s122
      %s144 = sphi 0, %s146
      %s147 = sphi 0, %s144
      %s148 = sphi 0, %s147
      %s164 = sphi 0, %s148
    $region4: #{dblanet_forward.1} parent=1 // loop_header_branch
      %19 = sbr.rel (%p17) target = $region8
    $region5: #{dblanet_forward.1} parent=1 // loop_body
      %s21 = ssub.s32 %s16, 1
      %s22 = ssub.s32 %s16, 2
      %s29 = sadd.s32 1, %s24
      %p30 = scmp.ge.s32.totalorder %s29, 12
      %s31 = scalar_select %p30, 0, %s29
      %s32 = sadd.s32 1, %s23
      %s33 = scalar_select %p30, %s32, %s23
      %p34 = scmp.ge.s32.totalorder %s33, 5
      %s35 = scalar_select %p34, 0, %s33
      %s36 = ssub.s32 %s24, %s31
      %p37 = scmp.eq.s32.totalorder %s36, 0
      %s39 = sadd.s32 %s38, 1
      %s40 = scalar_select %p37, %s38, %s39
      %p43 = pneg %p37
      %p44 = scmp.eq.s32.totalorder %s16, 59
      %p45 = por %p43, %p44
      %p46 = scmp.ne.s32.totalorder %s38, %s41
      %p47 = scmp.eq.s32.totalorder %s16, 0
      %p48 = por %p46, %p47
      %p49 = scmp.ne.s32.totalorder %s38, %s41
      %p50 = scmp.eq.s32.totalorder %s21, 59
      %p51 = por %p49, %p50
      %p52 = scmp.ne.s32.totalorder %s41, %s42
      %p53 = scmp.eq.s32.totalorder %s21, 0
      %p54 = por %p52, %p53
      %p55 = scmp.ne.s32.totalorder %s41, %s42
      %p56 = scmp.eq.s32.totalorder %s22, 59
      %p57 = por %p55, %p56
      %p59 = scmp.ne.s32.totalorder %s42, %s58
      %p60 = scmp.eq.s32.totalorder %s22, 0
      %p61 = por %p59, %p60
      %s62 = ssub.s32 %s23, %s35
      %p63 = scmp.eq.s32.totalorder %s62, 0
      %s65 = sadd.s32 %s64, 1
      %s66 = scalar_select %p63, %s64, %s65
      %p69 = pneg %p63
      %p70 = scmp.eq.s32.totalorder %s16, 59
      %p71 = por %p69, %p70
      %p72 = scmp.ne.s32.totalorder %s64, %s67
      %p73 = scmp.eq.s32.totalorder %s16, 0
      %p74 = por %p72, %p73
      %p75 = scmp.ne.s32.totalorder %s64, %s67
      %p76 = scmp.eq.s32.totalorder %s21, 59
      %p77 = por %p75, %p76
      %p78 = scmp.ne.s32.totalorder %s67, %s68
      %p79 = scmp.eq.s32.totalorder %s21, 0
      %p80 = por %p78, %p79
      %p81 = scmp.ne.s32.totalorder %s67, %s68
      %p82 = scmp.eq.s32.totalorder %s22, 59
      %p83 = por %p81, %p82
      %p85 = scmp.ne.s32.totalorder %s68, %s84
      %p86 = scmp.eq.s32.totalorder %s22, 0
      %p87 = por %p85, %p86
      %s88 = ssub.s32 %s23, %s35
      %s89 = ssub.s32 %s24, %s31
      %s90 = sor.u32 %s88, %s89
      %p91 = scmp.eq.s32.totalorder %s90, 0
      %s93 = sadd.s32 %s92, 1
      %s94 = scalar_select %p91, %s92, %s93
      %p97 = pneg %p91
      %p98 = scmp.eq.s32.totalorder %s16, 59
      %p99 = por %p97, %p98
      %p100 = scmp.ne.s32.totalorder %s92, %s95
      %p101 = scmp.eq.s32.totalorder %s16, 0
      %p102 = por %p100, %p101
      %p103 = scmp.ne.s32.totalorder %s92, %s95
      %p104 = scmp.eq.s32.totalorder %s21, 59
      %p105 = por %p103, %p104
      %p106 = scmp.ne.s32.totalorder %s95, %s96
      %p107 = scmp.eq.s32.totalorder %s21, 0
      %p108 = por %p106, %p107
      %p109 = scmp.ne.s32.totalorder %s95, %s96
      %p110 = scmp.eq.s32.totalorder %s22, 59
      %p111 = por %p109, %p110
      %p113 = scmp.ne.s32.totalorder %s96, %s112
      %p114 = scmp.eq.s32.totalorder %s22, 0
      %p115 = por %p113, %p114
      %s116 = ssub.s32 %s23, %s35
      %p117 = scmp.eq.s32.totalorder %s116, 0
      %s119 = sadd.s32 %s118, 1
      %s120 = scalar_select %p117, %s118, %s119
      %p123 = pneg %p117
      %p124 = scmp.eq.s32.totalorder %s16, 59
      %p125 = por %p123, %p124
      %p126 = scmp.ne.s32.totalorder %s118, %s121
      %p127 = scmp.eq.s32.totalorder %s16, 0
      %p128 = por %p126, %p127
      %p129 = scmp.ne.s32.totalorder %s118, %s121
      %p130 = scmp.eq.s32.totalorder %s21, 59
      %p131 = por %p129, %p130
      %p132 = scmp.ne.s32.totalorder %s121, %s122
      %p133 = scmp.eq.s32.totalorder %s21, 0
      %p134 = por %p132, %p133
      %p135 = scmp.ne.s32.totalorder %s121, %s122
      %p136 = scmp.eq.s32.totalorder %s22, 59
      %p137 = por %p135, %p136
      %p139 = scmp.ne.s32.totalorder %s122, %s138
      %p140 = scmp.eq.s32.totalorder %s22, 0
      %p141 = por %p139, %p140
      %s142 = ssub.s32 %s23, %s35
      %p143 = scmp.eq.s32.totalorder %s142, 0
      %s145 = sadd.s32 %s144, 1
      %s146 = scalar_select %p143, %s144, %s145
      %p149 = pneg %p143
      %p150 = scmp.eq.s32.totalorder %s16, 59
      %p151 = por %p149, %p150
      %p152 = scmp.ne.s32.totalorder %s144, %s147
      %p153 = scmp.eq.s32.totalorder %s16, 0
      %p154 = por %p152, %p153
      %p155 = scmp.ne.s32.totalorder %s144, %s147
      %p156 = scmp.eq.s32.totalorder %s21, 59
      %p157 = por %p155, %p156
      %p158 = scmp.ne.s32.totalorder %s147, %s148
      %p159 = scmp.eq.s32.totalorder %s21, 0
      %p160 = por %p158, %p159
      %p161 = scmp.ne.s32.totalorder %s147, %s148
      %p162 = scmp.eq.s32.totalorder %s22, 59
      %p163 = por %p161, %p162
      %p165 = scmp.ne.s32.totalorder %s148, %s164
      %p166 = scmp.eq.s32.totalorder %s22, 0
      %p167 = por %p165, %p166
      %p168 = scmp.le.s32.totalorder 1, %s16
      %p169 = scmp.lt.s32.totalorder %s16, 61
      %p170 = pnand %p168, %p169
      %p171 = pneg %p170
      // Predicated region
      $region9: #{dblanet_forward.1} parent=5 // pred_check
        _
      $region10: #{dblanet_forward.1} parent=5 // pred_check_branch
        %173 = sbr.rel (%p170) target = $region12
      $region11: #{dblanet_forward.1} parent=5 // pred_region
        %s174 = ssub.s32 %s16, 1
      $region12: #{dblanet_forward.1} parent=5 // pred_fallthru
        _
      %p175 = scmp.lt.s32.totalorder %s16, 60
      // Predicated region
      $region13: #{dblanet_forward.1} parent=5 // pred_check
        %p176 = pneg %p175
      $region14: #{dblanet_forward.1} parent=5 // pred_check_branch
        %178 = sbr.rel (%p176) target = $region16
      $region15: #{dblanet_forward.1} parent=5 // pred_region
        // Predicated region
        $region17: #{dblanet_forward.1} parent=15 // pred_check
          %p179 = pneg %p48
        $region18: #{dblanet_forward.1} parent=15 // pred_check_branch
          %181 = sbr.rel (%p179) target = $region20
        $region19: #{dblanet_forward.1} parent=15 // pred_region
          %s182 = smul.u32 24, %s24
          %p183 = scmp.lt.s32.totalorder %s182, 287
          %s184 = scalar_select %p183, %s182, 287
          %s185 = scalar_lea.vmem %s0, %s184
          %s186 = smul.u32 24, %s24
        $region20: #{dblanet_forward.1} parent=15 // pred_fallthru
          _
        // Predicated region
        $region21: #{dblanet_forward.1} parent=15 // pred_check
          %p187 = pneg %p74
        $region22: #{dblanet_forward.1} parent=15 // pred_check_branch
          %189 = sbr.rel (%p187) target = $region24
        $region23: #{dblanet_forward.1} parent=15 // pred_region
          %p190 = scmp.lt.s32.totalorder %s23, 4
          %s191 = scalar_select %p190, %s23, 4
          %s192 = smul.addr %s191, 8
          %s193 = smul.addr %s192, 2
          %s194 = scalar_lea.vmem %s1, %s193
        $region24: #{dblanet_forward.1} parent=15 // pred_fallthru
          _
        // Predicated region
        $region25: #{dblanet_forward.1} parent=15 // pred_check
          %p195 = pneg %p102
        $region26: #{dblanet_forward.1} parent=15 // pred_check_branch
          %197 = sbr.rel (%p195) target = $region28
        $region27: #{dblanet_forward.1} parent=15 // pred_region
          %s198 = sand.u32 %s92, 1
          %s199 = scalar_lea.sflag [#allocation4], %s198
          %s200 = sand.u32 %s92, 1
          %s201 = smul.addr %s200, 12288
          %s202 = scalar_lea.vmem [#allocation3], %s201
          %s203 = smul.u32 384, %s24
          %s205 = ssub.s32 196608, 196608
          %206 = vsyncadd %s199, %s205
          %s207 = smul.addr %s203, 8
          %s208 = smul.addr %s23, 36864
          %s209 = sadd.s32 %s207, %s208
          %s210 = smul.addr %s209, 64
          %s211 = scalar_lea.hbm %s2, %s210
          %s212 = sshll.u32 %s202, 4
          %s213 = int_to_ptr.vmem [resolvable:$true] %s212
          %218 = dma.hbm_to_vmem [thread:$0]  %s211, 196608, %s213, %s199, 512, 512, 32
        $region28: #{dblanet_forward.1} parent=15 // pred_fallthru
          _
        // Predicated region
        $region29: #{dblanet_forward.1} parent=15 // pred_check
          %p219 = pneg %p128
        $region30: #{dblanet_forward.1} parent=15 // pred_check_branch
          %221 = sbr.rel (%p219) target = $region32
        $region31: #{dblanet_forward.1} parent=15 // pred_region
          %s222 = sand.u32 %s118, 1
          %s223 = scalar_lea.sflag [#allocation6], %s222
          %s224 = sand.u32 %s118, 1
          %s225 = smul.addr %s224, 8
          %s226 = scalar_lea.vmem [#allocation5], %s225
          %s228 = ssub.s32 128, 128
          %229 = vsyncadd %s223, %s228
          %s230 = smul.addr %s23, 8
          %s231 = smul.addr %s230, 16
          %s232 = scalar_lea.hbm %s3, %s231
          %s234 = sshll.u32 %s226, 4
          %s235 = int_to_ptr.vmem [resolvable:$true] %s234
          %237 = dma.hbm_to_vmem [thread:$0]  %s232, 128, %s235, %s223
        $region32: #{dblanet_forward.1} parent=15 // pred_fallthru
          _
      $region16: #{dblanet_forward.1} parent=5 // pred_fallthru
        _
      %p238 = scmp.le.s32.totalorder 1, %s16
      %p239 = scmp.lt.s32.totalorder %s16, 61
      %p240 = pnand %p238, %p239
      %p241 = pneg %p240
      // Predicated region
      $region33: #{dblanet_forward.1} parent=5 // pred_check
        _
      $region34: #{dblanet_forward.1} parent=5 // pred_check_branch
        %243 = sbr.rel (%p240) target = $region36
      $region35: #{dblanet_forward.1} parent=5 // pred_region
        %s244 = ssub.s32 %s16, 1
        %s245 = sand.u32 %s95, 1
        %s246 = scalar_lea.sflag [#allocation4], %s245
        %s247 = sand.u32 %s95, 1
        %s248 = smul.addr %s247, 12288
        %s249 = scalar_lea.vmem [#allocation3], %s248
        // Predicated region
        $region37: #{dblanet_forward.1} parent=35 // pred_check
          %p250 = pneg %p108
        $region38: #{dblanet_forward.1} parent=35 // pred_check_branch
          %252 = sbr.rel (%p250) target = $region40
        $region39: #{dblanet_forward.1} parent=35 // pred_region
          %253 = dma.done %s246, 196608
        $region40: #{dblanet_forward.1} parent=35 // pred_fallthru
          _
        %s254 = sand.u32 %s121, 1
        %s255 = scalar_lea.sflag [#allocation6], %s254
        %s256 = sand.u32 %s121, 1
        %s257 = smul.addr %s256, 8
        %s258 = scalar_lea.vmem [#allocation5], %s257
        // Predicated region
        $region41: #{dblanet_forward.1} parent=35 // pred_check
          %p259 = pneg %p134
        $region42: #{dblanet_forward.1} parent=35 // pred_check_branch
          %261 = sbr.rel (%p259) target = $region44
        $region43: #{dblanet_forward.1} parent=35 // pred_region
          %262 = dma.done %s255, 128
        $region44: #{dblanet_forward.1} parent=35 // pred_fallthru
          _
        %s263 = smul.u32 24, %s26
        %p264 = scmp.lt.s32.totalorder %s263, 287
        %s265 = scalar_select %p264, %s263, 287
        %s266 = scalar_lea.vmem %s0, %s265
        %p267 = pneg %p54
        %p268 = pneg %p51
        %p269 = scmp.lt.s32.totalorder %s25, 4
        %s270 = scalar_select %p269, %s25, 4
        %s271 = smul.addr %s270, 8
        %s272 = smul.addr %s271, 2
        %s273 = scalar_lea.vmem %s1, %s272
        %p274 = pneg %p80
        %p275 = pneg %p77
        %s276 = sand.u32 %s95, 1
        %s277 = scalar_lea.sflag [#allocation4], %s276
        %s278 = sand.u32 %s95, 1
        %s279 = smul.addr %s278, 12288
        %s280 = scalar_lea.vmem [#allocation3], %s279
        %p281 = pneg %p108
        %p282 = pneg %p105
        %s283 = sand.u32 %s121, 1
        %s284 = scalar_lea.sflag [#allocation6], %s283
        %s285 = sand.u32 %s121, 1
        %s286 = smul.addr %s285, 8
        %s287 = scalar_lea.vmem [#allocation5], %s286
        %p288 = pneg %p134
        %p289 = pneg %p131
        %p290 = pneg %p160
        %p291 = pneg %p157
        %s292 = smul.u32 8, %s25
        %p293 = scmp.lt.s32.totalorder %s292, 39
        %s294 = scalar_select %p293, %s292, 39
        %s295 = smul.addr %s294, 2
        %s296 = scalar_lea.vmem %s4, %s295
        %s297 = smul.u32 24, %s26
        %p298 = scmp.lt.s32.totalorder %s297, 287
        %s299 = scalar_select %p298, %s297, 287
        %s300 = scalar_lea.vmem %s0, %s299
        %s301 = smul.u32 24, %s26
        %p302 = scmp.lt.s32.totalorder %s25, 4
        %s303 = scalar_select %p302, %s25, 4
        %s304 = smul.addr %s303, 8
        %s305 = smul.addr %s304, 2
        %s306 = scalar_lea.vmem %s1, %s305
        %s307 = smul.u32 384, %s26
        %s308 = smul.u32 8, %s25
        %p309 = scmp.lt.s32.totalorder %s308, 39
        %s310 = scalar_select %p309, %s308, 39
        %s311 = smul.addr %s310, 2
        %s312 = scalar_lea.vmem %s4, %s311
        %s313 = smul.u32 8, %s25
        %p314 = scmp.eq.s32.totalorder %s26, 0
        // Predicated region
        $region45: #{dblanet_forward.1} parent=35 // pred_check
          %p315 = pneg %p314
        $region46: #{dblanet_forward.1} parent=35 // pred_check_branch
          %317 = sbr.rel (%p315) target = $region48
        $region47: #{dblanet_forward.1} parent=35 // pred_region
          %318 = vst [vmem:[#allocation2] sm:$0xff] 0.0
          %319 = vst [vmem:[#allocation2 + $0x8] sm:$0xff] 0.0
        $region48: #{dblanet_forward.1} parent=35 // pred_fallthru
          _
        %v320 = vld [vmem:[#allocation2] sm:$0xff]
        %v321 = vld [vmem:[#allocation2 + $0x8] sm:$0xff]
        %v322 = vld [vmem:[%s300] sm:$0xff]
        %v323 = vld [vmem:[%s300 + $0x8] sm:$0xff]
        %v324 = vld [vmem:[%s300 + $0x10] sm:$0xff]
        %v325 = vld [vmem:[%s249] sm:$0xff]
        %v326 = vld [vmem:[%s249 + $0x8] sm:$0xff]
        %v327 = vld [vmem:[%s249 + $0x10] sm:$0xff]
        %v328 = vld [vmem:[%s249 + $0x18] sm:$0xff]
        %v329 = vld [vmem:[%s249 + $0x20] sm:$0xff]
        %v330 = vld [vmem:[%s249 + $0x28] sm:$0xff]
        %v331 = vld [vmem:[%s249 + $0x30] sm:$0xff]
        %v332 = vld [vmem:[%s249 + $0x38] sm:$0xff]
        %v333 = vld [vmem:[%s249 + $0x40] sm:$0xff]
        %v334 = vld [vmem:[%s249 + $0x48] sm:$0xff]
        %v335 = vld [vmem:[%s249 + $0x50] sm:$0xff]
        %v336 = vld [vmem:[%s249 + $0x58] sm:$0xff]
        %v337 = vld [vmem:[%s249 + $0x60] sm:$0xff]
        %v338 = vld [vmem:[%s249 + $0x68] sm:$0xff]
        %v339 = vld [vmem:[%s249 + $0x70] sm:$0xff]
        %v340 = vld [vmem:[%s249 + $0x78] sm:$0xff]
        %v341 = vld [vmem:[%s249 + $0x80] sm:$0xff]
        %v342 = vld [vmem:[%s249 + $0x88] sm:$0xff]
        %v343 = vld [vmem:[%s249 + $0x90] sm:$0xff]
        %v344 = vld [vmem:[%s249 + $0x98] sm:$0xff]
        %v345 = vld [vmem:[%s249 + $0xa0] sm:$0xff]
        %v346 = vld [vmem:[%s249 + $0xa8] sm:$0xff]
        %v347 = vld [vmem:[%s249 + $0xb0] sm:$0xff]
        %v348 = vld [vmem:[%s249 + $0xb8] sm:$0xff]
        %v349 = vld [vmem:[%s249 + $0xc0] sm:$0xff]
        %v350 = vld [vmem:[%s249 + $0xc8] sm:$0xff]
        %v351 = vld [vmem:[%s249 + $0xd0] sm:$0xff]
        %v352 = vld [vmem:[%s249 + $0xd8] sm:$0xff]
        %v353 = vld [vmem:[%s249 + $0xe0] sm:$0xff]
        %v354 = vld [vmem:[%s249 + $0xe8] sm:$0xff]
        %v355 = vld [vmem:[%s249 + $0xf0] sm:$0xff]
        %v356 = vld [vmem:[%s249 + $0xf8] sm:$0xff]
        %v357 = vld [vmem:[%s249 + $0x100] sm:$0xff]
        %v358 = vld [vmem:[%s249 + $0x108] sm:$0xff]
        %v359 = vld [vmem:[%s249 + $0x110] sm:$0xff]
        %v360 = vld [vmem:[%s249 + $0x118] sm:$0xff]
        %v361 = vld [vmem:[%s249 + $0x120] sm:$0xff]
        %v362 = vld [vmem:[%s249 + $0x128] sm:$0xff]
        %v363 = vld [vmem:[%s249 + $0x130] sm:$0xff]
        %v364 = vld [vmem:[%s249 + $0x138] sm:$0xff]
        %v365 = vld [vmem:[%s249 + $0x140] sm:$0xff]
        %v366 = vld [vmem:[%s249 + $0x148] sm:$0xff]
        %v367 = vld [vmem:[%s249 + $0x150] sm:$0xff]
        %v368 = vld [vmem:[%s249 + $0x158] sm:$0xff]
        %v369 = vld [vmem:[%s249 + $0x160] sm:$0xff]
        %v370 = vld [vmem:[%s249 + $0x168] sm:$0xff]
        %v371 = vld [vmem:[%s249 + $0x170] sm:$0xff]
        %v372 = vld [vmem:[%s249 + $0x178] sm:$0xff]
        %v373 = vld [vmem:[%s249 + $0x180] sm:$0xff]
        %v374 = vld [vmem:[%s249 + $0x188] sm:$0xff]
        %v375 = vld [vmem:[%s249 + $0x190] sm:$0xff]
        %v376 = vld [vmem:[%s249 + $0x198] sm:$0xff]
        %v377 = vld [vmem:[%s249 + $0x1a0] sm:$0xff]
        %v378 = vld [vmem:[%s249 + $0x1a8] sm:$0xff]
        %v379 = vld [vmem:[%s249 + $0x1b0] sm:$0xff]
        %v380 = vld [vmem:[%s249 + $0x1b8] sm:$0xff]
        %v381 = vld [vmem:[%s249 + $0x1c0] sm:$0xff]
        %v382 = vld [vmem:[%s249 + $0x1c8] sm:$0xff]
        %v383 = vld [vmem:[%s249 + $0x1d0] sm:$0xff]
        %v384 = vld [vmem:[%s249 + $0x1d8] sm:$0xff]
        %v385 = vld [vmem:[%s249 + $0x1e0] sm:$0xff]
        %v386 = vld [vmem:[%s249 + $0x1e8] sm:$0xff]
        %v387 = vld [vmem:[%s249 + $0x1f0] sm:$0xff]
        %v388 = vld [vmem:[%s249 + $0x1f8] sm:$0xff]
        %v389 = vld [vmem:[%s249 + $0x200] sm:$0xff]
        %v390 = vld [vmem:[%s249 + $0x208] sm:$0xff]
        %v391 = vld [vmem:[%s249 + $0x210] sm:$0xff]
        %v392 = vld [vmem:[%s249 + $0x218] sm:$0xff]
        %v393 = vld [vmem:[%s249 + $0x220] sm:$0xff]
        %v394 = vld [vmem:[%s249 + $0x228] sm:$0xff]
        %v395 = vld [vmem:[%s249 + $0x230] sm:$0xff]
        %v396 = vld [vmem:[%s249 + $0x238] sm:$0xff]
        %v397 = vld [vmem:[%s249 + $0x240] sm:$0xff]
        %v398 = vld [vmem:[%s249 + $0x248] sm:$0xff]
        %v399 = vld [vmem:[%s249 + $0x250] sm:$0xff]
        %v400 = vld [vmem:[%s249 + $0x258] sm:$0xff]
        %v401 = vld [vmem:[%s249 + $0x260] sm:$0xff]
        %v402 = vld [vmem:[%s249 + $0x268] sm:$0xff]
        %v403 = vld [vmem:[%s249 + $0x270] sm:$0xff]
        %v404 = vld [vmem:[%s249 + $0x278] sm:$0xff]
        %v405 = vld [vmem:[%s249 + $0x280] sm:$0xff]
        %v406 = vld [vmem:[%s249 + $0x288] sm:$0xff]
        %v407 = vld [vmem:[%s249 + $0x290] sm:$0xff]
        %v408 = vld [vmem:[%s249 + $0x298] sm:$0xff]
        %v409 = vld [vmem:[%s249 + $0x2a0] sm:$0xff]
        %v410 = vld [vmem:[%s249 + $0x2a8] sm:$0xff]
        %v411 = vld [vmem:[%s249 + $0x2b0] sm:$0xff]
        %v412 = vld [vmem:[%s249 + $0x2b8] sm:$0xff]
        %v413 = vld [vmem:[%s249 + $0x2c0] sm:$0xff]
        %v414 = vld [vmem:[%s249 + $0x2c8] sm:$0xff]
        %v415 = vld [vmem:[%s249 + $0x2d0] sm:$0xff]
        %v416 = vld [vmem:[%s249 + $0x2d8] sm:$0xff]
        %v417 = vld [vmem:[%s249 + $0x2e0] sm:$0xff]
        %v418 = vld [vmem:[%s249 + $0x2e8] sm:$0xff]
        %v419 = vld [vmem:[%s249 + $0x2f0] sm:$0xff]
        %v420 = vld [vmem:[%s249 + $0x2f8] sm:$0xff]
        %v421 = vld [vmem:[%s249 + $0x300] sm:$0xff]
        %v422 = vld [vmem:[%s249 + $0x308] sm:$0xff]
        %v423 = vld [vmem:[%s249 + $0x310] sm:$0xff]
        %v424 = vld [vmem:[%s249 + $0x318] sm:$0xff]
        %v425 = vld [vmem:[%s249 + $0x320] sm:$0xff]
        %v426 = vld [vmem:[%s249 + $0x328] sm:$0xff]
        %v427 = vld [vmem:[%s249 + $0x330] sm:$0xff]
        %v428 = vld [vmem:[%s249 + $0x338] sm:$0xff]
        %v429 = vld [vmem:[%s249 + $0x340] sm:$0xff]
        %v430 = vld [vmem:[%s249 + $0x348] sm:$0xff]
        %v431 = vld [vmem:[%s249 + $0x350] sm:$0xff]
        %v432 = vld [vmem:[%s249 + $0x358] sm:$0xff]
        %v433 = vld [vmem:[%s249 + $0x360] sm:$0xff]
        %v434 = vld [vmem:[%s249 + $0x368] sm:$0xff]
        %v435 = vld [vmem:[%s249 + $0x370] sm:$0xff]
        %v436 = vld [vmem:[%s249 + $0x378] sm:$0xff]
        %v437 = vld [vmem:[%s249 + $0x380] sm:$0xff]
        %v438 = vld [vmem:[%s249 + $0x388] sm:$0xff]
        %v439 = vld [vmem:[%s249 + $0x390] sm:$0xff]
        %v440 = vld [vmem:[%s249 + $0x398] sm:$0xff]
        %v441 = vld [vmem:[%s249 + $0x3a0] sm:$0xff]
        %v442 = vld [vmem:[%s249 + $0x3a8] sm:$0xff]
        %v443 = vld [vmem:[%s249 + $0x3b0] sm:$0xff]
        %v444 = vld [vmem:[%s249 + $0x3b8] sm:$0xff]
        %v445 = vld [vmem:[%s249 + $0x3c0] sm:$0xff]
        %v446 = vld [vmem:[%s249 + $0x3c8] sm:$0xff]
        %v447 = vld [vmem:[%s249 + $0x3d0] sm:$0xff]
        %v448 = vld [vmem:[%s249 + $0x3d8] sm:$0xff]
        %v449 = vld [vmem:[%s249 + $0x3e0] sm:$0xff]
        %v450 = vld [vmem:[%s249 + $0x3e8] sm:$0xff]
        %v451 = vld [vmem:[%s249 + $0x3f0] sm:$0xff]
        %v452 = vld [vmem:[%s249 + $0x3f8] sm:$0xff]
        %v453 = vld [vmem:[%s249 + $0x400] sm:$0xff]
        %v454 = vld [vmem:[%s249 + $0x408] sm:$0xff]
        %v455 = vld [vmem:[%s249 + $0x410] sm:$0xff]
        %v456 = vld [vmem:[%s249 + $0x418] sm:$0xff]
        %v457 = vld [vmem:[%s249 + $0x420] sm:$0xff]
        %v458 = vld [vmem:[%s249 + $0x428] sm:$0xff]
        %v459 = vld [vmem:[%s249 + $0x430] sm:$0xff]
        %v460 = vld [vmem:[%s249 + $0x438] sm:$0xff]
        %v461 = vld [vmem:[%s249 + $0x440] sm:$0xff]
        %v462 = vld [vmem:[%s249 + $0x448] sm:$0xff]
        %v463 = vld [vmem:[%s249 + $0x450] sm:$0xff]
        %v464 = vld [vmem:[%s249 + $0x458] sm:$0xff]
        %v465 = vld [vmem:[%s249 + $0x460] sm:$0xff]
        %v466 = vld [vmem:[%s249 + $0x468] sm:$0xff]
        %v467 = vld [vmem:[%s249 + $0x470] sm:$0xff]
        %v468 = vld [vmem:[%s249 + $0x478] sm:$0xff]
        %v469 = vld [vmem:[%s249 + $0x480] sm:$0xff]
        %v470 = vld [vmem:[%s249 + $0x488] sm:$0xff]
        %v471 = vld [vmem:[%s249 + $0x490] sm:$0xff]
        %v472 = vld [vmem:[%s249 + $0x498] sm:$0xff]
        %v473 = vld [vmem:[%s249 + $0x4a0] sm:$0xff]
        %v474 = vld [vmem:[%s249 + $0x4a8] sm:$0xff]
        %v475 = vld [vmem:[%s249 + $0x4b0] sm:$0xff]
        %v476 = vld [vmem:[%s249 + $0x4b8] sm:$0xff]
        %v477 = vld [vmem:[%s249 + $0x4c0] sm:$0xff]
        %v478 = vld [vmem:[%s249 + $0x4c8] sm:$0xff]
        %v479 = vld [vmem:[%s249 + $0x4d0] sm:$0xff]
        %v480 = vld [vmem:[%s249 + $0x4d8] sm:$0xff]
        %v481 = vld [vmem:[%s249 + $0x4e0] sm:$0xff]
        %v482 = vld [vmem:[%s249 + $0x4e8] sm:$0xff]
        %v483 = vld [vmem:[%s249 + $0x4f0] sm:$0xff]
        %v484 = vld [vmem:[%s249 + $0x4f8] sm:$0xff]
        %v485 = vld [vmem:[%s249 + $0x500] sm:$0xff]
        %v486 = vld [vmem:[%s249 + $0x508] sm:$0xff]
        %v487 = vld [vmem:[%s249 + $0x510] sm:$0xff]
        %v488 = vld [vmem:[%s249 + $0x518] sm:$0xff]
        %v489 = vld [vmem:[%s249 + $0x520] sm:$0xff]
        %v490 = vld [vmem:[%s249 + $0x528] sm:$0xff]
        %v491 = vld [vmem:[%s249 + $0x530] sm:$0xff]
        %v492 = vld [vmem:[%s249 + $0x538] sm:$0xff]
        %v493 = vld [vmem:[%s249 + $0x540] sm:$0xff]
        %v494 = vld [vmem:[%s249 + $0x548] sm:$0xff]
        %v495 = vld [vmem:[%s249 + $0x550] sm:$0xff]
        %v496 = vld [vmem:[%s249 + $0x558] sm:$0xff]
        %v497 = vld [vmem:[%s249 + $0x560] sm:$0xff]
        %v498 = vld [vmem:[%s249 + $0x568] sm:$0xff]
        %v499 = vld [vmem:[%s249 + $0x570] sm:$0xff]
        %v500 = vld [vmem:[%s249 + $0x578] sm:$0xff]
        %v501 = vld [vmem:[%s249 + $0x580] sm:$0xff]
        %v502 = vld [vmem:[%s249 + $0x588] sm:$0xff]
        %v503 = vld [vmem:[%s249 + $0x590] sm:$0xff]
        %v504 = vld [vmem:[%s249 + $0x598] sm:$0xff]
        %v505 = vld [vmem:[%s249 + $0x5a0] sm:$0xff]
        %v506 = vld [vmem:[%s249 + $0x5a8] sm:$0xff]
        %v507 = vld [vmem:[%s249 + $0x5b0] sm:$0xff]
        %v508 = vld [vmem:[%s249 + $0x5b8] sm:$0xff]
        %v509 = vld [vmem:[%s249 + $0x5c0] sm:$0xff]
        %v510 = vld [vmem:[%s249 + $0x5c8] sm:$0xff]
        %v511 = vld [vmem:[%s249 + $0x5d0] sm:$0xff]
        %v512 = vld [vmem:[%s249 + $0x5d8] sm:$0xff]
        %v513 = vld [vmem:[%s249 + $0x5e0] sm:$0xff]
        %v514 = vld [vmem:[%s249 + $0x5e8] sm:$0xff]
        %v515 = vld [vmem:[%s249 + $0x5f0] sm:$0xff]
        %v516 = vld [vmem:[%s249 + $0x5f8] sm:$0xff]
        %v517 = vld [vmem:[%s249 + $0x600] sm:$0xff]
        %v518 = vld [vmem:[%s249 + $0x608] sm:$0xff]
        %v519 = vld [vmem:[%s249 + $0x610] sm:$0xff]
        %v520 = vld [vmem:[%s249 + $0x618] sm:$0xff]
        %v521 = vld [vmem:[%s249 + $0x620] sm:$0xff]
        %v522 = vld [vmem:[%s249 + $0x628] sm:$0xff]
        %v523 = vld [vmem:[%s249 + $0x630] sm:$0xff]
        %v524 = vld [vmem:[%s249 + $0x638] sm:$0xff]
        %v525 = vld [vmem:[%s249 + $0x640] sm:$0xff]
        %v526 = vld [vmem:[%s249 + $0x648] sm:$0xff]
        %v527 = vld [vmem:[%s249 + $0x650] sm:$0xff]
        %v528 = vld [vmem:[%s249 + $0x658] sm:$0xff]
        %v529 = vld [vmem:[%s249 + $0x660] sm:$0xff]
        %v530 = vld [vmem:[%s249 + $0x668] sm:$0xff]
        %v531 = vld [vmem:[%s249 + $0x670] sm:$0xff]
        %v532 = vld [vmem:[%s249 + $0x678] sm:$0xff]
        %v533 = vld [vmem:[%s249 + $0x680] sm:$0xff]
        %v534 = vld [vmem:[%s249 + $0x688] sm:$0xff]
        %v535 = vld [vmem:[%s249 + $0x690] sm:$0xff]
        %v536 = vld [vmem:[%s249 + $0x698] sm:$0xff]
        %v537 = vld [vmem:[%s249 + $0x6a0] sm:$0xff]
        %v538 = vld [vmem:[%s249 + $0x6a8] sm:$0xff]
        %v539 = vld [vmem:[%s249 + $0x6b0] sm:$0xff]
        %v540 = vld [vmem:[%s249 + $0x6b8] sm:$0xff]
        %v541 = vld [vmem:[%s249 + $0x6c0] sm:$0xff]
        %v542 = vld [vmem:[%s249 + $0x6c8] sm:$0xff]
        %v543 = vld [vmem:[%s249 + $0x6d0] sm:$0xff]
        %v544 = vld [vmem:[%s249 + $0x6d8] sm:$0xff]
        %v545 = vld [vmem:[%s249 + $0x6e0] sm:$0xff]
        %v546 = vld [vmem:[%s249 + $0x6e8] sm:$0xff]
        %v547 = vld [vmem:[%s249 + $0x6f0] sm:$0xff]
        %v548 = vld [vmem:[%s249 + $0x6f8] sm:$0xff]
        %v549 = vld [vmem:[%s249 + $0x700] sm:$0xff]
        %v550 = vld [vmem:[%s249 + $0x708] sm:$0xff]
        %v551 = vld [vmem:[%s249 + $0x710] sm:$0xff]
        %v552 = vld [vmem:[%s249 + $0x718] sm:$0xff]
        %v553 = vld [vmem:[%s249 + $0x720] sm:$0xff]
        %v554 = vld [vmem:[%s249 + $0x728] sm:$0xff]
        %v555 = vld [vmem:[%s249 + $0x730] sm:$0xff]
        %v556 = vld [vmem:[%s249 + $0x738] sm:$0xff]
        %v557 = vld [vmem:[%s249 + $0x740] sm:$0xff]
        %v558 = vld [vmem:[%s249 + $0x748] sm:$0xff]
        %v559 = vld [vmem:[%s249 + $0x750] sm:$0xff]
        %v560 = vld [vmem:[%s249 + $0x758] sm:$0xff]
        %v561 = vld [vmem:[%s249 + $0x760] sm:$0xff]
        %v562 = vld [vmem:[%s249 + $0x768] sm:$0xff]
        %v563 = vld [vmem:[%s249 + $0x770] sm:$0xff]
        %v564 = vld [vmem:[%s249 + $0x778] sm:$0xff]
        %v565 = vld [vmem:[%s249 + $0x780] sm:$0xff]
        %v566 = vld [vmem:[%s249 + $0x788] sm:$0xff]
        %v567 = vld [vmem:[%s249 + $0x790] sm:$0xff]
        %v568 = vld [vmem:[%s249 + $0x798] sm:$0xff]
        %v569 = vld [vmem:[%s249 + $0x7a0] sm:$0xff]
        %v570 = vld [vmem:[%s249 + $0x7a8] sm:$0xff]
        %v571 = vld [vmem:[%s249 + $0x7b0] sm:$0xff]
        %v572 = vld [vmem:[%s249 + $0x7b8] sm:$0xff]
        %v573 = vld [vmem:[%s249 + $0x7c0] sm:$0xff]
        %v574 = vld [vmem:[%s249 + $0x7c8] sm:$0xff]
        %v575 = vld [vmem:[%s249 + $0x7d0] sm:$0xff]
        %v576 = vld [vmem:[%s249 + $0x7d8] sm:$0xff]
        %v577 = vld [vmem:[%s249 + $0x7e0] sm:$0xff]
        %v578 = vld [vmem:[%s249 + $0x7e8] sm:$0xff]
        %v579 = vld [vmem:[%s249 + $0x7f0] sm:$0xff]
        %v580 = vld [vmem:[%s249 + $0x7f8] sm:$0xff]
        %v581 = vld [vmem:[%s249 + $0x800] sm:$0xff]
        %v582 = vld [vmem:[%s249 + $0x808] sm:$0xff]
        %v583 = vld [vmem:[%s249 + $0x810] sm:$0xff]
        %v584 = vld [vmem:[%s249 + $0x818] sm:$0xff]
        %v585 = vld [vmem:[%s249 + $0x820] sm:$0xff]
        %v586 = vld [vmem:[%s249 + $0x828] sm:$0xff]
        %v587 = vld [vmem:[%s249 + $0x830] sm:$0xff]
        %v588 = vld [vmem:[%s249 + $0x838] sm:$0xff]
        %v589 = vld [vmem:[%s249 + $0x840] sm:$0xff]
        %v590 = vld [vmem:[%s249 + $0x848] sm:$0xff]
        %v591 = vld [vmem:[%s249 + $0x850] sm:$0xff]
        %v592 = vld [vmem:[%s249 + $0x858] sm:$0xff]
        %v593 = vld [vmem:[%s249 + $0x860] sm:$0xff]
        %v594 = vld [vmem:[%s249 + $0x868] sm:$0xff]
        %v595 = vld [vmem:[%s249 + $0x870] sm:$0xff]
        %v596 = vld [vmem:[%s249 + $0x878] sm:$0xff]
        %v597 = vld [vmem:[%s249 + $0x880] sm:$0xff]
        %v598 = vld [vmem:[%s249 + $0x888] sm:$0xff]
        %v599 = vld [vmem:[%s249 + $0x890] sm:$0xff]
        %v600 = vld [vmem:[%s249 + $0x898] sm:$0xff]
        %v601 = vld [vmem:[%s249 + $0x8a0] sm:$0xff]
        %v602 = vld [vmem:[%s249 + $0x8a8] sm:$0xff]
        %v603 = vld [vmem:[%s249 + $0x8b0] sm:$0xff]
        %v604 = vld [vmem:[%s249 + $0x8b8] sm:$0xff]
        %v605 = vld [vmem:[%s249 + $0x8c0] sm:$0xff]
        %v606 = vld [vmem:[%s249 + $0x8c8] sm:$0xff]
        %v607 = vld [vmem:[%s249 + $0x8d0] sm:$0xff]
        %v608 = vld [vmem:[%s249 + $0x8d8] sm:$0xff]
        %v609 = vld [vmem:[%s249 + $0x8e0] sm:$0xff]
        %v610 = vld [vmem:[%s249 + $0x8e8] sm:$0xff]
        %v611 = vld [vmem:[%s249 + $0x8f0] sm:$0xff]
        %v612 = vld [vmem:[%s249 + $0x8f8] sm:$0xff]
        %v613 = vld [vmem:[%s249 + $0x900] sm:$0xff]
        %v614 = vld [vmem:[%s249 + $0x908] sm:$0xff]
        %v615 = vld [vmem:[%s249 + $0x910] sm:$0xff]
        %v616 = vld [vmem:[%s249 + $0x918] sm:$0xff]
        %v617 = vld [vmem:[%s249 + $0x920] sm:$0xff]
        %v618 = vld [vmem:[%s249 + $0x928] sm:$0xff]
        %v619 = vld [vmem:[%s249 + $0x930] sm:$0xff]
        %v620 = vld [vmem:[%s249 + $0x938] sm:$0xff]
        %v621 = vld [vmem:[%s249 + $0x940] sm:$0xff]
        %v622 = vld [vmem:[%s249 + $0x948] sm:$0xff]
        %v623 = vld [vmem:[%s249 + $0x950] sm:$0xff]
        %v624 = vld [vmem:[%s249 + $0x958] sm:$0xff]
        %v625 = vld [vmem:[%s249 + $0x960] sm:$0xff]
        %v626 = vld [vmem:[%s249 + $0x968] sm:$0xff]
        %v627 = vld [vmem:[%s249 + $0x970] sm:$0xff]
        %v628 = vld [vmem:[%s249 + $0x978] sm:$0xff]
        %v629 = vld [vmem:[%s249 + $0x980] sm:$0xff]
        %v630 = vld [vmem:[%s249 + $0x988] sm:$0xff]
        %v631 = vld [vmem:[%s249 + $0x990] sm:$0xff]
        %v632 = vld [vmem:[%s249 + $0x998] sm:$0xff]
        %v633 = vld [vmem:[%s249 + $0x9a0] sm:$0xff]
        %v634 = vld [vmem:[%s249 + $0x9a8] sm:$0xff]
        %v635 = vld [vmem:[%s249 + $0x9b0] sm:$0xff]
        %v636 = vld [vmem:[%s249 + $0x9b8] sm:$0xff]
        %v637 = vld [vmem:[%s249 + $0x9c0] sm:$0xff]
        %v638 = vld [vmem:[%s249 + $0x9c8] sm:$0xff]
        %v639 = vld [vmem:[%s249 + $0x9d0] sm:$0xff]
        %v640 = vld [vmem:[%s249 + $0x9d8] sm:$0xff]
        %v641 = vld [vmem:[%s249 + $0x9e0] sm:$0xff]
        %v642 = vld [vmem:[%s249 + $0x9e8] sm:$0xff]
        %v643 = vld [vmem:[%s249 + $0x9f0] sm:$0xff]
        %v644 = vld [vmem:[%s249 + $0x9f8] sm:$0xff]
        %v645 = vld [vmem:[%s249 + $0xa00] sm:$0xff]
        %v646 = vld [vmem:[%s249 + $0xa08] sm:$0xff]
        %v647 = vld [vmem:[%s249 + $0xa10] sm:$0xff]
        %v648 = vld [vmem:[%s249 + $0xa18] sm:$0xff]
        %v649 = vld [vmem:[%s249 + $0xa20] sm:$0xff]
        %v650 = vld [vmem:[%s249 + $0xa28] sm:$0xff]
        %v651 = vld [vmem:[%s249 + $0xa30] sm:$0xff]
        %v652 = vld [vmem:[%s249 + $0xa38] sm:$0xff]
        %v653 = vld [vmem:[%s249 + $0xa40] sm:$0xff]
        %v654 = vld [vmem:[%s249 + $0xa48] sm:$0xff]
        %v655 = vld [vmem:[%s249 + $0xa50] sm:$0xff]
        %v656 = vld [vmem:[%s249 + $0xa58] sm:$0xff]
        %v657 = vld [vmem:[%s249 + $0xa60] sm:$0xff]
        %v658 = vld [vmem:[%s249 + $0xa68] sm:$0xff]
        %v659 = vld [vmem:[%s249 + $0xa70] sm:$0xff]
        %v660 = vld [vmem:[%s249 + $0xa78] sm:$0xff]
        %v661 = vld [vmem:[%s249 + $0xa80] sm:$0xff]
        %v662 = vld [vmem:[%s249 + $0xa88] sm:$0xff]
        %v663 = vld [vmem:[%s249 + $0xa90] sm:$0xff]
        %v664 = vld [vmem:[%s249 + $0xa98] sm:$0xff]
        %v665 = vld [vmem:[%s249 + $0xaa0] sm:$0xff]
        %v666 = vld [vmem:[%s249 + $0xaa8] sm:$0xff]
        %v667 = vld [vmem:[%s249 + $0xab0] sm:$0xff]
        %v668 = vld [vmem:[%s249 + $0xab8] sm:$0xff]
        %v669 = vld [vmem:[%s249 + $0xac0] sm:$0xff]
        %v670 = vld [vmem:[%s249 + $0xac8] sm:$0xff]
        %v671 = vld [vmem:[%s249 + $0xad0] sm:$0xff]
        %v672 = vld [vmem:[%s249 + $0xad8] sm:$0xff]
        %v673 = vld [vmem:[%s249 + $0xae0] sm:$0xff]
        %v674 = vld [vmem:[%s249 + $0xae8] sm:$0xff]
        %v675 = vld [vmem:[%s249 + $0xaf0] sm:$0xff]
        %v676 = vld [vmem:[%s249 + $0xaf8] sm:$0xff]
        %v677 = vld [vmem:[%s249 + $0xb00] sm:$0xff]
        %v678 = vld [vmem:[%s249 + $0xb08] sm:$0xff]
        %v679 = vld [vmem:[%s249 + $0xb10] sm:$0xff]
        %v680 = vld [vmem:[%s249 + $0xb18] sm:$0xff]
        %v681 = vld [vmem:[%s249 + $0xb20] sm:$0xff]
        %v682 = vld [vmem:[%s249 + $0xb28] sm:$0xff]
        %v683 = vld [vmem:[%s249 + $0xb30] sm:$0xff]
        %v684 = vld [vmem:[%s249 + $0xb38] sm:$0xff]
        %v685 = vld [vmem:[%s249 + $0xb40] sm:$0xff]
        %v686 = vld [vmem:[%s249 + $0xb48] sm:$0xff]
        %v687 = vld [vmem:[%s249 + $0xb50] sm:$0xff]
        %v688 = vld [vmem:[%s249 + $0xb58] sm:$0xff]
        %v689 = vld [vmem:[%s249 + $0xb60] sm:$0xff]
        %v690 = vld [vmem:[%s249 + $0xb68] sm:$0xff]
        %v691 = vld [vmem:[%s249 + $0xb70] sm:$0xff]
        %v692 = vld [vmem:[%s249 + $0xb78] sm:$0xff]
        %v693 = vld [vmem:[%s249 + $0xb80] sm:$0xff]
        %v694 = vld [vmem:[%s249 + $0xb88] sm:$0xff]
        %v695 = vld [vmem:[%s249 + $0xb90] sm:$0xff]
        %v696 = vld [vmem:[%s249 + $0xb98] sm:$0xff]
        %v697 = vld [vmem:[%s249 + $0xba0] sm:$0xff]
        %v698 = vld [vmem:[%s249 + $0xba8] sm:$0xff]
        %v699 = vld [vmem:[%s249 + $0xbb0] sm:$0xff]
        %v700 = vld [vmem:[%s249 + $0xbb8] sm:$0xff]
        %v701 = vld [vmem:[%s249 + $0xbc0] sm:$0xff]
        %v702 = vld [vmem:[%s249 + $0xbc8] sm:$0xff]
        %v703 = vld [vmem:[%s249 + $0xbd0] sm:$0xff]
        %v704 = vld [vmem:[%s249 + $0xbd8] sm:$0xff]
        %v705 = vld [vmem:[%s249 + $0xbe0] sm:$0xff]
        %v706 = vld [vmem:[%s249 + $0xbe8] sm:$0xff]
        %v707 = vld [vmem:[%s249 + $0xbf0] sm:$0xff]
        %v708 = vld [vmem:[%s249 + $0xbf8] sm:$0xff]
        %v709 = vld [vmem:[%s249 + $0xc00] sm:$0xff]
        %v710 = vld [vmem:[%s249 + $0xc08] sm:$0xff]
        %v711 = vld [vmem:[%s249 + $0xc10] sm:$0xff]
        %v712 = vld [vmem:[%s249 + $0xc18] sm:$0xff]
        %v713 = vld [vmem:[%s249 + $0xc20] sm:$0xff]
        %v714 = vld [vmem:[%s249 + $0xc28] sm:$0xff]
        %v715 = vld [vmem:[%s249 + $0xc30] sm:$0xff]
        %v716 = vld [vmem:[%s249 + $0xc38] sm:$0xff]
        %v717 = vld [vmem:[%s249 + $0xc40] sm:$0xff]
        %v718 = vld [vmem:[%s249 + $0xc48] sm:$0xff]
        %v719 = vld [vmem:[%s249 + $0xc50] sm:$0xff]
        %v720 = vld [vmem:[%s249 + $0xc58] sm:$0xff]
        %v721 = vld [vmem:[%s249 + $0xc60] sm:$0xff]
        %v722 = vld [vmem:[%s249 + $0xc68] sm:$0xff]
        %v723 = vld [vmem:[%s249 + $0xc70] sm:$0xff]
        %v724 = vld [vmem:[%s249 + $0xc78] sm:$0xff]
        %v725 = vld [vmem:[%s249 + $0xc80] sm:$0xff]
        %v726 = vld [vmem:[%s249 + $0xc88] sm:$0xff]
        %v727 = vld [vmem:[%s249 + $0xc90] sm:$0xff]
        %v728 = vld [vmem:[%s249 + $0xc98] sm:$0xff]
        %v729 = vld [vmem:[%s249 + $0xca0] sm:$0xff]
        %v730 = vld [vmem:[%s249 + $0xca8] sm:$0xff]
        %v731 = vld [vmem:[%s249 + $0xcb0] sm:$0xff]
        %v732 = vld [vmem:[%s249 + $0xcb8] sm:$0xff]
        %v733 = vld [vmem:[%s249 + $0xcc0] sm:$0xff]
        %v734 = vld [vmem:[%s249 + $0xcc8] sm:$0xff]
        %v735 = vld [vmem:[%s249 + $0xcd0] sm:$0xff]
        %v736 = vld [vmem:[%s249 + $0xcd8] sm:$0xff]
        %v737 = vld [vmem:[%s249 + $0xce0] sm:$0xff]
        %v738 = vld [vmem:[%s249 + $0xce8] sm:$0xff]
        %v739 = vld [vmem:[%s249 + $0xcf0] sm:$0xff]
        %v740 = vld [vmem:[%s249 + $0xcf8] sm:$0xff]
        %v741 = vld [vmem:[%s249 + $0xd00] sm:$0xff]
        %v742 = vld [vmem:[%s249 + $0xd08] sm:$0xff]
        %v743 = vld [vmem:[%s249 + $0xd10] sm:$0xff]
        %v744 = vld [vmem:[%s249 + $0xd18] sm:$0xff]
        %v745 = vld [vmem:[%s249 + $0xd20] sm:$0xff]
        %v746 = vld [vmem:[%s249 + $0xd28] sm:$0xff]
        %v747 = vld [vmem:[%s249 + $0xd30] sm:$0xff]
        %v748 = vld [vmem:[%s249 + $0xd38] sm:$0xff]
        %v749 = vld [vmem:[%s249 + $0xd40] sm:$0xff]
        %v750 = vld [vmem:[%s249 + $0xd48] sm:$0xff]
        %v751 = vld [vmem:[%s249 + $0xd50] sm:$0xff]
        %v752 = vld [vmem:[%s249 + $0xd58] sm:$0xff]
        %v753 = vld [vmem:[%s249 + $0xd60] sm:$0xff]
        %v754 = vld [vmem:[%s249 + $0xd68] sm:$0xff]
        %v755 = vld [vmem:[%s249 + $0xd70] sm:$0xff]
        %v756 = vld [vmem:[%s249 + $0xd78] sm:$0xff]
        %v757 = vld [vmem:[%s249 + $0xd80] sm:$0xff]
        %v758 = vld [vmem:[%s249 + $0xd88] sm:$0xff]
        %v759 = vld [vmem:[%s249 + $0xd90] sm:$0xff]
        %v760 = vld [vmem:[%s249 + $0xd98] sm:$0xff]
        %v761 = vld [vmem:[%s249 + $0xda0] sm:$0xff]
        %v762 = vld [vmem:[%s249 + $0xda8] sm:$0xff]
        %v763 = vld [vmem:[%s249 + $0xdb0] sm:$0xff]
        %v764 = vld [vmem:[%s249 + $0xdb8] sm:$0xff]
        %v765 = vld [vmem:[%s249 + $0xdc0] sm:$0xff]
        %v766 = vld [vmem:[%s249 + $0xdc8] sm:$0xff]
        %v767 = vld [vmem:[%s249 + $0xdd0] sm:$0xff]
        %v768 = vld [vmem:[%s249 + $0xdd8] sm:$0xff]
        %v769 = vld [vmem:[%s249 + $0xde0] sm:$0xff]
        %v770 = vld [vmem:[%s249 + $0xde8] sm:$0xff]
        %v771 = vld [vmem:[%s249 + $0xdf0] sm:$0xff]
        %v772 = vld [vmem:[%s249 + $0xdf8] sm:$0xff]
        %v773 = vld [vmem:[%s249 + $0xe00] sm:$0xff]
        %v774 = vld [vmem:[%s249 + $0xe08] sm:$0xff]
        %v775 = vld [vmem:[%s249 + $0xe10] sm:$0xff]
        %v776 = vld [vmem:[%s249 + $0xe18] sm:$0xff]
        %v777 = vld [vmem:[%s249 + $0xe20] sm:$0xff]
        %v778 = vld [vmem:[%s249 + $0xe28] sm:$0xff]
        %v779 = vld [vmem:[%s249 + $0xe30] sm:$0xff]
        %v780 = vld [vmem:[%s249 + $0xe38] sm:$0xff]
        %v781 = vld [vmem:[%s249 + $0xe40] sm:$0xff]
        %v782 = vld [vmem:[%s249 + $0xe48] sm:$0xff]
        %v783 = vld [vmem:[%s249 + $0xe50] sm:$0xff]
        %v784 = vld [vmem:[%s249 + $0xe58] sm:$0xff]
        %v785 = vld [vmem:[%s249 + $0xe60] sm:$0xff]
        %v786 = vld [vmem:[%s249 + $0xe68] sm:$0xff]
        %v787 = vld [vmem:[%s249 + $0xe70] sm:$0xff]
        %v788 = vld [vmem:[%s249 + $0xe78] sm:$0xff]
        %v789 = vld [vmem:[%s249 + $0xe80] sm:$0xff]
        %v790 = vld [vmem:[%s249 + $0xe88] sm:$0xff]
        %v791 = vld [vmem:[%s249 + $0xe90] sm:$0xff]
        %v792 = vld [vmem:[%s249 + $0xe98] sm:$0xff]
        %v793 = vld [vmem:[%s249 + $0xea0] sm:$0xff]
        %v794 = vld [vmem:[%s249 + $0xea8] sm:$0xff]
        %v795 = vld [vmem:[%s249 + $0xeb0] sm:$0xff]
        %v796 = vld [vmem:[%s249 + $0xeb8] sm:$0xff]
        %v797 = vld [vmem:[%s249 + $0xec0] sm:$0xff]
        %v798 = vld [vmem:[%s249 + $0xec8] sm:$0xff]
        %v799 = vld [vmem:[%s249 + $0xed0] sm:$0xff]
        %v800 = vld [vmem:[%s249 + $0xed8] sm:$0xff]
        %v801 = vld [vmem:[%s249 + $0xee0] sm:$0xff]
        %v802 = vld [vmem:[%s249 + $0xee8] sm:$0xff]
        %v803 = vld [vmem:[%s249 + $0xef0] sm:$0xff]
        %v804 = vld [vmem:[%s249 + $0xef8] sm:$0xff]
        %v805 = vld [vmem:[%s249 + $0xf00] sm:$0xff]
        %v806 = vld [vmem:[%s249 + $0xf08] sm:$0xff]
        %v807 = vld [vmem:[%s249 + $0xf10] sm:$0xff]
        %v808 = vld [vmem:[%s249 + $0xf18] sm:$0xff]
        %v809 = vld [vmem:[%s249 + $0xf20] sm:$0xff]
        %v810 = vld [vmem:[%s249 + $0xf28] sm:$0xff]
        %v811 = vld [vmem:[%s249 + $0xf30] sm:$0xff]
        %v812 = vld [vmem:[%s249 + $0xf38] sm:$0xff]
        %v813 = vld [vmem:[%s249 + $0xf40] sm:$0xff]
        %v814 = vld [vmem:[%s249 + $0xf48] sm:$0xff]
        %v815 = vld [vmem:[%s249 + $0xf50] sm:$0xff]
        %v816 = vld [vmem:[%s249 + $0xf58] sm:$0xff]
        %v817 = vld [vmem:[%s249 + $0xf60] sm:$0xff]
        %v818 = vld [vmem:[%s249 + $0xf68] sm:$0xff]
        %v819 = vld [vmem:[%s249 + $0xf70] sm:$0xff]
        %v820 = vld [vmem:[%s249 + $0xf78] sm:$0xff]
        %v821 = vld [vmem:[%s249 + $0xf80] sm:$0xff]
        %v822 = vld [vmem:[%s249 + $0xf88] sm:$0xff]
        %v823 = vld [vmem:[%s249 + $0xf90] sm:$0xff]
        %v824 = vld [vmem:[%s249 + $0xf98] sm:$0xff]
        %v825 = vld [vmem:[%s249 + $0xfa0] sm:$0xff]
        %v826 = vld [vmem:[%s249 + $0xfa8] sm:$0xff]
        %v827 = vld [vmem:[%s249 + $0xfb0] sm:$0xff]
        %v828 = vld [vmem:[%s249 + $0xfb8] sm:$0xff]
        %v829 = vld [vmem:[%s249 + $0xfc0] sm:$0xff]
        %v830 = vld [vmem:[%s249 + $0xfc8] sm:$0xff]
        %v831 = vld [vmem:[%s249 + $0xfd0] sm:$0xff]
        %v832 = vld [vmem:[%s249 + $0xfd8] sm:$0xff]
        %v833 = vld [vmem:[%s249 + $0xfe0] sm:$0xff]
        %v834 = vld [vmem:[%s249 + $0xfe8] sm:$0xff]
        %v835 = vld [vmem:[%s249 + $0xff0] sm:$0xff]
        %v836 = vld [vmem:[%s249 + $0xff8] sm:$0xff]
        %v837 = vld [vmem:[%s249 + $0x1000] sm:$0xff]
        %v838 = vld [vmem:[%s249 + $0x1008] sm:$0xff]
        %v839 = vld [vmem:[%s249 + $0x1010] sm:$0xff]
        %v840 = vld [vmem:[%s249 + $0x1018] sm:$0xff]
        %v841 = vld [vmem:[%s249 + $0x1020] sm:$0xff]
        %v842 = vld [vmem:[%s249 + $0x1028] sm:$0xff]
        %v843 = vld [vmem:[%s249 + $0x1030] sm:$0xff]
        %v844 = vld [vmem:[%s249 + $0x1038] sm:$0xff]
        %v845 = vld [vmem:[%s249 + $0x1040] sm:$0xff]
        %v846 = vld [vmem:[%s249 + $0x1048] sm:$0xff]
        %v847 = vld [vmem:[%s249 + $0x1050] sm:$0xff]
        %v848 = vld [vmem:[%s249 + $0x1058] sm:$0xff]
        %v849 = vld [vmem:[%s249 + $0x1060] sm:$0xff]
        %v850 = vld [vmem:[%s249 + $0x1068] sm:$0xff]
        %v851 = vld [vmem:[%s249 + $0x1070] sm:$0xff]
        %v852 = vld [vmem:[%s249 + $0x1078] sm:$0xff]
        %v853 = vld [vmem:[%s249 + $0x1080] sm:$0xff]
        %v854 = vld [vmem:[%s249 + $0x1088] sm:$0xff]
        %v855 = vld [vmem:[%s249 + $0x1090] sm:$0xff]
        %v856 = vld [vmem:[%s249 + $0x1098] sm:$0xff]
        %v857 = vld [vmem:[%s249 + $0x10a0] sm:$0xff]
        %v858 = vld [vmem:[%s249 + $0x10a8] sm:$0xff]
        %v859 = vld [vmem:[%s249 + $0x10b0] sm:$0xff]
        %v860 = vld [vmem:[%s249 + $0x10b8] sm:$0xff]
        %v861 = vld [vmem:[%s249 + $0x10c0] sm:$0xff]
        %v862 = vld [vmem:[%s249 + $0x10c8] sm:$0xff]
        %v863 = vld [vmem:[%s249 + $0x10d0] sm:$0xff]
        %v864 = vld [vmem:[%s249 + $0x10d8] sm:$0xff]
        %v865 = vld [vmem:[%s249 + $0x10e0] sm:$0xff]
        %v866 = vld [vmem:[%s249 + $0x10e8] sm:$0xff]
        %v867 = vld [vmem:[%s249 + $0x10f0] sm:$0xff]
        %v868 = vld [vmem:[%s249 + $0x10f8] sm:$0xff]
        %v869 = vld [vmem:[%s249 + $0x1100] sm:$0xff]
        %v870 = vld [vmem:[%s249 + $0x1108] sm:$0xff]
        %v871 = vld [vmem:[%s249 + $0x1110] sm:$0xff]
        %v872 = vld [vmem:[%s249 + $0x1118] sm:$0xff]
        %v873 = vld [vmem:[%s249 + $0x1120] sm:$0xff]
        %v874 = vld [vmem:[%s249 + $0x1128] sm:$0xff]
        %v875 = vld [vmem:[%s249 + $0x1130] sm:$0xff]
        %v876 = vld [vmem:[%s249 + $0x1138] sm:$0xff]
        %v877 = vld [vmem:[%s249 + $0x1140] sm:$0xff]
        %v878 = vld [vmem:[%s249 + $0x1148] sm:$0xff]
        %v879 = vld [vmem:[%s249 + $0x1150] sm:$0xff]
        %v880 = vld [vmem:[%s249 + $0x1158] sm:$0xff]
        %v881 = vld [vmem:[%s249 + $0x1160] sm:$0xff]
        %v882 = vld [vmem:[%s249 + $0x1168] sm:$0xff]
        %v883 = vld [vmem:[%s249 + $0x1170] sm:$0xff]
        %v884 = vld [vmem:[%s249 + $0x1178] sm:$0xff]
        %v885 = vld [vmem:[%s249 + $0x1180] sm:$0xff]
        %v886 = vld [vmem:[%s249 + $0x1188] sm:$0xff]
        %v887 = vld [vmem:[%s249 + $0x1190] sm:$0xff]
        %v888 = vld [vmem:[%s249 + $0x1198] sm:$0xff]
        %v889 = vld [vmem:[%s249 + $0x11a0] sm:$0xff]
        %v890 = vld [vmem:[%s249 + $0x11a8] sm:$0xff]
        %v891 = vld [vmem:[%s249 + $0x11b0] sm:$0xff]
        %v892 = vld [vmem:[%s249 + $0x11b8] sm:$0xff]
        %v893 = vld [vmem:[%s249 + $0x11c0] sm:$0xff]
        %v894 = vld [vmem:[%s249 + $0x11c8] sm:$0xff]
        %v895 = vld [vmem:[%s249 + $0x11d0] sm:$0xff]
        %v896 = vld [vmem:[%s249 + $0x11d8] sm:$0xff]
        %v897 = vld [vmem:[%s249 + $0x11e0] sm:$0xff]
        %v898 = vld [vmem:[%s249 + $0x11e8] sm:$0xff]
        %v899 = vld [vmem:[%s249 + $0x11f0] sm:$0xff]
        %v900 = vld [vmem:[%s249 + $0x11f8] sm:$0xff]
        %v901 = vld [vmem:[%s249 + $0x1200] sm:$0xff]
        %v902 = vld [vmem:[%s249 + $0x1208] sm:$0xff]
        %v903 = vld [vmem:[%s249 + $0x1210] sm:$0xff]
        %v904 = vld [vmem:[%s249 + $0x1218] sm:$0xff]
        %v905 = vld [vmem:[%s249 + $0x1220] sm:$0xff]
        %v906 = vld [vmem:[%s249 + $0x1228] sm:$0xff]
        %v907 = vld [vmem:[%s249 + $0x1230] sm:$0xff]
        %v908 = vld [vmem:[%s249 + $0x1238] sm:$0xff]
        %v909 = vld [vmem:[%s249 + $0x1240] sm:$0xff]
        %v910 = vld [vmem:[%s249 + $0x1248] sm:$0xff]
        %v911 = vld [vmem:[%s249 + $0x1250] sm:$0xff]
        %v912 = vld [vmem:[%s249 + $0x1258] sm:$0xff]
        %v913 = vld [vmem:[%s249 + $0x1260] sm:$0xff]
        %v914 = vld [vmem:[%s249 + $0x1268] sm:$0xff]
        %v915 = vld [vmem:[%s249 + $0x1270] sm:$0xff]
        %v916 = vld [vmem:[%s249 + $0x1278] sm:$0xff]
        %v917 = vld [vmem:[%s249 + $0x1280] sm:$0xff]
        %v918 = vld [vmem:[%s249 + $0x1288] sm:$0xff]
        %v919 = vld [vmem:[%s249 + $0x1290] sm:$0xff]
        %v920 = vld [vmem:[%s249 + $0x1298] sm:$0xff]
        %v921 = vld [vmem:[%s249 + $0x12a0] sm:$0xff]
        %v922 = vld [vmem:[%s249 + $0x12a8] sm:$0xff]
        %v923 = vld [vmem:[%s249 + $0x12b0] sm:$0xff]
        %v924 = vld [vmem:[%s249 + $0x12b8] sm:$0xff]
        %v925 = vld [vmem:[%s249 + $0x12c0] sm:$0xff]
        %v926 = vld [vmem:[%s249 + $0x12c8] sm:$0xff]
        %v927 = vld [vmem:[%s249 + $0x12d0] sm:$0xff]
        %v928 = vld [vmem:[%s249 + $0x12d8] sm:$0xff]
        %v929 = vld [vmem:[%s249 + $0x12e0] sm:$0xff]
        %v930 = vld [vmem:[%s249 + $0x12e8] sm:$0xff]
        %v931 = vld [vmem:[%s249 + $0x12f0] sm:$0xff]
        %v932 = vld [vmem:[%s249 + $0x12f8] sm:$0xff]
        %v933 = vld [vmem:[%s249 + $0x1300] sm:$0xff]
        %v934 = vld [vmem:[%s249 + $0x1308] sm:$0xff]
        %v935 = vld [vmem:[%s249 + $0x1310] sm:$0xff]
        %v936 = vld [vmem:[%s249 + $0x1318] sm:$0xff]
        %v937 = vld [vmem:[%s249 + $0x1320] sm:$0xff]
        %v938 = vld [vmem:[%s249 + $0x1328] sm:$0xff]
        %v939 = vld [vmem:[%s249 + $0x1330] sm:$0xff]
        %v940 = vld [vmem:[%s249 + $0x1338] sm:$0xff]
        %v941 = vld [vmem:[%s249 + $0x1340] sm:$0xff]
        %v942 = vld [vmem:[%s249 + $0x1348] sm:$0xff]
        %v943 = vld [vmem:[%s249 + $0x1350] sm:$0xff]
        %v944 = vld [vmem:[%s249 + $0x1358] sm:$0xff]
        %v945 = vld [vmem:[%s249 + $0x1360] sm:$0xff]
        %v946 = vld [vmem:[%s249 + $0x1368] sm:$0xff]
        %v947 = vld [vmem:[%s249 + $0x1370] sm:$0xff]
        %v948 = vld [vmem:[%s249 + $0x1378] sm:$0xff]
        %v949 = vld [vmem:[%s249 + $0x1380] sm:$0xff]
        %v950 = vld [vmem:[%s249 + $0x1388] sm:$0xff]
        %v951 = vld [vmem:[%s249 + $0x1390] sm:$0xff]
        %v952 = vld [vmem:[%s249 + $0x1398] sm:$0xff]
        %v953 = vld [vmem:[%s249 + $0x13a0] sm:$0xff]
        %v954 = vld [vmem:[%s249 + $0x13a8] sm:$0xff]
        %v955 = vld [vmem:[%s249 + $0x13b0] sm:$0xff]
        %v956 = vld [vmem:[%s249 + $0x13b8] sm:$0xff]
        %v957 = vld [vmem:[%s249 + $0x13c0] sm:$0xff]
        %v958 = vld [vmem:[%s249 + $0x13c8] sm:$0xff]
        %v959 = vld [vmem:[%s249 + $0x13d0] sm:$0xff]
        %v960 = vld [vmem:[%s249 + $0x13d8] sm:$0xff]
        %v961 = vld [vmem:[%s249 + $0x13e0] sm:$0xff]
        %v962 = vld [vmem:[%s249 + $0x13e8] sm:$0xff]
        %v963 = vld [vmem:[%s249 + $0x13f0] sm:$0xff]
        %v964 = vld [vmem:[%s249 + $0x13f8] sm:$0xff]
        %v965 = vld [vmem:[%s249 + $0x1400] sm:$0xff]
        %v966 = vld [vmem:[%s249 + $0x1408] sm:$0xff]
        %v967 = vld [vmem:[%s249 + $0x1410] sm:$0xff]
        %v968 = vld [vmem:[%s249 + $0x1418] sm:$0xff]
        %v969 = vld [vmem:[%s249 + $0x1420] sm:$0xff]
        %v970 = vld [vmem:[%s249 + $0x1428] sm:$0xff]
        %v971 = vld [vmem:[%s249 + $0x1430] sm:$0xff]
        %v972 = vld [vmem:[%s249 + $0x1438] sm:$0xff]
        %v973 = vld [vmem:[%s249 + $0x1440] sm:$0xff]
        %v974 = vld [vmem:[%s249 + $0x1448] sm:$0xff]
        %v975 = vld [vmem:[%s249 + $0x1450] sm:$0xff]
        %v976 = vld [vmem:[%s249 + $0x1458] sm:$0xff]
        %v977 = vld [vmem:[%s249 + $0x1460] sm:$0xff]
        %v978 = vld [vmem:[%s249 + $0x1468] sm:$0xff]
        %v979 = vld [vmem:[%s249 + $0x1470] sm:$0xff]
        %v980 = vld [vmem:[%s249 + $0x1478] sm:$0xff]
        %v981 = vld [vmem:[%s249 + $0x1480] sm:$0xff]
        %v982 = vld [vmem:[%s249 + $0x1488] sm:$0xff]
        %v983 = vld [vmem:[%s249 + $0x1490] sm:$0xff]
        %v984 = vld [vmem:[%s249 + $0x1498] sm:$0xff]
        %v985 = vld [vmem:[%s249 + $0x14a0] sm:$0xff]
        %v986 = vld [vmem:[%s249 + $0x14a8] sm:$0xff]
        %v987 = vld [vmem:[%s249 + $0x14b0] sm:$0xff]
        %v988 = vld [vmem:[%s249 + $0x14b8] sm:$0xff]
        %v989 = vld [vmem:[%s249 + $0x14c0] sm:$0xff]
        %v990 = vld [vmem:[%s249 + $0x14c8] sm:$0xff]
        %v991 = vld [vmem:[%s249 + $0x14d0] sm:$0xff]
        %v992 = vld [vmem:[%s249 + $0x14d8] sm:$0xff]
        %v993 = vld [vmem:[%s249 + $0x14e0] sm:$0xff]
        %v994 = vld [vmem:[%s249 + $0x14e8] sm:$0xff]
        %v995 = vld [vmem:[%s249 + $0x14f0] sm:$0xff]
        %v996 = vld [vmem:[%s249 + $0x14f8] sm:$0xff]
        %v997 = vld [vmem:[%s249 + $0x1500] sm:$0xff]
        %v998 = vld [vmem:[%s249 + $0x1508] sm:$0xff]
        %v999 = vld [vmem:[%s249 + $0x1510] sm:$0xff]
        %v1000 = vld [vmem:[%s249 + $0x1518] sm:$0xff]
        %v1001 = vld [vmem:[%s249 + $0x1520] sm:$0xff]
        %v1002 = vld [vmem:[%s249 + $0x1528] sm:$0xff]
        %v1003 = vld [vmem:[%s249 + $0x1530] sm:$0xff]
        %v1004 = vld [vmem:[%s249 + $0x1538] sm:$0xff]
        %v1005 = vld [vmem:[%s249 + $0x1540] sm:$0xff]
        %v1006 = vld [vmem:[%s249 + $0x1548] sm:$0xff]
        %v1007 = vld [vmem:[%s249 + $0x1550] sm:$0xff]
        %v1008 = vld [vmem:[%s249 + $0x1558] sm:$0xff]
        %v1009 = vld [vmem:[%s249 + $0x1560] sm:$0xff]
        %v1010 = vld [vmem:[%s249 + $0x1568] sm:$0xff]
        %v1011 = vld [vmem:[%s249 + $0x1570] sm:$0xff]
        %v1012 = vld [vmem:[%s249 + $0x1578] sm:$0xff]
        %v1013 = vld [vmem:[%s249 + $0x1580] sm:$0xff]
        %v1014 = vld [vmem:[%s249 + $0x1588] sm:$0xff]
        %v1015 = vld [vmem:[%s249 + $0x1590] sm:$0xff]
        %v1016 = vld [vmem:[%s249 + $0x1598] sm:$0xff]
        %v1017 = vld [vmem:[%s249 + $0x15a0] sm:$0xff]
        %v1018 = vld [vmem:[%s249 + $0x15a8] sm:$0xff]
        %v1019 = vld [vmem:[%s249 + $0x15b0] sm:$0xff]
        %v1020 = vld [vmem:[%s249 + $0x15b8] sm:$0xff]
        %v1021 = vld [vmem:[%s249 + $0x15c0] sm:$0xff]
        %v1022 = vld [vmem:[%s249 + $0x15c8] sm:$0xff]
        %v1023 = vld [vmem:[%s249 + $0x15d0] sm:$0xff]
        %v1024 = vld [vmem:[%s249 + $0x15d8] sm:$0xff]
        %v1025 = vld [vmem:[%s249 + $0x15e0] sm:$0xff]
        %v1026 = vld [vmem:[%s249 + $0x15e8] sm:$0xff]
        %v1027 = vld [vmem:[%s249 + $0x15f0] sm:$0xff]
        %v1028 = vld [vmem:[%s249 + $0x15f8] sm:$0xff]
        %v1029 = vld [vmem:[%s249 + $0x1600] sm:$0xff]
        %v1030 = vld [vmem:[%s249 + $0x1608] sm:$0xff]
        %v1031 = vld [vmem:[%s249 + $0x1610] sm:$0xff]
        %v1032 = vld [vmem:[%s249 + $0x1618] sm:$0xff]
        %v1033 = vld [vmem:[%s249 + $0x1620] sm:$0xff]
        %v1034 = vld [vmem:[%s249 + $0x1628] sm:$0xff]
        %v1035 = vld [vmem:[%s249 + $0x1630] sm:$0xff]
        %v1036 = vld [vmem:[%s249 + $0x1638] sm:$0xff]
        %v1037 = vld [vmem:[%s249 + $0x1640] sm:$0xff]
        %v1038 = vld [vmem:[%s249 + $0x1648] sm:$0xff]
        %v1039 = vld [vmem:[%s249 + $0x1650] sm:$0xff]
        %v1040 = vld [vmem:[%s249 + $0x1658] sm:$0xff]
        %v1041 = vld [vmem:[%s249 + $0x1660] sm:$0xff]
        %v1042 = vld [vmem:[%s249 + $0x1668] sm:$0xff]
        %v1043 = vld [vmem:[%s249 + $0x1670] sm:$0xff]
        %v1044 = vld [vmem:[%s249 + $0x1678] sm:$0xff]
        %v1045 = vld [vmem:[%s249 + $0x1680] sm:$0xff]
        %v1046 = vld [vmem:[%s249 + $0x1688] sm:$0xff]
        %v1047 = vld [vmem:[%s249 + $0x1690] sm:$0xff]
        %v1048 = vld [vmem:[%s249 + $0x1698] sm:$0xff]
        %v1049 = vld [vmem:[%s249 + $0x16a0] sm:$0xff]
        %v1050 = vld [vmem:[%s249 + $0x16a8] sm:$0xff]
        %v1051 = vld [vmem:[%s249 + $0x16b0] sm:$0xff]
        %v1052 = vld [vmem:[%s249 + $0x16b8] sm:$0xff]
        %v1053 = vld [vmem:[%s249 + $0x16c0] sm:$0xff]
        %v1054 = vld [vmem:[%s249 + $0x16c8] sm:$0xff]
        %v1055 = vld [vmem:[%s249 + $0x16d0] sm:$0xff]
        %v1056 = vld [vmem:[%s249 + $0x16d8] sm:$0xff]
        %v1057 = vld [vmem:[%s249 + $0x16e0] sm:$0xff]
        %v1058 = vld [vmem:[%s249 + $0x16e8] sm:$0xff]
        %v1059 = vld [vmem:[%s249 + $0x16f0] sm:$0xff]
        %v1060 = vld [vmem:[%s249 + $0x16f8] sm:$0xff]
        %v1061 = vld [vmem:[%s249 + $0x1700] sm:$0xff]
        %v1062 = vld [vmem:[%s249 + $0x1708] sm:$0xff]
        %v1063 = vld [vmem:[%s249 + $0x1710] sm:$0xff]
        %v1064 = vld [vmem:[%s249 + $0x1718] sm:$0xff]
        %v1065 = vld [vmem:[%s249 + $0x1720] sm:$0xff]
        %v1066 = vld [vmem:[%s249 + $0x1728] sm:$0xff]
        %v1067 = vld [vmem:[%s249 + $0x1730] sm:$0xff]
        %v1068 = vld [vmem:[%s249 + $0x1738] sm:$0xff]
        %v1069 = vld [vmem:[%s249 + $0x1740] sm:$0xff]
        %v1070 = vld [vmem:[%s249 + $0x1748] sm:$0xff]
        %v1071 = vld [vmem:[%s249 + $0x1750] sm:$0xff]
        %v1072 = vld [vmem:[%s249 + $0x1758] sm:$0xff]
        %v1073 = vld [vmem:[%s249 + $0x1760] sm:$0xff]
        %v1074 = vld [vmem:[%s249 + $0x1768] sm:$0xff]
        %v1075 = vld [vmem:[%s249 + $0x1770] sm:$0xff]
        %v1076 = vld [vmem:[%s249 + $0x1778] sm:$0xff]
        %v1077 = vld [vmem:[%s249 + $0x1780] sm:$0xff]
        %v1078 = vld [vmem:[%s249 + $0x1788] sm:$0xff]
        %v1079 = vld [vmem:[%s249 + $0x1790] sm:$0xff]
        %v1080 = vld [vmem:[%s249 + $0x1798] sm:$0xff]
        %v1081 = vld [vmem:[%s249 + $0x17a0] sm:$0xff]
        %v1082 = vld [vmem:[%s249 + $0x17a8] sm:$0xff]
        %v1083 = vld [vmem:[%s249 + $0x17b0] sm:$0xff]
        %v1084 = vld [vmem:[%s249 + $0x17b8] sm:$0xff]
        %v1085 = vld [vmem:[%s249 + $0x17c0] sm:$0xff]
        %v1086 = vld [vmem:[%s249 + $0x17c8] sm:$0xff]
        %v1087 = vld [vmem:[%s249 + $0x17d0] sm:$0xff]
        %v1088 = vld [vmem:[%s249 + $0x17d8] sm:$0xff]
        %v1089 = vld [vmem:[%s249 + $0x17e0] sm:$0xff]
        %v1090 = vld [vmem:[%s249 + $0x17e8] sm:$0xff]
        %v1091 = vld [vmem:[%s249 + $0x17f0] sm:$0xff]
        %v1092 = vld [vmem:[%s249 + $0x17f8] sm:$0xff]
        %v1093 = vld [vmem:[%s249 + $0x1800] sm:$0xff]
        %v1094 = vld [vmem:[%s249 + $0x1808] sm:$0xff]
        %v1095 = vld [vmem:[%s249 + $0x1810] sm:$0xff]
        %v1096 = vld [vmem:[%s249 + $0x1818] sm:$0xff]
        %v1097 = vld [vmem:[%s249 + $0x1820] sm:$0xff]
        %v1098 = vld [vmem:[%s249 + $0x1828] sm:$0xff]
        %v1099 = vld [vmem:[%s249 + $0x1830] sm:$0xff]
        %v1100 = vld [vmem:[%s249 + $0x1838] sm:$0xff]
        %v1101 = vld [vmem:[%s249 + $0x1840] sm:$0xff]
        %v1102 = vld [vmem:[%s249 + $0x1848] sm:$0xff]
        %v1103 = vld [vmem:[%s249 + $0x1850] sm:$0xff]
        %v1104 = vld [vmem:[%s249 + $0x1858] sm:$0xff]
        %v1105 = vld [vmem:[%s249 + $0x1860] sm:$0xff]
        %v1106 = vld [vmem:[%s249 + $0x1868] sm:$0xff]
        %v1107 = vld [vmem:[%s249 + $0x1870] sm:$0xff]
        %v1108 = vld [vmem:[%s249 + $0x1878] sm:$0xff]
        %v1109 = vld [vmem:[%s249 + $0x1880] sm:$0xff]
        %v1110 = vld [vmem:[%s249 + $0x1888] sm:$0xff]
        %v1111 = vld [vmem:[%s249 + $0x1890] sm:$0xff]
        %v1112 = vld [vmem:[%s249 + $0x1898] sm:$0xff]
        %v1113 = vld [vmem:[%s249 + $0x18a0] sm:$0xff]
        %v1114 = vld [vmem:[%s249 + $0x18a8] sm:$0xff]
        %v1115 = vld [vmem:[%s249 + $0x18b0] sm:$0xff]
        %v1116 = vld [vmem:[%s249 + $0x18b8] sm:$0xff]
        %v1117 = vld [vmem:[%s249 + $0x18c0] sm:$0xff]
        %v1118 = vld [vmem:[%s249 + $0x18c8] sm:$0xff]
        %v1119 = vld [vmem:[%s249 + $0x18d0] sm:$0xff]
        %v1120 = vld [vmem:[%s249 + $0x18d8] sm:$0xff]
        %v1121 = vld [vmem:[%s249 + $0x18e0] sm:$0xff]
        %v1122 = vld [vmem:[%s249 + $0x18e8] sm:$0xff]
        %v1123 = vld [vmem:[%s249 + $0x18f0] sm:$0xff]
        %v1124 = vld [vmem:[%s249 + $0x18f8] sm:$0xff]
        %v1125 = vld [vmem:[%s249 + $0x1900] sm:$0xff]
        %v1126 = vld [vmem:[%s249 + $0x1908] sm:$0xff]
        %v1127 = vld [vmem:[%s249 + $0x1910] sm:$0xff]
        %v1128 = vld [vmem:[%s249 + $0x1918] sm:$0xff]
        %v1129 = vld [vmem:[%s249 + $0x1920] sm:$0xff]
        %v1130 = vld [vmem:[%s249 + $0x1928] sm:$0xff]
        %v1131 = vld [vmem:[%s249 + $0x1930] sm:$0xff]
        %v1132 = vld [vmem:[%s249 + $0x1938] sm:$0xff]
        %v1133 = vld [vmem:[%s249 + $0x1940] sm:$0xff]
        %v1134 = vld [vmem:[%s249 + $0x1948] sm:$0xff]
        %v1135 = vld [vmem:[%s249 + $0x1950] sm:$0xff]
        %v1136 = vld [vmem:[%s249 + $0x1958] sm:$0xff]
        %v1137 = vld [vmem:[%s249 + $0x1960] sm:$0xff]
        %v1138 = vld [vmem:[%s249 + $0x1968] sm:$0xff]
        %v1139 = vld [vmem:[%s249 + $0x1970] sm:$0xff]
        %v1140 = vld [vmem:[%s249 + $0x1978] sm:$0xff]
        %v1141 = vld [vmem:[%s249 + $0x1980] sm:$0xff]
        %v1142 = vld [vmem:[%s249 + $0x1988] sm:$0xff]
        %v1143 = vld [vmem:[%s249 + $0x1990] sm:$0xff]
        %v1144 = vld [vmem:[%s249 + $0x1998] sm:$0xff]
        %v1145 = vld [vmem:[%s249 + $0x19a0] sm:$0xff]
        %v1146 = vld [vmem:[%s249 + $0x19a8] sm:$0xff]
        %v1147 = vld [vmem:[%s249 + $0x19b0] sm:$0xff]
        %v1148 = vld [vmem:[%s249 + $0x19b8] sm:$0xff]
        %v1149 = vld [vmem:[%s249 + $0x19c0] sm:$0xff]
        %v1150 = vld [vmem:[%s249 + $0x19c8] sm:$0xff]
        %v1151 = vld [vmem:[%s249 + $0x19d0] sm:$0xff]
        %v1152 = vld [vmem:[%s249 + $0x19d8] sm:$0xff]
        %v1153 = vld [vmem:[%s249 + $0x19e0] sm:$0xff]
        %v1154 = vld [vmem:[%s249 + $0x19e8] sm:$0xff]
        %v1155 = vld [vmem:[%s249 + $0x19f0] sm:$0xff]
        %v1156 = vld [vmem:[%s249 + $0x19f8] sm:$0xff]
        %v1157 = vld [vmem:[%s249 + $0x1a00] sm:$0xff]
        %v1158 = vld [vmem:[%s249 + $0x1a08] sm:$0xff]
        %v1159 = vld [vmem:[%s249 + $0x1a10] sm:$0xff]
        %v1160 = vld [vmem:[%s249 + $0x1a18] sm:$0xff]
        %v1161 = vld [vmem:[%s249 + $0x1a20] sm:$0xff]
        %v1162 = vld [vmem:[%s249 + $0x1a28] sm:$0xff]
        %v1163 = vld [vmem:[%s249 + $0x1a30] sm:$0xff]
        %v1164 = vld [vmem:[%s249 + $0x1a38] sm:$0xff]
        %v1165 = vld [vmem:[%s249 + $0x1a40] sm:$0xff]
        %v1166 = vld [vmem:[%s249 + $0x1a48] sm:$0xff]
        %v1167 = vld [vmem:[%s249 + $0x1a50] sm:$0xff]
        %v1168 = vld [vmem:[%s249 + $0x1a58] sm:$0xff]
        %v1169 = vld [vmem:[%s249 + $0x1a60] sm:$0xff]
        %v1170 = vld [vmem:[%s249 + $0x1a68] sm:$0xff]
        %v1171 = vld [vmem:[%s249 + $0x1a70] sm:$0xff]
        %v1172 = vld [vmem:[%s249 + $0x1a78] sm:$0xff]
        %v1173 = vld [vmem:[%s249 + $0x1a80] sm:$0xff]
        %v1174 = vld [vmem:[%s249 + $0x1a88] sm:$0xff]
        %v1175 = vld [vmem:[%s249 + $0x1a90] sm:$0xff]
        %v1176 = vld [vmem:[%s249 + $0x1a98] sm:$0xff]
        %v1177 = vld [vmem:[%s249 + $0x1aa0] sm:$0xff]
        %v1178 = vld [vmem:[%s249 + $0x1aa8] sm:$0xff]
        %v1179 = vld [vmem:[%s249 + $0x1ab0] sm:$0xff]
        %v1180 = vld [vmem:[%s249 + $0x1ab8] sm:$0xff]
        %v1181 = vld [vmem:[%s249 + $0x1ac0] sm:$0xff]
        %v1182 = vld [vmem:[%s249 + $0x1ac8] sm:$0xff]
        %v1183 = vld [vmem:[%s249 + $0x1ad0] sm:$0xff]
        %v1184 = vld [vmem:[%s249 + $0x1ad8] sm:$0xff]
        %v1185 = vld [vmem:[%s249 + $0x1ae0] sm:$0xff]
        %v1186 = vld [vmem:[%s249 + $0x1ae8] sm:$0xff]
        %v1187 = vld [vmem:[%s249 + $0x1af0] sm:$0xff]
        %v1188 = vld [vmem:[%s249 + $0x1af8] sm:$0xff]
        %v1189 = vld [vmem:[%s249 + $0x1b00] sm:$0xff]
        %v1190 = vld [vmem:[%s249 + $0x1b08] sm:$0xff]
        %v1191 = vld [vmem:[%s249 + $0x1b10] sm:$0xff]
        %v1192 = vld [vmem:[%s249 + $0x1b18] sm:$0xff]
        %v1193 = vld [vmem:[%s249 + $0x1b20] sm:$0xff]
        %v1194 = vld [vmem:[%s249 + $0x1b28] sm:$0xff]
        %v1195 = vld [vmem:[%s249 + $0x1b30] sm:$0xff]
        %v1196 = vld [vmem:[%s249 + $0x1b38] sm:$0xff]
        %v1197 = vld [vmem:[%s249 + $0x1b40] sm:$0xff]
        %v1198 = vld [vmem:[%s249 + $0x1b48] sm:$0xff]
        %v1199 = vld [vmem:[%s249 + $0x1b50] sm:$0xff]
        %v1200 = vld [vmem:[%s249 + $0x1b58] sm:$0xff]
        %v1201 = vld [vmem:[%s249 + $0x1b60] sm:$0xff]
        %v1202 = vld [vmem:[%s249 + $0x1b68] sm:$0xff]
        %v1203 = vld [vmem:[%s249 + $0x1b70] sm:$0xff]
        %v1204 = vld [vmem:[%s249 + $0x1b78] sm:$0xff]
        %v1205 = vld [vmem:[%s249 + $0x1b80] sm:$0xff]
        %v1206 = vld [vmem:[%s249 + $0x1b88] sm:$0xff]
        %v1207 = vld [vmem:[%s249 + $0x1b90] sm:$0xff]
        %v1208 = vld [vmem:[%s249 + $0x1b98] sm:$0xff]
        %v1209 = vld [vmem:[%s249 + $0x1ba0] sm:$0xff]
        %v1210 = vld [vmem:[%s249 + $0x1ba8] sm:$0xff]
        %v1211 = vld [vmem:[%s249 + $0x1bb0] sm:$0xff]
        %v1212 = vld [vmem:[%s249 + $0x1bb8] sm:$0xff]
        %v1213 = vld [vmem:[%s249 + $0x1bc0] sm:$0xff]
        %v1214 = vld [vmem:[%s249 + $0x1bc8] sm:$0xff]
        %v1215 = vld [vmem:[%s249 + $0x1bd0] sm:$0xff]
        %v1216 = vld [vmem:[%s249 + $0x1bd8] sm:$0xff]
        %v1217 = vld [vmem:[%s249 + $0x1be0] sm:$0xff]
        %v1218 = vld [vmem:[%s249 + $0x1be8] sm:$0xff]
        %v1219 = vld [vmem:[%s249 + $0x1bf0] sm:$0xff]
        %v1220 = vld [vmem:[%s249 + $0x1bf8] sm:$0xff]
        %v1221 = vld [vmem:[%s249 + $0x1c00] sm:$0xff]
        %v1222 = vld [vmem:[%s249 + $0x1c08] sm:$0xff]
        %v1223 = vld [vmem:[%s249 + $0x1c10] sm:$0xff]
        %v1224 = vld [vmem:[%s249 + $0x1c18] sm:$0xff]
        %v1225 = vld [vmem:[%s249 + $0x1c20] sm:$0xff]
        %v1226 = vld [vmem:[%s249 + $0x1c28] sm:$0xff]
        %v1227 = vld [vmem:[%s249 + $0x1c30] sm:$0xff]
        %v1228 = vld [vmem:[%s249 + $0x1c38] sm:$0xff]
        %v1229 = vld [vmem:[%s249 + $0x1c40] sm:$0xff]
        %v1230 = vld [vmem:[%s249 + $0x1c48] sm:$0xff]
        %v1231 = vld [vmem:[%s249 + $0x1c50] sm:$0xff]
        %v1232 = vld [vmem:[%s249 + $0x1c58] sm:$0xff]
        %v1233 = vld [vmem:[%s249 + $0x1c60] sm:$0xff]
        %v1234 = vld [vmem:[%s249 + $0x1c68] sm:$0xff]
        %v1235 = vld [vmem:[%s249 + $0x1c70] sm:$0xff]
        %v1236 = vld [vmem:[%s249 + $0x1c78] sm:$0xff]
        %v1237 = vld [vmem:[%s249 + $0x1c80] sm:$0xff]
        %v1238 = vld [vmem:[%s249 + $0x1c88] sm:$0xff]
        %v1239 = vld [vmem:[%s249 + $0x1c90] sm:$0xff]
        %v1240 = vld [vmem:[%s249 + $0x1c98] sm:$0xff]
        %v1241 = vld [vmem:[%s249 + $0x1ca0] sm:$0xff]
        %v1242 = vld [vmem:[%s249 + $0x1ca8] sm:$0xff]
        %v1243 = vld [vmem:[%s249 + $0x1cb0] sm:$0xff]
        %v1244 = vld [vmem:[%s249 + $0x1cb8] sm:$0xff]
        %v1245 = vld [vmem:[%s249 + $0x1cc0] sm:$0xff]
        %v1246 = vld [vmem:[%s249 + $0x1cc8] sm:$0xff]
        %v1247 = vld [vmem:[%s249 + $0x1cd0] sm:$0xff]
        %v1248 = vld [vmem:[%s249 + $0x1cd8] sm:$0xff]
        %v1249 = vld [vmem:[%s249 + $0x1ce0] sm:$0xff]
        %v1250 = vld [vmem:[%s249 + $0x1ce8] sm:$0xff]
        %v1251 = vld [vmem:[%s249 + $0x1cf0] sm:$0xff]
        %v1252 = vld [vmem:[%s249 + $0x1cf8] sm:$0xff]
        %v1253 = vld [vmem:[%s249 + $0x1d00] sm:$0xff]
        %v1254 = vld [vmem:[%s249 + $0x1d08] sm:$0xff]
        %v1255 = vld [vmem:[%s249 + $0x1d10] sm:$0xff]
        %v1256 = vld [vmem:[%s249 + $0x1d18] sm:$0xff]
        %v1257 = vld [vmem:[%s249 + $0x1d20] sm:$0xff]
        %v1258 = vld [vmem:[%s249 + $0x1d28] sm:$0xff]
        %v1259 = vld [vmem:[%s249 + $0x1d30] sm:$0xff]
        %v1260 = vld [vmem:[%s249 + $0x1d38] sm:$0xff]
        %v1261 = vld [vmem:[%s249 + $0x1d40] sm:$0xff]
        %v1262 = vld [vmem:[%s249 + $0x1d48] sm:$0xff]
        %v1263 = vld [vmem:[%s249 + $0x1d50] sm:$0xff]
        %v1264 = vld [vmem:[%s249 + $0x1d58] sm:$0xff]
        %v1265 = vld [vmem:[%s249 + $0x1d60] sm:$0xff]
        %v1266 = vld [vmem:[%s249 + $0x1d68] sm:$0xff]
        %v1267 = vld [vmem:[%s249 + $0x1d70] sm:$0xff]
        %v1268 = vld [vmem:[%s249 + $0x1d78] sm:$0xff]
        %v1269 = vld [vmem:[%s249 + $0x1d80] sm:$0xff]
        %v1270 = vld [vmem:[%s249 + $0x1d88] sm:$0xff]
        %v1271 = vld [vmem:[%s249 + $0x1d90] sm:$0xff]
        %v1272 = vld [vmem:[%s249 + $0x1d98] sm:$0xff]
        %v1273 = vld [vmem:[%s249 + $0x1da0] sm:$0xff]
        %v1274 = vld [vmem:[%s249 + $0x1da8] sm:$0xff]
        %v1275 = vld [vmem:[%s249 + $0x1db0] sm:$0xff]
        %v1276 = vld [vmem:[%s249 + $0x1db8] sm:$0xff]
        %v1277 = vld [vmem:[%s249 + $0x1dc0] sm:$0xff]
        %v1278 = vld [vmem:[%s249 + $0x1dc8] sm:$0xff]
        %v1279 = vld [vmem:[%s249 + $0x1dd0] sm:$0xff]
        %v1280 = vld [vmem:[%s249 + $0x1dd8] sm:$0xff]
        %v1281 = vld [vmem:[%s249 + $0x1de0] sm:$0xff]
        %v1282 = vld [vmem:[%s249 + $0x1de8] sm:$0xff]
        %v1283 = vld [vmem:[%s249 + $0x1df0] sm:$0xff]
        %v1284 = vld [vmem:[%s249 + $0x1df8] sm:$0xff]
        %v1285 = vld [vmem:[%s249 + $0x1e00] sm:$0xff]
        %v1286 = vld [vmem:[%s249 + $0x1e08] sm:$0xff]
        %v1287 = vld [vmem:[%s249 + $0x1e10] sm:$0xff]
        %v1288 = vld [vmem:[%s249 + $0x1e18] sm:$0xff]
        %v1289 = vld [vmem:[%s249 + $0x1e20] sm:$0xff]
        %v1290 = vld [vmem:[%s249 + $0x1e28] sm:$0xff]
        %v1291 = vld [vmem:[%s249 + $0x1e30] sm:$0xff]
        %v1292 = vld [vmem:[%s249 + $0x1e38] sm:$0xff]
        %v1293 = vld [vmem:[%s249 + $0x1e40] sm:$0xff]
        %v1294 = vld [vmem:[%s249 + $0x1e48] sm:$0xff]
        %v1295 = vld [vmem:[%s249 + $0x1e50] sm:$0xff]
        %v1296 = vld [vmem:[%s249 + $0x1e58] sm:$0xff]
        %v1297 = vld [vmem:[%s249 + $0x1e60] sm:$0xff]
        %v1298 = vld [vmem:[%s249 + $0x1e68] sm:$0xff]
        %v1299 = vld [vmem:[%s249 + $0x1e70] sm:$0xff]
        %v1300 = vld [vmem:[%s249 + $0x1e78] sm:$0xff]
        %v1301 = vld [vmem:[%s249 + $0x1e80] sm:$0xff]
        %v1302 = vld [vmem:[%s249 + $0x1e88] sm:$0xff]
        %v1303 = vld [vmem:[%s249 + $0x1e90] sm:$0xff]
        %v1304 = vld [vmem:[%s249 + $0x1e98] sm:$0xff]
        %v1305 = vld [vmem:[%s249 + $0x1ea0] sm:$0xff]
        %v1306 = vld [vmem:[%s249 + $0x1ea8] sm:$0xff]
        %v1307 = vld [vmem:[%s249 + $0x1eb0] sm:$0xff]
        %v1308 = vld [vmem:[%s249 + $0x1eb8] sm:$0xff]
        %v1309 = vld [vmem:[%s249 + $0x1ec0] sm:$0xff]
        %v1310 = vld [vmem:[%s249 + $0x1ec8] sm:$0xff]
        %v1311 = vld [vmem:[%s249 + $0x1ed0] sm:$0xff]
        %v1312 = vld [vmem:[%s249 + $0x1ed8] sm:$0xff]
        %v1313 = vld [vmem:[%s249 + $0x1ee0] sm:$0xff]
        %v1314 = vld [vmem:[%s249 + $0x1ee8] sm:$0xff]
        %v1315 = vld [vmem:[%s249 + $0x1ef0] sm:$0xff]
        %v1316 = vld [vmem:[%s249 + $0x1ef8] sm:$0xff]
        %v1317 = vld [vmem:[%s249 + $0x1f00] sm:$0xff]
        %v1318 = vld [vmem:[%s249 + $0x1f08] sm:$0xff]
        %v1319 = vld [vmem:[%s249 + $0x1f10] sm:$0xff]
        %v1320 = vld [vmem:[%s249 + $0x1f18] sm:$0xff]
        %v1321 = vld [vmem:[%s249 + $0x1f20] sm:$0xff]
        %v1322 = vld [vmem:[%s249 + $0x1f28] sm:$0xff]
        %v1323 = vld [vmem:[%s249 + $0x1f30] sm:$0xff]
        %v1324 = vld [vmem:[%s249 + $0x1f38] sm:$0xff]
        %v1325 = vld [vmem:[%s249 + $0x1f40] sm:$0xff]
        %v1326 = vld [vmem:[%s249 + $0x1f48] sm:$0xff]
        %v1327 = vld [vmem:[%s249 + $0x1f50] sm:$0xff]
        %v1328 = vld [vmem:[%s249 + $0x1f58] sm:$0xff]
        %v1329 = vld [vmem:[%s249 + $0x1f60] sm:$0xff]
        %v1330 = vld [vmem:[%s249 + $0x1f68] sm:$0xff]
        %v1331 = vld [vmem:[%s249 + $0x1f70] sm:$0xff]
        %v1332 = vld [vmem:[%s249 + $0x1f78] sm:$0xff]
        %v1333 = vld [vmem:[%s249 + $0x1f80] sm:$0xff]
        %v1334 = vld [vmem:[%s249 + $0x1f88] sm:$0xff]
        %v1335 = vld [vmem:[%s249 + $0x1f90] sm:$0xff]
        %v1336 = vld [vmem:[%s249 + $0x1f98] sm:$0xff]
        %v1337 = vld [vmem:[%s249 + $0x1fa0] sm:$0xff]
        %v1338 = vld [vmem:[%s249 + $0x1fa8] sm:$0xff]
        %v1339 = vld [vmem:[%s249 + $0x1fb0] sm:$0xff]
        %v1340 = vld [vmem:[%s249 + $0x1fb8] sm:$0xff]
        %v1341 = vld [vmem:[%s249 + $0x1fc0] sm:$0xff]
        %v1342 = vld [vmem:[%s249 + $0x1fc8] sm:$0xff]
        %v1343 = vld [vmem:[%s249 + $0x1fd0] sm:$0xff]
        %v1344 = vld [vmem:[%s249 + $0x1fd8] sm:$0xff]
        %v1345 = vld [vmem:[%s249 + $0x1fe0] sm:$0xff]
        %v1346 = vld [vmem:[%s249 + $0x1fe8] sm:$0xff]
        %v1347 = vld [vmem:[%s249 + $0x1ff0] sm:$0xff]
        %v1348 = vld [vmem:[%s249 + $0x1ff8] sm:$0xff]
        %v1349 = vld [vmem:[%s249 + $0x2000] sm:$0xff]
        %v1350 = vld [vmem:[%s249 + $0x2008] sm:$0xff]
        %v1351 = vld [vmem:[%s249 + $0x2010] sm:$0xff]
        %v1352 = vld [vmem:[%s249 + $0x2018] sm:$0xff]
        %v1353 = vld [vmem:[%s249 + $0x2020] sm:$0xff]
        %v1354 = vld [vmem:[%s249 + $0x2028] sm:$0xff]
        %v1355 = vld [vmem:[%s249 + $0x2030] sm:$0xff]
        %v1356 = vld [vmem:[%s249 + $0x2038] sm:$0xff]
        %v1357 = vld [vmem:[%s249 + $0x2040] sm:$0xff]
        %v1358 = vld [vmem:[%s249 + $0x2048] sm:$0xff]
        %v1359 = vld [vmem:[%s249 + $0x2050] sm:$0xff]
        %v1360 = vld [vmem:[%s249 + $0x2058] sm:$0xff]
        %v1361 = vld [vmem:[%s249 + $0x2060] sm:$0xff]
        %v1362 = vld [vmem:[%s249 + $0x2068] sm:$0xff]
        %v1363 = vld [vmem:[%s249 + $0x2070] sm:$0xff]
        %v1364 = vld [vmem:[%s249 + $0x2078] sm:$0xff]
        %v1365 = vld [vmem:[%s249 + $0x2080] sm:$0xff]
        %v1366 = vld [vmem:[%s249 + $0x2088] sm:$0xff]
        %v1367 = vld [vmem:[%s249 + $0x2090] sm:$0xff]
        %v1368 = vld [vmem:[%s249 + $0x2098] sm:$0xff]
        %v1369 = vld [vmem:[%s249 + $0x20a0] sm:$0xff]
        %v1370 = vld [vmem:[%s249 + $0x20a8] sm:$0xff]
        %v1371 = vld [vmem:[%s249 + $0x20b0] sm:$0xff]
        %v1372 = vld [vmem:[%s249 + $0x20b8] sm:$0xff]
        %v1373 = vld [vmem:[%s249 + $0x20c0] sm:$0xff]
        %v1374 = vld [vmem:[%s249 + $0x20c8] sm:$0xff]
        %v1375 = vld [vmem:[%s249 + $0x20d0] sm:$0xff]
        %v1376 = vld [vmem:[%s249 + $0x20d8] sm:$0xff]
        %v1377 = vld [vmem:[%s249 + $0x20e0] sm:$0xff]
        %v1378 = vld [vmem:[%s249 + $0x20e8] sm:$0xff]
        %v1379 = vld [vmem:[%s249 + $0x20f0] sm:$0xff]
        %v1380 = vld [vmem:[%s249 + $0x20f8] sm:$0xff]
        %v1381 = vld [vmem:[%s249 + $0x2100] sm:$0xff]
        %v1382 = vld [vmem:[%s249 + $0x2108] sm:$0xff]
        %v1383 = vld [vmem:[%s249 + $0x2110] sm:$0xff]
        %v1384 = vld [vmem:[%s249 + $0x2118] sm:$0xff]
        %v1385 = vld [vmem:[%s249 + $0x2120] sm:$0xff]
        %v1386 = vld [vmem:[%s249 + $0x2128] sm:$0xff]
        %v1387 = vld [vmem:[%s249 + $0x2130] sm:$0xff]
        %v1388 = vld [vmem:[%s249 + $0x2138] sm:$0xff]
        %v1389 = vld [vmem:[%s249 + $0x2140] sm:$0xff]
        %v1390 = vld [vmem:[%s249 + $0x2148] sm:$0xff]
        %v1391 = vld [vmem:[%s249 + $0x2150] sm:$0xff]
        %v1392 = vld [vmem:[%s249 + $0x2158] sm:$0xff]
        %v1393 = vld [vmem:[%s249 + $0x2160] sm:$0xff]
        %v1394 = vld [vmem:[%s249 + $0x2168] sm:$0xff]
        %v1395 = vld [vmem:[%s249 + $0x2170] sm:$0xff]
        %v1396 = vld [vmem:[%s249 + $0x2178] sm:$0xff]
        %v1397 = vld [vmem:[%s249 + $0x2180] sm:$0xff]
        %v1398 = vld [vmem:[%s249 + $0x2188] sm:$0xff]
        %v1399 = vld [vmem:[%s249 + $0x2190] sm:$0xff]
        %v1400 = vld [vmem:[%s249 + $0x2198] sm:$0xff]
        %v1401 = vld [vmem:[%s249 + $0x21a0] sm:$0xff]
        %v1402 = vld [vmem:[%s249 + $0x21a8] sm:$0xff]
        %v1403 = vld [vmem:[%s249 + $0x21b0] sm:$0xff]
        %v1404 = vld [vmem:[%s249 + $0x21b8] sm:$0xff]
        %v1405 = vld [vmem:[%s249 + $0x21c0] sm:$0xff]
        %v1406 = vld [vmem:[%s249 + $0x21c8] sm:$0xff]
        %v1407 = vld [vmem:[%s249 + $0x21d0] sm:$0xff]
        %v1408 = vld [vmem:[%s249 + $0x21d8] sm:$0xff]
        %v1409 = vld [vmem:[%s249 + $0x21e0] sm:$0xff]
        %v1410 = vld [vmem:[%s249 + $0x21e8] sm:$0xff]
        %v1411 = vld [vmem:[%s249 + $0x21f0] sm:$0xff]
        %v1412 = vld [vmem:[%s249 + $0x21f8] sm:$0xff]
        %v1413 = vld [vmem:[%s249 + $0x2200] sm:$0xff]
        %v1414 = vld [vmem:[%s249 + $0x2208] sm:$0xff]
        %v1415 = vld [vmem:[%s249 + $0x2210] sm:$0xff]
        %v1416 = vld [vmem:[%s249 + $0x2218] sm:$0xff]
        %v1417 = vld [vmem:[%s249 + $0x2220] sm:$0xff]
        %v1418 = vld [vmem:[%s249 + $0x2228] sm:$0xff]
        %v1419 = vld [vmem:[%s249 + $0x2230] sm:$0xff]
        %v1420 = vld [vmem:[%s249 + $0x2238] sm:$0xff]
        %v1421 = vld [vmem:[%s249 + $0x2240] sm:$0xff]
        %v1422 = vld [vmem:[%s249 + $0x2248] sm:$0xff]
        %v1423 = vld [vmem:[%s249 + $0x2250] sm:$0xff]
        %v1424 = vld [vmem:[%s249 + $0x2258] sm:$0xff]
        %v1425 = vld [vmem:[%s249 + $0x2260] sm:$0xff]
        %v1426 = vld [vmem:[%s249 + $0x2268] sm:$0xff]
        %v1427 = vld [vmem:[%s249 + $0x2270] sm:$0xff]
        %v1428 = vld [vmem:[%s249 + $0x2278] sm:$0xff]
        %v1429 = vld [vmem:[%s249 + $0x2280] sm:$0xff]
        %v1430 = vld [vmem:[%s249 + $0x2288] sm:$0xff]
        %v1431 = vld [vmem:[%s249 + $0x2290] sm:$0xff]
        %v1432 = vld [vmem:[%s249 + $0x2298] sm:$0xff]
        %v1433 = vld [vmem:[%s249 + $0x22a0] sm:$0xff]
        %v1434 = vld [vmem:[%s249 + $0x22a8] sm:$0xff]
        %v1435 = vld [vmem:[%s249 + $0x22b0] sm:$0xff]
        %v1436 = vld [vmem:[%s249 + $0x22b8] sm:$0xff]
        %v1437 = vld [vmem:[%s249 + $0x22c0] sm:$0xff]
        %v1438 = vld [vmem:[%s249 + $0x22c8] sm:$0xff]
        %v1439 = vld [vmem:[%s249 + $0x22d0] sm:$0xff]
        %v1440 = vld [vmem:[%s249 + $0x22d8] sm:$0xff]
        %v1441 = vld [vmem:[%s249 + $0x22e0] sm:$0xff]
        %v1442 = vld [vmem:[%s249 + $0x22e8] sm:$0xff]
        %v1443 = vld [vmem:[%s249 + $0x22f0] sm:$0xff]
        %v1444 = vld [vmem:[%s249 + $0x22f8] sm:$0xff]
        %v1445 = vld [vmem:[%s249 + $0x2300] sm:$0xff]
        %v1446 = vld [vmem:[%s249 + $0x2308] sm:$0xff]
        %v1447 = vld [vmem:[%s249 + $0x2310] sm:$0xff]
        %v1448 = vld [vmem:[%s249 + $0x2318] sm:$0xff]
        %v1449 = vld [vmem:[%s249 + $0x2320] sm:$0xff]
        %v1450 = vld [vmem:[%s249 + $0x2328] sm:$0xff]
        %v1451 = vld [vmem:[%s249 + $0x2330] sm:$0xff]
        %v1452 = vld [vmem:[%s249 + $0x2338] sm:$0xff]
        %v1453 = vld [vmem:[%s249 + $0x2340] sm:$0xff]
        %v1454 = vld [vmem:[%s249 + $0x2348] sm:$0xff]
        %v1455 = vld [vmem:[%s249 + $0x2350] sm:$0xff]
        %v1456 = vld [vmem:[%s249 + $0x2358] sm:$0xff]
        %v1457 = vld [vmem:[%s249 + $0x2360] sm:$0xff]
        %v1458 = vld [vmem:[%s249 + $0x2368] sm:$0xff]
        %v1459 = vld [vmem:[%s249 + $0x2370] sm:$0xff]
        %v1460 = vld [vmem:[%s249 + $0x2378] sm:$0xff]
        %v1461 = vld [vmem:[%s249 + $0x2380] sm:$0xff]
        %v1462 = vld [vmem:[%s249 + $0x2388] sm:$0xff]
        %v1463 = vld [vmem:[%s249 + $0x2390] sm:$0xff]
        %v1464 = vld [vmem:[%s249 + $0x2398] sm:$0xff]
        %v1465 = vld [vmem:[%s249 + $0x23a0] sm:$0xff]
        %v1466 = vld [vmem:[%s249 + $0x23a8] sm:$0xff]
        %v1467 = vld [vmem:[%s249 + $0x23b0] sm:$0xff]
        %v1468 = vld [vmem:[%s249 + $0x23b8] sm:$0xff]
        %v1469 = vld [vmem:[%s249 + $0x23c0] sm:$0xff]
        %v1470 = vld [vmem:[%s249 + $0x23c8] sm:$0xff]
        %v1471 = vld [vmem:[%s249 + $0x23d0] sm:$0xff]
        %v1472 = vld [vmem:[%s249 + $0x23d8] sm:$0xff]
        %v1473 = vld [vmem:[%s249 + $0x23e0] sm:$0xff]
        %v1474 = vld [vmem:[%s249 + $0x23e8] sm:$0xff]
        %v1475 = vld [vmem:[%s249 + $0x23f0] sm:$0xff]
        %v1476 = vld [vmem:[%s249 + $0x23f8] sm:$0xff]
        %v1477 = vld [vmem:[%s249 + $0x2400] sm:$0xff]
        %v1478 = vld [vmem:[%s249 + $0x2408] sm:$0xff]
        %v1479 = vld [vmem:[%s249 + $0x2410] sm:$0xff]
        %v1480 = vld [vmem:[%s249 + $0x2418] sm:$0xff]
        %v1481 = vld [vmem:[%s249 + $0x2420] sm:$0xff]
        %v1482 = vld [vmem:[%s249 + $0x2428] sm:$0xff]
        %v1483 = vld [vmem:[%s249 + $0x2430] sm:$0xff]
        %v1484 = vld [vmem:[%s249 + $0x2438] sm:$0xff]
        %v1485 = vld [vmem:[%s249 + $0x2440] sm:$0xff]
        %v1486 = vld [vmem:[%s249 + $0x2448] sm:$0xff]
        %v1487 = vld [vmem:[%s249 + $0x2450] sm:$0xff]
        %v1488 = vld [vmem:[%s249 + $0x2458] sm:$0xff]
        %v1489 = vld [vmem:[%s249 + $0x2460] sm:$0xff]
        %v1490 = vld [vmem:[%s249 + $0x2468] sm:$0xff]
        %v1491 = vld [vmem:[%s249 + $0x2470] sm:$0xff]
        %v1492 = vld [vmem:[%s249 + $0x2478] sm:$0xff]
        %v1493 = vld [vmem:[%s249 + $0x2480] sm:$0xff]
        %v1494 = vld [vmem:[%s249 + $0x2488] sm:$0xff]
        %v1495 = vld [vmem:[%s249 + $0x2490] sm:$0xff]
        %v1496 = vld [vmem:[%s249 + $0x2498] sm:$0xff]
        %v1497 = vld [vmem:[%s249 + $0x24a0] sm:$0xff]
        %v1498 = vld [vmem:[%s249 + $0x24a8] sm:$0xff]
        %v1499 = vld [vmem:[%s249 + $0x24b0] sm:$0xff]
        %v1500 = vld [vmem:[%s249 + $0x24b8] sm:$0xff]
        %v1501 = vld [vmem:[%s249 + $0x24c0] sm:$0xff]
        %v1502 = vld [vmem:[%s249 + $0x24c8] sm:$0xff]
        %v1503 = vld [vmem:[%s249 + $0x24d0] sm:$0xff]
        %v1504 = vld [vmem:[%s249 + $0x24d8] sm:$0xff]
        %v1505 = vld [vmem:[%s249 + $0x24e0] sm:$0xff]
        %v1506 = vld [vmem:[%s249 + $0x24e8] sm:$0xff]
        %v1507 = vld [vmem:[%s249 + $0x24f0] sm:$0xff]
        %v1508 = vld [vmem:[%s249 + $0x24f8] sm:$0xff]
        %v1509 = vld [vmem:[%s249 + $0x2500] sm:$0xff]
        %v1510 = vld [vmem:[%s249 + $0x2508] sm:$0xff]
        %v1511 = vld [vmem:[%s249 + $0x2510] sm:$0xff]
        %v1512 = vld [vmem:[%s249 + $0x2518] sm:$0xff]
        %v1513 = vld [vmem:[%s249 + $0x2520] sm:$0xff]
        %v1514 = vld [vmem:[%s249 + $0x2528] sm:$0xff]
        %v1515 = vld [vmem:[%s249 + $0x2530] sm:$0xff]
        %v1516 = vld [vmem:[%s249 + $0x2538] sm:$0xff]
        %v1517 = vld [vmem:[%s249 + $0x2540] sm:$0xff]
        %v1518 = vld [vmem:[%s249 + $0x2548] sm:$0xff]
        %v1519 = vld [vmem:[%s249 + $0x2550] sm:$0xff]
        %v1520 = vld [vmem:[%s249 + $0x2558] sm:$0xff]
        %v1521 = vld [vmem:[%s249 + $0x2560] sm:$0xff]
        %v1522 = vld [vmem:[%s249 + $0x2568] sm:$0xff]
        %v1523 = vld [vmem:[%s249 + $0x2570] sm:$0xff]
        %v1524 = vld [vmem:[%s249 + $0x2578] sm:$0xff]
        %v1525 = vld [vmem:[%s249 + $0x2580] sm:$0xff]
        %v1526 = vld [vmem:[%s249 + $0x2588] sm:$0xff]
        %v1527 = vld [vmem:[%s249 + $0x2590] sm:$0xff]
        %v1528 = vld [vmem:[%s249 + $0x2598] sm:$0xff]
        %v1529 = vld [vmem:[%s249 + $0x25a0] sm:$0xff]
        %v1530 = vld [vmem:[%s249 + $0x25a8] sm:$0xff]
        %v1531 = vld [vmem:[%s249 + $0x25b0] sm:$0xff]
        %v1532 = vld [vmem:[%s249 + $0x25b8] sm:$0xff]
        %v1533 = vld [vmem:[%s249 + $0x25c0] sm:$0xff]
        %v1534 = vld [vmem:[%s249 + $0x25c8] sm:$0xff]
        %v1535 = vld [vmem:[%s249 + $0x25d0] sm:$0xff]
        %v1536 = vld [vmem:[%s249 + $0x25d8] sm:$0xff]
        %v1537 = vld [vmem:[%s249 + $0x25e0] sm:$0xff]
        %v1538 = vld [vmem:[%s249 + $0x25e8] sm:$0xff]
        %v1539 = vld [vmem:[%s249 + $0x25f0] sm:$0xff]
        %v1540 = vld [vmem:[%s249 + $0x25f8] sm:$0xff]
        %v1541 = vld [vmem:[%s249 + $0x2600] sm:$0xff]
        %v1542 = vld [vmem:[%s249 + $0x2608] sm:$0xff]
        %v1543 = vld [vmem:[%s249 + $0x2610] sm:$0xff]
        %v1544 = vld [vmem:[%s249 + $0x2618] sm:$0xff]
        %v1545 = vld [vmem:[%s249 + $0x2620] sm:$0xff]
        %v1546 = vld [vmem:[%s249 + $0x2628] sm:$0xff]
        %v1547 = vld [vmem:[%s249 + $0x2630] sm:$0xff]
        %v1548 = vld [vmem:[%s249 + $0x2638] sm:$0xff]
        %v1549 = vld [vmem:[%s249 + $0x2640] sm:$0xff]
        %v1550 = vld [vmem:[%s249 + $0x2648] sm:$0xff]
        %v1551 = vld [vmem:[%s249 + $0x2650] sm:$0xff]
        %v1552 = vld [vmem:[%s249 + $0x2658] sm:$0xff]
        %v1553 = vld [vmem:[%s249 + $0x2660] sm:$0xff]
        %v1554 = vld [vmem:[%s249 + $0x2668] sm:$0xff]
        %v1555 = vld [vmem:[%s249 + $0x2670] sm:$0xff]
        %v1556 = vld [vmem:[%s249 + $0x2678] sm:$0xff]
        %v1557 = vld [vmem:[%s249 + $0x2680] sm:$0xff]
        %v1558 = vld [vmem:[%s249 + $0x2688] sm:$0xff]
        %v1559 = vld [vmem:[%s249 + $0x2690] sm:$0xff]
        %v1560 = vld [vmem:[%s249 + $0x2698] sm:$0xff]
        %v1561 = vld [vmem:[%s249 + $0x26a0] sm:$0xff]
        %v1562 = vld [vmem:[%s249 + $0x26a8] sm:$0xff]
        %v1563 = vld [vmem:[%s249 + $0x26b0] sm:$0xff]
        %v1564 = vld [vmem:[%s249 + $0x26b8] sm:$0xff]
        %v1565 = vld [vmem:[%s249 + $0x26c0] sm:$0xff]
        %v1566 = vld [vmem:[%s249 + $0x26c8] sm:$0xff]
        %v1567 = vld [vmem:[%s249 + $0x26d0] sm:$0xff]
        %v1568 = vld [vmem:[%s249 + $0x26d8] sm:$0xff]
        %v1569 = vld [vmem:[%s249 + $0x26e0] sm:$0xff]
        %v1570 = vld [vmem:[%s249 + $0x26e8] sm:$0xff]
        %v1571 = vld [vmem:[%s249 + $0x26f0] sm:$0xff]
        %v1572 = vld [vmem:[%s249 + $0x26f8] sm:$0xff]
        %v1573 = vld [vmem:[%s249 + $0x2700] sm:$0xff]
        %v1574 = vld [vmem:[%s249 + $0x2708] sm:$0xff]
        %v1575 = vld [vmem:[%s249 + $0x2710] sm:$0xff]
        %v1576 = vld [vmem:[%s249 + $0x2718] sm:$0xff]
        %v1577 = vld [vmem:[%s249 + $0x2720] sm:$0xff]
        %v1578 = vld [vmem:[%s249 + $0x2728] sm:$0xff]
        %v1579 = vld [vmem:[%s249 + $0x2730] sm:$0xff]
        %v1580 = vld [vmem:[%s249 + $0x2738] sm:$0xff]
        %v1581 = vld [vmem:[%s249 + $0x2740] sm:$0xff]
        %v1582 = vld [vmem:[%s249 + $0x2748] sm:$0xff]
        %v1583 = vld [vmem:[%s249 + $0x2750] sm:$0xff]
        %v1584 = vld [vmem:[%s249 + $0x2758] sm:$0xff]
        %v1585 = vld [vmem:[%s249 + $0x2760] sm:$0xff]
        %v1586 = vld [vmem:[%s249 + $0x2768] sm:$0xff]
        %v1587 = vld [vmem:[%s249 + $0x2770] sm:$0xff]
        %v1588 = vld [vmem:[%s249 + $0x2778] sm:$0xff]
        %v1589 = vld [vmem:[%s249 + $0x2780] sm:$0xff]
        %v1590 = vld [vmem:[%s249 + $0x2788] sm:$0xff]
        %v1591 = vld [vmem:[%s249 + $0x2790] sm:$0xff]
        %v1592 = vld [vmem:[%s249 + $0x2798] sm:$0xff]
        %v1593 = vld [vmem:[%s249 + $0x27a0] sm:$0xff]
        %v1594 = vld [vmem:[%s249 + $0x27a8] sm:$0xff]
        %v1595 = vld [vmem:[%s249 + $0x27b0] sm:$0xff]
        %v1596 = vld [vmem:[%s249 + $0x27b8] sm:$0xff]
        %v1597 = vld [vmem:[%s249 + $0x27c0] sm:$0xff]
        %v1598 = vld [vmem:[%s249 + $0x27c8] sm:$0xff]
        %v1599 = vld [vmem:[%s249 + $0x27d0] sm:$0xff]
        %v1600 = vld [vmem:[%s249 + $0x27d8] sm:$0xff]
        %v1601 = vld [vmem:[%s249 + $0x27e0] sm:$0xff]
        %v1602 = vld [vmem:[%s249 + $0x27e8] sm:$0xff]
        %v1603 = vld [vmem:[%s249 + $0x27f0] sm:$0xff]
        %v1604 = vld [vmem:[%s249 + $0x27f8] sm:$0xff]
        %v1605 = vld [vmem:[%s249 + $0x2800] sm:$0xff]
        %v1606 = vld [vmem:[%s249 + $0x2808] sm:$0xff]
        %v1607 = vld [vmem:[%s249 + $0x2810] sm:$0xff]
        %v1608 = vld [vmem:[%s249 + $0x2818] sm:$0xff]
        %v1609 = vld [vmem:[%s249 + $0x2820] sm:$0xff]
        %v1610 = vld [vmem:[%s249 + $0x2828] sm:$0xff]
        %v1611 = vld [vmem:[%s249 + $0x2830] sm:$0xff]
        %v1612 = vld [vmem:[%s249 + $0x2838] sm:$0xff]
        %v1613 = vld [vmem:[%s249 + $0x2840] sm:$0xff]
        %v1614 = vld [vmem:[%s249 + $0x2848] sm:$0xff]
        %v1615 = vld [vmem:[%s249 + $0x2850] sm:$0xff]
        %v1616 = vld [vmem:[%s249 + $0x2858] sm:$0xff]
        %v1617 = vld [vmem:[%s249 + $0x2860] sm:$0xff]
        %v1618 = vld [vmem:[%s249 + $0x2868] sm:$0xff]
        %v1619 = vld [vmem:[%s249 + $0x2870] sm:$0xff]
        %v1620 = vld [vmem:[%s249 + $0x2878] sm:$0xff]
        %v1621 = vld [vmem:[%s249 + $0x2880] sm:$0xff]
        %v1622 = vld [vmem:[%s249 + $0x2888] sm:$0xff]
        %v1623 = vld [vmem:[%s249 + $0x2890] sm:$0xff]
        %v1624 = vld [vmem:[%s249 + $0x2898] sm:$0xff]
        %v1625 = vld [vmem:[%s249 + $0x28a0] sm:$0xff]
        %v1626 = vld [vmem:[%s249 + $0x28a8] sm:$0xff]
        %v1627 = vld [vmem:[%s249 + $0x28b0] sm:$0xff]
        %v1628 = vld [vmem:[%s249 + $0x28b8] sm:$0xff]
        %v1629 = vld [vmem:[%s249 + $0x28c0] sm:$0xff]
        %v1630 = vld [vmem:[%s249 + $0x28c8] sm:$0xff]
        %v1631 = vld [vmem:[%s249 + $0x28d0] sm:$0xff]
        %v1632 = vld [vmem:[%s249 + $0x28d8] sm:$0xff]
        %v1633 = vld [vmem:[%s249 + $0x28e0] sm:$0xff]
        %v1634 = vld [vmem:[%s249 + $0x28e8] sm:$0xff]
        %v1635 = vld [vmem:[%s249 + $0x28f0] sm:$0xff]
        %v1636 = vld [vmem:[%s249 + $0x28f8] sm:$0xff]
        %v1637 = vld [vmem:[%s249 + $0x2900] sm:$0xff]
        %v1638 = vld [vmem:[%s249 + $0x2908] sm:$0xff]
        %v1639 = vld [vmem:[%s249 + $0x2910] sm:$0xff]
        %v1640 = vld [vmem:[%s249 + $0x2918] sm:$0xff]
        %v1641 = vld [vmem:[%s249 + $0x2920] sm:$0xff]
        %v1642 = vld [vmem:[%s249 + $0x2928] sm:$0xff]
        %v1643 = vld [vmem:[%s249 + $0x2930] sm:$0xff]
        %v1644 = vld [vmem:[%s249 + $0x2938] sm:$0xff]
        %v1645 = vld [vmem:[%s249 + $0x2940] sm:$0xff]
        %v1646 = vld [vmem:[%s249 + $0x2948] sm:$0xff]
        %v1647 = vld [vmem:[%s249 + $0x2950] sm:$0xff]
        %v1648 = vld [vmem:[%s249 + $0x2958] sm:$0xff]
        %v1649 = vld [vmem:[%s249 + $0x2960] sm:$0xff]
        %v1650 = vld [vmem:[%s249 + $0x2968] sm:$0xff]
        %v1651 = vld [vmem:[%s249 + $0x2970] sm:$0xff]
        %v1652 = vld [vmem:[%s249 + $0x2978] sm:$0xff]
        %v1653 = vld [vmem:[%s249 + $0x2980] sm:$0xff]
        %v1654 = vld [vmem:[%s249 + $0x2988] sm:$0xff]
        %v1655 = vld [vmem:[%s249 + $0x2990] sm:$0xff]
        %v1656 = vld [vmem:[%s249 + $0x2998] sm:$0xff]
        %v1657 = vld [vmem:[%s249 + $0x29a0] sm:$0xff]
        %v1658 = vld [vmem:[%s249 + $0x29a8] sm:$0xff]
        %v1659 = vld [vmem:[%s249 + $0x29b0] sm:$0xff]
        %v1660 = vld [vmem:[%s249 + $0x29b8] sm:$0xff]
        %v1661 = vld [vmem:[%s249 + $0x29c0] sm:$0xff]
        %v1662 = vld [vmem:[%s249 + $0x29c8] sm:$0xff]
        %v1663 = vld [vmem:[%s249 + $0x29d0] sm:$0xff]
        %v1664 = vld [vmem:[%s249 + $0x29d8] sm:$0xff]
        %v1665 = vld [vmem:[%s249 + $0x29e0] sm:$0xff]
        %v1666 = vld [vmem:[%s249 + $0x29e8] sm:$0xff]
        %v1667 = vld [vmem:[%s249 + $0x29f0] sm:$0xff]
        %v1668 = vld [vmem:[%s249 + $0x29f8] sm:$0xff]
        %v1669 = vld [vmem:[%s249 + $0x2a00] sm:$0xff]
        %v1670 = vld [vmem:[%s249 + $0x2a08] sm:$0xff]
        %v1671 = vld [vmem:[%s249 + $0x2a10] sm:$0xff]
        %v1672 = vld [vmem:[%s249 + $0x2a18] sm:$0xff]
        %v1673 = vld [vmem:[%s249 + $0x2a20] sm:$0xff]
        %v1674 = vld [vmem:[%s249 + $0x2a28] sm:$0xff]
        %v1675 = vld [vmem:[%s249 + $0x2a30] sm:$0xff]
        %v1676 = vld [vmem:[%s249 + $0x2a38] sm:$0xff]
        %v1677 = vld [vmem:[%s249 + $0x2a40] sm:$0xff]
        %v1678 = vld [vmem:[%s249 + $0x2a48] sm:$0xff]
        %v1679 = vld [vmem:[%s249 + $0x2a50] sm:$0xff]
        %v1680 = vld [vmem:[%s249 + $0x2a58] sm:$0xff]
        %v1681 = vld [vmem:[%s249 + $0x2a60] sm:$0xff]
        %v1682 = vld [vmem:[%s249 + $0x2a68] sm:$0xff]
        %v1683 = vld [vmem:[%s249 + $0x2a70] sm:$0xff]
        %v1684 = vld [vmem:[%s249 + $0x2a78] sm:$0xff]
        %v1685 = vld [vmem:[%s249 + $0x2a80] sm:$0xff]
        %v1686 = vld [vmem:[%s249 + $0x2a88] sm:$0xff]
        %v1687 = vld [vmem:[%s249 + $0x2a90] sm:$0xff]
        %v1688 = vld [vmem:[%s249 + $0x2a98] sm:$0xff]
        %v1689 = vld [vmem:[%s249 + $0x2aa0] sm:$0xff]
        %v1690 = vld [vmem:[%s249 + $0x2aa8] sm:$0xff]
        %v1691 = vld [vmem:[%s249 + $0x2ab0] sm:$0xff]
        %v1692 = vld [vmem:[%s249 + $0x2ab8] sm:$0xff]
        %v1693 = vld [vmem:[%s249 + $0x2ac0] sm:$0xff]
        %v1694 = vld [vmem:[%s249 + $0x2ac8] sm:$0xff]
        %v1695 = vld [vmem:[%s249 + $0x2ad0] sm:$0xff]
        %v1696 = vld [vmem:[%s249 + $0x2ad8] sm:$0xff]
        %v1697 = vld [vmem:[%s249 + $0x2ae0] sm:$0xff]
        %v1698 = vld [vmem:[%s249 + $0x2ae8] sm:$0xff]
        %v1699 = vld [vmem:[%s249 + $0x2af0] sm:$0xff]
        %v1700 = vld [vmem:[%s249 + $0x2af8] sm:$0xff]
        %v1701 = vld [vmem:[%s249 + $0x2b00] sm:$0xff]
        %v1702 = vld [vmem:[%s249 + $0x2b08] sm:$0xff]
        %v1703 = vld [vmem:[%s249 + $0x2b10] sm:$0xff]
        %v1704 = vld [vmem:[%s249 + $0x2b18] sm:$0xff]
        %v1705 = vld [vmem:[%s249 + $0x2b20] sm:$0xff]
        %v1706 = vld [vmem:[%s249 + $0x2b28] sm:$0xff]
        %v1707 = vld [vmem:[%s249 + $0x2b30] sm:$0xff]
        %v1708 = vld [vmem:[%s249 + $0x2b38] sm:$0xff]
        %v1709 = vld [vmem:[%s249 + $0x2b40] sm:$0xff]
        %v1710 = vld [vmem:[%s249 + $0x2b48] sm:$0xff]
        %v1711 = vld [vmem:[%s249 + $0x2b50] sm:$0xff]
        %v1712 = vld [vmem:[%s249 + $0x2b58] sm:$0xff]
        %v1713 = vld [vmem:[%s249 + $0x2b60] sm:$0xff]
        %v1714 = vld [vmem:[%s249 + $0x2b68] sm:$0xff]
        %v1715 = vld [vmem:[%s249 + $0x2b70] sm:$0xff]
        %v1716 = vld [vmem:[%s249 + $0x2b78] sm:$0xff]
        %v1717 = vld [vmem:[%s249 + $0x2b80] sm:$0xff]
        %v1718 = vld [vmem:[%s249 + $0x2b88] sm:$0xff]
        %v1719 = vld [vmem:[%s249 + $0x2b90] sm:$0xff]
        %v1720 = vld [vmem:[%s249 + $0x2b98] sm:$0xff]
        %v1721 = vld [vmem:[%s249 + $0x2ba0] sm:$0xff]
        %v1722 = vld [vmem:[%s249 + $0x2ba8] sm:$0xff]
        %v1723 = vld [vmem:[%s249 + $0x2bb0] sm:$0xff]
        %v1724 = vld [vmem:[%s249 + $0x2bb8] sm:$0xff]
        %v1725 = vld [vmem:[%s249 + $0x2bc0] sm:$0xff]
        %v1726 = vld [vmem:[%s249 + $0x2bc8] sm:$0xff]
        %v1727 = vld [vmem:[%s249 + $0x2bd0] sm:$0xff]
        %v1728 = vld [vmem:[%s249 + $0x2bd8] sm:$0xff]
        %v1729 = vld [vmem:[%s249 + $0x2be0] sm:$0xff]
        %v1730 = vld [vmem:[%s249 + $0x2be8] sm:$0xff]
        %v1731 = vld [vmem:[%s249 + $0x2bf0] sm:$0xff]
        %v1732 = vld [vmem:[%s249 + $0x2bf8] sm:$0xff]
        %v1733 = vld [vmem:[%s249 + $0x2c00] sm:$0xff]
        %v1734 = vld [vmem:[%s249 + $0x2c08] sm:$0xff]
        %v1735 = vld [vmem:[%s249 + $0x2c10] sm:$0xff]
        %v1736 = vld [vmem:[%s249 + $0x2c18] sm:$0xff]
        %v1737 = vld [vmem:[%s249 + $0x2c20] sm:$0xff]
        %v1738 = vld [vmem:[%s249 + $0x2c28] sm:$0xff]
        %v1739 = vld [vmem:[%s249 + $0x2c30] sm:$0xff]
        %v1740 = vld [vmem:[%s249 + $0x2c38] sm:$0xff]
        %v1741 = vld [vmem:[%s249 + $0x2c40] sm:$0xff]
        %v1742 = vld [vmem:[%s249 + $0x2c48] sm:$0xff]
        %v1743 = vld [vmem:[%s249 + $0x2c50] sm:$0xff]
        %v1744 = vld [vmem:[%s249 + $0x2c58] sm:$0xff]
        %v1745 = vld [vmem:[%s249 + $0x2c60] sm:$0xff]
        %v1746 = vld [vmem:[%s249 + $0x2c68] sm:$0xff]
        %v1747 = vld [vmem:[%s249 + $0x2c70] sm:$0xff]
        %v1748 = vld [vmem:[%s249 + $0x2c78] sm:$0xff]
        %v1749 = vld [vmem:[%s249 + $0x2c80] sm:$0xff]
        %v1750 = vld [vmem:[%s249 + $0x2c88] sm:$0xff]
        %v1751 = vld [vmem:[%s249 + $0x2c90] sm:$0xff]
        %v1752 = vld [vmem:[%s249 + $0x2c98] sm:$0xff]
        %v1753 = vld [vmem:[%s249 + $0x2ca0] sm:$0xff]
        %v1754 = vld [vmem:[%s249 + $0x2ca8] sm:$0xff]
        %v1755 = vld [vmem:[%s249 + $0x2cb0] sm:$0xff]
        %v1756 = vld [vmem:[%s249 + $0x2cb8] sm:$0xff]
        %v1757 = vld [vmem:[%s249 + $0x2cc0] sm:$0xff]
        %v1758 = vld [vmem:[%s249 + $0x2cc8] sm:$0xff]
        %v1759 = vld [vmem:[%s249 + $0x2cd0] sm:$0xff]
        %v1760 = vld [vmem:[%s249 + $0x2cd8] sm:$0xff]
        %v1761 = vld [vmem:[%s249 + $0x2ce0] sm:$0xff]
        %v1762 = vld [vmem:[%s249 + $0x2ce8] sm:$0xff]
        %v1763 = vld [vmem:[%s249 + $0x2cf0] sm:$0xff]
        %v1764 = vld [vmem:[%s249 + $0x2cf8] sm:$0xff]
        %v1765 = vld [vmem:[%s249 + $0x2d00] sm:$0xff]
        %v1766 = vld [vmem:[%s249 + $0x2d08] sm:$0xff]
        %v1767 = vld [vmem:[%s249 + $0x2d10] sm:$0xff]
        %v1768 = vld [vmem:[%s249 + $0x2d18] sm:$0xff]
        %v1769 = vld [vmem:[%s249 + $0x2d20] sm:$0xff]
        %v1770 = vld [vmem:[%s249 + $0x2d28] sm:$0xff]
        %v1771 = vld [vmem:[%s249 + $0x2d30] sm:$0xff]
        %v1772 = vld [vmem:[%s249 + $0x2d38] sm:$0xff]
        %v1773 = vld [vmem:[%s249 + $0x2d40] sm:$0xff]
        %v1774 = vld [vmem:[%s249 + $0x2d48] sm:$0xff]
        %v1775 = vld [vmem:[%s249 + $0x2d50] sm:$0xff]
        %v1776 = vld [vmem:[%s249 + $0x2d58] sm:$0xff]
        %v1777 = vld [vmem:[%s249 + $0x2d60] sm:$0xff]
        %v1778 = vld [vmem:[%s249 + $0x2d68] sm:$0xff]
        %v1779 = vld [vmem:[%s249 + $0x2d70] sm:$0xff]
        %v1780 = vld [vmem:[%s249 + $0x2d78] sm:$0xff]
        %v1781 = vld [vmem:[%s249 + $0x2d80] sm:$0xff]
        %v1782 = vld [vmem:[%s249 + $0x2d88] sm:$0xff]
        %v1783 = vld [vmem:[%s249 + $0x2d90] sm:$0xff]
        %v1784 = vld [vmem:[%s249 + $0x2d98] sm:$0xff]
        %v1785 = vld [vmem:[%s249 + $0x2da0] sm:$0xff]
        %v1786 = vld [vmem:[%s249 + $0x2da8] sm:$0xff]
        %v1787 = vld [vmem:[%s249 + $0x2db0] sm:$0xff]
        %v1788 = vld [vmem:[%s249 + $0x2db8] sm:$0xff]
        %v1789 = vld [vmem:[%s249 + $0x2dc0] sm:$0xff]
        %v1790 = vld [vmem:[%s249 + $0x2dc8] sm:$0xff]
        %v1791 = vld [vmem:[%s249 + $0x2dd0] sm:$0xff]
        %v1792 = vld [vmem:[%s249 + $0x2dd8] sm:$0xff]
        %v1793 = vld [vmem:[%s249 + $0x2de0] sm:$0xff]
        %v1794 = vld [vmem:[%s249 + $0x2de8] sm:$0xff]
        %v1795 = vld [vmem:[%s249 + $0x2df0] sm:$0xff]
        %v1796 = vld [vmem:[%s249 + $0x2df8] sm:$0xff]
        %v1797 = vld [vmem:[%s249 + $0x2e00] sm:$0xff]
        %v1798 = vld [vmem:[%s249 + $0x2e08] sm:$0xff]
        %v1799 = vld [vmem:[%s249 + $0x2e10] sm:$0xff]
        %v1800 = vld [vmem:[%s249 + $0x2e18] sm:$0xff]
        %v1801 = vld [vmem:[%s249 + $0x2e20] sm:$0xff]
        %v1802 = vld [vmem:[%s249 + $0x2e28] sm:$0xff]
        %v1803 = vld [vmem:[%s249 + $0x2e30] sm:$0xff]
        %v1804 = vld [vmem:[%s249 + $0x2e38] sm:$0xff]
        %v1805 = vld [vmem:[%s249 + $0x2e40] sm:$0xff]
        %v1806 = vld [vmem:[%s249 + $0x2e48] sm:$0xff]
        %v1807 = vld [vmem:[%s249 + $0x2e50] sm:$0xff]
        %v1808 = vld [vmem:[%s249 + $0x2e58] sm:$0xff]
        %v1809 = vld [vmem:[%s249 + $0x2e60] sm:$0xff]
        %v1810 = vld [vmem:[%s249 + $0x2e68] sm:$0xff]
        %v1811 = vld [vmem:[%s249 + $0x2e70] sm:$0xff]
        %v1812 = vld [vmem:[%s249 + $0x2e78] sm:$0xff]
        %v1813 = vld [vmem:[%s249 + $0x2e80] sm:$0xff]
        %v1814 = vld [vmem:[%s249 + $0x2e88] sm:$0xff]
        %v1815 = vld [vmem:[%s249 + $0x2e90] sm:$0xff]
        %v1816 = vld [vmem:[%s249 + $0x2e98] sm:$0xff]
        %v1817 = vld [vmem:[%s249 + $0x2ea0] sm:$0xff]
        %v1818 = vld [vmem:[%s249 + $0x2ea8] sm:$0xff]
        %v1819 = vld [vmem:[%s249 + $0x2eb0] sm:$0xff]
        %v1820 = vld [vmem:[%s249 + $0x2eb8] sm:$0xff]
        %v1821 = vld [vmem:[%s249 + $0x2ec0] sm:$0xff]
        %v1822 = vld [vmem:[%s249 + $0x2ec8] sm:$0xff]
        %v1823 = vld [vmem:[%s249 + $0x2ed0] sm:$0xff]
        %v1824 = vld [vmem:[%s249 + $0x2ed8] sm:$0xff]
        %v1825 = vld [vmem:[%s249 + $0x2ee0] sm:$0xff]
        %v1826 = vld [vmem:[%s249 + $0x2ee8] sm:$0xff]
        %v1827 = vld [vmem:[%s249 + $0x2ef0] sm:$0xff]
        %v1828 = vld [vmem:[%s249 + $0x2ef8] sm:$0xff]
        %v1829 = vld [vmem:[%s249 + $0x2f00] sm:$0xff]
        %v1830 = vld [vmem:[%s249 + $0x2f08] sm:$0xff]
        %v1831 = vld [vmem:[%s249 + $0x2f10] sm:$0xff]
        %v1832 = vld [vmem:[%s249 + $0x2f18] sm:$0xff]
        %v1833 = vld [vmem:[%s249 + $0x2f20] sm:$0xff]
        %v1834 = vld [vmem:[%s249 + $0x2f28] sm:$0xff]
        %v1835 = vld [vmem:[%s249 + $0x2f30] sm:$0xff]
        %v1836 = vld [vmem:[%s249 + $0x2f38] sm:$0xff]
        %v1837 = vld [vmem:[%s249 + $0x2f40] sm:$0xff]
        %v1838 = vld [vmem:[%s249 + $0x2f48] sm:$0xff]
        %v1839 = vld [vmem:[%s249 + $0x2f50] sm:$0xff]
        %v1840 = vld [vmem:[%s249 + $0x2f58] sm:$0xff]
        %v1841 = vld [vmem:[%s249 + $0x2f60] sm:$0xff]
        %v1842 = vld [vmem:[%s249 + $0x2f68] sm:$0xff]
        %v1843 = vld [vmem:[%s249 + $0x2f70] sm:$0xff]
        %v1844 = vld [vmem:[%s249 + $0x2f78] sm:$0xff]
        %v1845 = vld [vmem:[%s249 + $0x2f80] sm:$0xff]
        %v1846 = vld [vmem:[%s249 + $0x2f88] sm:$0xff]
        %v1847 = vld [vmem:[%s249 + $0x2f90] sm:$0xff]
        %v1848 = vld [vmem:[%s249 + $0x2f98] sm:$0xff]
        %v1849 = vld [vmem:[%s249 + $0x2fa0] sm:$0xff]
        %v1850 = vld [vmem:[%s249 + $0x2fa8] sm:$0xff]
        %v1851 = vld [vmem:[%s249 + $0x2fb0] sm:$0xff]
        %v1852 = vld [vmem:[%s249 + $0x2fb8] sm:$0xff]
        %v1853 = vld [vmem:[%s249 + $0x2fc0] sm:$0xff]
        %v1854 = vld [vmem:[%s249 + $0x2fc8] sm:$0xff]
        %v1855 = vld [vmem:[%s249 + $0x2fd0] sm:$0xff]
        %v1856 = vld [vmem:[%s249 + $0x2fd8] sm:$0xff]
        %v1857 = vld [vmem:[%s249 + $0x2fe0] sm:$0xff]
        %v1858 = vld [vmem:[%s249 + $0x2fe8] sm:$0xff]
        %v1859 = vld [vmem:[%s249 + $0x2ff0] sm:$0xff]
        %v1860 = vld [vmem:[%s249 + $0x2ff8] sm:$0xff]
        %v1864 = vcombine.high %v322, %v322
        %v1866 = vunpack.c.l.s4 1966171168
        %v1867 = vunpack.c.0.s8 %v1866
        %v1868 = vlaneseq
        %v1869 = vshrl.u32 %v1868, 7
        %v1870 = vsub.s32 %v1867, %v1869
        %v1871 = vrot.slane %v322, %v1870
        %v1873 = vunpack.c.l.s4 1966171168
        %v1874 = vunpack.c.0.s8 %v1873
        %v1875 = vlaneseq
        %v1876 = vshrl.u32 %v1875, 7
        %v1877 = vsub.s32 %v1874, %v1876
        %v1878 = vrot.slane %v1864, %v1877
        %v1879 = vcombine.high %v1871, %v1871
        %v1880 = vcombine.high %v1878, %v1878
        %v1882 = vunpack.c.l.s4 1966171168
        %v1883 = vunpack.c.0.s8 %v1882
        %v1884 = vlaneseq
        %v1885 = vshrl.u32 %v1884, 7
        %v1886 = vsub.s32 %v1883, %v1885
        %v1887 = vrot.slane %v1871, %v1886
        %v1889 = vunpack.c.l.s4 1966171168
        %v1890 = vunpack.c.0.s8 %v1889
        %v1891 = vlaneseq
        %v1892 = vshrl.u32 %v1891, 7
        %v1893 = vsub.s32 %v1890, %v1892
        %v1894 = vrot.slane %v1878, %v1893
        %v1896 = vunpack.c.l.s4 1966171168
        %v1897 = vunpack.c.0.s8 %v1896
        %v1898 = vlaneseq
        %v1899 = vshrl.u32 %v1898, 7
        %v1900 = vsub.s32 %v1897, %v1899
        %v1901 = vrot.slane %v1879, %v1900
        %v1903 = vunpack.c.l.s4 1966171168
        %v1904 = vunpack.c.0.s8 %v1903
        %v1905 = vlaneseq
        %v1906 = vshrl.u32 %v1905, 7
        %v1907 = vsub.s32 %v1904, %v1906
        %v1908 = vrot.slane %v1880, %v1907
        %v1909 = vcombine.high %v1887, %v1887
        %v1910 = vcombine.high %v1894, %v1894
        %v1911 = vcombine.high %v1901, %v1901
        %v1912 = vcombine.high %v1908, %v1908
        %v1913 = vcombine.high %v323, %v323
        %v1915 = vunpack.c.l.s4 1966171168
        %v1916 = vunpack.c.0.s8 %v1915
        %v1917 = vlaneseq
        %v1918 = vshrl.u32 %v1917, 7
        %v1919 = vsub.s32 %v1916, %v1918
        %v1920 = vrot.slane %v323, %v1919
        %v1922 = vunpack.c.l.s4 1966171168
        %v1923 = vunpack.c.0.s8 %v1922
        %v1924 = vlaneseq
        %v1925 = vshrl.u32 %v1924, 7
        %v1926 = vsub.s32 %v1923, %v1925
        %v1927 = vrot.slane %v1913, %v1926
        %v1928 = vcombine.high %v1920, %v1920
        %v1929 = vcombine.high %v1927, %v1927
        %v1931 = vunpack.c.l.s4 1966171168
        %v1932 = vunpack.c.0.s8 %v1931
        %v1933 = vlaneseq
        %v1934 = vshrl.u32 %v1933, 7
        %v1935 = vsub.s32 %v1932, %v1934
        %v1936 = vrot.slane %v1920, %v1935
        %v1938 = vunpack.c.l.s4 1966171168
        %v1939 = vunpack.c.0.s8 %v1938
        %v1940 = vlaneseq
        %v1941 = vshrl.u32 %v1940, 7
        %v1942 = vsub.s32 %v1939, %v1941
        %v1943 = vrot.slane %v1927, %v1942
        %v1945 = vunpack.c.l.s4 1966171168
        %v1946 = vunpack.c.0.s8 %v1945
        %v1947 = vlaneseq
        %v1948 = vshrl.u32 %v1947, 7
        %v1949 = vsub.s32 %v1946, %v1948
        %v1950 = vrot.slane %v1928, %v1949
        %v1952 = vunpack.c.l.s4 1966171168
        %v1953 = vunpack.c.0.s8 %v1952
        %v1954 = vlaneseq
        %v1955 = vshrl.u32 %v1954, 7
        %v1956 = vsub.s32 %v1953, %v1955
        %v1957 = vrot.slane %v1929, %v1956
        %v1958 = vcombine.high %v1936, %v1936
        %v1959 = vcombine.high %v1943, %v1943
        %v1960 = vcombine.high %v1950, %v1950
        %v1961 = vcombine.high %v1957, %v1957
        %v1962 = vcombine.high %v324, %v324
        %v1964 = vunpack.c.l.s4 1966171168
        %v1965 = vunpack.c.0.s8 %v1964
        %v1966 = vlaneseq
        %v1967 = vshrl.u32 %v1966, 7
        %v1968 = vsub.s32 %v1965, %v1967
        %v1969 = vrot.slane %v324, %v1968
        %v1971 = vunpack.c.l.s4 1966171168
        %v1972 = vunpack.c.0.s8 %v1971
        %v1973 = vlaneseq
        %v1974 = vshrl.u32 %v1973, 7
        %v1975 = vsub.s32 %v1972, %v1974
        %v1976 = vrot.slane %v1962, %v1975
        %v1977 = vcombine.high %v1969, %v1969
        %v1978 = vcombine.high %v1976, %v1976
        %v1980 = vunpack.c.l.s4 1966171168
        %v1981 = vunpack.c.0.s8 %v1980
        %v1982 = vlaneseq
        %v1983 = vshrl.u32 %v1982, 7
        %v1984 = vsub.s32 %v1981, %v1983
        %v1985 = vrot.slane %v1969, %v1984
        %v1987 = vunpack.c.l.s4 1966171168
        %v1988 = vunpack.c.0.s8 %v1987
        %v1989 = vlaneseq
        %v1990 = vshrl.u32 %v1989, 7
        %v1991 = vsub.s32 %v1988, %v1990
        %v1992 = vrot.slane %v1976, %v1991
        %v1994 = vunpack.c.l.s4 1966171168
        %v1995 = vunpack.c.0.s8 %v1994
        %v1996 = vlaneseq
        %v1997 = vshrl.u32 %v1996, 7
        %v1998 = vsub.s32 %v1995, %v1997
        %v1999 = vrot.slane %v1977, %v1998
        %v2001 = vunpack.c.l.s4 1966171168
        %v2002 = vunpack.c.0.s8 %v2001
        %v2003 = vlaneseq
        %v2004 = vshrl.u32 %v2003, 7
        %v2005 = vsub.s32 %v2002, %v2004
        %v2006 = vrot.slane %v1978, %v2005
        %v2007 = vcombine.high %v1985, %v1985
        %v2008 = vcombine.high %v1992, %v1992
        %v2009 = vcombine.high %v1999, %v1999
        %v2010 = vcombine.high %v2006, %v2006
        %v3571 = vunpack.c.l.b16 %v325
        %v3572 = vunpack.c.h.b16 %v325
        %v3573 = vunpack.c.l.b16 %v326
        %v3574 = vunpack.c.h.b16 %v326
        %v3575 = vunpack.c.l.b16 %v327
        %v3576 = vunpack.c.h.b16 %v327
        %v3577 = vunpack.c.l.b16 %v328
        %v3578 = vunpack.c.h.b16 %v328
        %v3579 = vunpack.c.l.b16 %v329
        %v3580 = vunpack.c.h.b16 %v329
        %v3581 = vunpack.c.l.b16 %v330
        %v3582 = vunpack.c.h.b16 %v330
        %v3583 = vunpack.c.l.b16 %v331
        %v3584 = vunpack.c.h.b16 %v331
        %v3585 = vunpack.c.l.b16 %v332
        %v3586 = vunpack.c.h.b16 %v332
        %v3587 = vunpack.c.l.b16 %v333
        %v3588 = vunpack.c.h.b16 %v333
        %v3589 = vunpack.c.l.b16 %v334
        %v3590 = vunpack.c.h.b16 %v334
        %v3591 = vunpack.c.l.b16 %v335
        %v3592 = vunpack.c.h.b16 %v335
        %v3593 = vunpack.c.l.b16 %v336
        %v3594 = vunpack.c.h.b16 %v336
        %v3595 = vunpack.c.l.b16 %v337
        %v3596 = vunpack.c.h.b16 %v337
        %v3597 = vunpack.c.l.b16 %v338
        %v3598 = vunpack.c.h.b16 %v338
        %v3599 = vunpack.c.l.b16 %v339
        %v3600 = vunpack.c.h.b16 %v339
        %v3601 = vunpack.c.l.b16 %v340
        %v3602 = vunpack.c.h.b16 %v340
        %v3603 = vunpack.c.l.b16 %v341
        %v3604 = vunpack.c.h.b16 %v341
        %v3605 = vunpack.c.l.b16 %v342
        %v3606 = vunpack.c.h.b16 %v342
        %v3607 = vunpack.c.l.b16 %v343
        %v3608 = vunpack.c.h.b16 %v343
        %v3609 = vunpack.c.l.b16 %v344
        %v3610 = vunpack.c.h.b16 %v344
        %v3611 = vunpack.c.l.b16 %v345
        %v3612 = vunpack.c.h.b16 %v345
        %v3613 = vunpack.c.l.b16 %v346
        %v3614 = vunpack.c.h.b16 %v346
        %v3615 = vunpack.c.l.b16 %v347
        %v3616 = vunpack.c.h.b16 %v347
        %v3617 = vunpack.c.l.b16 %v348
        %v3618 = vunpack.c.h.b16 %v348
        %v3619 = vunpack.c.l.b16 %v349
        %v3620 = vunpack.c.h.b16 %v349
        %v3621 = vunpack.c.l.b16 %v350
        %v3622 = vunpack.c.h.b16 %v350
        %v3623 = vunpack.c.l.b16 %v351
        %v3624 = vunpack.c.h.b16 %v351
        %v3625 = vunpack.c.l.b16 %v352
        %v3626 = vunpack.c.h.b16 %v352
        %v3627 = vunpack.c.l.b16 %v353
        %v3628 = vunpack.c.h.b16 %v353
        %v3629 = vunpack.c.l.b16 %v354
        %v3630 = vunpack.c.h.b16 %v354
        %v3631 = vunpack.c.l.b16 %v355
        %v3632 = vunpack.c.h.b16 %v355
        %v3633 = vunpack.c.l.b16 %v356
        %v3634 = vunpack.c.h.b16 %v356
        %v3635 = vunpack.c.l.b16 %v357
        %v3636 = vunpack.c.h.b16 %v357
        %v3637 = vunpack.c.l.b16 %v358
        %v3638 = vunpack.c.h.b16 %v358
        %v3639 = vunpack.c.l.b16 %v359
        %v3640 = vunpack.c.h.b16 %v359
        %v3641 = vunpack.c.l.b16 %v360
        %v3642 = vunpack.c.h.b16 %v360
        %v3643 = vunpack.c.l.b16 %v361
        %v3644 = vunpack.c.h.b16 %v361
        %v3645 = vunpack.c.l.b16 %v362
        %v3646 = vunpack.c.h.b16 %v362
        %v3647 = vunpack.c.l.b16 %v363
        %v3648 = vunpack.c.h.b16 %v363
        %v3649 = vunpack.c.l.b16 %v364
        %v3650 = vunpack.c.h.b16 %v364
        %v3651 = vunpack.c.l.b16 %v365
        %v3652 = vunpack.c.h.b16 %v365
        %v3653 = vunpack.c.l.b16 %v366
        %v3654 = vunpack.c.h.b16 %v366
        %v3655 = vunpack.c.l.b16 %v367
        %v3656 = vunpack.c.h.b16 %v367
        %v3657 = vunpack.c.l.b16 %v368
        %v3658 = vunpack.c.h.b16 %v368
        %v3659 = vunpack.c.l.b16 %v369
        %v3660 = vunpack.c.h.b16 %v369
        %v3661 = vunpack.c.l.b16 %v370
        %v3662 = vunpack.c.h.b16 %v370
        %v3663 = vunpack.c.l.b16 %v371
        %v3664 = vunpack.c.h.b16 %v371
        %v3665 = vunpack.c.l.b16 %v372
        %v3666 = vunpack.c.h.b16 %v372
        %v3667 = vunpack.c.l.b16 %v373
        %v3668 = vunpack.c.h.b16 %v373
        %v3669 = vunpack.c.l.b16 %v374
        %v3670 = vunpack.c.h.b16 %v374
        %v3671 = vunpack.c.l.b16 %v375
        %v3672 = vunpack.c.h.b16 %v375
        %v3673 = vunpack.c.l.b16 %v376
        %v3674 = vunpack.c.h.b16 %v376
        %v3675 = vunpack.c.l.b16 %v377
        %v3676 = vunpack.c.h.b16 %v377
        %v3677 = vunpack.c.l.b16 %v378
        %v3678 = vunpack.c.h.b16 %v378
        %v3679 = vunpack.c.l.b16 %v379
        %v3680 = vunpack.c.h.b16 %v379
        %v3681 = vunpack.c.l.b16 %v380
        %v3682 = vunpack.c.h.b16 %v380
        %v3683 = vunpack.c.l.b16 %v381
        %v3684 = vunpack.c.h.b16 %v381
        %v3685 = vunpack.c.l.b16 %v382
        %v3686 = vunpack.c.h.b16 %v382
        %v3687 = vunpack.c.l.b16 %v383
        %v3688 = vunpack.c.h.b16 %v383
        %v3689 = vunpack.c.l.b16 %v384
        %v3690 = vunpack.c.h.b16 %v384
        %v3691 = vunpack.c.l.b16 %v385
        %v3692 = vunpack.c.h.b16 %v385
        %v3693 = vunpack.c.l.b16 %v386
        %v3694 = vunpack.c.h.b16 %v386
        %v3695 = vunpack.c.l.b16 %v387
        %v3696 = vunpack.c.h.b16 %v387
        %v3697 = vunpack.c.l.b16 %v388
        %v3698 = vunpack.c.h.b16 %v388
        %v3699 = vunpack.c.l.b16 %v389
        %v3700 = vunpack.c.h.b16 %v389
        %v3701 = vunpack.c.l.b16 %v390
        %v3702 = vunpack.c.h.b16 %v390
        %v3703 = vunpack.c.l.b16 %v391
        %v3704 = vunpack.c.h.b16 %v391
        %v3705 = vunpack.c.l.b16 %v392
        %v3706 = vunpack.c.h.b16 %v392
        %v3707 = vunpack.c.l.b16 %v393
        %v3708 = vunpack.c.h.b16 %v393
        %v3709 = vunpack.c.l.b16 %v394
        %v3710 = vunpack.c.h.b16 %v394
        %v3711 = vunpack.c.l.b16 %v395
        %v3712 = vunpack.c.h.b16 %v395
        %v3713 = vunpack.c.l.b16 %v396
        %v3714 = vunpack.c.h.b16 %v396
        %v3715 = vunpack.c.l.b16 %v397
        %v3716 = vunpack.c.h.b16 %v397
        %v3717 = vunpack.c.l.b16 %v398
        %v3718 = vunpack.c.h.b16 %v398
        %v3719 = vunpack.c.l.b16 %v399
        %v3720 = vunpack.c.h.b16 %v399
        %v3721 = vunpack.c.l.b16 %v400
        %v3722 = vunpack.c.h.b16 %v400
        %v3723 = vunpack.c.l.b16 %v401
        %v3724 = vunpack.c.h.b16 %v401
        %v3725 = vunpack.c.l.b16 %v402
        %v3726 = vunpack.c.h.b16 %v402
        %v3727 = vunpack.c.l.b16 %v403
        %v3728 = vunpack.c.h.b16 %v403
        %v3729 = vunpack.c.l.b16 %v404
        %v3730 = vunpack.c.h.b16 %v404
        %v3731 = vunpack.c.l.b16 %v405
        %v3732 = vunpack.c.h.b16 %v405
        %v3733 = vunpack.c.l.b16 %v406
        %v3734 = vunpack.c.h.b16 %v406
        %v3735 = vunpack.c.l.b16 %v407
        %v3736 = vunpack.c.h.b16 %v407
        %v3737 = vunpack.c.l.b16 %v408
        %v3738 = vunpack.c.h.b16 %v408
        %v3739 = vunpack.c.l.b16 %v409
        %v3740 = vunpack.c.h.b16 %v409
        %v3741 = vunpack.c.l.b16 %v410
        %v3742 = vunpack.c.h.b16 %v410
        %v3743 = vunpack.c.l.b16 %v411
        %v3744 = vunpack.c.h.b16 %v411
        %v3745 = vunpack.c.l.b16 %v412
        %v3746 = vunpack.c.h.b16 %v412
        %v3747 = vunpack.c.l.b16 %v413
        %v3748 = vunpack.c.h.b16 %v413
        %v3749 = vunpack.c.l.b16 %v414
        %v3750 = vunpack.c.h.b16 %v414
        %v3751 = vunpack.c.l.b16 %v415
        %v3752 = vunpack.c.h.b16 %v415
        %v3753 = vunpack.c.l.b16 %v416
        %v3754 = vunpack.c.h.b16 %v416
        %v3755 = vunpack.c.l.b16 %v417
        %v3756 = vunpack.c.h.b16 %v417
        %v3757 = vunpack.c.l.b16 %v418
        %v3758 = vunpack.c.h.b16 %v418
        %v3759 = vunpack.c.l.b16 %v419
        %v3760 = vunpack.c.h.b16 %v419
        %v3761 = vunpack.c.l.b16 %v420
        %v3762 = vunpack.c.h.b16 %v420
        %v3763 = vunpack.c.l.b16 %v421
        %v3764 = vunpack.c.h.b16 %v421
        %v3765 = vunpack.c.l.b16 %v422
        %v3766 = vunpack.c.h.b16 %v422
        %v3767 = vunpack.c.l.b16 %v423
        %v3768 = vunpack.c.h.b16 %v423
        %v3769 = vunpack.c.l.b16 %v424
        %v3770 = vunpack.c.h.b16 %v424
        %v3771 = vunpack.c.l.b16 %v425
        %v3772 = vunpack.c.h.b16 %v425
        %v3773 = vunpack.c.l.b16 %v426
        %v3774 = vunpack.c.h.b16 %v426
        %v3775 = vunpack.c.l.b16 %v427
        %v3776 = vunpack.c.h.b16 %v427
        %v3777 = vunpack.c.l.b16 %v428
        %v3778 = vunpack.c.h.b16 %v428
        %v3779 = vunpack.c.l.b16 %v429
        %v3780 = vunpack.c.h.b16 %v429
        %v3781 = vunpack.c.l.b16 %v430
        %v3782 = vunpack.c.h.b16 %v430
        %v3783 = vunpack.c.l.b16 %v431
        %v3784 = vunpack.c.h.b16 %v431
        %v3785 = vunpack.c.l.b16 %v432
        %v3786 = vunpack.c.h.b16 %v432
        %v3787 = vunpack.c.l.b16 %v433
        %v3788 = vunpack.c.h.b16 %v433
        %v3789 = vunpack.c.l.b16 %v434
        %v3790 = vunpack.c.h.b16 %v434
        %v3791 = vunpack.c.l.b16 %v435
        %v3792 = vunpack.c.h.b16 %v435
        %v3793 = vunpack.c.l.b16 %v436
        %v3794 = vunpack.c.h.b16 %v436
        %v3795 = vunpack.c.l.b16 %v437
        %v3796 = vunpack.c.h.b16 %v437
        %v3797 = vunpack.c.l.b16 %v438
        %v3798 = vunpack.c.h.b16 %v438
        %v3799 = vunpack.c.l.b16 %v439
        %v3800 = vunpack.c.h.b16 %v439
        %v3801 = vunpack.c.l.b16 %v440
        %v3802 = vunpack.c.h.b16 %v440
        %v3803 = vunpack.c.l.b16 %v441
        %v3804 = vunpack.c.h.b16 %v441
        %v3805 = vunpack.c.l.b16 %v442
        %v3806 = vunpack.c.h.b16 %v442
        %v3807 = vunpack.c.l.b16 %v443
        %v3808 = vunpack.c.h.b16 %v443
        %v3809 = vunpack.c.l.b16 %v444
        %v3810 = vunpack.c.h.b16 %v444
        %v3811 = vunpack.c.l.b16 %v445
        %v3812 = vunpack.c.h.b16 %v445
        %v3813 = vunpack.c.l.b16 %v446
        %v3814 = vunpack.c.h.b16 %v446
        %v3815 = vunpack.c.l.b16 %v447
        %v3816 = vunpack.c.h.b16 %v447
        %v3817 = vunpack.c.l.b16 %v448
        %v3818 = vunpack.c.h.b16 %v448
        %v3819 = vunpack.c.l.b16 %v449
        %v3820 = vunpack.c.h.b16 %v449
        %v3821 = vunpack.c.l.b16 %v450
        %v3822 = vunpack.c.h.b16 %v450
        %v3823 = vunpack.c.l.b16 %v451
        %v3824 = vunpack.c.h.b16 %v451
        %v3825 = vunpack.c.l.b16 %v452
        %v3826 = vunpack.c.h.b16 %v452
        %v3827 = vunpack.c.l.b16 %v453
        %v3828 = vunpack.c.h.b16 %v453
        %v3829 = vunpack.c.l.b16 %v454
        %v3830 = vunpack.c.h.b16 %v454
        %v3831 = vunpack.c.l.b16 %v455
        %v3832 = vunpack.c.h.b16 %v455
        %v3833 = vunpack.c.l.b16 %v456
        %v3834 = vunpack.c.h.b16 %v456
        %v3835 = vunpack.c.l.b16 %v457
        %v3836 = vunpack.c.h.b16 %v457
        %v3837 = vunpack.c.l.b16 %v458
        %v3838 = vunpack.c.h.b16 %v458
        %v3839 = vunpack.c.l.b16 %v459
        %v3840 = vunpack.c.h.b16 %v459
        %v3841 = vunpack.c.l.b16 %v460
        %v3842 = vunpack.c.h.b16 %v460
        %v3843 = vunpack.c.l.b16 %v461
        %v3844 = vunpack.c.h.b16 %v461
        %v3845 = vunpack.c.l.b16 %v462
        %v3846 = vunpack.c.h.b16 %v462
        %v3847 = vunpack.c.l.b16 %v463
        %v3848 = vunpack.c.h.b16 %v463
        %v3849 = vunpack.c.l.b16 %v464
        %v3850 = vunpack.c.h.b16 %v464
        %v3851 = vunpack.c.l.b16 %v465
        %v3852 = vunpack.c.h.b16 %v465
        %v3853 = vunpack.c.l.b16 %v466
        %v3854 = vunpack.c.h.b16 %v466
        %v3855 = vunpack.c.l.b16 %v467
        %v3856 = vunpack.c.h.b16 %v467
        %v3857 = vunpack.c.l.b16 %v468
        %v3858 = vunpack.c.h.b16 %v468
        %v3859 = vunpack.c.l.b16 %v469
        %v3860 = vunpack.c.h.b16 %v469
        %v3861 = vunpack.c.l.b16 %v470
        %v3862 = vunpack.c.h.b16 %v470
        %v3863 = vunpack.c.l.b16 %v471
        %v3864 = vunpack.c.h.b16 %v471
        %v3865 = vunpack.c.l.b16 %v472
        %v3866 = vunpack.c.h.b16 %v472
        %v3867 = vunpack.c.l.b16 %v473
        %v3868 = vunpack.c.h.b16 %v473
        %v3869 = vunpack.c.l.b16 %v474
        %v3870 = vunpack.c.h.b16 %v474
        %v3871 = vunpack.c.l.b16 %v475
        %v3872 = vunpack.c.h.b16 %v475
        %v3873 = vunpack.c.l.b16 %v476
        %v3874 = vunpack.c.h.b16 %v476
        %v3875 = vunpack.c.l.b16 %v477
        %v3876 = vunpack.c.h.b16 %v477
        %v3877 = vunpack.c.l.b16 %v478
        %v3878 = vunpack.c.h.b16 %v478
        %v3879 = vunpack.c.l.b16 %v479
        %v3880 = vunpack.c.h.b16 %v479
        %v3881 = vunpack.c.l.b16 %v480
        %v3882 = vunpack.c.h.b16 %v480
        %v3883 = vunpack.c.l.b16 %v481
        %v3884 = vunpack.c.h.b16 %v481
        %v3885 = vunpack.c.l.b16 %v482
        %v3886 = vunpack.c.h.b16 %v482
        %v3887 = vunpack.c.l.b16 %v483
        %v3888 = vunpack.c.h.b16 %v483
        %v3889 = vunpack.c.l.b16 %v484
        %v3890 = vunpack.c.h.b16 %v484
        %v3891 = vunpack.c.l.b16 %v485
        %v3892 = vunpack.c.h.b16 %v485
        %v3893 = vunpack.c.l.b16 %v486
        %v3894 = vunpack.c.h.b16 %v486
        %v3895 = vunpack.c.l.b16 %v487
        %v3896 = vunpack.c.h.b16 %v487
        %v3897 = vunpack.c.l.b16 %v488
        %v3898 = vunpack.c.h.b16 %v488
        %v3899 = vunpack.c.l.b16 %v489
        %v3900 = vunpack.c.h.b16 %v489
        %v3901 = vunpack.c.l.b16 %v490
        %v3902 = vunpack.c.h.b16 %v490
        %v3903 = vunpack.c.l.b16 %v491
        %v3904 = vunpack.c.h.b16 %v491
        %v3905 = vunpack.c.l.b16 %v492
        %v3906 = vunpack.c.h.b16 %v492
        %v3907 = vunpack.c.l.b16 %v493
        %v3908 = vunpack.c.h.b16 %v493
        %v3909 = vunpack.c.l.b16 %v494
        %v3910 = vunpack.c.h.b16 %v494
        %v3911 = vunpack.c.l.b16 %v495
        %v3912 = vunpack.c.h.b16 %v495
        %v3913 = vunpack.c.l.b16 %v496
        %v3914 = vunpack.c.h.b16 %v496
        %v3915 = vunpack.c.l.b16 %v497
        %v3916 = vunpack.c.h.b16 %v497
        %v3917 = vunpack.c.l.b16 %v498
        %v3918 = vunpack.c.h.b16 %v498
        %v3919 = vunpack.c.l.b16 %v499
        %v3920 = vunpack.c.h.b16 %v499
        %v3921 = vunpack.c.l.b16 %v500
        %v3922 = vunpack.c.h.b16 %v500
        %v3923 = vunpack.c.l.b16 %v501
        %v3924 = vunpack.c.h.b16 %v501
        %v3925 = vunpack.c.l.b16 %v502
        %v3926 = vunpack.c.h.b16 %v502
        %v3927 = vunpack.c.l.b16 %v503
        %v3928 = vunpack.c.h.b16 %v503
        %v3929 = vunpack.c.l.b16 %v504
        %v3930 = vunpack.c.h.b16 %v504
        %v3931 = vunpack.c.l.b16 %v505
        %v3932 = vunpack.c.h.b16 %v505
        %v3933 = vunpack.c.l.b16 %v506
        %v3934 = vunpack.c.h.b16 %v506
        %v3935 = vunpack.c.l.b16 %v507
        %v3936 = vunpack.c.h.b16 %v507
        %v3937 = vunpack.c.l.b16 %v508
        %v3938 = vunpack.c.h.b16 %v508
        %v3939 = vunpack.c.l.b16 %v509
        %v3940 = vunpack.c.h.b16 %v509
        %v3941 = vunpack.c.l.b16 %v510
        %v3942 = vunpack.c.h.b16 %v510
        %v3943 = vunpack.c.l.b16 %v511
        %v3944 = vunpack.c.h.b16 %v511
        %v3945 = vunpack.c.l.b16 %v512
        %v3946 = vunpack.c.h.b16 %v512
        %v3947 = vunpack.c.l.b16 %v513
        %v3948 = vunpack.c.h.b16 %v513
        %v3949 = vunpack.c.l.b16 %v514
        %v3950 = vunpack.c.h.b16 %v514
        %v3951 = vunpack.c.l.b16 %v515
        %v3952 = vunpack.c.h.b16 %v515
        %v3953 = vunpack.c.l.b16 %v516
        %v3954 = vunpack.c.h.b16 %v516
        %v3955 = vunpack.c.l.b16 %v517
        %v3956 = vunpack.c.h.b16 %v517
        %v3957 = vunpack.c.l.b16 %v518
        %v3958 = vunpack.c.h.b16 %v518
        %v3959 = vunpack.c.l.b16 %v519
        %v3960 = vunpack.c.h.b16 %v519
        %v3961 = vunpack.c.l.b16 %v520
        %v3962 = vunpack.c.h.b16 %v520
        %v3963 = vunpack.c.l.b16 %v521
        %v3964 = vunpack.c.h.b16 %v521
        %v3965 = vunpack.c.l.b16 %v522
        %v3966 = vunpack.c.h.b16 %v522
        %v3967 = vunpack.c.l.b16 %v523
        %v3968 = vunpack.c.h.b16 %v523
        %v3969 = vunpack.c.l.b16 %v524
        %v3970 = vunpack.c.h.b16 %v524
        %v3971 = vunpack.c.l.b16 %v525
        %v3972 = vunpack.c.h.b16 %v525
        %v3973 = vunpack.c.l.b16 %v526
        %v3974 = vunpack.c.h.b16 %v526
        %v3975 = vunpack.c.l.b16 %v527
        %v3976 = vunpack.c.h.b16 %v527
        %v3977 = vunpack.c.l.b16 %v528
        %v3978 = vunpack.c.h.b16 %v528
        %v3979 = vunpack.c.l.b16 %v529
        %v3980 = vunpack.c.h.b16 %v529
        %v3981 = vunpack.c.l.b16 %v530
        %v3982 = vunpack.c.h.b16 %v530
        %v3983 = vunpack.c.l.b16 %v531
        %v3984 = vunpack.c.h.b16 %v531
        %v3985 = vunpack.c.l.b16 %v532
        %v3986 = vunpack.c.h.b16 %v532
        %v3987 = vunpack.c.l.b16 %v533
        %v3988 = vunpack.c.h.b16 %v533
        %v3989 = vunpack.c.l.b16 %v534
        %v3990 = vunpack.c.h.b16 %v534
        %v3991 = vunpack.c.l.b16 %v535
        %v3992 = vunpack.c.h.b16 %v535
        %v3993 = vunpack.c.l.b16 %v536
        %v3994 = vunpack.c.h.b16 %v536
        %v3995 = vunpack.c.l.b16 %v537
        %v3996 = vunpack.c.h.b16 %v537
        %v3997 = vunpack.c.l.b16 %v538
        %v3998 = vunpack.c.h.b16 %v538
        %v3999 = vunpack.c.l.b16 %v539
        %v4000 = vunpack.c.h.b16 %v539
        %v4001 = vunpack.c.l.b16 %v540
        %v4002 = vunpack.c.h.b16 %v540
        %v4003 = vunpack.c.l.b16 %v541
        %v4004 = vunpack.c.h.b16 %v541
        %v4005 = vunpack.c.l.b16 %v542
        %v4006 = vunpack.c.h.b16 %v542
        %v4007 = vunpack.c.l.b16 %v543
        %v4008 = vunpack.c.h.b16 %v543
        %v4009 = vunpack.c.l.b16 %v544
        %v4010 = vunpack.c.h.b16 %v544
        %v4011 = vunpack.c.l.b16 %v545
        %v4012 = vunpack.c.h.b16 %v545
        %v4013 = vunpack.c.l.b16 %v546
        %v4014 = vunpack.c.h.b16 %v546
        %v4015 = vunpack.c.l.b16 %v547
        %v4016 = vunpack.c.h.b16 %v547
        %v4017 = vunpack.c.l.b16 %v548
        %v4018 = vunpack.c.h.b16 %v548
        %v4019 = vunpack.c.l.b16 %v549
        %v4020 = vunpack.c.h.b16 %v549
        %v4021 = vunpack.c.l.b16 %v550
        %v4022 = vunpack.c.h.b16 %v550
        %v4023 = vunpack.c.l.b16 %v551
        %v4024 = vunpack.c.h.b16 %v551
        %v4025 = vunpack.c.l.b16 %v552
        %v4026 = vunpack.c.h.b16 %v552
        %v4027 = vunpack.c.l.b16 %v553
        %v4028 = vunpack.c.h.b16 %v553
        %v4029 = vunpack.c.l.b16 %v554
        %v4030 = vunpack.c.h.b16 %v554
        %v4031 = vunpack.c.l.b16 %v555
        %v4032 = vunpack.c.h.b16 %v555
        %v4033 = vunpack.c.l.b16 %v556
        %v4034 = vunpack.c.h.b16 %v556
        %v4035 = vunpack.c.l.b16 %v557
        %v4036 = vunpack.c.h.b16 %v557
        %v4037 = vunpack.c.l.b16 %v558
        %v4038 = vunpack.c.h.b16 %v558
        %v4039 = vunpack.c.l.b16 %v559
        %v4040 = vunpack.c.h.b16 %v559
        %v4041 = vunpack.c.l.b16 %v560
        %v4042 = vunpack.c.h.b16 %v560
        %v4043 = vunpack.c.l.b16 %v561
        %v4044 = vunpack.c.h.b16 %v561
        %v4045 = vunpack.c.l.b16 %v562
        %v4046 = vunpack.c.h.b16 %v562
        %v4047 = vunpack.c.l.b16 %v563
        %v4048 = vunpack.c.h.b16 %v563
        %v4049 = vunpack.c.l.b16 %v564
        %v4050 = vunpack.c.h.b16 %v564
        %v4051 = vunpack.c.l.b16 %v565
        %v4052 = vunpack.c.h.b16 %v565
        %v4053 = vunpack.c.l.b16 %v566
        %v4054 = vunpack.c.h.b16 %v566
        %v4055 = vunpack.c.l.b16 %v567
        %v4056 = vunpack.c.h.b16 %v567
        %v4057 = vunpack.c.l.b16 %v568
        %v4058 = vunpack.c.h.b16 %v568
        %v4059 = vunpack.c.l.b16 %v569
        %v4060 = vunpack.c.h.b16 %v569
        %v4061 = vunpack.c.l.b16 %v570
        %v4062 = vunpack.c.h.b16 %v570
        %v4063 = vunpack.c.l.b16 %v571
        %v4064 = vunpack.c.h.b16 %v571
        %v4065 = vunpack.c.l.b16 %v572
        %v4066 = vunpack.c.h.b16 %v572
        %v4067 = vunpack.c.l.b16 %v573
        %v4068 = vunpack.c.h.b16 %v573
        %v4069 = vunpack.c.l.b16 %v574
        %v4070 = vunpack.c.h.b16 %v574
        %v4071 = vunpack.c.l.b16 %v575
        %v4072 = vunpack.c.h.b16 %v575
        %v4073 = vunpack.c.l.b16 %v576
        %v4074 = vunpack.c.h.b16 %v576
        %v4075 = vunpack.c.l.b16 %v577
        %v4076 = vunpack.c.h.b16 %v577
        %v4077 = vunpack.c.l.b16 %v578
        %v4078 = vunpack.c.h.b16 %v578
        %v4079 = vunpack.c.l.b16 %v579
        %v4080 = vunpack.c.h.b16 %v579
        %v4081 = vunpack.c.l.b16 %v580
        %v4082 = vunpack.c.h.b16 %v580
        %v4083 = vunpack.c.l.b16 %v581
        %v4084 = vunpack.c.h.b16 %v581
        %v4085 = vunpack.c.l.b16 %v582
        %v4086 = vunpack.c.h.b16 %v582
        %v4087 = vunpack.c.l.b16 %v583
        %v4088 = vunpack.c.h.b16 %v583
        %v4089 = vunpack.c.l.b16 %v584
        %v4090 = vunpack.c.h.b16 %v584
        %v4091 = vunpack.c.l.b16 %v585
        %v4092 = vunpack.c.h.b16 %v585
        %v4093 = vunpack.c.l.b16 %v586
        %v4094 = vunpack.c.h.b16 %v586
        %v4095 = vunpack.c.l.b16 %v587
        %v4096 = vunpack.c.h.b16 %v587
        %v4097 = vunpack.c.l.b16 %v588
        %v4098 = vunpack.c.h.b16 %v588
        %v4099 = vunpack.c.l.b16 %v589
        %v4100 = vunpack.c.h.b16 %v589
        %v4101 = vunpack.c.l.b16 %v590
        %v4102 = vunpack.c.h.b16 %v590
        %v4103 = vunpack.c.l.b16 %v591
        %v4104 = vunpack.c.h.b16 %v591
        %v4105 = vunpack.c.l.b16 %v592
        %v4106 = vunpack.c.h.b16 %v592
        %v4107 = vunpack.c.l.b16 %v593
        %v4108 = vunpack.c.h.b16 %v593
        %v4109 = vunpack.c.l.b16 %v594
        %v4110 = vunpack.c.h.b16 %v594
        %v4111 = vunpack.c.l.b16 %v595
        %v4112 = vunpack.c.h.b16 %v595
        %v4113 = vunpack.c.l.b16 %v596
        %v4114 = vunpack.c.h.b16 %v596
        %v4115 = vunpack.c.l.b16 %v597
        %v4116 = vunpack.c.h.b16 %v597
        %v4117 = vunpack.c.l.b16 %v598
        %v4118 = vunpack.c.h.b16 %v598
        %v4119 = vunpack.c.l.b16 %v599
        %v4120 = vunpack.c.h.b16 %v599
        %v4121 = vunpack.c.l.b16 %v600
        %v4122 = vunpack.c.h.b16 %v600
        %v4123 = vunpack.c.l.b16 %v601
        %v4124 = vunpack.c.h.b16 %v601
        %v4125 = vunpack.c.l.b16 %v602
        %v4126 = vunpack.c.h.b16 %v602
        %v4127 = vunpack.c.l.b16 %v603
        %v4128 = vunpack.c.h.b16 %v603
        %v4129 = vunpack.c.l.b16 %v604
        %v4130 = vunpack.c.h.b16 %v604
        %v4131 = vunpack.c.l.b16 %v605
        %v4132 = vunpack.c.h.b16 %v605
        %v4133 = vunpack.c.l.b16 %v606
        %v4134 = vunpack.c.h.b16 %v606
        %v4135 = vunpack.c.l.b16 %v607
        %v4136 = vunpack.c.h.b16 %v607
        %v4137 = vunpack.c.l.b16 %v608
        %v4138 = vunpack.c.h.b16 %v608
        %v4139 = vunpack.c.l.b16 %v609
        %v4140 = vunpack.c.h.b16 %v609
        %v4141 = vunpack.c.l.b16 %v610
        %v4142 = vunpack.c.h.b16 %v610
        %v4143 = vunpack.c.l.b16 %v611
        %v4144 = vunpack.c.h.b16 %v611
        %v4145 = vunpack.c.l.b16 %v612
        %v4146 = vunpack.c.h.b16 %v612
        %v4147 = vunpack.c.l.b16 %v613
        %v4148 = vunpack.c.h.b16 %v613
        %v4149 = vunpack.c.l.b16 %v614
        %v4150 = vunpack.c.h.b16 %v614
        %v4151 = vunpack.c.l.b16 %v615
        %v4152 = vunpack.c.h.b16 %v615
        %v4153 = vunpack.c.l.b16 %v616
        %v4154 = vunpack.c.h.b16 %v616
        %v4155 = vunpack.c.l.b16 %v617
        %v4156 = vunpack.c.h.b16 %v617
        %v4157 = vunpack.c.l.b16 %v618
        %v4158 = vunpack.c.h.b16 %v618
        %v4159 = vunpack.c.l.b16 %v619
        %v4160 = vunpack.c.h.b16 %v619
        %v4161 = vunpack.c.l.b16 %v620
        %v4162 = vunpack.c.h.b16 %v620
        %v4163 = vunpack.c.l.b16 %v621
        %v4164 = vunpack.c.h.b16 %v621
        %v4165 = vunpack.c.l.b16 %v622
        %v4166 = vunpack.c.h.b16 %v622
        %v4167 = vunpack.c.l.b16 %v623
        %v4168 = vunpack.c.h.b16 %v623
        %v4169 = vunpack.c.l.b16 %v624
        %v4170 = vunpack.c.h.b16 %v624
        %v4171 = vunpack.c.l.b16 %v625
        %v4172 = vunpack.c.h.b16 %v625
        %v4173 = vunpack.c.l.b16 %v626
        %v4174 = vunpack.c.h.b16 %v626
        %v4175 = vunpack.c.l.b16 %v627
        %v4176 = vunpack.c.h.b16 %v627
        %v4177 = vunpack.c.l.b16 %v628
        %v4178 = vunpack.c.h.b16 %v628
        %v4179 = vunpack.c.l.b16 %v629
        %v4180 = vunpack.c.h.b16 %v629
        %v4181 = vunpack.c.l.b16 %v630
        %v4182 = vunpack.c.h.b16 %v630
        %v4183 = vunpack.c.l.b16 %v631
        %v4184 = vunpack.c.h.b16 %v631
        %v4185 = vunpack.c.l.b16 %v632
        %v4186 = vunpack.c.h.b16 %v632
        %v4187 = vunpack.c.l.b16 %v633
        %v4188 = vunpack.c.h.b16 %v633
        %v4189 = vunpack.c.l.b16 %v634
        %v4190 = vunpack.c.h.b16 %v634
        %v4191 = vunpack.c.l.b16 %v635
        %v4192 = vunpack.c.h.b16 %v635
        %v4193 = vunpack.c.l.b16 %v636
        %v4194 = vunpack.c.h.b16 %v636
        %v4195 = vunpack.c.l.b16 %v637
        %v4196 = vunpack.c.h.b16 %v637
        %v4197 = vunpack.c.l.b16 %v638
        %v4198 = vunpack.c.h.b16 %v638
        %v4199 = vunpack.c.l.b16 %v639
        %v4200 = vunpack.c.h.b16 %v639
        %v4201 = vunpack.c.l.b16 %v640
        %v4202 = vunpack.c.h.b16 %v640
        %v4203 = vunpack.c.l.b16 %v641
        %v4204 = vunpack.c.h.b16 %v641
        %v4205 = vunpack.c.l.b16 %v642
        %v4206 = vunpack.c.h.b16 %v642
        %v4207 = vunpack.c.l.b16 %v643
        %v4208 = vunpack.c.h.b16 %v643
        %v4209 = vunpack.c.l.b16 %v644
        %v4210 = vunpack.c.h.b16 %v644
        %v4211 = vunpack.c.l.b16 %v645
        %v4212 = vunpack.c.h.b16 %v645
        %v4213 = vunpack.c.l.b16 %v646
        %v4214 = vunpack.c.h.b16 %v646
        %v4215 = vunpack.c.l.b16 %v647
        %v4216 = vunpack.c.h.b16 %v647
        %v4217 = vunpack.c.l.b16 %v648
        %v4218 = vunpack.c.h.b16 %v648
        %v4219 = vunpack.c.l.b16 %v649
        %v4220 = vunpack.c.h.b16 %v649
        %v4221 = vunpack.c.l.b16 %v650
        %v4222 = vunpack.c.h.b16 %v650
        %v4223 = vunpack.c.l.b16 %v651
        %v4224 = vunpack.c.h.b16 %v651
        %v4225 = vunpack.c.l.b16 %v652
        %v4226 = vunpack.c.h.b16 %v652
        %v4227 = vunpack.c.l.b16 %v653
        %v4228 = vunpack.c.h.b16 %v653
        %v4229 = vunpack.c.l.b16 %v654
        %v4230 = vunpack.c.h.b16 %v654
        %v4231 = vunpack.c.l.b16 %v655
        %v4232 = vunpack.c.h.b16 %v655
        %v4233 = vunpack.c.l.b16 %v656
        %v4234 = vunpack.c.h.b16 %v656
        %v4235 = vunpack.c.l.b16 %v657
        %v4236 = vunpack.c.h.b16 %v657
        %v4237 = vunpack.c.l.b16 %v658
        %v4238 = vunpack.c.h.b16 %v658
        %v4239 = vunpack.c.l.b16 %v659
        %v4240 = vunpack.c.h.b16 %v659
        %v4241 = vunpack.c.l.b16 %v660
        %v4242 = vunpack.c.h.b16 %v660
        %v4243 = vunpack.c.l.b16 %v661
        %v4244 = vunpack.c.h.b16 %v661
        %v4245 = vunpack.c.l.b16 %v662
        %v4246 = vunpack.c.h.b16 %v662
        %v4247 = vunpack.c.l.b16 %v663
        %v4248 = vunpack.c.h.b16 %v663
        %v4249 = vunpack.c.l.b16 %v664
        %v4250 = vunpack.c.h.b16 %v664
        %v4251 = vunpack.c.l.b16 %v665
        %v4252 = vunpack.c.h.b16 %v665
        %v4253 = vunpack.c.l.b16 %v666
        %v4254 = vunpack.c.h.b16 %v666
        %v4255 = vunpack.c.l.b16 %v667
        %v4256 = vunpack.c.h.b16 %v667
        %v4257 = vunpack.c.l.b16 %v668
        %v4258 = vunpack.c.h.b16 %v668
        %v4259 = vunpack.c.l.b16 %v669
        %v4260 = vunpack.c.h.b16 %v669
        %v4261 = vunpack.c.l.b16 %v670
        %v4262 = vunpack.c.h.b16 %v670
        %v4263 = vunpack.c.l.b16 %v671
        %v4264 = vunpack.c.h.b16 %v671
        %v4265 = vunpack.c.l.b16 %v672
        %v4266 = vunpack.c.h.b16 %v672
        %v4267 = vunpack.c.l.b16 %v673
        %v4268 = vunpack.c.h.b16 %v673
        %v4269 = vunpack.c.l.b16 %v674
        %v4270 = vunpack.c.h.b16 %v674
        %v4271 = vunpack.c.l.b16 %v675
        %v4272 = vunpack.c.h.b16 %v675
        %v4273 = vunpack.c.l.b16 %v676
        %v4274 = vunpack.c.h.b16 %v676
        %v4275 = vunpack.c.l.b16 %v677
        %v4276 = vunpack.c.h.b16 %v677
        %v4277 = vunpack.c.l.b16 %v678
        %v4278 = vunpack.c.h.b16 %v678
        %v4279 = vunpack.c.l.b16 %v679
        %v4280 = vunpack.c.h.b16 %v679
        %v4281 = vunpack.c.l.b16 %v680
        %v4282 = vunpack.c.h.b16 %v680
        %v4283 = vunpack.c.l.b16 %v681
        %v4284 = vunpack.c.h.b16 %v681
        %v4285 = vunpack.c.l.b16 %v682
        %v4286 = vunpack.c.h.b16 %v682
        %v4287 = vunpack.c.l.b16 %v683
        %v4288 = vunpack.c.h.b16 %v683
        %v4289 = vunpack.c.l.b16 %v684
        %v4290 = vunpack.c.h.b16 %v684
        %v4291 = vunpack.c.l.b16 %v685
        %v4292 = vunpack.c.h.b16 %v685
        %v4293 = vunpack.c.l.b16 %v686
        %v4294 = vunpack.c.h.b16 %v686
        %v4295 = vunpack.c.l.b16 %v687
        %v4296 = vunpack.c.h.b16 %v687
        %v4297 = vunpack.c.l.b16 %v688
        %v4298 = vunpack.c.h.b16 %v688
        %v4299 = vunpack.c.l.b16 %v689
        %v4300 = vunpack.c.h.b16 %v689
        %v4301 = vunpack.c.l.b16 %v690
        %v4302 = vunpack.c.h.b16 %v690
        %v4303 = vunpack.c.l.b16 %v691
        %v4304 = vunpack.c.h.b16 %v691
        %v4305 = vunpack.c.l.b16 %v692
        %v4306 = vunpack.c.h.b16 %v692
        %v4307 = vunpack.c.l.b16 %v693
        %v4308 = vunpack.c.h.b16 %v693
        %v4309 = vunpack.c.l.b16 %v694
        %v4310 = vunpack.c.h.b16 %v694
        %v4311 = vunpack.c.l.b16 %v695
        %v4312 = vunpack.c.h.b16 %v695
        %v4313 = vunpack.c.l.b16 %v696
        %v4314 = vunpack.c.h.b16 %v696
        %v4315 = vunpack.c.l.b16 %v697
        %v4316 = vunpack.c.h.b16 %v697
        %v4317 = vunpack.c.l.b16 %v698
        %v4318 = vunpack.c.h.b16 %v698
        %v4319 = vunpack.c.l.b16 %v699
        %v4320 = vunpack.c.h.b16 %v699
        %v4321 = vunpack.c.l.b16 %v700
        %v4322 = vunpack.c.h.b16 %v700
        %v4323 = vunpack.c.l.b16 %v701
        %v4324 = vunpack.c.h.b16 %v701
        %v4325 = vunpack.c.l.b16 %v702
        %v4326 = vunpack.c.h.b16 %v702
        %v4327 = vunpack.c.l.b16 %v703
        %v4328 = vunpack.c.h.b16 %v703
        %v4329 = vunpack.c.l.b16 %v704
        %v4330 = vunpack.c.h.b16 %v704
        %v4331 = vunpack.c.l.b16 %v705
        %v4332 = vunpack.c.h.b16 %v705
        %v4333 = vunpack.c.l.b16 %v706
        %v4334 = vunpack.c.h.b16 %v706
        %v4335 = vunpack.c.l.b16 %v707
        %v4336 = vunpack.c.h.b16 %v707
        %v4337 = vunpack.c.l.b16 %v708
        %v4338 = vunpack.c.h.b16 %v708
        %v4339 = vunpack.c.l.b16 %v709
        %v4340 = vunpack.c.h.b16 %v709
        %v4341 = vunpack.c.l.b16 %v710
        %v4342 = vunpack.c.h.b16 %v710
        %v4343 = vunpack.c.l.b16 %v711
        %v4344 = vunpack.c.h.b16 %v711
        %v4345 = vunpack.c.l.b16 %v712
        %v4346 = vunpack.c.h.b16 %v712
        %v4347 = vunpack.c.l.b16 %v713
        %v4348 = vunpack.c.h.b16 %v713
        %v4349 = vunpack.c.l.b16 %v714
        %v4350 = vunpack.c.h.b16 %v714
        %v4351 = vunpack.c.l.b16 %v715
        %v4352 = vunpack.c.h.b16 %v715
        %v4353 = vunpack.c.l.b16 %v716
        %v4354 = vunpack.c.h.b16 %v716
        %v4355 = vunpack.c.l.b16 %v717
        %v4356 = vunpack.c.h.b16 %v717
        %v4357 = vunpack.c.l.b16 %v718
        %v4358 = vunpack.c.h.b16 %v718
        %v4359 = vunpack.c.l.b16 %v719
        %v4360 = vunpack.c.h.b16 %v719
        %v4361 = vunpack.c.l.b16 %v720
        %v4362 = vunpack.c.h.b16 %v720
        %v4363 = vunpack.c.l.b16 %v721
        %v4364 = vunpack.c.h.b16 %v721
        %v4365 = vunpack.c.l.b16 %v722
        %v4366 = vunpack.c.h.b16 %v722
        %v4367 = vunpack.c.l.b16 %v723
        %v4368 = vunpack.c.h.b16 %v723
        %v4369 = vunpack.c.l.b16 %v724
        %v4370 = vunpack.c.h.b16 %v724
        %v4371 = vunpack.c.l.b16 %v725
        %v4372 = vunpack.c.h.b16 %v725
        %v4373 = vunpack.c.l.b16 %v726
        %v4374 = vunpack.c.h.b16 %v726
        %v4375 = vunpack.c.l.b16 %v727
        %v4376 = vunpack.c.h.b16 %v727
        %v4377 = vunpack.c.l.b16 %v728
        %v4378 = vunpack.c.h.b16 %v728
        %v4379 = vunpack.c.l.b16 %v729
        %v4380 = vunpack.c.h.b16 %v729
        %v4381 = vunpack.c.l.b16 %v730
        %v4382 = vunpack.c.h.b16 %v730
        %v4383 = vunpack.c.l.b16 %v731
        %v4384 = vunpack.c.h.b16 %v731
        %v4385 = vunpack.c.l.b16 %v732
        %v4386 = vunpack.c.h.b16 %v732
        %v4387 = vunpack.c.l.b16 %v733
        %v4388 = vunpack.c.h.b16 %v733
        %v4389 = vunpack.c.l.b16 %v734
        %v4390 = vunpack.c.h.b16 %v734
        %v4391 = vunpack.c.l.b16 %v735
        %v4392 = vunpack.c.h.b16 %v735
        %v4393 = vunpack.c.l.b16 %v736
        %v4394 = vunpack.c.h.b16 %v736
        %v4395 = vunpack.c.l.b16 %v737
        %v4396 = vunpack.c.h.b16 %v737
        %v4397 = vunpack.c.l.b16 %v738
        %v4398 = vunpack.c.h.b16 %v738
        %v4399 = vunpack.c.l.b16 %v739
        %v4400 = vunpack.c.h.b16 %v739
        %v4401 = vunpack.c.l.b16 %v740
        %v4402 = vunpack.c.h.b16 %v740
        %v4403 = vunpack.c.l.b16 %v741
        %v4404 = vunpack.c.h.b16 %v741
        %v4405 = vunpack.c.l.b16 %v742
        %v4406 = vunpack.c.h.b16 %v742
        %v4407 = vunpack.c.l.b16 %v743
        %v4408 = vunpack.c.h.b16 %v743
        %v4409 = vunpack.c.l.b16 %v744
        %v4410 = vunpack.c.h.b16 %v744
        %v4411 = vunpack.c.l.b16 %v745
        %v4412 = vunpack.c.h.b16 %v745
        %v4413 = vunpack.c.l.b16 %v746
        %v4414 = vunpack.c.h.b16 %v746
        %v4415 = vunpack.c.l.b16 %v747
        %v4416 = vunpack.c.h.b16 %v747
        %v4417 = vunpack.c.l.b16 %v748
        %v4418 = vunpack.c.h.b16 %v748
        %v4419 = vunpack.c.l.b16 %v749
        %v4420 = vunpack.c.h.b16 %v749
        %v4421 = vunpack.c.l.b16 %v750
        %v4422 = vunpack.c.h.b16 %v750
        %v4423 = vunpack.c.l.b16 %v751
        %v4424 = vunpack.c.h.b16 %v751
        %v4425 = vunpack.c.l.b16 %v752
        %v4426 = vunpack.c.h.b16 %v752
        %v4427 = vunpack.c.l.b16 %v753
        %v4428 = vunpack.c.h.b16 %v753
        %v4429 = vunpack.c.l.b16 %v754
        %v4430 = vunpack.c.h.b16 %v754
        %v4431 = vunpack.c.l.b16 %v755
        %v4432 = vunpack.c.h.b16 %v755
        %v4433 = vunpack.c.l.b16 %v756
        %v4434 = vunpack.c.h.b16 %v756
        %v4435 = vunpack.c.l.b16 %v757
        %v4436 = vunpack.c.h.b16 %v757
        %v4437 = vunpack.c.l.b16 %v758
        %v4438 = vunpack.c.h.b16 %v758
        %v4439 = vunpack.c.l.b16 %v759
        %v4440 = vunpack.c.h.b16 %v759
        %v4441 = vunpack.c.l.b16 %v760
        %v4442 = vunpack.c.h.b16 %v760
        %v4443 = vunpack.c.l.b16 %v761
        %v4444 = vunpack.c.h.b16 %v761
        %v4445 = vunpack.c.l.b16 %v762
        %v4446 = vunpack.c.h.b16 %v762
        %v4447 = vunpack.c.l.b16 %v763
        %v4448 = vunpack.c.h.b16 %v763
        %v4449 = vunpack.c.l.b16 %v764
        %v4450 = vunpack.c.h.b16 %v764
        %v4451 = vunpack.c.l.b16 %v765
        %v4452 = vunpack.c.h.b16 %v765
        %v4453 = vunpack.c.l.b16 %v766
        %v4454 = vunpack.c.h.b16 %v766
        %v4455 = vunpack.c.l.b16 %v767
        %v4456 = vunpack.c.h.b16 %v767
        %v4457 = vunpack.c.l.b16 %v768
        %v4458 = vunpack.c.h.b16 %v768
        %v4459 = vunpack.c.l.b16 %v769
        %v4460 = vunpack.c.h.b16 %v769
        %v4461 = vunpack.c.l.b16 %v770
        %v4462 = vunpack.c.h.b16 %v770
        %v4463 = vunpack.c.l.b16 %v771
        %v4464 = vunpack.c.h.b16 %v771
        %v4465 = vunpack.c.l.b16 %v772
        %v4466 = vunpack.c.h.b16 %v772
        %v4467 = vunpack.c.l.b16 %v773
        %v4468 = vunpack.c.h.b16 %v773
        %v4469 = vunpack.c.l.b16 %v774
        %v4470 = vunpack.c.h.b16 %v774
        %v4471 = vunpack.c.l.b16 %v775
        %v4472 = vunpack.c.h.b16 %v775
        %v4473 = vunpack.c.l.b16 %v776
        %v4474 = vunpack.c.h.b16 %v776
        %v4475 = vunpack.c.l.b16 %v777
        %v4476 = vunpack.c.h.b16 %v777
        %v4477 = vunpack.c.l.b16 %v778
        %v4478 = vunpack.c.h.b16 %v778
        %v4479 = vunpack.c.l.b16 %v779
        %v4480 = vunpack.c.h.b16 %v779
        %v4481 = vunpack.c.l.b16 %v780
        %v4482 = vunpack.c.h.b16 %v780
        %v4483 = vunpack.c.l.b16 %v781
        %v4484 = vunpack.c.h.b16 %v781
        %v4485 = vunpack.c.l.b16 %v782
        %v4486 = vunpack.c.h.b16 %v782
        %v4487 = vunpack.c.l.b16 %v783
        %v4488 = vunpack.c.h.b16 %v783
        %v4489 = vunpack.c.l.b16 %v784
        %v4490 = vunpack.c.h.b16 %v784
        %v4491 = vunpack.c.l.b16 %v785
        %v4492 = vunpack.c.h.b16 %v785
        %v4493 = vunpack.c.l.b16 %v786
        %v4494 = vunpack.c.h.b16 %v786
        %v4495 = vunpack.c.l.b16 %v787
        %v4496 = vunpack.c.h.b16 %v787
        %v4497 = vunpack.c.l.b16 %v788
        %v4498 = vunpack.c.h.b16 %v788
        %v4499 = vunpack.c.l.b16 %v789
        %v4500 = vunpack.c.h.b16 %v789
        %v4501 = vunpack.c.l.b16 %v790
        %v4502 = vunpack.c.h.b16 %v790
        %v4503 = vunpack.c.l.b16 %v791
        %v4504 = vunpack.c.h.b16 %v791
        %v4505 = vunpack.c.l.b16 %v792
        %v4506 = vunpack.c.h.b16 %v792
        %v4507 = vunpack.c.l.b16 %v793
        %v4508 = vunpack.c.h.b16 %v793
        %v4509 = vunpack.c.l.b16 %v794
        %v4510 = vunpack.c.h.b16 %v794
        %v4511 = vunpack.c.l.b16 %v795
        %v4512 = vunpack.c.h.b16 %v795
        %v4513 = vunpack.c.l.b16 %v796
        %v4514 = vunpack.c.h.b16 %v796
        %v4515 = vunpack.c.l.b16 %v797
        %v4516 = vunpack.c.h.b16 %v797
        %v4517 = vunpack.c.l.b16 %v798
        %v4518 = vunpack.c.h.b16 %v798
        %v4519 = vunpack.c.l.b16 %v799
        %v4520 = vunpack.c.h.b16 %v799
        %v4521 = vunpack.c.l.b16 %v800
        %v4522 = vunpack.c.h.b16 %v800
        %v4523 = vunpack.c.l.b16 %v801
        %v4524 = vunpack.c.h.b16 %v801
        %v4525 = vunpack.c.l.b16 %v802
        %v4526 = vunpack.c.h.b16 %v802
        %v4527 = vunpack.c.l.b16 %v803
        %v4528 = vunpack.c.h.b16 %v803
        %v4529 = vunpack.c.l.b16 %v804
        %v4530 = vunpack.c.h.b16 %v804
        %v4531 = vunpack.c.l.b16 %v805
        %v4532 = vunpack.c.h.b16 %v805
        %v4533 = vunpack.c.l.b16 %v806
        %v4534 = vunpack.c.h.b16 %v806
        %v4535 = vunpack.c.l.b16 %v807
        %v4536 = vunpack.c.h.b16 %v807
        %v4537 = vunpack.c.l.b16 %v808
        %v4538 = vunpack.c.h.b16 %v808
        %v4539 = vunpack.c.l.b16 %v809
        %v4540 = vunpack.c.h.b16 %v809
        %v4541 = vunpack.c.l.b16 %v810
        %v4542 = vunpack.c.h.b16 %v810
        %v4543 = vunpack.c.l.b16 %v811
        %v4544 = vunpack.c.h.b16 %v811
        %v4545 = vunpack.c.l.b16 %v812
        %v4546 = vunpack.c.h.b16 %v812
        %v4547 = vunpack.c.l.b16 %v813
        %v4548 = vunpack.c.h.b16 %v813
        %v4549 = vunpack.c.l.b16 %v814
        %v4550 = vunpack.c.h.b16 %v814
        %v4551 = vunpack.c.l.b16 %v815
        %v4552 = vunpack.c.h.b16 %v815
        %v4553 = vunpack.c.l.b16 %v816
        %v4554 = vunpack.c.h.b16 %v816
        %v4555 = vunpack.c.l.b16 %v817
        %v4556 = vunpack.c.h.b16 %v817
        %v4557 = vunpack.c.l.b16 %v818
        %v4558 = vunpack.c.h.b16 %v818
        %v4559 = vunpack.c.l.b16 %v819
        %v4560 = vunpack.c.h.b16 %v819
        %v4561 = vunpack.c.l.b16 %v820
        %v4562 = vunpack.c.h.b16 %v820
        %v4563 = vunpack.c.l.b16 %v821
        %v4564 = vunpack.c.h.b16 %v821
        %v4565 = vunpack.c.l.b16 %v822
        %v4566 = vunpack.c.h.b16 %v822
        %v4567 = vunpack.c.l.b16 %v823
        %v4568 = vunpack.c.h.b16 %v823
        %v4569 = vunpack.c.l.b16 %v824
        %v4570 = vunpack.c.h.b16 %v824
        %v4571 = vunpack.c.l.b16 %v825
        %v4572 = vunpack.c.h.b16 %v825
        %v4573 = vunpack.c.l.b16 %v826
        %v4574 = vunpack.c.h.b16 %v826
        %v4575 = vunpack.c.l.b16 %v827
        %v4576 = vunpack.c.h.b16 %v827
        %v4577 = vunpack.c.l.b16 %v828
        %v4578 = vunpack.c.h.b16 %v828
        %v4579 = vunpack.c.l.b16 %v829
        %v4580 = vunpack.c.h.b16 %v829
        %v4581 = vunpack.c.l.b16 %v830
        %v4582 = vunpack.c.h.b16 %v830
        %v4583 = vunpack.c.l.b16 %v831
        %v4584 = vunpack.c.h.b16 %v831
        %v4585 = vunpack.c.l.b16 %v832
        %v4586 = vunpack.c.h.b16 %v832
        %v4587 = vunpack.c.l.b16 %v833
        %v4588 = vunpack.c.h.b16 %v833
        %v4589 = vunpack.c.l.b16 %v834
        %v4590 = vunpack.c.h.b16 %v834
        %v4591 = vunpack.c.l.b16 %v835
        %v4592 = vunpack.c.h.b16 %v835
        %v4593 = vunpack.c.l.b16 %v836
        %v4594 = vunpack.c.h.b16 %v836
        %v4595 = vunpack.c.l.b16 %v837
        %v4596 = vunpack.c.h.b16 %v837
        %v4597 = vunpack.c.l.b16 %v838
        %v4598 = vunpack.c.h.b16 %v838
        %v4599 = vunpack.c.l.b16 %v839
        %v4600 = vunpack.c.h.b16 %v839
        %v4601 = vunpack.c.l.b16 %v840
        %v4602 = vunpack.c.h.b16 %v840
        %v4603 = vunpack.c.l.b16 %v841
        %v4604 = vunpack.c.h.b16 %v841
        %v4605 = vunpack.c.l.b16 %v842
        %v4606 = vunpack.c.h.b16 %v842
        %v4607 = vunpack.c.l.b16 %v843
        %v4608 = vunpack.c.h.b16 %v843
        %v4609 = vunpack.c.l.b16 %v844
        %v4610 = vunpack.c.h.b16 %v844
        %v4611 = vunpack.c.l.b16 %v845
        %v4612 = vunpack.c.h.b16 %v845
        %v4613 = vunpack.c.l.b16 %v846
        %v4614 = vunpack.c.h.b16 %v846
        %v4615 = vunpack.c.l.b16 %v847
        %v4616 = vunpack.c.h.b16 %v847
        %v4617 = vunpack.c.l.b16 %v848
        %v4618 = vunpack.c.h.b16 %v848
        %v4619 = vunpack.c.l.b16 %v849
        %v4620 = vunpack.c.h.b16 %v849
        %v4621 = vunpack.c.l.b16 %v850
        %v4622 = vunpack.c.h.b16 %v850
        %v4623 = vunpack.c.l.b16 %v851
        %v4624 = vunpack.c.h.b16 %v851
        %v4625 = vunpack.c.l.b16 %v852
        %v4626 = vunpack.c.h.b16 %v852
        %v4627 = vunpack.c.l.b16 %v853
        %v4628 = vunpack.c.h.b16 %v853
        %v4629 = vunpack.c.l.b16 %v854
        %v4630 = vunpack.c.h.b16 %v854
        %v4631 = vunpack.c.l.b16 %v855
        %v4632 = vunpack.c.h.b16 %v855
        %v4633 = vunpack.c.l.b16 %v856
        %v4634 = vunpack.c.h.b16 %v856
        %v4635 = vunpack.c.l.b16 %v857
        %v4636 = vunpack.c.h.b16 %v857
        %v4637 = vunpack.c.l.b16 %v858
        %v4638 = vunpack.c.h.b16 %v858
        %v4639 = vunpack.c.l.b16 %v859
        %v4640 = vunpack.c.h.b16 %v859
        %v4641 = vunpack.c.l.b16 %v860
        %v4642 = vunpack.c.h.b16 %v860
        %v4643 = vunpack.c.l.b16 %v861
        %v4644 = vunpack.c.h.b16 %v861
        %v4645 = vunpack.c.l.b16 %v862
        %v4646 = vunpack.c.h.b16 %v862
        %v4647 = vunpack.c.l.b16 %v863
        %v4648 = vunpack.c.h.b16 %v863
        %v4649 = vunpack.c.l.b16 %v864
        %v4650 = vunpack.c.h.b16 %v864
        %v4651 = vunpack.c.l.b16 %v865
        %v4652 = vunpack.c.h.b16 %v865
        %v4653 = vunpack.c.l.b16 %v866
        %v4654 = vunpack.c.h.b16 %v866
        %v4655 = vunpack.c.l.b16 %v867
        %v4656 = vunpack.c.h.b16 %v867
        %v4657 = vunpack.c.l.b16 %v868
        %v4658 = vunpack.c.h.b16 %v868
        %v4659 = vunpack.c.l.b16 %v869
        %v4660 = vunpack.c.h.b16 %v869
        %v4661 = vunpack.c.l.b16 %v870
        %v4662 = vunpack.c.h.b16 %v870
        %v4663 = vunpack.c.l.b16 %v871
        %v4664 = vunpack.c.h.b16 %v871
        %v4665 = vunpack.c.l.b16 %v872
        %v4666 = vunpack.c.h.b16 %v872
        %v4667 = vunpack.c.l.b16 %v873
        %v4668 = vunpack.c.h.b16 %v873
        %v4669 = vunpack.c.l.b16 %v874
        %v4670 = vunpack.c.h.b16 %v874
        %v4671 = vunpack.c.l.b16 %v875
        %v4672 = vunpack.c.h.b16 %v875
        %v4673 = vunpack.c.l.b16 %v876
        %v4674 = vunpack.c.h.b16 %v876
        %v4675 = vunpack.c.l.b16 %v877
        %v4676 = vunpack.c.h.b16 %v877
        %v4677 = vunpack.c.l.b16 %v878
        %v4678 = vunpack.c.h.b16 %v878
        %v4679 = vunpack.c.l.b16 %v879
        %v4680 = vunpack.c.h.b16 %v879
        %v4681 = vunpack.c.l.b16 %v880
        %v4682 = vunpack.c.h.b16 %v880
        %v4683 = vunpack.c.l.b16 %v881
        %v4684 = vunpack.c.h.b16 %v881
        %v4685 = vunpack.c.l.b16 %v882
        %v4686 = vunpack.c.h.b16 %v882
        %v4687 = vunpack.c.l.b16 %v883
        %v4688 = vunpack.c.h.b16 %v883
        %v4689 = vunpack.c.l.b16 %v884
        %v4690 = vunpack.c.h.b16 %v884
        %v4691 = vunpack.c.l.b16 %v885
        %v4692 = vunpack.c.h.b16 %v885
        %v4693 = vunpack.c.l.b16 %v886
        %v4694 = vunpack.c.h.b16 %v886
        %v4695 = vunpack.c.l.b16 %v887
        %v4696 = vunpack.c.h.b16 %v887
        %v4697 = vunpack.c.l.b16 %v888
        %v4698 = vunpack.c.h.b16 %v888
        %v4699 = vunpack.c.l.b16 %v889
        %v4700 = vunpack.c.h.b16 %v889
        %v4701 = vunpack.c.l.b16 %v890
        %v4702 = vunpack.c.h.b16 %v890
        %v4703 = vunpack.c.l.b16 %v891
        %v4704 = vunpack.c.h.b16 %v891
        %v4705 = vunpack.c.l.b16 %v892
        %v4706 = vunpack.c.h.b16 %v892
        %v4707 = vunpack.c.l.b16 %v893
        %v4708 = vunpack.c.h.b16 %v893
        %v4709 = vunpack.c.l.b16 %v894
        %v4710 = vunpack.c.h.b16 %v894
        %v4711 = vunpack.c.l.b16 %v895
        %v4712 = vunpack.c.h.b16 %v895
        %v4713 = vunpack.c.l.b16 %v896
        %v4714 = vunpack.c.h.b16 %v896
        %v4715 = vunpack.c.l.b16 %v897
        %v4716 = vunpack.c.h.b16 %v897
        %v4717 = vunpack.c.l.b16 %v898
        %v4718 = vunpack.c.h.b16 %v898
        %v4719 = vunpack.c.l.b16 %v899
        %v4720 = vunpack.c.h.b16 %v899
        %v4721 = vunpack.c.l.b16 %v900
        %v4722 = vunpack.c.h.b16 %v900
        %v4723 = vunpack.c.l.b16 %v901
        %v4724 = vunpack.c.h.b16 %v901
        %v4725 = vunpack.c.l.b16 %v902
        %v4726 = vunpack.c.h.b16 %v902
        %v4727 = vunpack.c.l.b16 %v903
        %v4728 = vunpack.c.h.b16 %v903
        %v4729 = vunpack.c.l.b16 %v904
        %v4730 = vunpack.c.h.b16 %v904
        %v4731 = vunpack.c.l.b16 %v905
        %v4732 = vunpack.c.h.b16 %v905
        %v4733 = vunpack.c.l.b16 %v906
        %v4734 = vunpack.c.h.b16 %v906
        %v4735 = vunpack.c.l.b16 %v907
        %v4736 = vunpack.c.h.b16 %v907
        %v4737 = vunpack.c.l.b16 %v908
        %v4738 = vunpack.c.h.b16 %v908
        %v4739 = vunpack.c.l.b16 %v909
        %v4740 = vunpack.c.h.b16 %v909
        %v4741 = vunpack.c.l.b16 %v910
        %v4742 = vunpack.c.h.b16 %v910
        %v4743 = vunpack.c.l.b16 %v911
        %v4744 = vunpack.c.h.b16 %v911
        %v4745 = vunpack.c.l.b16 %v912
        %v4746 = vunpack.c.h.b16 %v912
        %v4747 = vunpack.c.l.b16 %v913
        %v4748 = vunpack.c.h.b16 %v913
        %v4749 = vunpack.c.l.b16 %v914
        %v4750 = vunpack.c.h.b16 %v914
        %v4751 = vunpack.c.l.b16 %v915
        %v4752 = vunpack.c.h.b16 %v915
        %v4753 = vunpack.c.l.b16 %v916
        %v4754 = vunpack.c.h.b16 %v916
        %v4755 = vunpack.c.l.b16 %v917
        %v4756 = vunpack.c.h.b16 %v917
        %v4757 = vunpack.c.l.b16 %v918
        %v4758 = vunpack.c.h.b16 %v918
        %v4759 = vunpack.c.l.b16 %v919
        %v4760 = vunpack.c.h.b16 %v919
        %v4761 = vunpack.c.l.b16 %v920
        %v4762 = vunpack.c.h.b16 %v920
        %v4763 = vunpack.c.l.b16 %v921
        %v4764 = vunpack.c.h.b16 %v921
        %v4765 = vunpack.c.l.b16 %v922
        %v4766 = vunpack.c.h.b16 %v922
        %v4767 = vunpack.c.l.b16 %v923
        %v4768 = vunpack.c.h.b16 %v923
        %v4769 = vunpack.c.l.b16 %v924
        %v4770 = vunpack.c.h.b16 %v924
        %v4771 = vunpack.c.l.b16 %v925
        %v4772 = vunpack.c.h.b16 %v925
        %v4773 = vunpack.c.l.b16 %v926
        %v4774 = vunpack.c.h.b16 %v926
        %v4775 = vunpack.c.l.b16 %v927
        %v4776 = vunpack.c.h.b16 %v927
        %v4777 = vunpack.c.l.b16 %v928
        %v4778 = vunpack.c.h.b16 %v928
        %v4779 = vunpack.c.l.b16 %v929
        %v4780 = vunpack.c.h.b16 %v929
        %v4781 = vunpack.c.l.b16 %v930
        %v4782 = vunpack.c.h.b16 %v930
        %v4783 = vunpack.c.l.b16 %v931
        %v4784 = vunpack.c.h.b16 %v931
        %v4785 = vunpack.c.l.b16 %v932
        %v4786 = vunpack.c.h.b16 %v932
        %v4787 = vunpack.c.l.b16 %v933
        %v4788 = vunpack.c.h.b16 %v933
        %v4789 = vunpack.c.l.b16 %v934
        %v4790 = vunpack.c.h.b16 %v934
        %v4791 = vunpack.c.l.b16 %v935
        %v4792 = vunpack.c.h.b16 %v935
        %v4793 = vunpack.c.l.b16 %v936
        %v4794 = vunpack.c.h.b16 %v936
        %v4795 = vunpack.c.l.b16 %v937
        %v4796 = vunpack.c.h.b16 %v937
        %v4797 = vunpack.c.l.b16 %v938
        %v4798 = vunpack.c.h.b16 %v938
        %v4799 = vunpack.c.l.b16 %v939
        %v4800 = vunpack.c.h.b16 %v939
        %v4801 = vunpack.c.l.b16 %v940
        %v4802 = vunpack.c.h.b16 %v940
        %v4803 = vunpack.c.l.b16 %v941
        %v4804 = vunpack.c.h.b16 %v941
        %v4805 = vunpack.c.l.b16 %v942
        %v4806 = vunpack.c.h.b16 %v942
        %v4807 = vunpack.c.l.b16 %v943
        %v4808 = vunpack.c.h.b16 %v943
        %v4809 = vunpack.c.l.b16 %v944
        %v4810 = vunpack.c.h.b16 %v944
        %v4811 = vunpack.c.l.b16 %v945
        %v4812 = vunpack.c.h.b16 %v945
        %v4813 = vunpack.c.l.b16 %v946
        %v4814 = vunpack.c.h.b16 %v946
        %v4815 = vunpack.c.l.b16 %v947
        %v4816 = vunpack.c.h.b16 %v947
        %v4817 = vunpack.c.l.b16 %v948
        %v4818 = vunpack.c.h.b16 %v948
        %v4819 = vunpack.c.l.b16 %v949
        %v4820 = vunpack.c.h.b16 %v949
        %v4821 = vunpack.c.l.b16 %v950
        %v4822 = vunpack.c.h.b16 %v950
        %v4823 = vunpack.c.l.b16 %v951
        %v4824 = vunpack.c.h.b16 %v951
        %v4825 = vunpack.c.l.b16 %v952
        %v4826 = vunpack.c.h.b16 %v952
        %v4827 = vunpack.c.l.b16 %v953
        %v4828 = vunpack.c.h.b16 %v953
        %v4829 = vunpack.c.l.b16 %v954
        %v4830 = vunpack.c.h.b16 %v954
        %v4831 = vunpack.c.l.b16 %v955
        %v4832 = vunpack.c.h.b16 %v955
        %v4833 = vunpack.c.l.b16 %v956
        %v4834 = vunpack.c.h.b16 %v956
        %v4835 = vunpack.c.l.b16 %v957
        %v4836 = vunpack.c.h.b16 %v957
        %v4837 = vunpack.c.l.b16 %v958
        %v4838 = vunpack.c.h.b16 %v958
        %v4839 = vunpack.c.l.b16 %v959
        %v4840 = vunpack.c.h.b16 %v959
        %v4841 = vunpack.c.l.b16 %v960
        %v4842 = vunpack.c.h.b16 %v960
        %v4843 = vunpack.c.l.b16 %v961
        %v4844 = vunpack.c.h.b16 %v961
        %v4845 = vunpack.c.l.b16 %v962
        %v4846 = vunpack.c.h.b16 %v962
        %v4847 = vunpack.c.l.b16 %v963
        %v4848 = vunpack.c.h.b16 %v963
        %v4849 = vunpack.c.l.b16 %v964
        %v4850 = vunpack.c.h.b16 %v964
        %v4851 = vunpack.c.l.b16 %v965
        %v4852 = vunpack.c.h.b16 %v965
        %v4853 = vunpack.c.l.b16 %v966
        %v4854 = vunpack.c.h.b16 %v966
        %v4855 = vunpack.c.l.b16 %v967
        %v4856 = vunpack.c.h.b16 %v967
        %v4857 = vunpack.c.l.b16 %v968
        %v4858 = vunpack.c.h.b16 %v968
        %v4859 = vunpack.c.l.b16 %v969
        %v4860 = vunpack.c.h.b16 %v969
        %v4861 = vunpack.c.l.b16 %v970
        %v4862 = vunpack.c.h.b16 %v970
        %v4863 = vunpack.c.l.b16 %v971
        %v4864 = vunpack.c.h.b16 %v971
        %v4865 = vunpack.c.l.b16 %v972
        %v4866 = vunpack.c.h.b16 %v972
        %v4867 = vunpack.c.l.b16 %v973
        %v4868 = vunpack.c.h.b16 %v973
        %v4869 = vunpack.c.l.b16 %v974
        %v4870 = vunpack.c.h.b16 %v974
        %v4871 = vunpack.c.l.b16 %v975
        %v4872 = vunpack.c.h.b16 %v975
        %v4873 = vunpack.c.l.b16 %v976
        %v4874 = vunpack.c.h.b16 %v976
        %v4875 = vunpack.c.l.b16 %v977
        %v4876 = vunpack.c.h.b16 %v977
        %v4877 = vunpack.c.l.b16 %v978
        %v4878 = vunpack.c.h.b16 %v978
        %v4879 = vunpack.c.l.b16 %v979
        %v4880 = vunpack.c.h.b16 %v979
        %v4881 = vunpack.c.l.b16 %v980
        %v4882 = vunpack.c.h.b16 %v980
        %v4883 = vunpack.c.l.b16 %v981
        %v4884 = vunpack.c.h.b16 %v981
        %v4885 = vunpack.c.l.b16 %v982
        %v4886 = vunpack.c.h.b16 %v982
        %v4887 = vunpack.c.l.b16 %v983
        %v4888 = vunpack.c.h.b16 %v983
        %v4889 = vunpack.c.l.b16 %v984
        %v4890 = vunpack.c.h.b16 %v984
        %v4891 = vunpack.c.l.b16 %v985
        %v4892 = vunpack.c.h.b16 %v985
        %v4893 = vunpack.c.l.b16 %v986
        %v4894 = vunpack.c.h.b16 %v986
        %v4895 = vunpack.c.l.b16 %v987
        %v4896 = vunpack.c.h.b16 %v987
        %v4897 = vunpack.c.l.b16 %v988
        %v4898 = vunpack.c.h.b16 %v988
        %v4899 = vunpack.c.l.b16 %v989
        %v4900 = vunpack.c.h.b16 %v989
        %v4901 = vunpack.c.l.b16 %v990
        %v4902 = vunpack.c.h.b16 %v990
        %v4903 = vunpack.c.l.b16 %v991
        %v4904 = vunpack.c.h.b16 %v991
        %v4905 = vunpack.c.l.b16 %v992
        %v4906 = vunpack.c.h.b16 %v992
        %v4907 = vunpack.c.l.b16 %v993
        %v4908 = vunpack.c.h.b16 %v993
        %v4909 = vunpack.c.l.b16 %v994
        %v4910 = vunpack.c.h.b16 %v994
        %v4911 = vunpack.c.l.b16 %v995
        %v4912 = vunpack.c.h.b16 %v995
        %v4913 = vunpack.c.l.b16 %v996
        %v4914 = vunpack.c.h.b16 %v996
        %v4915 = vunpack.c.l.b16 %v997
        %v4916 = vunpack.c.h.b16 %v997
        %v4917 = vunpack.c.l.b16 %v998
        %v4918 = vunpack.c.h.b16 %v998
        %v4919 = vunpack.c.l.b16 %v999
        %v4920 = vunpack.c.h.b16 %v999
        %v4921 = vunpack.c.l.b16 %v1000
        %v4922 = vunpack.c.h.b16 %v1000
        %v4923 = vunpack.c.l.b16 %v1001
        %v4924 = vunpack.c.h.b16 %v1001
        %v4925 = vunpack.c.l.b16 %v1002
        %v4926 = vunpack.c.h.b16 %v1002
        %v4927 = vunpack.c.l.b16 %v1003
        %v4928 = vunpack.c.h.b16 %v1003
        %v4929 = vunpack.c.l.b16 %v1004
        %v4930 = vunpack.c.h.b16 %v1004
        %v4931 = vunpack.c.l.b16 %v1005
        %v4932 = vunpack.c.h.b16 %v1005
        %v4933 = vunpack.c.l.b16 %v1006
        %v4934 = vunpack.c.h.b16 %v1006
        %v4935 = vunpack.c.l.b16 %v1007
        %v4936 = vunpack.c.h.b16 %v1007
        %v4937 = vunpack.c.l.b16 %v1008
        %v4938 = vunpack.c.h.b16 %v1008
        %v4939 = vunpack.c.l.b16 %v1009
        %v4940 = vunpack.c.h.b16 %v1009
        %v4941 = vunpack.c.l.b16 %v1010
        %v4942 = vunpack.c.h.b16 %v1010
        %v4943 = vunpack.c.l.b16 %v1011
        %v4944 = vunpack.c.h.b16 %v1011
        %v4945 = vunpack.c.l.b16 %v1012
        %v4946 = vunpack.c.h.b16 %v1012
        %v4947 = vunpack.c.l.b16 %v1013
        %v4948 = vunpack.c.h.b16 %v1013
        %v4949 = vunpack.c.l.b16 %v1014
        %v4950 = vunpack.c.h.b16 %v1014
        %v4951 = vunpack.c.l.b16 %v1015
        %v4952 = vunpack.c.h.b16 %v1015
        %v4953 = vunpack.c.l.b16 %v1016
        %v4954 = vunpack.c.h.b16 %v1016
        %v4955 = vunpack.c.l.b16 %v1017
        %v4956 = vunpack.c.h.b16 %v1017
        %v4957 = vunpack.c.l.b16 %v1018
        %v4958 = vunpack.c.h.b16 %v1018
        %v4959 = vunpack.c.l.b16 %v1019
        %v4960 = vunpack.c.h.b16 %v1019
        %v4961 = vunpack.c.l.b16 %v1020
        %v4962 = vunpack.c.h.b16 %v1020
        %v4963 = vunpack.c.l.b16 %v1021
        %v4964 = vunpack.c.h.b16 %v1021
        %v4965 = vunpack.c.l.b16 %v1022
        %v4966 = vunpack.c.h.b16 %v1022
        %v4967 = vunpack.c.l.b16 %v1023
        %v4968 = vunpack.c.h.b16 %v1023
        %v4969 = vunpack.c.l.b16 %v1024
        %v4970 = vunpack.c.h.b16 %v1024
        %v4971 = vunpack.c.l.b16 %v1025
        %v4972 = vunpack.c.h.b16 %v1025
        %v4973 = vunpack.c.l.b16 %v1026
        %v4974 = vunpack.c.h.b16 %v1026
        %v4975 = vunpack.c.l.b16 %v1027
        %v4976 = vunpack.c.h.b16 %v1027
        %v4977 = vunpack.c.l.b16 %v1028
        %v4978 = vunpack.c.h.b16 %v1028
        %v4979 = vunpack.c.l.b16 %v1029
        %v4980 = vunpack.c.h.b16 %v1029
        %v4981 = vunpack.c.l.b16 %v1030
        %v4982 = vunpack.c.h.b16 %v1030
        %v4983 = vunpack.c.l.b16 %v1031
        %v4984 = vunpack.c.h.b16 %v1031
        %v4985 = vunpack.c.l.b16 %v1032
        %v4986 = vunpack.c.h.b16 %v1032
        %v4987 = vunpack.c.l.b16 %v1033
        %v4988 = vunpack.c.h.b16 %v1033
        %v4989 = vunpack.c.l.b16 %v1034
        %v4990 = vunpack.c.h.b16 %v1034
        %v4991 = vunpack.c.l.b16 %v1035
        %v4992 = vunpack.c.h.b16 %v1035
        %v4993 = vunpack.c.l.b16 %v1036
        %v4994 = vunpack.c.h.b16 %v1036
        %v4995 = vunpack.c.l.b16 %v1037
        %v4996 = vunpack.c.h.b16 %v1037
        %v4997 = vunpack.c.l.b16 %v1038
        %v4998 = vunpack.c.h.b16 %v1038
        %v4999 = vunpack.c.l.b16 %v1039
        %v5000 = vunpack.c.h.b16 %v1039
        %v5001 = vunpack.c.l.b16 %v1040
        %v5002 = vunpack.c.h.b16 %v1040
        %v5003 = vunpack.c.l.b16 %v1041
        %v5004 = vunpack.c.h.b16 %v1041
        %v5005 = vunpack.c.l.b16 %v1042
        %v5006 = vunpack.c.h.b16 %v1042
        %v5007 = vunpack.c.l.b16 %v1043
        %v5008 = vunpack.c.h.b16 %v1043
        %v5009 = vunpack.c.l.b16 %v1044
        %v5010 = vunpack.c.h.b16 %v1044
        %v5011 = vunpack.c.l.b16 %v1045
        %v5012 = vunpack.c.h.b16 %v1045
        %v5013 = vunpack.c.l.b16 %v1046
        %v5014 = vunpack.c.h.b16 %v1046
        %v5015 = vunpack.c.l.b16 %v1047
        %v5016 = vunpack.c.h.b16 %v1047
        %v5017 = vunpack.c.l.b16 %v1048
        %v5018 = vunpack.c.h.b16 %v1048
        %v5019 = vunpack.c.l.b16 %v1049
        %v5020 = vunpack.c.h.b16 %v1049
        %v5021 = vunpack.c.l.b16 %v1050
        %v5022 = vunpack.c.h.b16 %v1050
        %v5023 = vunpack.c.l.b16 %v1051
        %v5024 = vunpack.c.h.b16 %v1051
        %v5025 = vunpack.c.l.b16 %v1052
        %v5026 = vunpack.c.h.b16 %v1052
        %v5027 = vunpack.c.l.b16 %v1053
        %v5028 = vunpack.c.h.b16 %v1053
        %v5029 = vunpack.c.l.b16 %v1054
        %v5030 = vunpack.c.h.b16 %v1054
        %v5031 = vunpack.c.l.b16 %v1055
        %v5032 = vunpack.c.h.b16 %v1055
        %v5033 = vunpack.c.l.b16 %v1056
        %v5034 = vunpack.c.h.b16 %v1056
        %v5035 = vunpack.c.l.b16 %v1057
        %v5036 = vunpack.c.h.b16 %v1057
        %v5037 = vunpack.c.l.b16 %v1058
        %v5038 = vunpack.c.h.b16 %v1058
        %v5039 = vunpack.c.l.b16 %v1059
        %v5040 = vunpack.c.h.b16 %v1059
        %v5041 = vunpack.c.l.b16 %v1060
        %v5042 = vunpack.c.h.b16 %v1060
        %v5043 = vunpack.c.l.b16 %v1061
        %v5044 = vunpack.c.h.b16 %v1061
        %v5045 = vunpack.c.l.b16 %v1062
        %v5046 = vunpack.c.h.b16 %v1062
        %v5047 = vunpack.c.l.b16 %v1063
        %v5048 = vunpack.c.h.b16 %v1063
        %v5049 = vunpack.c.l.b16 %v1064
        %v5050 = vunpack.c.h.b16 %v1064
        %v5051 = vunpack.c.l.b16 %v1065
        %v5052 = vunpack.c.h.b16 %v1065
        %v5053 = vunpack.c.l.b16 %v1066
        %v5054 = vunpack.c.h.b16 %v1066
        %v5055 = vunpack.c.l.b16 %v1067
        %v5056 = vunpack.c.h.b16 %v1067
        %v5057 = vunpack.c.l.b16 %v1068
        %v5058 = vunpack.c.h.b16 %v1068
        %v5059 = vunpack.c.l.b16 %v1069
        %v5060 = vunpack.c.h.b16 %v1069
        %v5061 = vunpack.c.l.b16 %v1070
        %v5062 = vunpack.c.h.b16 %v1070
        %v5063 = vunpack.c.l.b16 %v1071
        %v5064 = vunpack.c.h.b16 %v1071
        %v5065 = vunpack.c.l.b16 %v1072
        %v5066 = vunpack.c.h.b16 %v1072
        %v5067 = vunpack.c.l.b16 %v1073
        %v5068 = vunpack.c.h.b16 %v1073
        %v5069 = vunpack.c.l.b16 %v1074
        %v5070 = vunpack.c.h.b16 %v1074
        %v5071 = vunpack.c.l.b16 %v1075
        %v5072 = vunpack.c.h.b16 %v1075
        %v5073 = vunpack.c.l.b16 %v1076
        %v5074 = vunpack.c.h.b16 %v1076
        %v5075 = vunpack.c.l.b16 %v1077
        %v5076 = vunpack.c.h.b16 %v1077
        %v5077 = vunpack.c.l.b16 %v1078
        %v5078 = vunpack.c.h.b16 %v1078
        %v5079 = vunpack.c.l.b16 %v1079
        %v5080 = vunpack.c.h.b16 %v1079
        %v5081 = vunpack.c.l.b16 %v1080
        %v5082 = vunpack.c.h.b16 %v1080
        %v5083 = vunpack.c.l.b16 %v1081
        %v5084 = vunpack.c.h.b16 %v1081
        %v5085 = vunpack.c.l.b16 %v1082
        %v5086 = vunpack.c.h.b16 %v1082
        %v5087 = vunpack.c.l.b16 %v1083
        %v5088 = vunpack.c.h.b16 %v1083
        %v5089 = vunpack.c.l.b16 %v1084
        %v5090 = vunpack.c.h.b16 %v1084
        %v5091 = vunpack.c.l.b16 %v1085
        %v5092 = vunpack.c.h.b16 %v1085
        %v5093 = vunpack.c.l.b16 %v1086
        %v5094 = vunpack.c.h.b16 %v1086
        %v5095 = vunpack.c.l.b16 %v1087
        %v5096 = vunpack.c.h.b16 %v1087
        %v5097 = vunpack.c.l.b16 %v1088
        %v5098 = vunpack.c.h.b16 %v1088
        %v5099 = vunpack.c.l.b16 %v1089
        %v5100 = vunpack.c.h.b16 %v1089
        %v5101 = vunpack.c.l.b16 %v1090
        %v5102 = vunpack.c.h.b16 %v1090
        %v5103 = vunpack.c.l.b16 %v1091
        %v5104 = vunpack.c.h.b16 %v1091
        %v5105 = vunpack.c.l.b16 %v1092
        %v5106 = vunpack.c.h.b16 %v1092
        %v5107 = vunpack.c.l.b16 %v1093
        %v5108 = vunpack.c.h.b16 %v1093
        %v5109 = vunpack.c.l.b16 %v1094
        %v5110 = vunpack.c.h.b16 %v1094
        %v5111 = vunpack.c.l.b16 %v1095
        %v5112 = vunpack.c.h.b16 %v1095
        %v5113 = vunpack.c.l.b16 %v1096
        %v5114 = vunpack.c.h.b16 %v1096
        %v5115 = vunpack.c.l.b16 %v1097
        %v5116 = vunpack.c.h.b16 %v1097
        %v5117 = vunpack.c.l.b16 %v1098
        %v5118 = vunpack.c.h.b16 %v1098
        %v5119 = vunpack.c.l.b16 %v1099
        %v5120 = vunpack.c.h.b16 %v1099
        %v5121 = vunpack.c.l.b16 %v1100
        %v5122 = vunpack.c.h.b16 %v1100
        %v5123 = vunpack.c.l.b16 %v1101
        %v5124 = vunpack.c.h.b16 %v1101
        %v5125 = vunpack.c.l.b16 %v1102
        %v5126 = vunpack.c.h.b16 %v1102
        %v5127 = vunpack.c.l.b16 %v1103
        %v5128 = vunpack.c.h.b16 %v1103
        %v5129 = vunpack.c.l.b16 %v1104
        %v5130 = vunpack.c.h.b16 %v1104
        %v5131 = vunpack.c.l.b16 %v1105
        %v5132 = vunpack.c.h.b16 %v1105
        %v5133 = vunpack.c.l.b16 %v1106
        %v5134 = vunpack.c.h.b16 %v1106
        %v5135 = vunpack.c.l.b16 %v1107
        %v5136 = vunpack.c.h.b16 %v1107
        %v5137 = vunpack.c.l.b16 %v1108
        %v5138 = vunpack.c.h.b16 %v1108
        %v5139 = vunpack.c.l.b16 %v1109
        %v5140 = vunpack.c.h.b16 %v1109
        %v5141 = vunpack.c.l.b16 %v1110
        %v5142 = vunpack.c.h.b16 %v1110
        %v5143 = vunpack.c.l.b16 %v1111
        %v5144 = vunpack.c.h.b16 %v1111
        %v5145 = vunpack.c.l.b16 %v1112
        %v5146 = vunpack.c.h.b16 %v1112
        %v5147 = vunpack.c.l.b16 %v1113
        %v5148 = vunpack.c.h.b16 %v1113
        %v5149 = vunpack.c.l.b16 %v1114
        %v5150 = vunpack.c.h.b16 %v1114
        %v5151 = vunpack.c.l.b16 %v1115
        %v5152 = vunpack.c.h.b16 %v1115
        %v5153 = vunpack.c.l.b16 %v1116
        %v5154 = vunpack.c.h.b16 %v1116
        %v5155 = vunpack.c.l.b16 %v1117
        %v5156 = vunpack.c.h.b16 %v1117
        %v5157 = vunpack.c.l.b16 %v1118
        %v5158 = vunpack.c.h.b16 %v1118
        %v5159 = vunpack.c.l.b16 %v1119
        %v5160 = vunpack.c.h.b16 %v1119
        %v5161 = vunpack.c.l.b16 %v1120
        %v5162 = vunpack.c.h.b16 %v1120
        %v5163 = vunpack.c.l.b16 %v1121
        %v5164 = vunpack.c.h.b16 %v1121
        %v5165 = vunpack.c.l.b16 %v1122
        %v5166 = vunpack.c.h.b16 %v1122
        %v5167 = vunpack.c.l.b16 %v1123
        %v5168 = vunpack.c.h.b16 %v1123
        %v5169 = vunpack.c.l.b16 %v1124
        %v5170 = vunpack.c.h.b16 %v1124
        %v5171 = vunpack.c.l.b16 %v1125
        %v5172 = vunpack.c.h.b16 %v1125
        %v5173 = vunpack.c.l.b16 %v1126
        %v5174 = vunpack.c.h.b16 %v1126
        %v5175 = vunpack.c.l.b16 %v1127
        %v5176 = vunpack.c.h.b16 %v1127
        %v5177 = vunpack.c.l.b16 %v1128
        %v5178 = vunpack.c.h.b16 %v1128
        %v5179 = vunpack.c.l.b16 %v1129
        %v5180 = vunpack.c.h.b16 %v1129
        %v5181 = vunpack.c.l.b16 %v1130
        %v5182 = vunpack.c.h.b16 %v1130
        %v5183 = vunpack.c.l.b16 %v1131
        %v5184 = vunpack.c.h.b16 %v1131
        %v5185 = vunpack.c.l.b16 %v1132
        %v5186 = vunpack.c.h.b16 %v1132
        %v5187 = vunpack.c.l.b16 %v1133
        %v5188 = vunpack.c.h.b16 %v1133
        %v5189 = vunpack.c.l.b16 %v1134
        %v5190 = vunpack.c.h.b16 %v1134
        %v5191 = vunpack.c.l.b16 %v1135
        %v5192 = vunpack.c.h.b16 %v1135
        %v5193 = vunpack.c.l.b16 %v1136
        %v5194 = vunpack.c.h.b16 %v1136
        %v5195 = vunpack.c.l.b16 %v1137
        %v5196 = vunpack.c.h.b16 %v1137
        %v5197 = vunpack.c.l.b16 %v1138
        %v5198 = vunpack.c.h.b16 %v1138
        %v5199 = vunpack.c.l.b16 %v1139
        %v5200 = vunpack.c.h.b16 %v1139
        %v5201 = vunpack.c.l.b16 %v1140
        %v5202 = vunpack.c.h.b16 %v1140
        %v5203 = vunpack.c.l.b16 %v1141
        %v5204 = vunpack.c.h.b16 %v1141
        %v5205 = vunpack.c.l.b16 %v1142
        %v5206 = vunpack.c.h.b16 %v1142
        %v5207 = vunpack.c.l.b16 %v1143
        %v5208 = vunpack.c.h.b16 %v1143
        %v5209 = vunpack.c.l.b16 %v1144
        %v5210 = vunpack.c.h.b16 %v1144
        %v5211 = vunpack.c.l.b16 %v1145
        %v5212 = vunpack.c.h.b16 %v1145
        %v5213 = vunpack.c.l.b16 %v1146
        %v5214 = vunpack.c.h.b16 %v1146
        %v5215 = vunpack.c.l.b16 %v1147
        %v5216 = vunpack.c.h.b16 %v1147
        %v5217 = vunpack.c.l.b16 %v1148
        %v5218 = vunpack.c.h.b16 %v1148
        %v5219 = vunpack.c.l.b16 %v1149
        %v5220 = vunpack.c.h.b16 %v1149
        %v5221 = vunpack.c.l.b16 %v1150
        %v5222 = vunpack.c.h.b16 %v1150
        %v5223 = vunpack.c.l.b16 %v1151
        %v5224 = vunpack.c.h.b16 %v1151
        %v5225 = vunpack.c.l.b16 %v1152
        %v5226 = vunpack.c.h.b16 %v1152
        %v5227 = vunpack.c.l.b16 %v1153
        %v5228 = vunpack.c.h.b16 %v1153
        %v5229 = vunpack.c.l.b16 %v1154
        %v5230 = vunpack.c.h.b16 %v1154
        %v5231 = vunpack.c.l.b16 %v1155
        %v5232 = vunpack.c.h.b16 %v1155
        %v5233 = vunpack.c.l.b16 %v1156
        %v5234 = vunpack.c.h.b16 %v1156
        %v5235 = vunpack.c.l.b16 %v1157
        %v5236 = vunpack.c.h.b16 %v1157
        %v5237 = vunpack.c.l.b16 %v1158
        %v5238 = vunpack.c.h.b16 %v1158
        %v5239 = vunpack.c.l.b16 %v1159
        %v5240 = vunpack.c.h.b16 %v1159
        %v5241 = vunpack.c.l.b16 %v1160
        %v5242 = vunpack.c.h.b16 %v1160
        %v5243 = vunpack.c.l.b16 %v1161
        %v5244 = vunpack.c.h.b16 %v1161
        %v5245 = vunpack.c.l.b16 %v1162
        %v5246 = vunpack.c.h.b16 %v1162
        %v5247 = vunpack.c.l.b16 %v1163
        %v5248 = vunpack.c.h.b16 %v1163
        %v5249 = vunpack.c.l.b16 %v1164
        %v5250 = vunpack.c.h.b16 %v1164
        %v5251 = vunpack.c.l.b16 %v1165
        %v5252 = vunpack.c.h.b16 %v1165
        %v5253 = vunpack.c.l.b16 %v1166
        %v5254 = vunpack.c.h.b16 %v1166
        %v5255 = vunpack.c.l.b16 %v1167
        %v5256 = vunpack.c.h.b16 %v1167
        %v5257 = vunpack.c.l.b16 %v1168
        %v5258 = vunpack.c.h.b16 %v1168
        %v5259 = vunpack.c.l.b16 %v1169
        %v5260 = vunpack.c.h.b16 %v1169
        %v5261 = vunpack.c.l.b16 %v1170
        %v5262 = vunpack.c.h.b16 %v1170
        %v5263 = vunpack.c.l.b16 %v1171
        %v5264 = vunpack.c.h.b16 %v1171
        %v5265 = vunpack.c.l.b16 %v1172
        %v5266 = vunpack.c.h.b16 %v1172
        %v5267 = vunpack.c.l.b16 %v1173
        %v5268 = vunpack.c.h.b16 %v1173
        %v5269 = vunpack.c.l.b16 %v1174
        %v5270 = vunpack.c.h.b16 %v1174
        %v5271 = vunpack.c.l.b16 %v1175
        %v5272 = vunpack.c.h.b16 %v1175
        %v5273 = vunpack.c.l.b16 %v1176
        %v5274 = vunpack.c.h.b16 %v1176
        %v5275 = vunpack.c.l.b16 %v1177
        %v5276 = vunpack.c.h.b16 %v1177
        %v5277 = vunpack.c.l.b16 %v1178
        %v5278 = vunpack.c.h.b16 %v1178
        %v5279 = vunpack.c.l.b16 %v1179
        %v5280 = vunpack.c.h.b16 %v1179
        %v5281 = vunpack.c.l.b16 %v1180
        %v5282 = vunpack.c.h.b16 %v1180
        %v5283 = vunpack.c.l.b16 %v1181
        %v5284 = vunpack.c.h.b16 %v1181
        %v5285 = vunpack.c.l.b16 %v1182
        %v5286 = vunpack.c.h.b16 %v1182
        %v5287 = vunpack.c.l.b16 %v1183
        %v5288 = vunpack.c.h.b16 %v1183
        %v5289 = vunpack.c.l.b16 %v1184
        %v5290 = vunpack.c.h.b16 %v1184
        %v5291 = vunpack.c.l.b16 %v1185
        %v5292 = vunpack.c.h.b16 %v1185
        %v5293 = vunpack.c.l.b16 %v1186
        %v5294 = vunpack.c.h.b16 %v1186
        %v5295 = vunpack.c.l.b16 %v1187
        %v5296 = vunpack.c.h.b16 %v1187
        %v5297 = vunpack.c.l.b16 %v1188
        %v5298 = vunpack.c.h.b16 %v1188
        %v5299 = vunpack.c.l.b16 %v1189
        %v5300 = vunpack.c.h.b16 %v1189
        %v5301 = vunpack.c.l.b16 %v1190
        %v5302 = vunpack.c.h.b16 %v1190
        %v5303 = vunpack.c.l.b16 %v1191
        %v5304 = vunpack.c.h.b16 %v1191
        %v5305 = vunpack.c.l.b16 %v1192
        %v5306 = vunpack.c.h.b16 %v1192
        %v5307 = vunpack.c.l.b16 %v1193
        %v5308 = vunpack.c.h.b16 %v1193
        %v5309 = vunpack.c.l.b16 %v1194
        %v5310 = vunpack.c.h.b16 %v1194
        %v5311 = vunpack.c.l.b16 %v1195
        %v5312 = vunpack.c.h.b16 %v1195
        %v5313 = vunpack.c.l.b16 %v1196
        %v5314 = vunpack.c.h.b16 %v1196
        %v5315 = vunpack.c.l.b16 %v1197
        %v5316 = vunpack.c.h.b16 %v1197
        %v5317 = vunpack.c.l.b16 %v1198
        %v5318 = vunpack.c.h.b16 %v1198
        %v5319 = vunpack.c.l.b16 %v1199
        %v5320 = vunpack.c.h.b16 %v1199
        %v5321 = vunpack.c.l.b16 %v1200
        %v5322 = vunpack.c.h.b16 %v1200
        %v5323 = vunpack.c.l.b16 %v1201
        %v5324 = vunpack.c.h.b16 %v1201
        %v5325 = vunpack.c.l.b16 %v1202
        %v5326 = vunpack.c.h.b16 %v1202
        %v5327 = vunpack.c.l.b16 %v1203
        %v5328 = vunpack.c.h.b16 %v1203
        %v5329 = vunpack.c.l.b16 %v1204
        %v5330 = vunpack.c.h.b16 %v1204
        %v5331 = vunpack.c.l.b16 %v1205
        %v5332 = vunpack.c.h.b16 %v1205
        %v5333 = vunpack.c.l.b16 %v1206
        %v5334 = vunpack.c.h.b16 %v1206
        %v5335 = vunpack.c.l.b16 %v1207
        %v5336 = vunpack.c.h.b16 %v1207
        %v5337 = vunpack.c.l.b16 %v1208
        %v5338 = vunpack.c.h.b16 %v1208
        %v5339 = vunpack.c.l.b16 %v1209
        %v5340 = vunpack.c.h.b16 %v1209
        %v5341 = vunpack.c.l.b16 %v1210
        %v5342 = vunpack.c.h.b16 %v1210
        %v5343 = vunpack.c.l.b16 %v1211
        %v5344 = vunpack.c.h.b16 %v1211
        %v5345 = vunpack.c.l.b16 %v1212
        %v5346 = vunpack.c.h.b16 %v1212
        %v5347 = vunpack.c.l.b16 %v1213
        %v5348 = vunpack.c.h.b16 %v1213
        %v5349 = vunpack.c.l.b16 %v1214
        %v5350 = vunpack.c.h.b16 %v1214
        %v5351 = vunpack.c.l.b16 %v1215
        %v5352 = vunpack.c.h.b16 %v1215
        %v5353 = vunpack.c.l.b16 %v1216
        %v5354 = vunpack.c.h.b16 %v1216
        %v5355 = vunpack.c.l.b16 %v1217
        %v5356 = vunpack.c.h.b16 %v1217
        %v5357 = vunpack.c.l.b16 %v1218
        %v5358 = vunpack.c.h.b16 %v1218
        %v5359 = vunpack.c.l.b16 %v1219
        %v5360 = vunpack.c.h.b16 %v1219
        %v5361 = vunpack.c.l.b16 %v1220
        %v5362 = vunpack.c.h.b16 %v1220
        %v5363 = vunpack.c.l.b16 %v1221
        %v5364 = vunpack.c.h.b16 %v1221
        %v5365 = vunpack.c.l.b16 %v1222
        %v5366 = vunpack.c.h.b16 %v1222
        %v5367 = vunpack.c.l.b16 %v1223
        %v5368 = vunpack.c.h.b16 %v1223
        %v5369 = vunpack.c.l.b16 %v1224
        %v5370 = vunpack.c.h.b16 %v1224
        %v5371 = vunpack.c.l.b16 %v1225
        %v5372 = vunpack.c.h.b16 %v1225
        %v5373 = vunpack.c.l.b16 %v1226
        %v5374 = vunpack.c.h.b16 %v1226
        %v5375 = vunpack.c.l.b16 %v1227
        %v5376 = vunpack.c.h.b16 %v1227
        %v5377 = vunpack.c.l.b16 %v1228
        %v5378 = vunpack.c.h.b16 %v1228
        %v5379 = vunpack.c.l.b16 %v1229
        %v5380 = vunpack.c.h.b16 %v1229
        %v5381 = vunpack.c.l.b16 %v1230
        %v5382 = vunpack.c.h.b16 %v1230
        %v5383 = vunpack.c.l.b16 %v1231
        %v5384 = vunpack.c.h.b16 %v1231
        %v5385 = vunpack.c.l.b16 %v1232
        %v5386 = vunpack.c.h.b16 %v1232
        %v5387 = vunpack.c.l.b16 %v1233
        %v5388 = vunpack.c.h.b16 %v1233
        %v5389 = vunpack.c.l.b16 %v1234
        %v5390 = vunpack.c.h.b16 %v1234
        %v5391 = vunpack.c.l.b16 %v1235
        %v5392 = vunpack.c.h.b16 %v1235
        %v5393 = vunpack.c.l.b16 %v1236
        %v5394 = vunpack.c.h.b16 %v1236
        %v5395 = vunpack.c.l.b16 %v1237
        %v5396 = vunpack.c.h.b16 %v1237
        %v5397 = vunpack.c.l.b16 %v1238
        %v5398 = vunpack.c.h.b16 %v1238
        %v5399 = vunpack.c.l.b16 %v1239
        %v5400 = vunpack.c.h.b16 %v1239
        %v5401 = vunpack.c.l.b16 %v1240
        %v5402 = vunpack.c.h.b16 %v1240
        %v5403 = vunpack.c.l.b16 %v1241
        %v5404 = vunpack.c.h.b16 %v1241
        %v5405 = vunpack.c.l.b16 %v1242
        %v5406 = vunpack.c.h.b16 %v1242
        %v5407 = vunpack.c.l.b16 %v1243
        %v5408 = vunpack.c.h.b16 %v1243
        %v5409 = vunpack.c.l.b16 %v1244
        %v5410 = vunpack.c.h.b16 %v1244
        %v5411 = vunpack.c.l.b16 %v1245
        %v5412 = vunpack.c.h.b16 %v1245
        %v5413 = vunpack.c.l.b16 %v1246
        %v5414 = vunpack.c.h.b16 %v1246
        %v5415 = vunpack.c.l.b16 %v1247
        %v5416 = vunpack.c.h.b16 %v1247
        %v5417 = vunpack.c.l.b16 %v1248
        %v5418 = vunpack.c.h.b16 %v1248
        %v5419 = vunpack.c.l.b16 %v1249
        %v5420 = vunpack.c.h.b16 %v1249
        %v5421 = vunpack.c.l.b16 %v1250
        %v5422 = vunpack.c.h.b16 %v1250
        %v5423 = vunpack.c.l.b16 %v1251
        %v5424 = vunpack.c.h.b16 %v1251
        %v5425 = vunpack.c.l.b16 %v1252
        %v5426 = vunpack.c.h.b16 %v1252
        %v5427 = vunpack.c.l.b16 %v1253
        %v5428 = vunpack.c.h.b16 %v1253
        %v5429 = vunpack.c.l.b16 %v1254
        %v5430 = vunpack.c.h.b16 %v1254
        %v5431 = vunpack.c.l.b16 %v1255
        %v5432 = vunpack.c.h.b16 %v1255
        %v5433 = vunpack.c.l.b16 %v1256
        %v5434 = vunpack.c.h.b16 %v1256
        %v5435 = vunpack.c.l.b16 %v1257
        %v5436 = vunpack.c.h.b16 %v1257
        %v5437 = vunpack.c.l.b16 %v1258
        %v5438 = vunpack.c.h.b16 %v1258
        %v5439 = vunpack.c.l.b16 %v1259
        %v5440 = vunpack.c.h.b16 %v1259
        %v5441 = vunpack.c.l.b16 %v1260
        %v5442 = vunpack.c.h.b16 %v1260
        %v5443 = vunpack.c.l.b16 %v1261
        %v5444 = vunpack.c.h.b16 %v1261
        %v5445 = vunpack.c.l.b16 %v1262
        %v5446 = vunpack.c.h.b16 %v1262
        %v5447 = vunpack.c.l.b16 %v1263
        %v5448 = vunpack.c.h.b16 %v1263
        %v5449 = vunpack.c.l.b16 %v1264
        %v5450 = vunpack.c.h.b16 %v1264
        %v5451 = vunpack.c.l.b16 %v1265
        %v5452 = vunpack.c.h.b16 %v1265
        %v5453 = vunpack.c.l.b16 %v1266
        %v5454 = vunpack.c.h.b16 %v1266
        %v5455 = vunpack.c.l.b16 %v1267
        %v5456 = vunpack.c.h.b16 %v1267
        %v5457 = vunpack.c.l.b16 %v1268
        %v5458 = vunpack.c.h.b16 %v1268
        %v5459 = vunpack.c.l.b16 %v1269
        %v5460 = vunpack.c.h.b16 %v1269
        %v5461 = vunpack.c.l.b16 %v1270
        %v5462 = vunpack.c.h.b16 %v1270
        %v5463 = vunpack.c.l.b16 %v1271
        %v5464 = vunpack.c.h.b16 %v1271
        %v5465 = vunpack.c.l.b16 %v1272
        %v5466 = vunpack.c.h.b16 %v1272
        %v5467 = vunpack.c.l.b16 %v1273
        %v5468 = vunpack.c.h.b16 %v1273
        %v5469 = vunpack.c.l.b16 %v1274
        %v5470 = vunpack.c.h.b16 %v1274
        %v5471 = vunpack.c.l.b16 %v1275
        %v5472 = vunpack.c.h.b16 %v1275
        %v5473 = vunpack.c.l.b16 %v1276
        %v5474 = vunpack.c.h.b16 %v1276
        %v5475 = vunpack.c.l.b16 %v1277
        %v5476 = vunpack.c.h.b16 %v1277
        %v5477 = vunpack.c.l.b16 %v1278
        %v5478 = vunpack.c.h.b16 %v1278
        %v5479 = vunpack.c.l.b16 %v1279
        %v5480 = vunpack.c.h.b16 %v1279
        %v5481 = vunpack.c.l.b16 %v1280
        %v5482 = vunpack.c.h.b16 %v1280
        %v5483 = vunpack.c.l.b16 %v1281
        %v5484 = vunpack.c.h.b16 %v1281
        %v5485 = vunpack.c.l.b16 %v1282
        %v5486 = vunpack.c.h.b16 %v1282
        %v5487 = vunpack.c.l.b16 %v1283
        %v5488 = vunpack.c.h.b16 %v1283
        %v5489 = vunpack.c.l.b16 %v1284
        %v5490 = vunpack.c.h.b16 %v1284
        %v5491 = vunpack.c.l.b16 %v1285
        %v5492 = vunpack.c.h.b16 %v1285
        %v5493 = vunpack.c.l.b16 %v1286
        %v5494 = vunpack.c.h.b16 %v1286
        %v5495 = vunpack.c.l.b16 %v1287
        %v5496 = vunpack.c.h.b16 %v1287
        %v5497 = vunpack.c.l.b16 %v1288
        %v5498 = vunpack.c.h.b16 %v1288
        %v5499 = vunpack.c.l.b16 %v1289
        %v5500 = vunpack.c.h.b16 %v1289
        %v5501 = vunpack.c.l.b16 %v1290
        %v5502 = vunpack.c.h.b16 %v1290
        %v5503 = vunpack.c.l.b16 %v1291
        %v5504 = vunpack.c.h.b16 %v1291
        %v5505 = vunpack.c.l.b16 %v1292
        %v5506 = vunpack.c.h.b16 %v1292
        %v5507 = vunpack.c.l.b16 %v1293
        %v5508 = vunpack.c.h.b16 %v1293
        %v5509 = vunpack.c.l.b16 %v1294
        %v5510 = vunpack.c.h.b16 %v1294
        %v5511 = vunpack.c.l.b16 %v1295
        %v5512 = vunpack.c.h.b16 %v1295
        %v5513 = vunpack.c.l.b16 %v1296
        %v5514 = vunpack.c.h.b16 %v1296
        %v5515 = vunpack.c.l.b16 %v1297
        %v5516 = vunpack.c.h.b16 %v1297
        %v5517 = vunpack.c.l.b16 %v1298
        %v5518 = vunpack.c.h.b16 %v1298
        %v5519 = vunpack.c.l.b16 %v1299
        %v5520 = vunpack.c.h.b16 %v1299
        %v5521 = vunpack.c.l.b16 %v1300
        %v5522 = vunpack.c.h.b16 %v1300
        %v5523 = vunpack.c.l.b16 %v1301
        %v5524 = vunpack.c.h.b16 %v1301
        %v5525 = vunpack.c.l.b16 %v1302
        %v5526 = vunpack.c.h.b16 %v1302
        %v5527 = vunpack.c.l.b16 %v1303
        %v5528 = vunpack.c.h.b16 %v1303
        %v5529 = vunpack.c.l.b16 %v1304
        %v5530 = vunpack.c.h.b16 %v1304
        %v5531 = vunpack.c.l.b16 %v1305
        %v5532 = vunpack.c.h.b16 %v1305
        %v5533 = vunpack.c.l.b16 %v1306
        %v5534 = vunpack.c.h.b16 %v1306
        %v5535 = vunpack.c.l.b16 %v1307
        %v5536 = vunpack.c.h.b16 %v1307
        %v5537 = vunpack.c.l.b16 %v1308
        %v5538 = vunpack.c.h.b16 %v1308
        %v5539 = vunpack.c.l.b16 %v1309
        %v5540 = vunpack.c.h.b16 %v1309
        %v5541 = vunpack.c.l.b16 %v1310
        %v5542 = vunpack.c.h.b16 %v1310
        %v5543 = vunpack.c.l.b16 %v1311
        %v5544 = vunpack.c.h.b16 %v1311
        %v5545 = vunpack.c.l.b16 %v1312
        %v5546 = vunpack.c.h.b16 %v1312
        %v5547 = vunpack.c.l.b16 %v1313
        %v5548 = vunpack.c.h.b16 %v1313
        %v5549 = vunpack.c.l.b16 %v1314
        %v5550 = vunpack.c.h.b16 %v1314
        %v5551 = vunpack.c.l.b16 %v1315
        %v5552 = vunpack.c.h.b16 %v1315
        %v5553 = vunpack.c.l.b16 %v1316
        %v5554 = vunpack.c.h.b16 %v1316
        %v5555 = vunpack.c.l.b16 %v1317
        %v5556 = vunpack.c.h.b16 %v1317
        %v5557 = vunpack.c.l.b16 %v1318
        %v5558 = vunpack.c.h.b16 %v1318
        %v5559 = vunpack.c.l.b16 %v1319
        %v5560 = vunpack.c.h.b16 %v1319
        %v5561 = vunpack.c.l.b16 %v1320
        %v5562 = vunpack.c.h.b16 %v1320
        %v5563 = vunpack.c.l.b16 %v1321
        %v5564 = vunpack.c.h.b16 %v1321
        %v5565 = vunpack.c.l.b16 %v1322
        %v5566 = vunpack.c.h.b16 %v1322
        %v5567 = vunpack.c.l.b16 %v1323
        %v5568 = vunpack.c.h.b16 %v1323
        %v5569 = vunpack.c.l.b16 %v1324
        %v5570 = vunpack.c.h.b16 %v1324
        %v5571 = vunpack.c.l.b16 %v1325
        %v5572 = vunpack.c.h.b16 %v1325
        %v5573 = vunpack.c.l.b16 %v1326
        %v5574 = vunpack.c.h.b16 %v1326
        %v5575 = vunpack.c.l.b16 %v1327
        %v5576 = vunpack.c.h.b16 %v1327
        %v5577 = vunpack.c.l.b16 %v1328
        %v5578 = vunpack.c.h.b16 %v1328
        %v5579 = vunpack.c.l.b16 %v1329
        %v5580 = vunpack.c.h.b16 %v1329
        %v5581 = vunpack.c.l.b16 %v1330
        %v5582 = vunpack.c.h.b16 %v1330
        %v5583 = vunpack.c.l.b16 %v1331
        %v5584 = vunpack.c.h.b16 %v1331
        %v5585 = vunpack.c.l.b16 %v1332
        %v5586 = vunpack.c.h.b16 %v1332
        %v5587 = vunpack.c.l.b16 %v1333
        %v5588 = vunpack.c.h.b16 %v1333
        %v5589 = vunpack.c.l.b16 %v1334
        %v5590 = vunpack.c.h.b16 %v1334
        %v5591 = vunpack.c.l.b16 %v1335
        %v5592 = vunpack.c.h.b16 %v1335
        %v5593 = vunpack.c.l.b16 %v1336
        %v5594 = vunpack.c.h.b16 %v1336
        %v5595 = vunpack.c.l.b16 %v1337
        %v5596 = vunpack.c.h.b16 %v1337
        %v5597 = vunpack.c.l.b16 %v1338
        %v5598 = vunpack.c.h.b16 %v1338
        %v5599 = vunpack.c.l.b16 %v1339
        %v5600 = vunpack.c.h.b16 %v1339
        %v5601 = vunpack.c.l.b16 %v1340
        %v5602 = vunpack.c.h.b16 %v1340
        %v5603 = vunpack.c.l.b16 %v1341
        %v5604 = vunpack.c.h.b16 %v1341
        %v5605 = vunpack.c.l.b16 %v1342
        %v5606 = vunpack.c.h.b16 %v1342
        %v5607 = vunpack.c.l.b16 %v1343
        %v5608 = vunpack.c.h.b16 %v1343
        %v5609 = vunpack.c.l.b16 %v1344
        %v5610 = vunpack.c.h.b16 %v1344
        %v5611 = vunpack.c.l.b16 %v1345
        %v5612 = vunpack.c.h.b16 %v1345
        %v5613 = vunpack.c.l.b16 %v1346
        %v5614 = vunpack.c.h.b16 %v1346
        %v5615 = vunpack.c.l.b16 %v1347
        %v5616 = vunpack.c.h.b16 %v1347
        %v5617 = vunpack.c.l.b16 %v1348
        %v5618 = vunpack.c.h.b16 %v1348
        %v5619 = vunpack.c.l.b16 %v1349
        %v5620 = vunpack.c.h.b16 %v1349
        %v5621 = vunpack.c.l.b16 %v1350
        %v5622 = vunpack.c.h.b16 %v1350
        %v5623 = vunpack.c.l.b16 %v1351
        %v5624 = vunpack.c.h.b16 %v1351
        %v5625 = vunpack.c.l.b16 %v1352
        %v5626 = vunpack.c.h.b16 %v1352
        %v5627 = vunpack.c.l.b16 %v1353
        %v5628 = vunpack.c.h.b16 %v1353
        %v5629 = vunpack.c.l.b16 %v1354
        %v5630 = vunpack.c.h.b16 %v1354
        %v5631 = vunpack.c.l.b16 %v1355
        %v5632 = vunpack.c.h.b16 %v1355
        %v5633 = vunpack.c.l.b16 %v1356
        %v5634 = vunpack.c.h.b16 %v1356
        %v5635 = vunpack.c.l.b16 %v1357
        %v5636 = vunpack.c.h.b16 %v1357
        %v5637 = vunpack.c.l.b16 %v1358
        %v5638 = vunpack.c.h.b16 %v1358
        %v5639 = vunpack.c.l.b16 %v1359
        %v5640 = vunpack.c.h.b16 %v1359
        %v5641 = vunpack.c.l.b16 %v1360
        %v5642 = vunpack.c.h.b16 %v1360
        %v5643 = vunpack.c.l.b16 %v1361
        %v5644 = vunpack.c.h.b16 %v1361
        %v5645 = vunpack.c.l.b16 %v1362
        %v5646 = vunpack.c.h.b16 %v1362
        %v5647 = vunpack.c.l.b16 %v1363
        %v5648 = vunpack.c.h.b16 %v1363
        %v5649 = vunpack.c.l.b16 %v1364
        %v5650 = vunpack.c.h.b16 %v1364
        %v5651 = vunpack.c.l.b16 %v1365
        %v5652 = vunpack.c.h.b16 %v1365
        %v5653 = vunpack.c.l.b16 %v1366
        %v5654 = vunpack.c.h.b16 %v1366
        %v5655 = vunpack.c.l.b16 %v1367
        %v5656 = vunpack.c.h.b16 %v1367
        %v5657 = vunpack.c.l.b16 %v1368
        %v5658 = vunpack.c.h.b16 %v1368
        %v5659 = vunpack.c.l.b16 %v1369
        %v5660 = vunpack.c.h.b16 %v1369
        %v5661 = vunpack.c.l.b16 %v1370
        %v5662 = vunpack.c.h.b16 %v1370
        %v5663 = vunpack.c.l.b16 %v1371
        %v5664 = vunpack.c.h.b16 %v1371
        %v5665 = vunpack.c.l.b16 %v1372
        %v5666 = vunpack.c.h.b16 %v1372
        %v5667 = vunpack.c.l.b16 %v1373
        %v5668 = vunpack.c.h.b16 %v1373
        %v5669 = vunpack.c.l.b16 %v1374
        %v5670 = vunpack.c.h.b16 %v1374
        %v5671 = vunpack.c.l.b16 %v1375
        %v5672 = vunpack.c.h.b16 %v1375
        %v5673 = vunpack.c.l.b16 %v1376
        %v5674 = vunpack.c.h.b16 %v1376
        %v5675 = vunpack.c.l.b16 %v1377
        %v5676 = vunpack.c.h.b16 %v1377
        %v5677 = vunpack.c.l.b16 %v1378
        %v5678 = vunpack.c.h.b16 %v1378
        %v5679 = vunpack.c.l.b16 %v1379
        %v5680 = vunpack.c.h.b16 %v1379
        %v5681 = vunpack.c.l.b16 %v1380
        %v5682 = vunpack.c.h.b16 %v1380
        %v5683 = vunpack.c.l.b16 %v1381
        %v5684 = vunpack.c.h.b16 %v1381
        %v5685 = vunpack.c.l.b16 %v1382
        %v5686 = vunpack.c.h.b16 %v1382
        %v5687 = vunpack.c.l.b16 %v1383
        %v5688 = vunpack.c.h.b16 %v1383
        %v5689 = vunpack.c.l.b16 %v1384
        %v5690 = vunpack.c.h.b16 %v1384
        %v5691 = vunpack.c.l.b16 %v1385
        %v5692 = vunpack.c.h.b16 %v1385
        %v5693 = vunpack.c.l.b16 %v1386
        %v5694 = vunpack.c.h.b16 %v1386
        %v5695 = vunpack.c.l.b16 %v1387
        %v5696 = vunpack.c.h.b16 %v1387
        %v5697 = vunpack.c.l.b16 %v1388
        %v5698 = vunpack.c.h.b16 %v1388
        %v5699 = vunpack.c.l.b16 %v1389
        %v5700 = vunpack.c.h.b16 %v1389
        %v5701 = vunpack.c.l.b16 %v1390
        %v5702 = vunpack.c.h.b16 %v1390
        %v5703 = vunpack.c.l.b16 %v1391
        %v5704 = vunpack.c.h.b16 %v1391
        %v5705 = vunpack.c.l.b16 %v1392
        %v5706 = vunpack.c.h.b16 %v1392
        %v5707 = vunpack.c.l.b16 %v1393
        %v5708 = vunpack.c.h.b16 %v1393
        %v5709 = vunpack.c.l.b16 %v1394
        %v5710 = vunpack.c.h.b16 %v1394
        %v5711 = vunpack.c.l.b16 %v1395
        %v5712 = vunpack.c.h.b16 %v1395
        %v5713 = vunpack.c.l.b16 %v1396
        %v5714 = vunpack.c.h.b16 %v1396
        %v5715 = vunpack.c.l.b16 %v1397
        %v5716 = vunpack.c.h.b16 %v1397
        %v5717 = vunpack.c.l.b16 %v1398
        %v5718 = vunpack.c.h.b16 %v1398
        %v5719 = vunpack.c.l.b16 %v1399
        %v5720 = vunpack.c.h.b16 %v1399
        %v5721 = vunpack.c.l.b16 %v1400
        %v5722 = vunpack.c.h.b16 %v1400
        %v5723 = vunpack.c.l.b16 %v1401
        %v5724 = vunpack.c.h.b16 %v1401
        %v5725 = vunpack.c.l.b16 %v1402
        %v5726 = vunpack.c.h.b16 %v1402
        %v5727 = vunpack.c.l.b16 %v1403
        %v5728 = vunpack.c.h.b16 %v1403
        %v5729 = vunpack.c.l.b16 %v1404
        %v5730 = vunpack.c.h.b16 %v1404
        %v5731 = vunpack.c.l.b16 %v1405
        %v5732 = vunpack.c.h.b16 %v1405
        %v5733 = vunpack.c.l.b16 %v1406
        %v5734 = vunpack.c.h.b16 %v1406
        %v5735 = vunpack.c.l.b16 %v1407
        %v5736 = vunpack.c.h.b16 %v1407
        %v5737 = vunpack.c.l.b16 %v1408
        %v5738 = vunpack.c.h.b16 %v1408
        %v5739 = vunpack.c.l.b16 %v1409
        %v5740 = vunpack.c.h.b16 %v1409
        %v5741 = vunpack.c.l.b16 %v1410
        %v5742 = vunpack.c.h.b16 %v1410
        %v5743 = vunpack.c.l.b16 %v1411
        %v5744 = vunpack.c.h.b16 %v1411
        %v5745 = vunpack.c.l.b16 %v1412
        %v5746 = vunpack.c.h.b16 %v1412
        %v5747 = vunpack.c.l.b16 %v1413
        %v5748 = vunpack.c.h.b16 %v1413
        %v5749 = vunpack.c.l.b16 %v1414
        %v5750 = vunpack.c.h.b16 %v1414
        %v5751 = vunpack.c.l.b16 %v1415
        %v5752 = vunpack.c.h.b16 %v1415
        %v5753 = vunpack.c.l.b16 %v1416
        %v5754 = vunpack.c.h.b16 %v1416
        %v5755 = vunpack.c.l.b16 %v1417
        %v5756 = vunpack.c.h.b16 %v1417
        %v5757 = vunpack.c.l.b16 %v1418
        %v5758 = vunpack.c.h.b16 %v1418
        %v5759 = vunpack.c.l.b16 %v1419
        %v5760 = vunpack.c.h.b16 %v1419
        %v5761 = vunpack.c.l.b16 %v1420
        %v5762 = vunpack.c.h.b16 %v1420
        %v5763 = vunpack.c.l.b16 %v1421
        %v5764 = vunpack.c.h.b16 %v1421
        %v5765 = vunpack.c.l.b16 %v1422
        %v5766 = vunpack.c.h.b16 %v1422
        %v5767 = vunpack.c.l.b16 %v1423
        %v5768 = vunpack.c.h.b16 %v1423
        %v5769 = vunpack.c.l.b16 %v1424
        %v5770 = vunpack.c.h.b16 %v1424
        %v5771 = vunpack.c.l.b16 %v1425
        %v5772 = vunpack.c.h.b16 %v1425
        %v5773 = vunpack.c.l.b16 %v1426
        %v5774 = vunpack.c.h.b16 %v1426
        %v5775 = vunpack.c.l.b16 %v1427
        %v5776 = vunpack.c.h.b16 %v1427
        %v5777 = vunpack.c.l.b16 %v1428
        %v5778 = vunpack.c.h.b16 %v1428
        %v5779 = vunpack.c.l.b16 %v1429
        %v5780 = vunpack.c.h.b16 %v1429
        %v5781 = vunpack.c.l.b16 %v1430
        %v5782 = vunpack.c.h.b16 %v1430
        %v5783 = vunpack.c.l.b16 %v1431
        %v5784 = vunpack.c.h.b16 %v1431
        %v5785 = vunpack.c.l.b16 %v1432
        %v5786 = vunpack.c.h.b16 %v1432
        %v5787 = vunpack.c.l.b16 %v1433
        %v5788 = vunpack.c.h.b16 %v1433
        %v5789 = vunpack.c.l.b16 %v1434
        %v5790 = vunpack.c.h.b16 %v1434
        %v5791 = vunpack.c.l.b16 %v1435
        %v5792 = vunpack.c.h.b16 %v1435
        %v5793 = vunpack.c.l.b16 %v1436
        %v5794 = vunpack.c.h.b16 %v1436
        %v5795 = vunpack.c.l.b16 %v1437
        %v5796 = vunpack.c.h.b16 %v1437
        %v5797 = vunpack.c.l.b16 %v1438
        %v5798 = vunpack.c.h.b16 %v1438
        %v5799 = vunpack.c.l.b16 %v1439
        %v5800 = vunpack.c.h.b16 %v1439
        %v5801 = vunpack.c.l.b16 %v1440
        %v5802 = vunpack.c.h.b16 %v1440
        %v5803 = vunpack.c.l.b16 %v1441
        %v5804 = vunpack.c.h.b16 %v1441
        %v5805 = vunpack.c.l.b16 %v1442
        %v5806 = vunpack.c.h.b16 %v1442
        %v5807 = vunpack.c.l.b16 %v1443
        %v5808 = vunpack.c.h.b16 %v1443
        %v5809 = vunpack.c.l.b16 %v1444
        %v5810 = vunpack.c.h.b16 %v1444
        %v5811 = vunpack.c.l.b16 %v1445
        %v5812 = vunpack.c.h.b16 %v1445
        %v5813 = vunpack.c.l.b16 %v1446
        %v5814 = vunpack.c.h.b16 %v1446
        %v5815 = vunpack.c.l.b16 %v1447
        %v5816 = vunpack.c.h.b16 %v1447
        %v5817 = vunpack.c.l.b16 %v1448
        %v5818 = vunpack.c.h.b16 %v1448
        %v5819 = vunpack.c.l.b16 %v1449
        %v5820 = vunpack.c.h.b16 %v1449
        %v5821 = vunpack.c.l.b16 %v1450
        %v5822 = vunpack.c.h.b16 %v1450
        %v5823 = vunpack.c.l.b16 %v1451
        %v5824 = vunpack.c.h.b16 %v1451
        %v5825 = vunpack.c.l.b16 %v1452
        %v5826 = vunpack.c.h.b16 %v1452
        %v5827 = vunpack.c.l.b16 %v1453
        %v5828 = vunpack.c.h.b16 %v1453
        %v5829 = vunpack.c.l.b16 %v1454
        %v5830 = vunpack.c.h.b16 %v1454
        %v5831 = vunpack.c.l.b16 %v1455
        %v5832 = vunpack.c.h.b16 %v1455
        %v5833 = vunpack.c.l.b16 %v1456
        %v5834 = vunpack.c.h.b16 %v1456
        %v5835 = vunpack.c.l.b16 %v1457
        %v5836 = vunpack.c.h.b16 %v1457
        %v5837 = vunpack.c.l.b16 %v1458
        %v5838 = vunpack.c.h.b16 %v1458
        %v5839 = vunpack.c.l.b16 %v1459
        %v5840 = vunpack.c.h.b16 %v1459
        %v5841 = vunpack.c.l.b16 %v1460
        %v5842 = vunpack.c.h.b16 %v1460
        %v5843 = vunpack.c.l.b16 %v1461
        %v5844 = vunpack.c.h.b16 %v1461
        %v5845 = vunpack.c.l.b16 %v1462
        %v5846 = vunpack.c.h.b16 %v1462
        %v5847 = vunpack.c.l.b16 %v1463
        %v5848 = vunpack.c.h.b16 %v1463
        %v5849 = vunpack.c.l.b16 %v1464
        %v5850 = vunpack.c.h.b16 %v1464
        %v5851 = vunpack.c.l.b16 %v1465
        %v5852 = vunpack.c.h.b16 %v1465
        %v5853 = vunpack.c.l.b16 %v1466
        %v5854 = vunpack.c.h.b16 %v1466
        %v5855 = vunpack.c.l.b16 %v1467
        %v5856 = vunpack.c.h.b16 %v1467
        %v5857 = vunpack.c.l.b16 %v1468
        %v5858 = vunpack.c.h.b16 %v1468
        %v5859 = vunpack.c.l.b16 %v1469
        %v5860 = vunpack.c.h.b16 %v1469
        %v5861 = vunpack.c.l.b16 %v1470
        %v5862 = vunpack.c.h.b16 %v1470
        %v5863 = vunpack.c.l.b16 %v1471
        %v5864 = vunpack.c.h.b16 %v1471
        %v5865 = vunpack.c.l.b16 %v1472
        %v5866 = vunpack.c.h.b16 %v1472
        %v5867 = vunpack.c.l.b16 %v1473
        %v5868 = vunpack.c.h.b16 %v1473
        %v5869 = vunpack.c.l.b16 %v1474
        %v5870 = vunpack.c.h.b16 %v1474
        %v5871 = vunpack.c.l.b16 %v1475
        %v5872 = vunpack.c.h.b16 %v1475
        %v5873 = vunpack.c.l.b16 %v1476
        %v5874 = vunpack.c.h.b16 %v1476
        %v5875 = vunpack.c.l.b16 %v1477
        %v5876 = vunpack.c.h.b16 %v1477
        %v5877 = vunpack.c.l.b16 %v1478
        %v5878 = vunpack.c.h.b16 %v1478
        %v5879 = vunpack.c.l.b16 %v1479
        %v5880 = vunpack.c.h.b16 %v1479
        %v5881 = vunpack.c.l.b16 %v1480
        %v5882 = vunpack.c.h.b16 %v1480
        %v5883 = vunpack.c.l.b16 %v1481
        %v5884 = vunpack.c.h.b16 %v1481
        %v5885 = vunpack.c.l.b16 %v1482
        %v5886 = vunpack.c.h.b16 %v1482
        %v5887 = vunpack.c.l.b16 %v1483
        %v5888 = vunpack.c.h.b16 %v1483
        %v5889 = vunpack.c.l.b16 %v1484
        %v5890 = vunpack.c.h.b16 %v1484
        %v5891 = vunpack.c.l.b16 %v1485
        %v5892 = vunpack.c.h.b16 %v1485
        %v5893 = vunpack.c.l.b16 %v1486
        %v5894 = vunpack.c.h.b16 %v1486
        %v5895 = vunpack.c.l.b16 %v1487
        %v5896 = vunpack.c.h.b16 %v1487
        %v5897 = vunpack.c.l.b16 %v1488
        %v5898 = vunpack.c.h.b16 %v1488
        %v5899 = vunpack.c.l.b16 %v1489
        %v5900 = vunpack.c.h.b16 %v1489
        %v5901 = vunpack.c.l.b16 %v1490
        %v5902 = vunpack.c.h.b16 %v1490
        %v5903 = vunpack.c.l.b16 %v1491
        %v5904 = vunpack.c.h.b16 %v1491
        %v5905 = vunpack.c.l.b16 %v1492
        %v5906 = vunpack.c.h.b16 %v1492
        %v5907 = vunpack.c.l.b16 %v1493
        %v5908 = vunpack.c.h.b16 %v1493
        %v5909 = vunpack.c.l.b16 %v1494
        %v5910 = vunpack.c.h.b16 %v1494
        %v5911 = vunpack.c.l.b16 %v1495
        %v5912 = vunpack.c.h.b16 %v1495
        %v5913 = vunpack.c.l.b16 %v1496
        %v5914 = vunpack.c.h.b16 %v1496
        %v5915 = vunpack.c.l.b16 %v1497
        %v5916 = vunpack.c.h.b16 %v1497
        %v5917 = vunpack.c.l.b16 %v1498
        %v5918 = vunpack.c.h.b16 %v1498
        %v5919 = vunpack.c.l.b16 %v1499
        %v5920 = vunpack.c.h.b16 %v1499
        %v5921 = vunpack.c.l.b16 %v1500
        %v5922 = vunpack.c.h.b16 %v1500
        %v5923 = vunpack.c.l.b16 %v1501
        %v5924 = vunpack.c.h.b16 %v1501
        %v5925 = vunpack.c.l.b16 %v1502
        %v5926 = vunpack.c.h.b16 %v1502
        %v5927 = vunpack.c.l.b16 %v1503
        %v5928 = vunpack.c.h.b16 %v1503
        %v5929 = vunpack.c.l.b16 %v1504
        %v5930 = vunpack.c.h.b16 %v1504
        %v5931 = vunpack.c.l.b16 %v1505
        %v5932 = vunpack.c.h.b16 %v1505
        %v5933 = vunpack.c.l.b16 %v1506
        %v5934 = vunpack.c.h.b16 %v1506
        %v5935 = vunpack.c.l.b16 %v1507
        %v5936 = vunpack.c.h.b16 %v1507
        %v5937 = vunpack.c.l.b16 %v1508
        %v5938 = vunpack.c.h.b16 %v1508
        %v5939 = vunpack.c.l.b16 %v1509
        %v5940 = vunpack.c.h.b16 %v1509
        %v5941 = vunpack.c.l.b16 %v1510
        %v5942 = vunpack.c.h.b16 %v1510
        %v5943 = vunpack.c.l.b16 %v1511
        %v5944 = vunpack.c.h.b16 %v1511
        %v5945 = vunpack.c.l.b16 %v1512
        %v5946 = vunpack.c.h.b16 %v1512
        %v5947 = vunpack.c.l.b16 %v1513
        %v5948 = vunpack.c.h.b16 %v1513
        %v5949 = vunpack.c.l.b16 %v1514
        %v5950 = vunpack.c.h.b16 %v1514
        %v5951 = vunpack.c.l.b16 %v1515
        %v5952 = vunpack.c.h.b16 %v1515
        %v5953 = vunpack.c.l.b16 %v1516
        %v5954 = vunpack.c.h.b16 %v1516
        %v5955 = vunpack.c.l.b16 %v1517
        %v5956 = vunpack.c.h.b16 %v1517
        %v5957 = vunpack.c.l.b16 %v1518
        %v5958 = vunpack.c.h.b16 %v1518
        %v5959 = vunpack.c.l.b16 %v1519
        %v5960 = vunpack.c.h.b16 %v1519
        %v5961 = vunpack.c.l.b16 %v1520
        %v5962 = vunpack.c.h.b16 %v1520
        %v5963 = vunpack.c.l.b16 %v1521
        %v5964 = vunpack.c.h.b16 %v1521
        %v5965 = vunpack.c.l.b16 %v1522
        %v5966 = vunpack.c.h.b16 %v1522
        %v5967 = vunpack.c.l.b16 %v1523
        %v5968 = vunpack.c.h.b16 %v1523
        %v5969 = vunpack.c.l.b16 %v1524
        %v5970 = vunpack.c.h.b16 %v1524
        %v5971 = vunpack.c.l.b16 %v1525
        %v5972 = vunpack.c.h.b16 %v1525
        %v5973 = vunpack.c.l.b16 %v1526
        %v5974 = vunpack.c.h.b16 %v1526
        %v5975 = vunpack.c.l.b16 %v1527
        %v5976 = vunpack.c.h.b16 %v1527
        %v5977 = vunpack.c.l.b16 %v1528
        %v5978 = vunpack.c.h.b16 %v1528
        %v5979 = vunpack.c.l.b16 %v1529
        %v5980 = vunpack.c.h.b16 %v1529
        %v5981 = vunpack.c.l.b16 %v1530
        %v5982 = vunpack.c.h.b16 %v1530
        %v5983 = vunpack.c.l.b16 %v1531
        %v5984 = vunpack.c.h.b16 %v1531
        %v5985 = vunpack.c.l.b16 %v1532
        %v5986 = vunpack.c.h.b16 %v1532
        %v5987 = vunpack.c.l.b16 %v1533
        %v5988 = vunpack.c.h.b16 %v1533
        %v5989 = vunpack.c.l.b16 %v1534
        %v5990 = vunpack.c.h.b16 %v1534
        %v5991 = vunpack.c.l.b16 %v1535
        %v5992 = vunpack.c.h.b16 %v1535
        %v5993 = vunpack.c.l.b16 %v1536
        %v5994 = vunpack.c.h.b16 %v1536
        %v5995 = vunpack.c.l.b16 %v1537
        %v5996 = vunpack.c.h.b16 %v1537
        %v5997 = vunpack.c.l.b16 %v1538
        %v5998 = vunpack.c.h.b16 %v1538
        %v5999 = vunpack.c.l.b16 %v1539
        %v6000 = vunpack.c.h.b16 %v1539
        %v6001 = vunpack.c.l.b16 %v1540
        %v6002 = vunpack.c.h.b16 %v1540
        %v6003 = vunpack.c.l.b16 %v1541
        %v6004 = vunpack.c.h.b16 %v1541
        %v6005 = vunpack.c.l.b16 %v1542
        %v6006 = vunpack.c.h.b16 %v1542
        %v6007 = vunpack.c.l.b16 %v1543
        %v6008 = vunpack.c.h.b16 %v1543
        %v6009 = vunpack.c.l.b16 %v1544
        %v6010 = vunpack.c.h.b16 %v1544
        %v6011 = vunpack.c.l.b16 %v1545
        %v6012 = vunpack.c.h.b16 %v1545
        %v6013 = vunpack.c.l.b16 %v1546
        %v6014 = vunpack.c.h.b16 %v1546
        %v6015 = vunpack.c.l.b16 %v1547
        %v6016 = vunpack.c.h.b16 %v1547
        %v6017 = vunpack.c.l.b16 %v1548
        %v6018 = vunpack.c.h.b16 %v1548
        %v6019 = vunpack.c.l.b16 %v1549
        %v6020 = vunpack.c.h.b16 %v1549
        %v6021 = vunpack.c.l.b16 %v1550
        %v6022 = vunpack.c.h.b16 %v1550
        %v6023 = vunpack.c.l.b16 %v1551
        %v6024 = vunpack.c.h.b16 %v1551
        %v6025 = vunpack.c.l.b16 %v1552
        %v6026 = vunpack.c.h.b16 %v1552
        %v6027 = vunpack.c.l.b16 %v1553
        %v6028 = vunpack.c.h.b16 %v1553
        %v6029 = vunpack.c.l.b16 %v1554
        %v6030 = vunpack.c.h.b16 %v1554
        %v6031 = vunpack.c.l.b16 %v1555
        %v6032 = vunpack.c.h.b16 %v1555
        %v6033 = vunpack.c.l.b16 %v1556
        %v6034 = vunpack.c.h.b16 %v1556
        %v6035 = vunpack.c.l.b16 %v1557
        %v6036 = vunpack.c.h.b16 %v1557
        %v6037 = vunpack.c.l.b16 %v1558
        %v6038 = vunpack.c.h.b16 %v1558
        %v6039 = vunpack.c.l.b16 %v1559
        %v6040 = vunpack.c.h.b16 %v1559
        %v6041 = vunpack.c.l.b16 %v1560
        %v6042 = vunpack.c.h.b16 %v1560
        %v6043 = vunpack.c.l.b16 %v1561
        %v6044 = vunpack.c.h.b16 %v1561
        %v6045 = vunpack.c.l.b16 %v1562
        %v6046 = vunpack.c.h.b16 %v1562
        %v6047 = vunpack.c.l.b16 %v1563
        %v6048 = vunpack.c.h.b16 %v1563
        %v6049 = vunpack.c.l.b16 %v1564
        %v6050 = vunpack.c.h.b16 %v1564
        %v6051 = vunpack.c.l.b16 %v1565
        %v6052 = vunpack.c.h.b16 %v1565
        %v6053 = vunpack.c.l.b16 %v1566
        %v6054 = vunpack.c.h.b16 %v1566
        %v6055 = vunpack.c.l.b16 %v1567
        %v6056 = vunpack.c.h.b16 %v1567
        %v6057 = vunpack.c.l.b16 %v1568
        %v6058 = vunpack.c.h.b16 %v1568
        %v6059 = vunpack.c.l.b16 %v1569
        %v6060 = vunpack.c.h.b16 %v1569
        %v6061 = vunpack.c.l.b16 %v1570
        %v6062 = vunpack.c.h.b16 %v1570
        %v6063 = vunpack.c.l.b16 %v1571
        %v6064 = vunpack.c.h.b16 %v1571
        %v6065 = vunpack.c.l.b16 %v1572
        %v6066 = vunpack.c.h.b16 %v1572
        %v6067 = vunpack.c.l.b16 %v1573
        %v6068 = vunpack.c.h.b16 %v1573
        %v6069 = vunpack.c.l.b16 %v1574
        %v6070 = vunpack.c.h.b16 %v1574
        %v6071 = vunpack.c.l.b16 %v1575
        %v6072 = vunpack.c.h.b16 %v1575
        %v6073 = vunpack.c.l.b16 %v1576
        %v6074 = vunpack.c.h.b16 %v1576
        %v6075 = vunpack.c.l.b16 %v1577
        %v6076 = vunpack.c.h.b16 %v1577
        %v6077 = vunpack.c.l.b16 %v1578
        %v6078 = vunpack.c.h.b16 %v1578
        %v6079 = vunpack.c.l.b16 %v1579
        %v6080 = vunpack.c.h.b16 %v1579
        %v6081 = vunpack.c.l.b16 %v1580
        %v6082 = vunpack.c.h.b16 %v1580
        %v6083 = vunpack.c.l.b16 %v1581
        %v6084 = vunpack.c.h.b16 %v1581
        %v6085 = vunpack.c.l.b16 %v1582
        %v6086 = vunpack.c.h.b16 %v1582
        %v6087 = vunpack.c.l.b16 %v1583
        %v6088 = vunpack.c.h.b16 %v1583
        %v6089 = vunpack.c.l.b16 %v1584
        %v6090 = vunpack.c.h.b16 %v1584
        %v6091 = vunpack.c.l.b16 %v1585
        %v6092 = vunpack.c.h.b16 %v1585
        %v6093 = vunpack.c.l.b16 %v1586
        %v6094 = vunpack.c.h.b16 %v1586
        %v6095 = vunpack.c.l.b16 %v1587
        %v6096 = vunpack.c.h.b16 %v1587
        %v6097 = vunpack.c.l.b16 %v1588
        %v6098 = vunpack.c.h.b16 %v1588
        %v6099 = vunpack.c.l.b16 %v1589
        %v6100 = vunpack.c.h.b16 %v1589
        %v6101 = vunpack.c.l.b16 %v1590
        %v6102 = vunpack.c.h.b16 %v1590
        %v6103 = vunpack.c.l.b16 %v1591
        %v6104 = vunpack.c.h.b16 %v1591
        %v6105 = vunpack.c.l.b16 %v1592
        %v6106 = vunpack.c.h.b16 %v1592
        %v6107 = vunpack.c.l.b16 %v1593
        %v6108 = vunpack.c.h.b16 %v1593
        %v6109 = vunpack.c.l.b16 %v1594
        %v6110 = vunpack.c.h.b16 %v1594
        %v6111 = vunpack.c.l.b16 %v1595
        %v6112 = vunpack.c.h.b16 %v1595
        %v6113 = vunpack.c.l.b16 %v1596
        %v6114 = vunpack.c.h.b16 %v1596
        %v6115 = vunpack.c.l.b16 %v1597
        %v6116 = vunpack.c.h.b16 %v1597
        %v6117 = vunpack.c.l.b16 %v1598
        %v6118 = vunpack.c.h.b16 %v1598
        %v6119 = vunpack.c.l.b16 %v1599
        %v6120 = vunpack.c.h.b16 %v1599
        %v6121 = vunpack.c.l.b16 %v1600
        %v6122 = vunpack.c.h.b16 %v1600
        %v6123 = vunpack.c.l.b16 %v1601
        %v6124 = vunpack.c.h.b16 %v1601
        %v6125 = vunpack.c.l.b16 %v1602
        %v6126 = vunpack.c.h.b16 %v1602
        %v6127 = vunpack.c.l.b16 %v1603
        %v6128 = vunpack.c.h.b16 %v1603
        %v6129 = vunpack.c.l.b16 %v1604
        %v6130 = vunpack.c.h.b16 %v1604
        %v6131 = vunpack.c.l.b16 %v1605
        %v6132 = vunpack.c.h.b16 %v1605
        %v6133 = vunpack.c.l.b16 %v1606
        %v6134 = vunpack.c.h.b16 %v1606
        %v6135 = vunpack.c.l.b16 %v1607
        %v6136 = vunpack.c.h.b16 %v1607
        %v6137 = vunpack.c.l.b16 %v1608
        %v6138 = vunpack.c.h.b16 %v1608
        %v6139 = vunpack.c.l.b16 %v1609
        %v6140 = vunpack.c.h.b16 %v1609
        %v6141 = vunpack.c.l.b16 %v1610
        %v6142 = vunpack.c.h.b16 %v1610
        %v6143 = vunpack.c.l.b16 %v1611
        %v6144 = vunpack.c.h.b16 %v1611
        %v6145 = vunpack.c.l.b16 %v1612
        %v6146 = vunpack.c.h.b16 %v1612
        %v6147 = vunpack.c.l.b16 %v1613
        %v6148 = vunpack.c.h.b16 %v1613
        %v6149 = vunpack.c.l.b16 %v1614
        %v6150 = vunpack.c.h.b16 %v1614
        %v6151 = vunpack.c.l.b16 %v1615
        %v6152 = vunpack.c.h.b16 %v1615
        %v6153 = vunpack.c.l.b16 %v1616
        %v6154 = vunpack.c.h.b16 %v1616
        %v6155 = vunpack.c.l.b16 %v1617
        %v6156 = vunpack.c.h.b16 %v1617
        %v6157 = vunpack.c.l.b16 %v1618
        %v6158 = vunpack.c.h.b16 %v1618
        %v6159 = vunpack.c.l.b16 %v1619
        %v6160 = vunpack.c.h.b16 %v1619
        %v6161 = vunpack.c.l.b16 %v1620
        %v6162 = vunpack.c.h.b16 %v1620
        %v6163 = vunpack.c.l.b16 %v1621
        %v6164 = vunpack.c.h.b16 %v1621
        %v6165 = vunpack.c.l.b16 %v1622
        %v6166 = vunpack.c.h.b16 %v1622
        %v6167 = vunpack.c.l.b16 %v1623
        %v6168 = vunpack.c.h.b16 %v1623
        %v6169 = vunpack.c.l.b16 %v1624
        %v6170 = vunpack.c.h.b16 %v1624
        %v6171 = vunpack.c.l.b16 %v1625
        %v6172 = vunpack.c.h.b16 %v1625
        %v6173 = vunpack.c.l.b16 %v1626
        %v6174 = vunpack.c.h.b16 %v1626
        %v6175 = vunpack.c.l.b16 %v1627
        %v6176 = vunpack.c.h.b16 %v1627
        %v6177 = vunpack.c.l.b16 %v1628
        %v6178 = vunpack.c.h.b16 %v1628
        %v6179 = vunpack.c.l.b16 %v1629
        %v6180 = vunpack.c.h.b16 %v1629
        %v6181 = vunpack.c.l.b16 %v1630
        %v6182 = vunpack.c.h.b16 %v1630
        %v6183 = vunpack.c.l.b16 %v1631
        %v6184 = vunpack.c.h.b16 %v1631
        %v6185 = vunpack.c.l.b16 %v1632
        %v6186 = vunpack.c.h.b16 %v1632
        %v6187 = vunpack.c.l.b16 %v1633
        %v6188 = vunpack.c.h.b16 %v1633
        %v6189 = vunpack.c.l.b16 %v1634
        %v6190 = vunpack.c.h.b16 %v1634
        %v6191 = vunpack.c.l.b16 %v1635
        %v6192 = vunpack.c.h.b16 %v1635
        %v6193 = vunpack.c.l.b16 %v1636
        %v6194 = vunpack.c.h.b16 %v1636
        %v6195 = vunpack.c.l.b16 %v1637
        %v6196 = vunpack.c.h.b16 %v1637
        %v6197 = vunpack.c.l.b16 %v1638
        %v6198 = vunpack.c.h.b16 %v1638
        %v6199 = vunpack.c.l.b16 %v1639
        %v6200 = vunpack.c.h.b16 %v1639
        %v6201 = vunpack.c.l.b16 %v1640
        %v6202 = vunpack.c.h.b16 %v1640
        %v6203 = vunpack.c.l.b16 %v1641
        %v6204 = vunpack.c.h.b16 %v1641
        %v6205 = vunpack.c.l.b16 %v1642
        %v6206 = vunpack.c.h.b16 %v1642
        %v6207 = vunpack.c.l.b16 %v1643
        %v6208 = vunpack.c.h.b16 %v1643
        %v6209 = vunpack.c.l.b16 %v1644
        %v6210 = vunpack.c.h.b16 %v1644
        %v6211 = vunpack.c.l.b16 %v1645
        %v6212 = vunpack.c.h.b16 %v1645
        %v6213 = vunpack.c.l.b16 %v1646
        %v6214 = vunpack.c.h.b16 %v1646
        %v6215 = vunpack.c.l.b16 %v1647
        %v6216 = vunpack.c.h.b16 %v1647
        %v6217 = vunpack.c.l.b16 %v1648
        %v6218 = vunpack.c.h.b16 %v1648
        %v6219 = vunpack.c.l.b16 %v1649
        %v6220 = vunpack.c.h.b16 %v1649
        %v6221 = vunpack.c.l.b16 %v1650
        %v6222 = vunpack.c.h.b16 %v1650
        %v6223 = vunpack.c.l.b16 %v1651
        %v6224 = vunpack.c.h.b16 %v1651
        %v6225 = vunpack.c.l.b16 %v1652
        %v6226 = vunpack.c.h.b16 %v1652
        %v6227 = vunpack.c.l.b16 %v1653
        %v6228 = vunpack.c.h.b16 %v1653
        %v6229 = vunpack.c.l.b16 %v1654
        %v6230 = vunpack.c.h.b16 %v1654
        %v6231 = vunpack.c.l.b16 %v1655
        %v6232 = vunpack.c.h.b16 %v1655
        %v6233 = vunpack.c.l.b16 %v1656
        %v6234 = vunpack.c.h.b16 %v1656
        %v6235 = vunpack.c.l.b16 %v1657
        %v6236 = vunpack.c.h.b16 %v1657
        %v6237 = vunpack.c.l.b16 %v1658
        %v6238 = vunpack.c.h.b16 %v1658
        %v6239 = vunpack.c.l.b16 %v1659
        %v6240 = vunpack.c.h.b16 %v1659
        %v6241 = vunpack.c.l.b16 %v1660
        %v6242 = vunpack.c.h.b16 %v1660
        %v6243 = vunpack.c.l.b16 %v1661
        %v6244 = vunpack.c.h.b16 %v1661
        %v6245 = vunpack.c.l.b16 %v1662
        %v6246 = vunpack.c.h.b16 %v1662
        %v6247 = vunpack.c.l.b16 %v1663
        %v6248 = vunpack.c.h.b16 %v1663
        %v6249 = vunpack.c.l.b16 %v1664
        %v6250 = vunpack.c.h.b16 %v1664
        %v6251 = vunpack.c.l.b16 %v1665
        %v6252 = vunpack.c.h.b16 %v1665
        %v6253 = vunpack.c.l.b16 %v1666
        %v6254 = vunpack.c.h.b16 %v1666
        %v6255 = vunpack.c.l.b16 %v1667
        %v6256 = vunpack.c.h.b16 %v1667
        %v6257 = vunpack.c.l.b16 %v1668
        %v6258 = vunpack.c.h.b16 %v1668
        %v6259 = vunpack.c.l.b16 %v1669
        %v6260 = vunpack.c.h.b16 %v1669
        %v6261 = vunpack.c.l.b16 %v1670
        %v6262 = vunpack.c.h.b16 %v1670
        %v6263 = vunpack.c.l.b16 %v1671
        %v6264 = vunpack.c.h.b16 %v1671
        %v6265 = vunpack.c.l.b16 %v1672
        %v6266 = vunpack.c.h.b16 %v1672
        %v6267 = vunpack.c.l.b16 %v1673
        %v6268 = vunpack.c.h.b16 %v1673
        %v6269 = vunpack.c.l.b16 %v1674
        %v6270 = vunpack.c.h.b16 %v1674
        %v6271 = vunpack.c.l.b16 %v1675
        %v6272 = vunpack.c.h.b16 %v1675
        %v6273 = vunpack.c.l.b16 %v1676
        %v6274 = vunpack.c.h.b16 %v1676
        %v6275 = vunpack.c.l.b16 %v1677
        %v6276 = vunpack.c.h.b16 %v1677
        %v6277 = vunpack.c.l.b16 %v1678
        %v6278 = vunpack.c.h.b16 %v1678
        %v6279 = vunpack.c.l.b16 %v1679
        %v6280 = vunpack.c.h.b16 %v1679
        %v6281 = vunpack.c.l.b16 %v1680
        %v6282 = vunpack.c.h.b16 %v1680
        %v6283 = vunpack.c.l.b16 %v1681
        %v6284 = vunpack.c.h.b16 %v1681
        %v6285 = vunpack.c.l.b16 %v1682
        %v6286 = vunpack.c.h.b16 %v1682
        %v6287 = vunpack.c.l.b16 %v1683
        %v6288 = vunpack.c.h.b16 %v1683
        %v6289 = vunpack.c.l.b16 %v1684
        %v6290 = vunpack.c.h.b16 %v1684
        %v6291 = vunpack.c.l.b16 %v1685
        %v6292 = vunpack.c.h.b16 %v1685
        %v6293 = vunpack.c.l.b16 %v1686
        %v6294 = vunpack.c.h.b16 %v1686
        %v6295 = vunpack.c.l.b16 %v1687
        %v6296 = vunpack.c.h.b16 %v1687
        %v6297 = vunpack.c.l.b16 %v1688
        %v6298 = vunpack.c.h.b16 %v1688
        %v6299 = vunpack.c.l.b16 %v1689
        %v6300 = vunpack.c.h.b16 %v1689
        %v6301 = vunpack.c.l.b16 %v1690
        %v6302 = vunpack.c.h.b16 %v1690
        %v6303 = vunpack.c.l.b16 %v1691
        %v6304 = vunpack.c.h.b16 %v1691
        %v6305 = vunpack.c.l.b16 %v1692
        %v6306 = vunpack.c.h.b16 %v1692
        %v6307 = vunpack.c.l.b16 %v1693
        %v6308 = vunpack.c.h.b16 %v1693
        %v6309 = vunpack.c.l.b16 %v1694
        %v6310 = vunpack.c.h.b16 %v1694
        %v6311 = vunpack.c.l.b16 %v1695
        %v6312 = vunpack.c.h.b16 %v1695
        %v6313 = vunpack.c.l.b16 %v1696
        %v6314 = vunpack.c.h.b16 %v1696
        %v6315 = vunpack.c.l.b16 %v1697
        %v6316 = vunpack.c.h.b16 %v1697
        %v6317 = vunpack.c.l.b16 %v1698
        %v6318 = vunpack.c.h.b16 %v1698
        %v6319 = vunpack.c.l.b16 %v1699
        %v6320 = vunpack.c.h.b16 %v1699
        %v6321 = vunpack.c.l.b16 %v1700
        %v6322 = vunpack.c.h.b16 %v1700
        %v6323 = vunpack.c.l.b16 %v1701
        %v6324 = vunpack.c.h.b16 %v1701
        %v6325 = vunpack.c.l.b16 %v1702
        %v6326 = vunpack.c.h.b16 %v1702
        %v6327 = vunpack.c.l.b16 %v1703
        %v6328 = vunpack.c.h.b16 %v1703
        %v6329 = vunpack.c.l.b16 %v1704
        %v6330 = vunpack.c.h.b16 %v1704
        %v6331 = vunpack.c.l.b16 %v1705
        %v6332 = vunpack.c.h.b16 %v1705
        %v6333 = vunpack.c.l.b16 %v1706
        %v6334 = vunpack.c.h.b16 %v1706
        %v6335 = vunpack.c.l.b16 %v1707
        %v6336 = vunpack.c.h.b16 %v1707
        %v6337 = vunpack.c.l.b16 %v1708
        %v6338 = vunpack.c.h.b16 %v1708
        %v6339 = vunpack.c.l.b16 %v1709
        %v6340 = vunpack.c.h.b16 %v1709
        %v6341 = vunpack.c.l.b16 %v1710
        %v6342 = vunpack.c.h.b16 %v1710
        %v6343 = vunpack.c.l.b16 %v1711
        %v6344 = vunpack.c.h.b16 %v1711
        %v6345 = vunpack.c.l.b16 %v1712
        %v6346 = vunpack.c.h.b16 %v1712
        %v6347 = vunpack.c.l.b16 %v1713
        %v6348 = vunpack.c.h.b16 %v1713
        %v6349 = vunpack.c.l.b16 %v1714
        %v6350 = vunpack.c.h.b16 %v1714
        %v6351 = vunpack.c.l.b16 %v1715
        %v6352 = vunpack.c.h.b16 %v1715
        %v6353 = vunpack.c.l.b16 %v1716
        %v6354 = vunpack.c.h.b16 %v1716
        %v6355 = vunpack.c.l.b16 %v1717
        %v6356 = vunpack.c.h.b16 %v1717
        %v6357 = vunpack.c.l.b16 %v1718
        %v6358 = vunpack.c.h.b16 %v1718
        %v6359 = vunpack.c.l.b16 %v1719
        %v6360 = vunpack.c.h.b16 %v1719
        %v6361 = vunpack.c.l.b16 %v1720
        %v6362 = vunpack.c.h.b16 %v1720
        %v6363 = vunpack.c.l.b16 %v1721
        %v6364 = vunpack.c.h.b16 %v1721
        %v6365 = vunpack.c.l.b16 %v1722
        %v6366 = vunpack.c.h.b16 %v1722
        %v6367 = vunpack.c.l.b16 %v1723
        %v6368 = vunpack.c.h.b16 %v1723
        %v6369 = vunpack.c.l.b16 %v1724
        %v6370 = vunpack.c.h.b16 %v1724
        %v6371 = vunpack.c.l.b16 %v1725
        %v6372 = vunpack.c.h.b16 %v1725
        %v6373 = vunpack.c.l.b16 %v1726
        %v6374 = vunpack.c.h.b16 %v1726
        %v6375 = vunpack.c.l.b16 %v1727
        %v6376 = vunpack.c.h.b16 %v1727
        %v6377 = vunpack.c.l.b16 %v1728
        %v6378 = vunpack.c.h.b16 %v1728
        %v6379 = vunpack.c.l.b16 %v1729
        %v6380 = vunpack.c.h.b16 %v1729
        %v6381 = vunpack.c.l.b16 %v1730
        %v6382 = vunpack.c.h.b16 %v1730
        %v6383 = vunpack.c.l.b16 %v1731
        %v6384 = vunpack.c.h.b16 %v1731
        %v6385 = vunpack.c.l.b16 %v1732
        %v6386 = vunpack.c.h.b16 %v1732
        %v6387 = vunpack.c.l.b16 %v1733
        %v6388 = vunpack.c.h.b16 %v1733
        %v6389 = vunpack.c.l.b16 %v1734
        %v6390 = vunpack.c.h.b16 %v1734
        %v6391 = vunpack.c.l.b16 %v1735
        %v6392 = vunpack.c.h.b16 %v1735
        %v6393 = vunpack.c.l.b16 %v1736
        %v6394 = vunpack.c.h.b16 %v1736
        %v6395 = vunpack.c.l.b16 %v1737
        %v6396 = vunpack.c.h.b16 %v1737
        %v6397 = vunpack.c.l.b16 %v1738
        %v6398 = vunpack.c.h.b16 %v1738
        %v6399 = vunpack.c.l.b16 %v1739
        %v6400 = vunpack.c.h.b16 %v1739
        %v6401 = vunpack.c.l.b16 %v1740
        %v6402 = vunpack.c.h.b16 %v1740
        %v6403 = vunpack.c.l.b16 %v1741
        %v6404 = vunpack.c.h.b16 %v1741
        %v6405 = vunpack.c.l.b16 %v1742
        %v6406 = vunpack.c.h.b16 %v1742
        %v6407 = vunpack.c.l.b16 %v1743
        %v6408 = vunpack.c.h.b16 %v1743
        %v6409 = vunpack.c.l.b16 %v1744
        %v6410 = vunpack.c.h.b16 %v1744
        %v6411 = vunpack.c.l.b16 %v1745
        %v6412 = vunpack.c.h.b16 %v1745
        %v6413 = vunpack.c.l.b16 %v1746
        %v6414 = vunpack.c.h.b16 %v1746
        %v6415 = vunpack.c.l.b16 %v1747
        %v6416 = vunpack.c.h.b16 %v1747
        %v6417 = vunpack.c.l.b16 %v1748
        %v6418 = vunpack.c.h.b16 %v1748
        %v6419 = vunpack.c.l.b16 %v1749
        %v6420 = vunpack.c.h.b16 %v1749
        %v6421 = vunpack.c.l.b16 %v1750
        %v6422 = vunpack.c.h.b16 %v1750
        %v6423 = vunpack.c.l.b16 %v1751
        %v6424 = vunpack.c.h.b16 %v1751
        %v6425 = vunpack.c.l.b16 %v1752
        %v6426 = vunpack.c.h.b16 %v1752
        %v6427 = vunpack.c.l.b16 %v1753
        %v6428 = vunpack.c.h.b16 %v1753
        %v6429 = vunpack.c.l.b16 %v1754
        %v6430 = vunpack.c.h.b16 %v1754
        %v6431 = vunpack.c.l.b16 %v1755
        %v6432 = vunpack.c.h.b16 %v1755
        %v6433 = vunpack.c.l.b16 %v1756
        %v6434 = vunpack.c.h.b16 %v1756
        %v6435 = vunpack.c.l.b16 %v1757
        %v6436 = vunpack.c.h.b16 %v1757
        %v6437 = vunpack.c.l.b16 %v1758
        %v6438 = vunpack.c.h.b16 %v1758
        %v6439 = vunpack.c.l.b16 %v1759
        %v6440 = vunpack.c.h.b16 %v1759
        %v6441 = vunpack.c.l.b16 %v1760
        %v6442 = vunpack.c.h.b16 %v1760
        %v6443 = vunpack.c.l.b16 %v1761
        %v6444 = vunpack.c.h.b16 %v1761
        %v6445 = vunpack.c.l.b16 %v1762
        %v6446 = vunpack.c.h.b16 %v1762
        %v6447 = vunpack.c.l.b16 %v1763
        %v6448 = vunpack.c.h.b16 %v1763
        %v6449 = vunpack.c.l.b16 %v1764
        %v6450 = vunpack.c.h.b16 %v1764
        %v6451 = vunpack.c.l.b16 %v1765
        %v6452 = vunpack.c.h.b16 %v1765
        %v6453 = vunpack.c.l.b16 %v1766
        %v6454 = vunpack.c.h.b16 %v1766
        %v6455 = vunpack.c.l.b16 %v1767
        %v6456 = vunpack.c.h.b16 %v1767
        %v6457 = vunpack.c.l.b16 %v1768
        %v6458 = vunpack.c.h.b16 %v1768
        %v6459 = vunpack.c.l.b16 %v1769
        %v6460 = vunpack.c.h.b16 %v1769
        %v6461 = vunpack.c.l.b16 %v1770
        %v6462 = vunpack.c.h.b16 %v1770
        %v6463 = vunpack.c.l.b16 %v1771
        %v6464 = vunpack.c.h.b16 %v1771
        %v6465 = vunpack.c.l.b16 %v1772
        %v6466 = vunpack.c.h.b16 %v1772
        %v6467 = vunpack.c.l.b16 %v1773
        %v6468 = vunpack.c.h.b16 %v1773
        %v6469 = vunpack.c.l.b16 %v1774
        %v6470 = vunpack.c.h.b16 %v1774
        %v6471 = vunpack.c.l.b16 %v1775
        %v6472 = vunpack.c.h.b16 %v1775
        %v6473 = vunpack.c.l.b16 %v1776
        %v6474 = vunpack.c.h.b16 %v1776
        %v6475 = vunpack.c.l.b16 %v1777
        %v6476 = vunpack.c.h.b16 %v1777
        %v6477 = vunpack.c.l.b16 %v1778
        %v6478 = vunpack.c.h.b16 %v1778
        %v6479 = vunpack.c.l.b16 %v1779
        %v6480 = vunpack.c.h.b16 %v1779
        %v6481 = vunpack.c.l.b16 %v1780
        %v6482 = vunpack.c.h.b16 %v1780
        %v6483 = vunpack.c.l.b16 %v1781
        %v6484 = vunpack.c.h.b16 %v1781
        %v6485 = vunpack.c.l.b16 %v1782
        %v6486 = vunpack.c.h.b16 %v1782
        %v6487 = vunpack.c.l.b16 %v1783
        %v6488 = vunpack.c.h.b16 %v1783
        %v6489 = vunpack.c.l.b16 %v1784
        %v6490 = vunpack.c.h.b16 %v1784
        %v6491 = vunpack.c.l.b16 %v1785
        %v6492 = vunpack.c.h.b16 %v1785
        %v6493 = vunpack.c.l.b16 %v1786
        %v6494 = vunpack.c.h.b16 %v1786
        %v6495 = vunpack.c.l.b16 %v1787
        %v6496 = vunpack.c.h.b16 %v1787
        %v6497 = vunpack.c.l.b16 %v1788
        %v6498 = vunpack.c.h.b16 %v1788
        %v6499 = vunpack.c.l.b16 %v1789
        %v6500 = vunpack.c.h.b16 %v1789
        %v6501 = vunpack.c.l.b16 %v1790
        %v6502 = vunpack.c.h.b16 %v1790
        %v6503 = vunpack.c.l.b16 %v1791
        %v6504 = vunpack.c.h.b16 %v1791
        %v6505 = vunpack.c.l.b16 %v1792
        %v6506 = vunpack.c.h.b16 %v1792
        %v6507 = vunpack.c.l.b16 %v1793
        %v6508 = vunpack.c.h.b16 %v1793
        %v6509 = vunpack.c.l.b16 %v1794
        %v6510 = vunpack.c.h.b16 %v1794
        %v6511 = vunpack.c.l.b16 %v1795
        %v6512 = vunpack.c.h.b16 %v1795
        %v6513 = vunpack.c.l.b16 %v1796
        %v6514 = vunpack.c.h.b16 %v1796
        %v6515 = vunpack.c.l.b16 %v1797
        %v6516 = vunpack.c.h.b16 %v1797
        %v6517 = vunpack.c.l.b16 %v1798
        %v6518 = vunpack.c.h.b16 %v1798
        %v6519 = vunpack.c.l.b16 %v1799
        %v6520 = vunpack.c.h.b16 %v1799
        %v6521 = vunpack.c.l.b16 %v1800
        %v6522 = vunpack.c.h.b16 %v1800
        %v6523 = vunpack.c.l.b16 %v1801
        %v6524 = vunpack.c.h.b16 %v1801
        %v6525 = vunpack.c.l.b16 %v1802
        %v6526 = vunpack.c.h.b16 %v1802
        %v6527 = vunpack.c.l.b16 %v1803
        %v6528 = vunpack.c.h.b16 %v1803
        %v6529 = vunpack.c.l.b16 %v1804
        %v6530 = vunpack.c.h.b16 %v1804
        %v6531 = vunpack.c.l.b16 %v1805
        %v6532 = vunpack.c.h.b16 %v1805
        %v6533 = vunpack.c.l.b16 %v1806
        %v6534 = vunpack.c.h.b16 %v1806
        %v6535 = vunpack.c.l.b16 %v1807
        %v6536 = vunpack.c.h.b16 %v1807
        %v6537 = vunpack.c.l.b16 %v1808
        %v6538 = vunpack.c.h.b16 %v1808
        %v6539 = vunpack.c.l.b16 %v1809
        %v6540 = vunpack.c.h.b16 %v1809
        %v6541 = vunpack.c.l.b16 %v1810
        %v6542 = vunpack.c.h.b16 %v1810
        %v6543 = vunpack.c.l.b16 %v1811
        %v6544 = vunpack.c.h.b16 %v1811
        %v6545 = vunpack.c.l.b16 %v1812
        %v6546 = vunpack.c.h.b16 %v1812
        %v6547 = vunpack.c.l.b16 %v1813
        %v6548 = vunpack.c.h.b16 %v1813
        %v6549 = vunpack.c.l.b16 %v1814
        %v6550 = vunpack.c.h.b16 %v1814
        %v6551 = vunpack.c.l.b16 %v1815
        %v6552 = vunpack.c.h.b16 %v1815
        %v6553 = vunpack.c.l.b16 %v1816
        %v6554 = vunpack.c.h.b16 %v1816
        %v6555 = vunpack.c.l.b16 %v1817
        %v6556 = vunpack.c.h.b16 %v1817
        %v6557 = vunpack.c.l.b16 %v1818
        %v6558 = vunpack.c.h.b16 %v1818
        %v6559 = vunpack.c.l.b16 %v1819
        %v6560 = vunpack.c.h.b16 %v1819
        %v6561 = vunpack.c.l.b16 %v1820
        %v6562 = vunpack.c.h.b16 %v1820
        %v6563 = vunpack.c.l.b16 %v1821
        %v6564 = vunpack.c.h.b16 %v1821
        %v6565 = vunpack.c.l.b16 %v1822
        %v6566 = vunpack.c.h.b16 %v1822
        %v6567 = vunpack.c.l.b16 %v1823
        %v6568 = vunpack.c.h.b16 %v1823
        %v6569 = vunpack.c.l.b16 %v1824
        %v6570 = vunpack.c.h.b16 %v1824
        %v6571 = vunpack.c.l.b16 %v1825
        %v6572 = vunpack.c.h.b16 %v1825
        %v6573 = vunpack.c.l.b16 %v1826
        %v6574 = vunpack.c.h.b16 %v1826
        %v6575 = vunpack.c.l.b16 %v1827
        %v6576 = vunpack.c.h.b16 %v1827
        %v6577 = vunpack.c.l.b16 %v1828
        %v6578 = vunpack.c.h.b16 %v1828
        %v6579 = vunpack.c.l.b16 %v1829
        %v6580 = vunpack.c.h.b16 %v1829
        %v6581 = vunpack.c.l.b16 %v1830
        %v6582 = vunpack.c.h.b16 %v1830
        %v6583 = vunpack.c.l.b16 %v1831
        %v6584 = vunpack.c.h.b16 %v1831
        %v6585 = vunpack.c.l.b16 %v1832
        %v6586 = vunpack.c.h.b16 %v1832
        %v6587 = vunpack.c.l.b16 %v1833
        %v6588 = vunpack.c.h.b16 %v1833
        %v6589 = vunpack.c.l.b16 %v1834
        %v6590 = vunpack.c.h.b16 %v1834
        %v6591 = vunpack.c.l.b16 %v1835
        %v6592 = vunpack.c.h.b16 %v1835
        %v6593 = vunpack.c.l.b16 %v1836
        %v6594 = vunpack.c.h.b16 %v1836
        %v6595 = vunpack.c.l.b16 %v1837
        %v6596 = vunpack.c.h.b16 %v1837
        %v6597 = vunpack.c.l.b16 %v1838
        %v6598 = vunpack.c.h.b16 %v1838
        %v6599 = vunpack.c.l.b16 %v1839
        %v6600 = vunpack.c.h.b16 %v1839
        %v6601 = vunpack.c.l.b16 %v1840
        %v6602 = vunpack.c.h.b16 %v1840
        %v6603 = vunpack.c.l.b16 %v1841
        %v6604 = vunpack.c.h.b16 %v1841
        %v6605 = vunpack.c.l.b16 %v1842
        %v6606 = vunpack.c.h.b16 %v1842
        %v6607 = vunpack.c.l.b16 %v1843
        %v6608 = vunpack.c.h.b16 %v1843
        %v6609 = vunpack.c.l.b16 %v1844
        %v6610 = vunpack.c.h.b16 %v1844
        %v6611 = vunpack.c.l.b16 %v1845
        %v6612 = vunpack.c.h.b16 %v1845
        %v6613 = vunpack.c.l.b16 %v1846
        %v6614 = vunpack.c.h.b16 %v1846
        %v6615 = vunpack.c.l.b16 %v1847
        %v6616 = vunpack.c.h.b16 %v1847
        %v6617 = vunpack.c.l.b16 %v1848
        %v6618 = vunpack.c.h.b16 %v1848
        %v6619 = vunpack.c.l.b16 %v1849
        %v6620 = vunpack.c.h.b16 %v1849
        %v6621 = vunpack.c.l.b16 %v1850
        %v6622 = vunpack.c.h.b16 %v1850
        %v6623 = vunpack.c.l.b16 %v1851
        %v6624 = vunpack.c.h.b16 %v1851
        %v6625 = vunpack.c.l.b16 %v1852
        %v6626 = vunpack.c.h.b16 %v1852
        %v6627 = vunpack.c.l.b16 %v1853
        %v6628 = vunpack.c.h.b16 %v1853
        %v6629 = vunpack.c.l.b16 %v1854
        %v6630 = vunpack.c.h.b16 %v1854
        %v6631 = vunpack.c.l.b16 %v1855
        %v6632 = vunpack.c.h.b16 %v1855
        %v6633 = vunpack.c.l.b16 %v1856
        %v6634 = vunpack.c.h.b16 %v1856
        %v6635 = vunpack.c.l.b16 %v1857
        %v6636 = vunpack.c.h.b16 %v1857
        %v6637 = vunpack.c.l.b16 %v1858
        %v6638 = vunpack.c.h.b16 %v1858
        %v6639 = vunpack.c.l.b16 %v1859
        %v6640 = vunpack.c.h.b16 %v1859
        %v6641 = vunpack.c.l.b16 %v1860
        %v6642 = vunpack.c.h.b16 %v1860
        %v6643 = vpack.c.b16 %v3579, %v3571
        %v6644 = vpack.c.b16 %v3580, %v3572
        %v6645 = vpack.c.b16 %v3581, %v3573
        %v6646 = vpack.c.b16 %v3582, %v3574
        %v6647 = vpack.c.b16 %v3583, %v3575
        %v6648 = vpack.c.b16 %v3584, %v3576
        %v6649 = vpack.c.b16 %v3585, %v3577
        %v6650 = vpack.c.b16 %v3586, %v3578
        %v6651 = vpack.c.b16 %v3595, %v3587
        %v6652 = vpack.c.b16 %v3596, %v3588
        %v6653 = vpack.c.b16 %v3597, %v3589
        %v6654 = vpack.c.b16 %v3598, %v3590
        %v6655 = vpack.c.b16 %v3599, %v3591
        %v6656 = vpack.c.b16 %v3600, %v3592
        %v6657 = vpack.c.b16 %v3601, %v3593
        %v6658 = vpack.c.b16 %v3602, %v3594
        %v6659 = vpack.c.b16 %v3611, %v3603
        %v6660 = vpack.c.b16 %v3612, %v3604
        %v6661 = vpack.c.b16 %v3613, %v3605
        %v6662 = vpack.c.b16 %v3614, %v3606
        %v6663 = vpack.c.b16 %v3615, %v3607
        %v6664 = vpack.c.b16 %v3616, %v3608
        %v6665 = vpack.c.b16 %v3617, %v3609
        %v6666 = vpack.c.b16 %v3618, %v3610
        %v6667 = vpack.c.b16 %v3627, %v3619
        %v6668 = vpack.c.b16 %v3628, %v3620
        %v6669 = vpack.c.b16 %v3629, %v3621
        %v6670 = vpack.c.b16 %v3630, %v3622
        %v6671 = vpack.c.b16 %v3631, %v3623
        %v6672 = vpack.c.b16 %v3632, %v3624
        %v6673 = vpack.c.b16 %v3633, %v3625
        %v6674 = vpack.c.b16 %v3634, %v3626
        %v6675 = vpack.c.b16 %v3643, %v3635
        %v6676 = vpack.c.b16 %v3644, %v3636
        %v6677 = vpack.c.b16 %v3645, %v3637
        %v6678 = vpack.c.b16 %v3646, %v3638
        %v6679 = vpack.c.b16 %v3647, %v3639
        %v6680 = vpack.c.b16 %v3648, %v3640
        %v6681 = vpack.c.b16 %v3649, %v3641
        %v6682 = vpack.c.b16 %v3650, %v3642
        %v6683 = vpack.c.b16 %v3659, %v3651
        %v6684 = vpack.c.b16 %v3660, %v3652
        %v6685 = vpack.c.b16 %v3661, %v3653
        %v6686 = vpack.c.b16 %v3662, %v3654
        %v6687 = vpack.c.b16 %v3663, %v3655
        %v6688 = vpack.c.b16 %v3664, %v3656
        %v6689 = vpack.c.b16 %v3665, %v3657
        %v6690 = vpack.c.b16 %v3666, %v3658
        %v6691 = vpack.c.b16 %v3675, %v3667
        %v6692 = vpack.c.b16 %v3676, %v3668
        %v6693 = vpack.c.b16 %v3677, %v3669
        %v6694 = vpack.c.b16 %v3678, %v3670
        %v6695 = vpack.c.b16 %v3679, %v3671
        %v6696 = vpack.c.b16 %v3680, %v3672
        %v6697 = vpack.c.b16 %v3681, %v3673
        %v6698 = vpack.c.b16 %v3682, %v3674
        %v6699 = vpack.c.b16 %v3691, %v3683
        %v6700 = vpack.c.b16 %v3692, %v3684
        %v6701 = vpack.c.b16 %v3693, %v3685
        %v6702 = vpack.c.b16 %v3694, %v3686
        %v6703 = vpack.c.b16 %v3695, %v3687
        %v6704 = vpack.c.b16 %v3696, %v3688
        %v6705 = vpack.c.b16 %v3697, %v3689
        %v6706 = vpack.c.b16 %v3698, %v3690
        %v6707 = vpack.c.b16 %v3707, %v3699
        %v6708 = vpack.c.b16 %v3708, %v3700
        %v6709 = vpack.c.b16 %v3709, %v3701
        %v6710 = vpack.c.b16 %v3710, %v3702
        %v6711 = vpack.c.b16 %v3711, %v3703
        %v6712 = vpack.c.b16 %v3712, %v3704
        %v6713 = vpack.c.b16 %v3713, %v3705
        %v6714 = vpack.c.b16 %v3714, %v3706
        %v6715 = vpack.c.b16 %v3723, %v3715
        %v6716 = vpack.c.b16 %v3724, %v3716
        %v6717 = vpack.c.b16 %v3725, %v3717
        %v6718 = vpack.c.b16 %v3726, %v3718
        %v6719 = vpack.c.b16 %v3727, %v3719
        %v6720 = vpack.c.b16 %v3728, %v3720
        %v6721 = vpack.c.b16 %v3729, %v3721
        %v6722 = vpack.c.b16 %v3730, %v3722
        %v6723 = vpack.c.b16 %v3739, %v3731
        %v6724 = vpack.c.b16 %v3740, %v3732
        %v6725 = vpack.c.b16 %v3741, %v3733
        %v6726 = vpack.c.b16 %v3742, %v3734
        %v6727 = vpack.c.b16 %v3743, %v3735
        %v6728 = vpack.c.b16 %v3744, %v3736
        %v6729 = vpack.c.b16 %v3745, %v3737
        %v6730 = vpack.c.b16 %v3746, %v3738
        %v6731 = vpack.c.b16 %v3755, %v3747
        %v6732 = vpack.c.b16 %v3756, %v3748
        %v6733 = vpack.c.b16 %v3757, %v3749
        %v6734 = vpack.c.b16 %v3758, %v3750
        %v6735 = vpack.c.b16 %v3759, %v3751
        %v6736 = vpack.c.b16 %v3760, %v3752
        %v6737 = vpack.c.b16 %v3761, %v3753
        %v6738 = vpack.c.b16 %v3762, %v3754
        %v6739 = vpack.c.b16 %v3771, %v3763
        %v6740 = vpack.c.b16 %v3772, %v3764
        %v6741 = vpack.c.b16 %v3773, %v3765
        %v6742 = vpack.c.b16 %v3774, %v3766
        %v6743 = vpack.c.b16 %v3775, %v3767
        %v6744 = vpack.c.b16 %v3776, %v3768
        %v6745 = vpack.c.b16 %v3777, %v3769
        %v6746 = vpack.c.b16 %v3778, %v3770
        %v6747 = vpack.c.b16 %v3787, %v3779
        %v6748 = vpack.c.b16 %v3788, %v3780
        %v6749 = vpack.c.b16 %v3789, %v3781
        %v6750 = vpack.c.b16 %v3790, %v3782
        %v6751 = vpack.c.b16 %v3791, %v3783
        %v6752 = vpack.c.b16 %v3792, %v3784
        %v6753 = vpack.c.b16 %v3793, %v3785
        %v6754 = vpack.c.b16 %v3794, %v3786
        %v6755 = vpack.c.b16 %v3803, %v3795
        %v6756 = vpack.c.b16 %v3804, %v3796
        %v6757 = vpack.c.b16 %v3805, %v3797
        %v6758 = vpack.c.b16 %v3806, %v3798
        %v6759 = vpack.c.b16 %v3807, %v3799
        %v6760 = vpack.c.b16 %v3808, %v3800
        %v6761 = vpack.c.b16 %v3809, %v3801
        %v6762 = vpack.c.b16 %v3810, %v3802
        %v6763 = vpack.c.b16 %v3819, %v3811
        %v6764 = vpack.c.b16 %v3820, %v3812
        %v6765 = vpack.c.b16 %v3821, %v3813
        %v6766 = vpack.c.b16 %v3822, %v3814
        %v6767 = vpack.c.b16 %v3823, %v3815
        %v6768 = vpack.c.b16 %v3824, %v3816
        %v6769 = vpack.c.b16 %v3825, %v3817
        %v6770 = vpack.c.b16 %v3826, %v3818
        %v6771 = vpack.c.b16 %v3835, %v3827
        %v6772 = vpack.c.b16 %v3836, %v3828
        %v6773 = vpack.c.b16 %v3837, %v3829
        %v6774 = vpack.c.b16 %v3838, %v3830
        %v6775 = vpack.c.b16 %v3839, %v3831
        %v6776 = vpack.c.b16 %v3840, %v3832
        %v6777 = vpack.c.b16 %v3841, %v3833
        %v6778 = vpack.c.b16 %v3842, %v3834
        %v6779 = vpack.c.b16 %v3851, %v3843
        %v6780 = vpack.c.b16 %v3852, %v3844
        %v6781 = vpack.c.b16 %v3853, %v3845
        %v6782 = vpack.c.b16 %v3854, %v3846
        %v6783 = vpack.c.b16 %v3855, %v3847
        %v6784 = vpack.c.b16 %v3856, %v3848
        %v6785 = vpack.c.b16 %v3857, %v3849
        %v6786 = vpack.c.b16 %v3858, %v3850
        %v6787 = vpack.c.b16 %v3867, %v3859
        %v6788 = vpack.c.b16 %v3868, %v3860
        %v6789 = vpack.c.b16 %v3869, %v3861
        %v6790 = vpack.c.b16 %v3870, %v3862
        %v6791 = vpack.c.b16 %v3871, %v3863
        %v6792 = vpack.c.b16 %v3872, %v3864
        %v6793 = vpack.c.b16 %v3873, %v3865
        %v6794 = vpack.c.b16 %v3874, %v3866
        %v6795 = vpack.c.b16 %v3883, %v3875
        %v6796 = vpack.c.b16 %v3884, %v3876
        %v6797 = vpack.c.b16 %v3885, %v3877
        %v6798 = vpack.c.b16 %v3886, %v3878
        %v6799 = vpack.c.b16 %v3887, %v3879
        %v6800 = vpack.c.b16 %v3888, %v3880
        %v6801 = vpack.c.b16 %v3889, %v3881
        %v6802 = vpack.c.b16 %v3890, %v3882
        %v6803 = vpack.c.b16 %v3899, %v3891
        %v6804 = vpack.c.b16 %v3900, %v3892
        %v6805 = vpack.c.b16 %v3901, %v3893
        %v6806 = vpack.c.b16 %v3902, %v3894
        %v6807 = vpack.c.b16 %v3903, %v3895
        %v6808 = vpack.c.b16 %v3904, %v3896
        %v6809 = vpack.c.b16 %v3905, %v3897
        %v6810 = vpack.c.b16 %v3906, %v3898
        %v6811 = vpack.c.b16 %v3915, %v3907
        %v6812 = vpack.c.b16 %v3916, %v3908
        %v6813 = vpack.c.b16 %v3917, %v3909
        %v6814 = vpack.c.b16 %v3918, %v3910
        %v6815 = vpack.c.b16 %v3919, %v3911
        %v6816 = vpack.c.b16 %v3920, %v3912
        %v6817 = vpack.c.b16 %v3921, %v3913
        %v6818 = vpack.c.b16 %v3922, %v3914
        %v6819 = vpack.c.b16 %v3931, %v3923
        %v6820 = vpack.c.b16 %v3932, %v3924
        %v6821 = vpack.c.b16 %v3933, %v3925
        %v6822 = vpack.c.b16 %v3934, %v3926
        %v6823 = vpack.c.b16 %v3935, %v3927
        %v6824 = vpack.c.b16 %v3936, %v3928
        %v6825 = vpack.c.b16 %v3937, %v3929
        %v6826 = vpack.c.b16 %v3938, %v3930
        %v6827 = vpack.c.b16 %v3947, %v3939
        %v6828 = vpack.c.b16 %v3948, %v3940
        %v6829 = vpack.c.b16 %v3949, %v3941
        %v6830 = vpack.c.b16 %v3950, %v3942
        %v6831 = vpack.c.b16 %v3951, %v3943
        %v6832 = vpack.c.b16 %v3952, %v3944
        %v6833 = vpack.c.b16 %v3953, %v3945
        %v6834 = vpack.c.b16 %v3954, %v3946
        %v6835 = vpack.c.b16 %v3963, %v3955
        %v6836 = vpack.c.b16 %v3964, %v3956
        %v6837 = vpack.c.b16 %v3965, %v3957
        %v6838 = vpack.c.b16 %v3966, %v3958
        %v6839 = vpack.c.b16 %v3967, %v3959
        %v6840 = vpack.c.b16 %v3968, %v3960
        %v6841 = vpack.c.b16 %v3969, %v3961
        %v6842 = vpack.c.b16 %v3970, %v3962
        %v6843 = vpack.c.b16 %v3979, %v3971
        %v6844 = vpack.c.b16 %v3980, %v3972
        %v6845 = vpack.c.b16 %v3981, %v3973
        %v6846 = vpack.c.b16 %v3982, %v3974
        %v6847 = vpack.c.b16 %v3983, %v3975
        %v6848 = vpack.c.b16 %v3984, %v3976
        %v6849 = vpack.c.b16 %v3985, %v3977
        %v6850 = vpack.c.b16 %v3986, %v3978
        %v6851 = vpack.c.b16 %v3995, %v3987
        %v6852 = vpack.c.b16 %v3996, %v3988
        %v6853 = vpack.c.b16 %v3997, %v3989
        %v6854 = vpack.c.b16 %v3998, %v3990
        %v6855 = vpack.c.b16 %v3999, %v3991
        %v6856 = vpack.c.b16 %v4000, %v3992
        %v6857 = vpack.c.b16 %v4001, %v3993
        %v6858 = vpack.c.b16 %v4002, %v3994
        %v6859 = vpack.c.b16 %v4011, %v4003
        %v6860 = vpack.c.b16 %v4012, %v4004
        %v6861 = vpack.c.b16 %v4013, %v4005
        %v6862 = vpack.c.b16 %v4014, %v4006
        %v6863 = vpack.c.b16 %v4015, %v4007
        %v6864 = vpack.c.b16 %v4016, %v4008
        %v6865 = vpack.c.b16 %v4017, %v4009
        %v6866 = vpack.c.b16 %v4018, %v4010
        %v6867 = vpack.c.b16 %v4027, %v4019
        %v6868 = vpack.c.b16 %v4028, %v4020
        %v6869 = vpack.c.b16 %v4029, %v4021
        %v6870 = vpack.c.b16 %v4030, %v4022
        %v6871 = vpack.c.b16 %v4031, %v4023
        %v6872 = vpack.c.b16 %v4032, %v4024
        %v6873 = vpack.c.b16 %v4033, %v4025
        %v6874 = vpack.c.b16 %v4034, %v4026
        %v6875 = vpack.c.b16 %v4043, %v4035
        %v6876 = vpack.c.b16 %v4044, %v4036
        %v6877 = vpack.c.b16 %v4045, %v4037
        %v6878 = vpack.c.b16 %v4046, %v4038
        %v6879 = vpack.c.b16 %v4047, %v4039
        %v6880 = vpack.c.b16 %v4048, %v4040
        %v6881 = vpack.c.b16 %v4049, %v4041
        %v6882 = vpack.c.b16 %v4050, %v4042
        %v6883 = vpack.c.b16 %v4059, %v4051
        %v6884 = vpack.c.b16 %v4060, %v4052
        %v6885 = vpack.c.b16 %v4061, %v4053
        %v6886 = vpack.c.b16 %v4062, %v4054
        %v6887 = vpack.c.b16 %v4063, %v4055
        %v6888 = vpack.c.b16 %v4064, %v4056
        %v6889 = vpack.c.b16 %v4065, %v4057
        %v6890 = vpack.c.b16 %v4066, %v4058
        %v6891 = vpack.c.b16 %v4075, %v4067
        %v6892 = vpack.c.b16 %v4076, %v4068
        %v6893 = vpack.c.b16 %v4077, %v4069
        %v6894 = vpack.c.b16 %v4078, %v4070
        %v6895 = vpack.c.b16 %v4079, %v4071
        %v6896 = vpack.c.b16 %v4080, %v4072
        %v6897 = vpack.c.b16 %v4081, %v4073
        %v6898 = vpack.c.b16 %v4082, %v4074
        %v6899 = vpack.c.b16 %v4091, %v4083
        %v6900 = vpack.c.b16 %v4092, %v4084
        %v6901 = vpack.c.b16 %v4093, %v4085
        %v6902 = vpack.c.b16 %v4094, %v4086
        %v6903 = vpack.c.b16 %v4095, %v4087
        %v6904 = vpack.c.b16 %v4096, %v4088
        %v6905 = vpack.c.b16 %v4097, %v4089
        %v6906 = vpack.c.b16 %v4098, %v4090
        %v6907 = vpack.c.b16 %v4107, %v4099
        %v6908 = vpack.c.b16 %v4108, %v4100
        %v6909 = vpack.c.b16 %v4109, %v4101
        %v6910 = vpack.c.b16 %v4110, %v4102
        %v6911 = vpack.c.b16 %v4111, %v4103
        %v6912 = vpack.c.b16 %v4112, %v4104
        %v6913 = vpack.c.b16 %v4113, %v4105
        %v6914 = vpack.c.b16 %v4114, %v4106
        %v6915 = vpack.c.b16 %v4123, %v4115
        %v6916 = vpack.c.b16 %v4124, %v4116
        %v6917 = vpack.c.b16 %v4125, %v4117
        %v6918 = vpack.c.b16 %v4126, %v4118
        %v6919 = vpack.c.b16 %v4127, %v4119
        %v6920 = vpack.c.b16 %v4128, %v4120
        %v6921 = vpack.c.b16 %v4129, %v4121
        %v6922 = vpack.c.b16 %v4130, %v4122
        %v6923 = vpack.c.b16 %v4139, %v4131
        %v6924 = vpack.c.b16 %v4140, %v4132
        %v6925 = vpack.c.b16 %v4141, %v4133
        %v6926 = vpack.c.b16 %v4142, %v4134
        %v6927 = vpack.c.b16 %v4143, %v4135
        %v6928 = vpack.c.b16 %v4144, %v4136
        %v6929 = vpack.c.b16 %v4145, %v4137
        %v6930 = vpack.c.b16 %v4146, %v4138
        %v6931 = vpack.c.b16 %v4155, %v4147
        %v6932 = vpack.c.b16 %v4156, %v4148
        %v6933 = vpack.c.b16 %v4157, %v4149
        %v6934 = vpack.c.b16 %v4158, %v4150
        %v6935 = vpack.c.b16 %v4159, %v4151
        %v6936 = vpack.c.b16 %v4160, %v4152
        %v6937 = vpack.c.b16 %v4161, %v4153
        %v6938 = vpack.c.b16 %v4162, %v4154
        %v6939 = vpack.c.b16 %v4171, %v4163
        %v6940 = vpack.c.b16 %v4172, %v4164
        %v6941 = vpack.c.b16 %v4173, %v4165
        %v6942 = vpack.c.b16 %v4174, %v4166
        %v6943 = vpack.c.b16 %v4175, %v4167
        %v6944 = vpack.c.b16 %v4176, %v4168
        %v6945 = vpack.c.b16 %v4177, %v4169
        %v6946 = vpack.c.b16 %v4178, %v4170
        %v6947 = vpack.c.b16 %v4187, %v4179
        %v6948 = vpack.c.b16 %v4188, %v4180
        %v6949 = vpack.c.b16 %v4189, %v4181
        %v6950 = vpack.c.b16 %v4190, %v4182
        %v6951 = vpack.c.b16 %v4191, %v4183
        %v6952 = vpack.c.b16 %v4192, %v4184
        %v6953 = vpack.c.b16 %v4193, %v4185
        %v6954 = vpack.c.b16 %v4194, %v4186
        %v6955 = vpack.c.b16 %v4203, %v4195
        %v6956 = vpack.c.b16 %v4204, %v4196
        %v6957 = vpack.c.b16 %v4205, %v4197
        %v6958 = vpack.c.b16 %v4206, %v4198
        %v6959 = vpack.c.b16 %v4207, %v4199
        %v6960 = vpack.c.b16 %v4208, %v4200
        %v6961 = vpack.c.b16 %v4209, %v4201
        %v6962 = vpack.c.b16 %v4210, %v4202
        %v6963 = vpack.c.b16 %v4219, %v4211
        %v6964 = vpack.c.b16 %v4220, %v4212
        %v6965 = vpack.c.b16 %v4221, %v4213
        %v6966 = vpack.c.b16 %v4222, %v4214
        %v6967 = vpack.c.b16 %v4223, %v4215
        %v6968 = vpack.c.b16 %v4224, %v4216
        %v6969 = vpack.c.b16 %v4225, %v4217
        %v6970 = vpack.c.b16 %v4226, %v4218
        %v6971 = vpack.c.b16 %v4235, %v4227
        %v6972 = vpack.c.b16 %v4236, %v4228
        %v6973 = vpack.c.b16 %v4237, %v4229
        %v6974 = vpack.c.b16 %v4238, %v4230
        %v6975 = vpack.c.b16 %v4239, %v4231
        %v6976 = vpack.c.b16 %v4240, %v4232
        %v6977 = vpack.c.b16 %v4241, %v4233
        %v6978 = vpack.c.b16 %v4242, %v4234
        %v6979 = vpack.c.b16 %v4251, %v4243
        %v6980 = vpack.c.b16 %v4252, %v4244
        %v6981 = vpack.c.b16 %v4253, %v4245
        %v6982 = vpack.c.b16 %v4254, %v4246
        %v6983 = vpack.c.b16 %v4255, %v4247
        %v6984 = vpack.c.b16 %v4256, %v4248
        %v6985 = vpack.c.b16 %v4257, %v4249
        %v6986 = vpack.c.b16 %v4258, %v4250
        %v6987 = vpack.c.b16 %v4267, %v4259
        %v6988 = vpack.c.b16 %v4268, %v4260
        %v6989 = vpack.c.b16 %v4269, %v4261
        %v6990 = vpack.c.b16 %v4270, %v4262
        %v6991 = vpack.c.b16 %v4271, %v4263
        %v6992 = vpack.c.b16 %v4272, %v4264
        %v6993 = vpack.c.b16 %v4273, %v4265
        %v6994 = vpack.c.b16 %v4274, %v4266
        %v6995 = vpack.c.b16 %v4283, %v4275
        %v6996 = vpack.c.b16 %v4284, %v4276
        %v6997 = vpack.c.b16 %v4285, %v4277
        %v6998 = vpack.c.b16 %v4286, %v4278
        %v6999 = vpack.c.b16 %v4287, %v4279
        %v7000 = vpack.c.b16 %v4288, %v4280
        %v7001 = vpack.c.b16 %v4289, %v4281
        %v7002 = vpack.c.b16 %v4290, %v4282
        %v7003 = vpack.c.b16 %v4299, %v4291
        %v7004 = vpack.c.b16 %v4300, %v4292
        %v7005 = vpack.c.b16 %v4301, %v4293
        %v7006 = vpack.c.b16 %v4302, %v4294
        %v7007 = vpack.c.b16 %v4303, %v4295
        %v7008 = vpack.c.b16 %v4304, %v4296
        %v7009 = vpack.c.b16 %v4305, %v4297
        %v7010 = vpack.c.b16 %v4306, %v4298
        %v7011 = vpack.c.b16 %v4315, %v4307
        %v7012 = vpack.c.b16 %v4316, %v4308
        %v7013 = vpack.c.b16 %v4317, %v4309
        %v7014 = vpack.c.b16 %v4318, %v4310
        %v7015 = vpack.c.b16 %v4319, %v4311
        %v7016 = vpack.c.b16 %v4320, %v4312
        %v7017 = vpack.c.b16 %v4321, %v4313
        %v7018 = vpack.c.b16 %v4322, %v4314
        %v7019 = vpack.c.b16 %v4331, %v4323
        %v7020 = vpack.c.b16 %v4332, %v4324
        %v7021 = vpack.c.b16 %v4333, %v4325
        %v7022 = vpack.c.b16 %v4334, %v4326
        %v7023 = vpack.c.b16 %v4335, %v4327
        %v7024 = vpack.c.b16 %v4336, %v4328
        %v7025 = vpack.c.b16 %v4337, %v4329
        %v7026 = vpack.c.b16 %v4338, %v4330
        %v7027 = vpack.c.b16 %v4347, %v4339
        %v7028 = vpack.c.b16 %v4348, %v4340
        %v7029 = vpack.c.b16 %v4349, %v4341
        %v7030 = vpack.c.b16 %v4350, %v4342
        %v7031 = vpack.c.b16 %v4351, %v4343
        %v7032 = vpack.c.b16 %v4352, %v4344
        %v7033 = vpack.c.b16 %v4353, %v4345
        %v7034 = vpack.c.b16 %v4354, %v4346
        %v7035 = vpack.c.b16 %v4363, %v4355
        %v7036 = vpack.c.b16 %v4364, %v4356
        %v7037 = vpack.c.b16 %v4365, %v4357
        %v7038 = vpack.c.b16 %v4366, %v4358
        %v7039 = vpack.c.b16 %v4367, %v4359
        %v7040 = vpack.c.b16 %v4368, %v4360
        %v7041 = vpack.c.b16 %v4369, %v4361
        %v7042 = vpack.c.b16 %v4370, %v4362
        %v7043 = vpack.c.b16 %v4379, %v4371
        %v7044 = vpack.c.b16 %v4380, %v4372
        %v7045 = vpack.c.b16 %v4381, %v4373
        %v7046 = vpack.c.b16 %v4382, %v4374
        %v7047 = vpack.c.b16 %v4383, %v4375
        %v7048 = vpack.c.b16 %v4384, %v4376
        %v7049 = vpack.c.b16 %v4385, %v4377
        %v7050 = vpack.c.b16 %v4386, %v4378
        %v7051 = vpack.c.b16 %v4395, %v4387
        %v7052 = vpack.c.b16 %v4396, %v4388
        %v7053 = vpack.c.b16 %v4397, %v4389
        %v7054 = vpack.c.b16 %v4398, %v4390
        %v7055 = vpack.c.b16 %v4399, %v4391
        %v7056 = vpack.c.b16 %v4400, %v4392
        %v7057 = vpack.c.b16 %v4401, %v4393
        %v7058 = vpack.c.b16 %v4402, %v4394
        %v7059 = vpack.c.b16 %v4411, %v4403
        %v7060 = vpack.c.b16 %v4412, %v4404
        %v7061 = vpack.c.b16 %v4413, %v4405
        %v7062 = vpack.c.b16 %v4414, %v4406
        %v7063 = vpack.c.b16 %v4415, %v4407
        %v7064 = vpack.c.b16 %v4416, %v4408
        %v7065 = vpack.c.b16 %v4417, %v4409
        %v7066 = vpack.c.b16 %v4418, %v4410
        %v7067 = vpack.c.b16 %v4427, %v4419
        %v7068 = vpack.c.b16 %v4428, %v4420
        %v7069 = vpack.c.b16 %v4429, %v4421
        %v7070 = vpack.c.b16 %v4430, %v4422
        %v7071 = vpack.c.b16 %v4431, %v4423
        %v7072 = vpack.c.b16 %v4432, %v4424
        %v7073 = vpack.c.b16 %v4433, %v4425
        %v7074 = vpack.c.b16 %v4434, %v4426
        %v7075 = vpack.c.b16 %v4443, %v4435
        %v7076 = vpack.c.b16 %v4444, %v4436
        %v7077 = vpack.c.b16 %v4445, %v4437
        %v7078 = vpack.c.b16 %v4446, %v4438
        %v7079 = vpack.c.b16 %v4447, %v4439
        %v7080 = vpack.c.b16 %v4448, %v4440
        %v7081 = vpack.c.b16 %v4449, %v4441
        %v7082 = vpack.c.b16 %v4450, %v4442
        %v7083 = vpack.c.b16 %v4459, %v4451
        %v7084 = vpack.c.b16 %v4460, %v4452
        %v7085 = vpack.c.b16 %v4461, %v4453
        %v7086 = vpack.c.b16 %v4462, %v4454
        %v7087 = vpack.c.b16 %v4463, %v4455
        %v7088 = vpack.c.b16 %v4464, %v4456
        %v7089 = vpack.c.b16 %v4465, %v4457
        %v7090 = vpack.c.b16 %v4466, %v4458
        %v7091 = vpack.c.b16 %v4475, %v4467
        %v7092 = vpack.c.b16 %v4476, %v4468
        %v7093 = vpack.c.b16 %v4477, %v4469
        %v7094 = vpack.c.b16 %v4478, %v4470
        %v7095 = vpack.c.b16 %v4479, %v4471
        %v7096 = vpack.c.b16 %v4480, %v4472
        %v7097 = vpack.c.b16 %v4481, %v4473
        %v7098 = vpack.c.b16 %v4482, %v4474
        %v7099 = vpack.c.b16 %v4491, %v4483
        %v7100 = vpack.c.b16 %v4492, %v4484
        %v7101 = vpack.c.b16 %v4493, %v4485
        %v7102 = vpack.c.b16 %v4494, %v4486
        %v7103 = vpack.c.b16 %v4495, %v4487
        %v7104 = vpack.c.b16 %v4496, %v4488
        %v7105 = vpack.c.b16 %v4497, %v4489
        %v7106 = vpack.c.b16 %v4498, %v4490
        %v7107 = vpack.c.b16 %v4507, %v4499
        %v7108 = vpack.c.b16 %v4508, %v4500
        %v7109 = vpack.c.b16 %v4509, %v4501
        %v7110 = vpack.c.b16 %v4510, %v4502
        %v7111 = vpack.c.b16 %v4511, %v4503
        %v7112 = vpack.c.b16 %v4512, %v4504
        %v7113 = vpack.c.b16 %v4513, %v4505
        %v7114 = vpack.c.b16 %v4514, %v4506
        %v7115 = vpack.c.b16 %v4523, %v4515
        %v7116 = vpack.c.b16 %v4524, %v4516
        %v7117 = vpack.c.b16 %v4525, %v4517
        %v7118 = vpack.c.b16 %v4526, %v4518
        %v7119 = vpack.c.b16 %v4527, %v4519
        %v7120 = vpack.c.b16 %v4528, %v4520
        %v7121 = vpack.c.b16 %v4529, %v4521
        %v7122 = vpack.c.b16 %v4530, %v4522
        %v7123 = vpack.c.b16 %v4539, %v4531
        %v7124 = vpack.c.b16 %v4540, %v4532
        %v7125 = vpack.c.b16 %v4541, %v4533
        %v7126 = vpack.c.b16 %v4542, %v4534
        %v7127 = vpack.c.b16 %v4543, %v4535
        %v7128 = vpack.c.b16 %v4544, %v4536
        %v7129 = vpack.c.b16 %v4545, %v4537
        %v7130 = vpack.c.b16 %v4546, %v4538
        %v7131 = vpack.c.b16 %v4555, %v4547
        %v7132 = vpack.c.b16 %v4556, %v4548
        %v7133 = vpack.c.b16 %v4557, %v4549
        %v7134 = vpack.c.b16 %v4558, %v4550
        %v7135 = vpack.c.b16 %v4559, %v4551
        %v7136 = vpack.c.b16 %v4560, %v4552
        %v7137 = vpack.c.b16 %v4561, %v4553
        %v7138 = vpack.c.b16 %v4562, %v4554
        %v7139 = vpack.c.b16 %v4571, %v4563
        %v7140 = vpack.c.b16 %v4572, %v4564
        %v7141 = vpack.c.b16 %v4573, %v4565
        %v7142 = vpack.c.b16 %v4574, %v4566
        %v7143 = vpack.c.b16 %v4575, %v4567
        %v7144 = vpack.c.b16 %v4576, %v4568
        %v7145 = vpack.c.b16 %v4577, %v4569
        %v7146 = vpack.c.b16 %v4578, %v4570
        %v7147 = vpack.c.b16 %v4587, %v4579
        %v7148 = vpack.c.b16 %v4588, %v4580
        %v7149 = vpack.c.b16 %v4589, %v4581
        %v7150 = vpack.c.b16 %v4590, %v4582
        %v7151 = vpack.c.b16 %v4591, %v4583
        %v7152 = vpack.c.b16 %v4592, %v4584
        %v7153 = vpack.c.b16 %v4593, %v4585
        %v7154 = vpack.c.b16 %v4594, %v4586
        %v7155 = vpack.c.b16 %v4603, %v4595
        %v7156 = vpack.c.b16 %v4604, %v4596
        %v7157 = vpack.c.b16 %v4605, %v4597
        %v7158 = vpack.c.b16 %v4606, %v4598
        %v7159 = vpack.c.b16 %v4607, %v4599
        %v7160 = vpack.c.b16 %v4608, %v4600
        %v7161 = vpack.c.b16 %v4609, %v4601
        %v7162 = vpack.c.b16 %v4610, %v4602
        %v7163 = vpack.c.b16 %v4619, %v4611
        %v7164 = vpack.c.b16 %v4620, %v4612
        %v7165 = vpack.c.b16 %v4621, %v4613
        %v7166 = vpack.c.b16 %v4622, %v4614
        %v7167 = vpack.c.b16 %v4623, %v4615
        %v7168 = vpack.c.b16 %v4624, %v4616
        %v7169 = vpack.c.b16 %v4625, %v4617
        %v7170 = vpack.c.b16 %v4626, %v4618
        %v7171 = vpack.c.b16 %v4635, %v4627
        %v7172 = vpack.c.b16 %v4636, %v4628
        %v7173 = vpack.c.b16 %v4637, %v4629
        %v7174 = vpack.c.b16 %v4638, %v4630
        %v7175 = vpack.c.b16 %v4639, %v4631
        %v7176 = vpack.c.b16 %v4640, %v4632
        %v7177 = vpack.c.b16 %v4641, %v4633
        %v7178 = vpack.c.b16 %v4642, %v4634
        %v7179 = vpack.c.b16 %v4651, %v4643
        %v7180 = vpack.c.b16 %v4652, %v4644
        %v7181 = vpack.c.b16 %v4653, %v4645
        %v7182 = vpack.c.b16 %v4654, %v4646
        %v7183 = vpack.c.b16 %v4655, %v4647
        %v7184 = vpack.c.b16 %v4656, %v4648
        %v7185 = vpack.c.b16 %v4657, %v4649
        %v7186 = vpack.c.b16 %v4658, %v4650
        %v7187 = vpack.c.b16 %v4667, %v4659
        %v7188 = vpack.c.b16 %v4668, %v4660
        %v7189 = vpack.c.b16 %v4669, %v4661
        %v7190 = vpack.c.b16 %v4670, %v4662
        %v7191 = vpack.c.b16 %v4671, %v4663
        %v7192 = vpack.c.b16 %v4672, %v4664
        %v7193 = vpack.c.b16 %v4673, %v4665
        %v7194 = vpack.c.b16 %v4674, %v4666
        %v7195 = vpack.c.b16 %v4683, %v4675
        %v7196 = vpack.c.b16 %v4684, %v4676
        %v7197 = vpack.c.b16 %v4685, %v4677
        %v7198 = vpack.c.b16 %v4686, %v4678
        %v7199 = vpack.c.b16 %v4687, %v4679
        %v7200 = vpack.c.b16 %v4688, %v4680
        %v7201 = vpack.c.b16 %v4689, %v4681
        %v7202 = vpack.c.b16 %v4690, %v4682
        %v7203 = vpack.c.b16 %v4699, %v4691
        %v7204 = vpack.c.b16 %v4700, %v4692
        %v7205 = vpack.c.b16 %v4701, %v4693
        %v7206 = vpack.c.b16 %v4702, %v4694
        %v7207 = vpack.c.b16 %v4703, %v4695
        %v7208 = vpack.c.b16 %v4704, %v4696
        %v7209 = vpack.c.b16 %v4705, %v4697
        %v7210 = vpack.c.b16 %v4706, %v4698
        %v7211 = vpack.c.b16 %v4715, %v4707
        %v7212 = vpack.c.b16 %v4716, %v4708
        %v7213 = vpack.c.b16 %v4717, %v4709
        %v7214 = vpack.c.b16 %v4718, %v4710
        %v7215 = vpack.c.b16 %v4719, %v4711
        %v7216 = vpack.c.b16 %v4720, %v4712
        %v7217 = vpack.c.b16 %v4721, %v4713
        %v7218 = vpack.c.b16 %v4722, %v4714
        %v7219 = vpack.c.b16 %v4731, %v4723
        %v7220 = vpack.c.b16 %v4732, %v4724
        %v7221 = vpack.c.b16 %v4733, %v4725
        %v7222 = vpack.c.b16 %v4734, %v4726
        %v7223 = vpack.c.b16 %v4735, %v4727
        %v7224 = vpack.c.b16 %v4736, %v4728
        %v7225 = vpack.c.b16 %v4737, %v4729
        %v7226 = vpack.c.b16 %v4738, %v4730
        %v7227 = vpack.c.b16 %v4747, %v4739
        %v7228 = vpack.c.b16 %v4748, %v4740
        %v7229 = vpack.c.b16 %v4749, %v4741
        %v7230 = vpack.c.b16 %v4750, %v4742
        %v7231 = vpack.c.b16 %v4751, %v4743
        %v7232 = vpack.c.b16 %v4752, %v4744
        %v7233 = vpack.c.b16 %v4753, %v4745
        %v7234 = vpack.c.b16 %v4754, %v4746
        %v7235 = vpack.c.b16 %v4763, %v4755
        %v7236 = vpack.c.b16 %v4764, %v4756
        %v7237 = vpack.c.b16 %v4765, %v4757
        %v7238 = vpack.c.b16 %v4766, %v4758
        %v7239 = vpack.c.b16 %v4767, %v4759
        %v7240 = vpack.c.b16 %v4768, %v4760
        %v7241 = vpack.c.b16 %v4769, %v4761
        %v7242 = vpack.c.b16 %v4770, %v4762
        %v7243 = vpack.c.b16 %v4779, %v4771
        %v7244 = vpack.c.b16 %v4780, %v4772
        %v7245 = vpack.c.b16 %v4781, %v4773
        %v7246 = vpack.c.b16 %v4782, %v4774
        %v7247 = vpack.c.b16 %v4783, %v4775
        %v7248 = vpack.c.b16 %v4784, %v4776
        %v7249 = vpack.c.b16 %v4785, %v4777
        %v7250 = vpack.c.b16 %v4786, %v4778
        %v7251 = vpack.c.b16 %v4795, %v4787
        %v7252 = vpack.c.b16 %v4796, %v4788
        %v7253 = vpack.c.b16 %v4797, %v4789
        %v7254 = vpack.c.b16 %v4798, %v4790
        %v7255 = vpack.c.b16 %v4799, %v4791
        %v7256 = vpack.c.b16 %v4800, %v4792
        %v7257 = vpack.c.b16 %v4801, %v4793
        %v7258 = vpack.c.b16 %v4802, %v4794
        %v7259 = vpack.c.b16 %v4811, %v4803
        %v7260 = vpack.c.b16 %v4812, %v4804
        %v7261 = vpack.c.b16 %v4813, %v4805
        %v7262 = vpack.c.b16 %v4814, %v4806
        %v7263 = vpack.c.b16 %v4815, %v4807
        %v7264 = vpack.c.b16 %v4816, %v4808
        %v7265 = vpack.c.b16 %v4817, %v4809
        %v7266 = vpack.c.b16 %v4818, %v4810
        %v7267 = vpack.c.b16 %v4827, %v4819
        %v7268 = vpack.c.b16 %v4828, %v4820
        %v7269 = vpack.c.b16 %v4829, %v4821
        %v7270 = vpack.c.b16 %v4830, %v4822
        %v7271 = vpack.c.b16 %v4831, %v4823
        %v7272 = vpack.c.b16 %v4832, %v4824
        %v7273 = vpack.c.b16 %v4833, %v4825
        %v7274 = vpack.c.b16 %v4834, %v4826
        %v7275 = vpack.c.b16 %v4843, %v4835
        %v7276 = vpack.c.b16 %v4844, %v4836
        %v7277 = vpack.c.b16 %v4845, %v4837
        %v7278 = vpack.c.b16 %v4846, %v4838
        %v7279 = vpack.c.b16 %v4847, %v4839
        %v7280 = vpack.c.b16 %v4848, %v4840
        %v7281 = vpack.c.b16 %v4849, %v4841
        %v7282 = vpack.c.b16 %v4850, %v4842
        %v7283 = vpack.c.b16 %v4859, %v4851
        %v7284 = vpack.c.b16 %v4860, %v4852
        %v7285 = vpack.c.b16 %v4861, %v4853
        %v7286 = vpack.c.b16 %v4862, %v4854
        %v7287 = vpack.c.b16 %v4863, %v4855
        %v7288 = vpack.c.b16 %v4864, %v4856
        %v7289 = vpack.c.b16 %v4865, %v4857
        %v7290 = vpack.c.b16 %v4866, %v4858
        %v7291 = vpack.c.b16 %v4875, %v4867
        %v7292 = vpack.c.b16 %v4876, %v4868
        %v7293 = vpack.c.b16 %v4877, %v4869
        %v7294 = vpack.c.b16 %v4878, %v4870
        %v7295 = vpack.c.b16 %v4879, %v4871
        %v7296 = vpack.c.b16 %v4880, %v4872
        %v7297 = vpack.c.b16 %v4881, %v4873
        %v7298 = vpack.c.b16 %v4882, %v4874
        %v7299 = vpack.c.b16 %v4891, %v4883
        %v7300 = vpack.c.b16 %v4892, %v4884
        %v7301 = vpack.c.b16 %v4893, %v4885
        %v7302 = vpack.c.b16 %v4894, %v4886
        %v7303 = vpack.c.b16 %v4895, %v4887
        %v7304 = vpack.c.b16 %v4896, %v4888
        %v7305 = vpack.c.b16 %v4897, %v4889
        %v7306 = vpack.c.b16 %v4898, %v4890
        %v7307 = vpack.c.b16 %v4907, %v4899
        %v7308 = vpack.c.b16 %v4908, %v4900
        %v7309 = vpack.c.b16 %v4909, %v4901
        %v7310 = vpack.c.b16 %v4910, %v4902
        %v7311 = vpack.c.b16 %v4911, %v4903
        %v7312 = vpack.c.b16 %v4912, %v4904
        %v7313 = vpack.c.b16 %v4913, %v4905
        %v7314 = vpack.c.b16 %v4914, %v4906
        %v7315 = vpack.c.b16 %v4923, %v4915
        %v7316 = vpack.c.b16 %v4924, %v4916
        %v7317 = vpack.c.b16 %v4925, %v4917
        %v7318 = vpack.c.b16 %v4926, %v4918
        %v7319 = vpack.c.b16 %v4927, %v4919
        %v7320 = vpack.c.b16 %v4928, %v4920
        %v7321 = vpack.c.b16 %v4929, %v4921
        %v7322 = vpack.c.b16 %v4930, %v4922
        %v7323 = vpack.c.b16 %v4939, %v4931
        %v7324 = vpack.c.b16 %v4940, %v4932
        %v7325 = vpack.c.b16 %v4941, %v4933
        %v7326 = vpack.c.b16 %v4942, %v4934
        %v7327 = vpack.c.b16 %v4943, %v4935
        %v7328 = vpack.c.b16 %v4944, %v4936
        %v7329 = vpack.c.b16 %v4945, %v4937
        %v7330 = vpack.c.b16 %v4946, %v4938
        %v7331 = vpack.c.b16 %v4955, %v4947
        %v7332 = vpack.c.b16 %v4956, %v4948
        %v7333 = vpack.c.b16 %v4957, %v4949
        %v7334 = vpack.c.b16 %v4958, %v4950
        %v7335 = vpack.c.b16 %v4959, %v4951
        %v7336 = vpack.c.b16 %v4960, %v4952
        %v7337 = vpack.c.b16 %v4961, %v4953
        %v7338 = vpack.c.b16 %v4962, %v4954
        %v7339 = vpack.c.b16 %v4971, %v4963
        %v7340 = vpack.c.b16 %v4972, %v4964
        %v7341 = vpack.c.b16 %v4973, %v4965
        %v7342 = vpack.c.b16 %v4974, %v4966
        %v7343 = vpack.c.b16 %v4975, %v4967
        %v7344 = vpack.c.b16 %v4976, %v4968
        %v7345 = vpack.c.b16 %v4977, %v4969
        %v7346 = vpack.c.b16 %v4978, %v4970
        %v7347 = vpack.c.b16 %v4987, %v4979
        %v7348 = vpack.c.b16 %v4988, %v4980
        %v7349 = vpack.c.b16 %v4989, %v4981
        %v7350 = vpack.c.b16 %v4990, %v4982
        %v7351 = vpack.c.b16 %v4991, %v4983
        %v7352 = vpack.c.b16 %v4992, %v4984
        %v7353 = vpack.c.b16 %v4993, %v4985
        %v7354 = vpack.c.b16 %v4994, %v4986
        %v7355 = vpack.c.b16 %v5003, %v4995
        %v7356 = vpack.c.b16 %v5004, %v4996
        %v7357 = vpack.c.b16 %v5005, %v4997
        %v7358 = vpack.c.b16 %v5006, %v4998
        %v7359 = vpack.c.b16 %v5007, %v4999
        %v7360 = vpack.c.b16 %v5008, %v5000
        %v7361 = vpack.c.b16 %v5009, %v5001
        %v7362 = vpack.c.b16 %v5010, %v5002
        %v7363 = vpack.c.b16 %v5019, %v5011
        %v7364 = vpack.c.b16 %v5020, %v5012
        %v7365 = vpack.c.b16 %v5021, %v5013
        %v7366 = vpack.c.b16 %v5022, %v5014
        %v7367 = vpack.c.b16 %v5023, %v5015
        %v7368 = vpack.c.b16 %v5024, %v5016
        %v7369 = vpack.c.b16 %v5025, %v5017
        %v7370 = vpack.c.b16 %v5026, %v5018
        %v7371 = vpack.c.b16 %v5035, %v5027
        %v7372 = vpack.c.b16 %v5036, %v5028
        %v7373 = vpack.c.b16 %v5037, %v5029
        %v7374 = vpack.c.b16 %v5038, %v5030
        %v7375 = vpack.c.b16 %v5039, %v5031
        %v7376 = vpack.c.b16 %v5040, %v5032
        %v7377 = vpack.c.b16 %v5041, %v5033
        %v7378 = vpack.c.b16 %v5042, %v5034
        %v7379 = vpack.c.b16 %v5051, %v5043
        %v7380 = vpack.c.b16 %v5052, %v5044
        %v7381 = vpack.c.b16 %v5053, %v5045
        %v7382 = vpack.c.b16 %v5054, %v5046
        %v7383 = vpack.c.b16 %v5055, %v5047
        %v7384 = vpack.c.b16 %v5056, %v5048
        %v7385 = vpack.c.b16 %v5057, %v5049
        %v7386 = vpack.c.b16 %v5058, %v5050
        %v7387 = vpack.c.b16 %v5067, %v5059
        %v7388 = vpack.c.b16 %v5068, %v5060
        %v7389 = vpack.c.b16 %v5069, %v5061
        %v7390 = vpack.c.b16 %v5070, %v5062
        %v7391 = vpack.c.b16 %v5071, %v5063
        %v7392 = vpack.c.b16 %v5072, %v5064
        %v7393 = vpack.c.b16 %v5073, %v5065
        %v7394 = vpack.c.b16 %v5074, %v5066
        %v7395 = vpack.c.b16 %v5083, %v5075
        %v7396 = vpack.c.b16 %v5084, %v5076
        %v7397 = vpack.c.b16 %v5085, %v5077
        %v7398 = vpack.c.b16 %v5086, %v5078
        %v7399 = vpack.c.b16 %v5087, %v5079
        %v7400 = vpack.c.b16 %v5088, %v5080
        %v7401 = vpack.c.b16 %v5089, %v5081
        %v7402 = vpack.c.b16 %v5090, %v5082
        %v7403 = vpack.c.b16 %v5099, %v5091
        %v7404 = vpack.c.b16 %v5100, %v5092
        %v7405 = vpack.c.b16 %v5101, %v5093
        %v7406 = vpack.c.b16 %v5102, %v5094
        %v7407 = vpack.c.b16 %v5103, %v5095
        %v7408 = vpack.c.b16 %v5104, %v5096
        %v7409 = vpack.c.b16 %v5105, %v5097
        %v7410 = vpack.c.b16 %v5106, %v5098
        %v7411 = vpack.c.b16 %v5115, %v5107
        %v7412 = vpack.c.b16 %v5116, %v5108
        %v7413 = vpack.c.b16 %v5117, %v5109
        %v7414 = vpack.c.b16 %v5118, %v5110
        %v7415 = vpack.c.b16 %v5119, %v5111
        %v7416 = vpack.c.b16 %v5120, %v5112
        %v7417 = vpack.c.b16 %v5121, %v5113
        %v7418 = vpack.c.b16 %v5122, %v5114
        %v7419 = vpack.c.b16 %v5131, %v5123
        %v7420 = vpack.c.b16 %v5132, %v5124
        %v7421 = vpack.c.b16 %v5133, %v5125
        %v7422 = vpack.c.b16 %v5134, %v5126
        %v7423 = vpack.c.b16 %v5135, %v5127
        %v7424 = vpack.c.b16 %v5136, %v5128
        %v7425 = vpack.c.b16 %v5137, %v5129
        %v7426 = vpack.c.b16 %v5138, %v5130
        %v7427 = vpack.c.b16 %v5147, %v5139
        %v7428 = vpack.c.b16 %v5148, %v5140
        %v7429 = vpack.c.b16 %v5149, %v5141
        %v7430 = vpack.c.b16 %v5150, %v5142
        %v7431 = vpack.c.b16 %v5151, %v5143
        %v7432 = vpack.c.b16 %v5152, %v5144
        %v7433 = vpack.c.b16 %v5153, %v5145
        %v7434 = vpack.c.b16 %v5154, %v5146
        %v7435 = vpack.c.b16 %v5163, %v5155
        %v7436 = vpack.c.b16 %v5164, %v5156
        %v7437 = vpack.c.b16 %v5165, %v5157
        %v7438 = vpack.c.b16 %v5166, %v5158
        %v7439 = vpack.c.b16 %v5167, %v5159
        %v7440 = vpack.c.b16 %v5168, %v5160
        %v7441 = vpack.c.b16 %v5169, %v5161
        %v7442 = vpack.c.b16 %v5170, %v5162
        %v7443 = vpack.c.b16 %v5179, %v5171
        %v7444 = vpack.c.b16 %v5180, %v5172
        %v7445 = vpack.c.b16 %v5181, %v5173
        %v7446 = vpack.c.b16 %v5182, %v5174
        %v7447 = vpack.c.b16 %v5183, %v5175
        %v7448 = vpack.c.b16 %v5184, %v5176
        %v7449 = vpack.c.b16 %v5185, %v5177
        %v7450 = vpack.c.b16 %v5186, %v5178
        %v7451 = vpack.c.b16 %v5195, %v5187
        %v7452 = vpack.c.b16 %v5196, %v5188
        %v7453 = vpack.c.b16 %v5197, %v5189
        %v7454 = vpack.c.b16 %v5198, %v5190
        %v7455 = vpack.c.b16 %v5199, %v5191
        %v7456 = vpack.c.b16 %v5200, %v5192
        %v7457 = vpack.c.b16 %v5201, %v5193
        %v7458 = vpack.c.b16 %v5202, %v5194
        %v7459 = vpack.c.b16 %v5211, %v5203
        %v7460 = vpack.c.b16 %v5212, %v5204
        %v7461 = vpack.c.b16 %v5213, %v5205
        %v7462 = vpack.c.b16 %v5214, %v5206
        %v7463 = vpack.c.b16 %v5215, %v5207
        %v7464 = vpack.c.b16 %v5216, %v5208
        %v7465 = vpack.c.b16 %v5217, %v5209
        %v7466 = vpack.c.b16 %v5218, %v5210
        %v7467 = vpack.c.b16 %v5227, %v5219
        %v7468 = vpack.c.b16 %v5228, %v5220
        %v7469 = vpack.c.b16 %v5229, %v5221
        %v7470 = vpack.c.b16 %v5230, %v5222
        %v7471 = vpack.c.b16 %v5231, %v5223
        %v7472 = vpack.c.b16 %v5232, %v5224
        %v7473 = vpack.c.b16 %v5233, %v5225
        %v7474 = vpack.c.b16 %v5234, %v5226
        %v7475 = vpack.c.b16 %v5243, %v5235
        %v7476 = vpack.c.b16 %v5244, %v5236
        %v7477 = vpack.c.b16 %v5245, %v5237
        %v7478 = vpack.c.b16 %v5246, %v5238
        %v7479 = vpack.c.b16 %v5247, %v5239
        %v7480 = vpack.c.b16 %v5248, %v5240
        %v7481 = vpack.c.b16 %v5249, %v5241
        %v7482 = vpack.c.b16 %v5250, %v5242
        %v7483 = vpack.c.b16 %v5259, %v5251
        %v7484 = vpack.c.b16 %v5260, %v5252
        %v7485 = vpack.c.b16 %v5261, %v5253
        %v7486 = vpack.c.b16 %v5262, %v5254
        %v7487 = vpack.c.b16 %v5263, %v5255
        %v7488 = vpack.c.b16 %v5264, %v5256
        %v7489 = vpack.c.b16 %v5265, %v5257
        %v7490 = vpack.c.b16 %v5266, %v5258
        %v7491 = vpack.c.b16 %v5275, %v5267
        %v7492 = vpack.c.b16 %v5276, %v5268
        %v7493 = vpack.c.b16 %v5277, %v5269
        %v7494 = vpack.c.b16 %v5278, %v5270
        %v7495 = vpack.c.b16 %v5279, %v5271
        %v7496 = vpack.c.b16 %v5280, %v5272
        %v7497 = vpack.c.b16 %v5281, %v5273
        %v7498 = vpack.c.b16 %v5282, %v5274
        %v7499 = vpack.c.b16 %v5291, %v5283
        %v7500 = vpack.c.b16 %v5292, %v5284
        %v7501 = vpack.c.b16 %v5293, %v5285
        %v7502 = vpack.c.b16 %v5294, %v5286
        %v7503 = vpack.c.b16 %v5295, %v5287
        %v7504 = vpack.c.b16 %v5296, %v5288
        %v7505 = vpack.c.b16 %v5297, %v5289
        %v7506 = vpack.c.b16 %v5298, %v5290
        %v7507 = vpack.c.b16 %v5307, %v5299
        %v7508 = vpack.c.b16 %v5308, %v5300
        %v7509 = vpack.c.b16 %v5309, %v5301
        %v7510 = vpack.c.b16 %v5310, %v5302
        %v7511 = vpack.c.b16 %v5311, %v5303
        %v7512 = vpack.c.b16 %v5312, %v5304
        %v7513 = vpack.c.b16 %v5313, %v5305
        %v7514 = vpack.c.b16 %v5314, %v5306
        %v7515 = vpack.c.b16 %v5323, %v5315
        %v7516 = vpack.c.b16 %v5324, %v5316
        %v7517 = vpack.c.b16 %v5325, %v5317
        %v7518 = vpack.c.b16 %v5326, %v5318
        %v7519 = vpack.c.b16 %v5327, %v5319
        %v7520 = vpack.c.b16 %v5328, %v5320
        %v7521 = vpack.c.b16 %v5329, %v5321
        %v7522 = vpack.c.b16 %v5330, %v5322
        %v7523 = vpack.c.b16 %v5339, %v5331
        %v7524 = vpack.c.b16 %v5340, %v5332
        %v7525 = vpack.c.b16 %v5341, %v5333
        %v7526 = vpack.c.b16 %v5342, %v5334
        %v7527 = vpack.c.b16 %v5343, %v5335
        %v7528 = vpack.c.b16 %v5344, %v5336
        %v7529 = vpack.c.b16 %v5345, %v5337
        %v7530 = vpack.c.b16 %v5346, %v5338
        %v7531 = vpack.c.b16 %v5355, %v5347
        %v7532 = vpack.c.b16 %v5356, %v5348
        %v7533 = vpack.c.b16 %v5357, %v5349
        %v7534 = vpack.c.b16 %v5358, %v5350
        %v7535 = vpack.c.b16 %v5359, %v5351
        %v7536 = vpack.c.b16 %v5360, %v5352
        %v7537 = vpack.c.b16 %v5361, %v5353
        %v7538 = vpack.c.b16 %v5362, %v5354
        %v7539 = vpack.c.b16 %v5371, %v5363
        %v7540 = vpack.c.b16 %v5372, %v5364
        %v7541 = vpack.c.b16 %v5373, %v5365
        %v7542 = vpack.c.b16 %v5374, %v5366
        %v7543 = vpack.c.b16 %v5375, %v5367
        %v7544 = vpack.c.b16 %v5376, %v5368
        %v7545 = vpack.c.b16 %v5377, %v5369
        %v7546 = vpack.c.b16 %v5378, %v5370
        %v7547 = vpack.c.b16 %v5387, %v5379
        %v7548 = vpack.c.b16 %v5388, %v5380
        %v7549 = vpack.c.b16 %v5389, %v5381
        %v7550 = vpack.c.b16 %v5390, %v5382
        %v7551 = vpack.c.b16 %v5391, %v5383
        %v7552 = vpack.c.b16 %v5392, %v5384
        %v7553 = vpack.c.b16 %v5393, %v5385
        %v7554 = vpack.c.b16 %v5394, %v5386
        %v7555 = vpack.c.b16 %v5403, %v5395
        %v7556 = vpack.c.b16 %v5404, %v5396
        %v7557 = vpack.c.b16 %v5405, %v5397
        %v7558 = vpack.c.b16 %v5406, %v5398
        %v7559 = vpack.c.b16 %v5407, %v5399
        %v7560 = vpack.c.b16 %v5408, %v5400
        %v7561 = vpack.c.b16 %v5409, %v5401
        %v7562 = vpack.c.b16 %v5410, %v5402
        %v7563 = vpack.c.b16 %v5419, %v5411
        %v7564 = vpack.c.b16 %v5420, %v5412
        %v7565 = vpack.c.b16 %v5421, %v5413
        %v7566 = vpack.c.b16 %v5422, %v5414
        %v7567 = vpack.c.b16 %v5423, %v5415
        %v7568 = vpack.c.b16 %v5424, %v5416
        %v7569 = vpack.c.b16 %v5425, %v5417
        %v7570 = vpack.c.b16 %v5426, %v5418
        %v7571 = vpack.c.b16 %v5435, %v5427
        %v7572 = vpack.c.b16 %v5436, %v5428
        %v7573 = vpack.c.b16 %v5437, %v5429
        %v7574 = vpack.c.b16 %v5438, %v5430
        %v7575 = vpack.c.b16 %v5439, %v5431
        %v7576 = vpack.c.b16 %v5440, %v5432
        %v7577 = vpack.c.b16 %v5441, %v5433
        %v7578 = vpack.c.b16 %v5442, %v5434
        %v7579 = vpack.c.b16 %v5451, %v5443
        %v7580 = vpack.c.b16 %v5452, %v5444
        %v7581 = vpack.c.b16 %v5453, %v5445
        %v7582 = vpack.c.b16 %v5454, %v5446
        %v7583 = vpack.c.b16 %v5455, %v5447
        %v7584 = vpack.c.b16 %v5456, %v5448
        %v7585 = vpack.c.b16 %v5457, %v5449
        %v7586 = vpack.c.b16 %v5458, %v5450
        %v7587 = vpack.c.b16 %v5467, %v5459
        %v7588 = vpack.c.b16 %v5468, %v5460
        %v7589 = vpack.c.b16 %v5469, %v5461
        %v7590 = vpack.c.b16 %v5470, %v5462
        %v7591 = vpack.c.b16 %v5471, %v5463
        %v7592 = vpack.c.b16 %v5472, %v5464
        %v7593 = vpack.c.b16 %v5473, %v5465
        %v7594 = vpack.c.b16 %v5474, %v5466
        %v7595 = vpack.c.b16 %v5483, %v5475
        %v7596 = vpack.c.b16 %v5484, %v5476
        %v7597 = vpack.c.b16 %v5485, %v5477
        %v7598 = vpack.c.b16 %v5486, %v5478
        %v7599 = vpack.c.b16 %v5487, %v5479
        %v7600 = vpack.c.b16 %v5488, %v5480
        %v7601 = vpack.c.b16 %v5489, %v5481
        %v7602 = vpack.c.b16 %v5490, %v5482
        %v7603 = vpack.c.b16 %v5499, %v5491
        %v7604 = vpack.c.b16 %v5500, %v5492
        %v7605 = vpack.c.b16 %v5501, %v5493
        %v7606 = vpack.c.b16 %v5502, %v5494
        %v7607 = vpack.c.b16 %v5503, %v5495
        %v7608 = vpack.c.b16 %v5504, %v5496
        %v7609 = vpack.c.b16 %v5505, %v5497
        %v7610 = vpack.c.b16 %v5506, %v5498
        %v7611 = vpack.c.b16 %v5515, %v5507
        %v7612 = vpack.c.b16 %v5516, %v5508
        %v7613 = vpack.c.b16 %v5517, %v5509
        %v7614 = vpack.c.b16 %v5518, %v5510
        %v7615 = vpack.c.b16 %v5519, %v5511
        %v7616 = vpack.c.b16 %v5520, %v5512
        %v7617 = vpack.c.b16 %v5521, %v5513
        %v7618 = vpack.c.b16 %v5522, %v5514
        %v7619 = vpack.c.b16 %v5531, %v5523
        %v7620 = vpack.c.b16 %v5532, %v5524
        %v7621 = vpack.c.b16 %v5533, %v5525
        %v7622 = vpack.c.b16 %v5534, %v5526
        %v7623 = vpack.c.b16 %v5535, %v5527
        %v7624 = vpack.c.b16 %v5536, %v5528
        %v7625 = vpack.c.b16 %v5537, %v5529
        %v7626 = vpack.c.b16 %v5538, %v5530
        %v7627 = vpack.c.b16 %v5547, %v5539
        %v7628 = vpack.c.b16 %v5548, %v5540
        %v7629 = vpack.c.b16 %v5549, %v5541
        %v7630 = vpack.c.b16 %v5550, %v5542
        %v7631 = vpack.c.b16 %v5551, %v5543
        %v7632 = vpack.c.b16 %v5552, %v5544
        %v7633 = vpack.c.b16 %v5553, %v5545
        %v7634 = vpack.c.b16 %v5554, %v5546
        %v7635 = vpack.c.b16 %v5563, %v5555
        %v7636 = vpack.c.b16 %v5564, %v5556
        %v7637 = vpack.c.b16 %v5565, %v5557
        %v7638 = vpack.c.b16 %v5566, %v5558
        %v7639 = vpack.c.b16 %v5567, %v5559
        %v7640 = vpack.c.b16 %v5568, %v5560
        %v7641 = vpack.c.b16 %v5569, %v5561
        %v7642 = vpack.c.b16 %v5570, %v5562
        %v7643 = vpack.c.b16 %v5579, %v5571
        %v7644 = vpack.c.b16 %v5580, %v5572
        %v7645 = vpack.c.b16 %v5581, %v5573
        %v7646 = vpack.c.b16 %v5582, %v5574
        %v7647 = vpack.c.b16 %v5583, %v5575
        %v7648 = vpack.c.b16 %v5584, %v5576
        %v7649 = vpack.c.b16 %v5585, %v5577
        %v7650 = vpack.c.b16 %v5586, %v5578
        %v7651 = vpack.c.b16 %v5595, %v5587
        %v7652 = vpack.c.b16 %v5596, %v5588
        %v7653 = vpack.c.b16 %v5597, %v5589
        %v7654 = vpack.c.b16 %v5598, %v5590
        %v7655 = vpack.c.b16 %v5599, %v5591
        %v7656 = vpack.c.b16 %v5600, %v5592
        %v7657 = vpack.c.b16 %v5601, %v5593
        %v7658 = vpack.c.b16 %v5602, %v5594
        %v7659 = vpack.c.b16 %v5611, %v5603
        %v7660 = vpack.c.b16 %v5612, %v5604
        %v7661 = vpack.c.b16 %v5613, %v5605
        %v7662 = vpack.c.b16 %v5614, %v5606
        %v7663 = vpack.c.b16 %v5615, %v5607
        %v7664 = vpack.c.b16 %v5616, %v5608
        %v7665 = vpack.c.b16 %v5617, %v5609
        %v7666 = vpack.c.b16 %v5618, %v5610
        %v7667 = vpack.c.b16 %v5627, %v5619
        %v7668 = vpack.c.b16 %v5628, %v5620
        %v7669 = vpack.c.b16 %v5629, %v5621
        %v7670 = vpack.c.b16 %v5630, %v5622
        %v7671 = vpack.c.b16 %v5631, %v5623
        %v7672 = vpack.c.b16 %v5632, %v5624
        %v7673 = vpack.c.b16 %v5633, %v5625
        %v7674 = vpack.c.b16 %v5634, %v5626
        %v7675 = vpack.c.b16 %v5643, %v5635
        %v7676 = vpack.c.b16 %v5644, %v5636
        %v7677 = vpack.c.b16 %v5645, %v5637
        %v7678 = vpack.c.b16 %v5646, %v5638
        %v7679 = vpack.c.b16 %v5647, %v5639
        %v7680 = vpack.c.b16 %v5648, %v5640
        %v7681 = vpack.c.b16 %v5649, %v5641
        %v7682 = vpack.c.b16 %v5650, %v5642
        %v7683 = vpack.c.b16 %v5659, %v5651
        %v7684 = vpack.c.b16 %v5660, %v5652
        %v7685 = vpack.c.b16 %v5661, %v5653
        %v7686 = vpack.c.b16 %v5662, %v5654
        %v7687 = vpack.c.b16 %v5663, %v5655
        %v7688 = vpack.c.b16 %v5664, %v5656
        %v7689 = vpack.c.b16 %v5665, %v5657
        %v7690 = vpack.c.b16 %v5666, %v5658
        %v7691 = vpack.c.b16 %v5675, %v5667
        %v7692 = vpack.c.b16 %v5676, %v5668
        %v7693 = vpack.c.b16 %v5677, %v5669
        %v7694 = vpack.c.b16 %v5678, %v5670
        %v7695 = vpack.c.b16 %v5679, %v5671
        %v7696 = vpack.c.b16 %v5680, %v5672
        %v7697 = vpack.c.b16 %v5681, %v5673
        %v7698 = vpack.c.b16 %v5682, %v5674
        %v7699 = vpack.c.b16 %v5691, %v5683
        %v7700 = vpack.c.b16 %v5692, %v5684
        %v7701 = vpack.c.b16 %v5693, %v5685
        %v7702 = vpack.c.b16 %v5694, %v5686
        %v7703 = vpack.c.b16 %v5695, %v5687
        %v7704 = vpack.c.b16 %v5696, %v5688
        %v7705 = vpack.c.b16 %v5697, %v5689
        %v7706 = vpack.c.b16 %v5698, %v5690
        %v7707 = vpack.c.b16 %v5707, %v5699
        %v7708 = vpack.c.b16 %v5708, %v5700
        %v7709 = vpack.c.b16 %v5709, %v5701
        %v7710 = vpack.c.b16 %v5710, %v5702
        %v7711 = vpack.c.b16 %v5711, %v5703
        %v7712 = vpack.c.b16 %v5712, %v5704
        %v7713 = vpack.c.b16 %v5713, %v5705
        %v7714 = vpack.c.b16 %v5714, %v5706
        %v7715 = vpack.c.b16 %v5723, %v5715
        %v7716 = vpack.c.b16 %v5724, %v5716
        %v7717 = vpack.c.b16 %v5725, %v5717
        %v7718 = vpack.c.b16 %v5726, %v5718
        %v7719 = vpack.c.b16 %v5727, %v5719
        %v7720 = vpack.c.b16 %v5728, %v5720
        %v7721 = vpack.c.b16 %v5729, %v5721
        %v7722 = vpack.c.b16 %v5730, %v5722
        %v7723 = vpack.c.b16 %v5739, %v5731
        %v7724 = vpack.c.b16 %v5740, %v5732
        %v7725 = vpack.c.b16 %v5741, %v5733
        %v7726 = vpack.c.b16 %v5742, %v5734
        %v7727 = vpack.c.b16 %v5743, %v5735
        %v7728 = vpack.c.b16 %v5744, %v5736
        %v7729 = vpack.c.b16 %v5745, %v5737
        %v7730 = vpack.c.b16 %v5746, %v5738
        %v7731 = vpack.c.b16 %v5755, %v5747
        %v7732 = vpack.c.b16 %v5756, %v5748
        %v7733 = vpack.c.b16 %v5757, %v5749
        %v7734 = vpack.c.b16 %v5758, %v5750
        %v7735 = vpack.c.b16 %v5759, %v5751
        %v7736 = vpack.c.b16 %v5760, %v5752
        %v7737 = vpack.c.b16 %v5761, %v5753
        %v7738 = vpack.c.b16 %v5762, %v5754
        %v7739 = vpack.c.b16 %v5771, %v5763
        %v7740 = vpack.c.b16 %v5772, %v5764
        %v7741 = vpack.c.b16 %v5773, %v5765
        %v7742 = vpack.c.b16 %v5774, %v5766
        %v7743 = vpack.c.b16 %v5775, %v5767
        %v7744 = vpack.c.b16 %v5776, %v5768
        %v7745 = vpack.c.b16 %v5777, %v5769
        %v7746 = vpack.c.b16 %v5778, %v5770
        %v7747 = vpack.c.b16 %v5787, %v5779
        %v7748 = vpack.c.b16 %v5788, %v5780
        %v7749 = vpack.c.b16 %v5789, %v5781
        %v7750 = vpack.c.b16 %v5790, %v5782
        %v7751 = vpack.c.b16 %v5791, %v5783
        %v7752 = vpack.c.b16 %v5792, %v5784
        %v7753 = vpack.c.b16 %v5793, %v5785
        %v7754 = vpack.c.b16 %v5794, %v5786
        %v7755 = vpack.c.b16 %v5803, %v5795
        %v7756 = vpack.c.b16 %v5804, %v5796
        %v7757 = vpack.c.b16 %v5805, %v5797
        %v7758 = vpack.c.b16 %v5806, %v5798
        %v7759 = vpack.c.b16 %v5807, %v5799
        %v7760 = vpack.c.b16 %v5808, %v5800
        %v7761 = vpack.c.b16 %v5809, %v5801
        %v7762 = vpack.c.b16 %v5810, %v5802
        %v7763 = vpack.c.b16 %v5819, %v5811
        %v7764 = vpack.c.b16 %v5820, %v5812
        %v7765 = vpack.c.b16 %v5821, %v5813
        %v7766 = vpack.c.b16 %v5822, %v5814
        %v7767 = vpack.c.b16 %v5823, %v5815
        %v7768 = vpack.c.b16 %v5824, %v5816
        %v7769 = vpack.c.b16 %v5825, %v5817
        %v7770 = vpack.c.b16 %v5826, %v5818
        %v7771 = vpack.c.b16 %v5835, %v5827
        %v7772 = vpack.c.b16 %v5836, %v5828
        %v7773 = vpack.c.b16 %v5837, %v5829
        %v7774 = vpack.c.b16 %v5838, %v5830
        %v7775 = vpack.c.b16 %v5839, %v5831
        %v7776 = vpack.c.b16 %v5840, %v5832
        %v7777 = vpack.c.b16 %v5841, %v5833
        %v7778 = vpack.c.b16 %v5842, %v5834
        %v7779 = vpack.c.b16 %v5851, %v5843
        %v7780 = vpack.c.b16 %v5852, %v5844
        %v7781 = vpack.c.b16 %v5853, %v5845
        %v7782 = vpack.c.b16 %v5854, %v5846
        %v7783 = vpack.c.b16 %v5855, %v5847
        %v7784 = vpack.c.b16 %v5856, %v5848
        %v7785 = vpack.c.b16 %v5857, %v5849
        %v7786 = vpack.c.b16 %v5858, %v5850
        %v7787 = vpack.c.b16 %v5867, %v5859
        %v7788 = vpack.c.b16 %v5868, %v5860
        %v7789 = vpack.c.b16 %v5869, %v5861
        %v7790 = vpack.c.b16 %v5870, %v5862
        %v7791 = vpack.c.b16 %v5871, %v5863
        %v7792 = vpack.c.b16 %v5872, %v5864
        %v7793 = vpack.c.b16 %v5873, %v5865
        %v7794 = vpack.c.b16 %v5874, %v5866
        %v7795 = vpack.c.b16 %v5883, %v5875
        %v7796 = vpack.c.b16 %v5884, %v5876
        %v7797 = vpack.c.b16 %v5885, %v5877
        %v7798 = vpack.c.b16 %v5886, %v5878
        %v7799 = vpack.c.b16 %v5887, %v5879
        %v7800 = vpack.c.b16 %v5888, %v5880
        %v7801 = vpack.c.b16 %v5889, %v5881
        %v7802 = vpack.c.b16 %v5890, %v5882
        %v7803 = vpack.c.b16 %v5899, %v5891
        %v7804 = vpack.c.b16 %v5900, %v5892
        %v7805 = vpack.c.b16 %v5901, %v5893
        %v7806 = vpack.c.b16 %v5902, %v5894
        %v7807 = vpack.c.b16 %v5903, %v5895
        %v7808 = vpack.c.b16 %v5904, %v5896
        %v7809 = vpack.c.b16 %v5905, %v5897
        %v7810 = vpack.c.b16 %v5906, %v5898
        %v7811 = vpack.c.b16 %v5915, %v5907
        %v7812 = vpack.c.b16 %v5916, %v5908
        %v7813 = vpack.c.b16 %v5917, %v5909
        %v7814 = vpack.c.b16 %v5918, %v5910
        %v7815 = vpack.c.b16 %v5919, %v5911
        %v7816 = vpack.c.b16 %v5920, %v5912
        %v7817 = vpack.c.b16 %v5921, %v5913
        %v7818 = vpack.c.b16 %v5922, %v5914
        %v7819 = vpack.c.b16 %v5931, %v5923
        %v7820 = vpack.c.b16 %v5932, %v5924
        %v7821 = vpack.c.b16 %v5933, %v5925
        %v7822 = vpack.c.b16 %v5934, %v5926
        %v7823 = vpack.c.b16 %v5935, %v5927
        %v7824 = vpack.c.b16 %v5936, %v5928
        %v7825 = vpack.c.b16 %v5937, %v5929
        %v7826 = vpack.c.b16 %v5938, %v5930
        %v7827 = vpack.c.b16 %v5947, %v5939
        %v7828 = vpack.c.b16 %v5948, %v5940
        %v7829 = vpack.c.b16 %v5949, %v5941
        %v7830 = vpack.c.b16 %v5950, %v5942
        %v7831 = vpack.c.b16 %v5951, %v5943
        %v7832 = vpack.c.b16 %v5952, %v5944
        %v7833 = vpack.c.b16 %v5953, %v5945
        %v7834 = vpack.c.b16 %v5954, %v5946
        %v7835 = vpack.c.b16 %v5963, %v5955
        %v7836 = vpack.c.b16 %v5964, %v5956
        %v7837 = vpack.c.b16 %v5965, %v5957
        %v7838 = vpack.c.b16 %v5966, %v5958
        %v7839 = vpack.c.b16 %v5967, %v5959
        %v7840 = vpack.c.b16 %v5968, %v5960
        %v7841 = vpack.c.b16 %v5969, %v5961
        %v7842 = vpack.c.b16 %v5970, %v5962
        %v7843 = vpack.c.b16 %v5979, %v5971
        %v7844 = vpack.c.b16 %v5980, %v5972
        %v7845 = vpack.c.b16 %v5981, %v5973
        %v7846 = vpack.c.b16 %v5982, %v5974
        %v7847 = vpack.c.b16 %v5983, %v5975
        %v7848 = vpack.c.b16 %v5984, %v5976
        %v7849 = vpack.c.b16 %v5985, %v5977
        %v7850 = vpack.c.b16 %v5986, %v5978
        %v7851 = vpack.c.b16 %v5995, %v5987
        %v7852 = vpack.c.b16 %v5996, %v5988
        %v7853 = vpack.c.b16 %v5997, %v5989
        %v7854 = vpack.c.b16 %v5998, %v5990
        %v7855 = vpack.c.b16 %v5999, %v5991
        %v7856 = vpack.c.b16 %v6000, %v5992
        %v7857 = vpack.c.b16 %v6001, %v5993
        %v7858 = vpack.c.b16 %v6002, %v5994
        %v7859 = vpack.c.b16 %v6011, %v6003
        %v7860 = vpack.c.b16 %v6012, %v6004
        %v7861 = vpack.c.b16 %v6013, %v6005
        %v7862 = vpack.c.b16 %v6014, %v6006
        %v7863 = vpack.c.b16 %v6015, %v6007
        %v7864 = vpack.c.b16 %v6016, %v6008
        %v7865 = vpack.c.b16 %v6017, %v6009
        %v7866 = vpack.c.b16 %v6018, %v6010
        %v7867 = vpack.c.b16 %v6027, %v6019
        %v7868 = vpack.c.b16 %v6028, %v6020
        %v7869 = vpack.c.b16 %v6029, %v6021
        %v7870 = vpack.c.b16 %v6030, %v6022
        %v7871 = vpack.c.b16 %v6031, %v6023
        %v7872 = vpack.c.b16 %v6032, %v6024
        %v7873 = vpack.c.b16 %v6033, %v6025
        %v7874 = vpack.c.b16 %v6034, %v6026
        %v7875 = vpack.c.b16 %v6043, %v6035
        %v7876 = vpack.c.b16 %v6044, %v6036
        %v7877 = vpack.c.b16 %v6045, %v6037
        %v7878 = vpack.c.b16 %v6046, %v6038
        %v7879 = vpack.c.b16 %v6047, %v6039
        %v7880 = vpack.c.b16 %v6048, %v6040
        %v7881 = vpack.c.b16 %v6049, %v6041
        %v7882 = vpack.c.b16 %v6050, %v6042
        %v7883 = vpack.c.b16 %v6059, %v6051
        %v7884 = vpack.c.b16 %v6060, %v6052
        %v7885 = vpack.c.b16 %v6061, %v6053
        %v7886 = vpack.c.b16 %v6062, %v6054
        %v7887 = vpack.c.b16 %v6063, %v6055
        %v7888 = vpack.c.b16 %v6064, %v6056
        %v7889 = vpack.c.b16 %v6065, %v6057
        %v7890 = vpack.c.b16 %v6066, %v6058
        %v7891 = vpack.c.b16 %v6075, %v6067
        %v7892 = vpack.c.b16 %v6076, %v6068
        %v7893 = vpack.c.b16 %v6077, %v6069
        %v7894 = vpack.c.b16 %v6078, %v6070
        %v7895 = vpack.c.b16 %v6079, %v6071
        %v7896 = vpack.c.b16 %v6080, %v6072
        %v7897 = vpack.c.b16 %v6081, %v6073
        %v7898 = vpack.c.b16 %v6082, %v6074
        %v7899 = vpack.c.b16 %v6091, %v6083
        %v7900 = vpack.c.b16 %v6092, %v6084
        %v7901 = vpack.c.b16 %v6093, %v6085
        %v7902 = vpack.c.b16 %v6094, %v6086
        %v7903 = vpack.c.b16 %v6095, %v6087
        %v7904 = vpack.c.b16 %v6096, %v6088
        %v7905 = vpack.c.b16 %v6097, %v6089
        %v7906 = vpack.c.b16 %v6098, %v6090
        %v7907 = vpack.c.b16 %v6107, %v6099
        %v7908 = vpack.c.b16 %v6108, %v6100
        %v7909 = vpack.c.b16 %v6109, %v6101
        %v7910 = vpack.c.b16 %v6110, %v6102
        %v7911 = vpack.c.b16 %v6111, %v6103
        %v7912 = vpack.c.b16 %v6112, %v6104
        %v7913 = vpack.c.b16 %v6113, %v6105
        %v7914 = vpack.c.b16 %v6114, %v6106
        %v7915 = vpack.c.b16 %v6123, %v6115
        %v7916 = vpack.c.b16 %v6124, %v6116
        %v7917 = vpack.c.b16 %v6125, %v6117
        %v7918 = vpack.c.b16 %v6126, %v6118
        %v7919 = vpack.c.b16 %v6127, %v6119
        %v7920 = vpack.c.b16 %v6128, %v6120
        %v7921 = vpack.c.b16 %v6129, %v6121
        %v7922 = vpack.c.b16 %v6130, %v6122
        %v7923 = vpack.c.b16 %v6139, %v6131
        %v7924 = vpack.c.b16 %v6140, %v6132
        %v7925 = vpack.c.b16 %v6141, %v6133
        %v7926 = vpack.c.b16 %v6142, %v6134
        %v7927 = vpack.c.b16 %v6143, %v6135
        %v7928 = vpack.c.b16 %v6144, %v6136
        %v7929 = vpack.c.b16 %v6145, %v6137
        %v7930 = vpack.c.b16 %v6146, %v6138
        %v7931 = vpack.c.b16 %v6155, %v6147
        %v7932 = vpack.c.b16 %v6156, %v6148
        %v7933 = vpack.c.b16 %v6157, %v6149
        %v7934 = vpack.c.b16 %v6158, %v6150
        %v7935 = vpack.c.b16 %v6159, %v6151
        %v7936 = vpack.c.b16 %v6160, %v6152
        %v7937 = vpack.c.b16 %v6161, %v6153
        %v7938 = vpack.c.b16 %v6162, %v6154
        %v7939 = vpack.c.b16 %v6171, %v6163
        %v7940 = vpack.c.b16 %v6172, %v6164
        %v7941 = vpack.c.b16 %v6173, %v6165
        %v7942 = vpack.c.b16 %v6174, %v6166
        %v7943 = vpack.c.b16 %v6175, %v6167
        %v7944 = vpack.c.b16 %v6176, %v6168
        %v7945 = vpack.c.b16 %v6177, %v6169
        %v7946 = vpack.c.b16 %v6178, %v6170
        %v7947 = vpack.c.b16 %v6187, %v6179
        %v7948 = vpack.c.b16 %v6188, %v6180
        %v7949 = vpack.c.b16 %v6189, %v6181
        %v7950 = vpack.c.b16 %v6190, %v6182
        %v7951 = vpack.c.b16 %v6191, %v6183
        %v7952 = vpack.c.b16 %v6192, %v6184
        %v7953 = vpack.c.b16 %v6193, %v6185
        %v7954 = vpack.c.b16 %v6194, %v6186
        %v7955 = vpack.c.b16 %v6203, %v6195
        %v7956 = vpack.c.b16 %v6204, %v6196
        %v7957 = vpack.c.b16 %v6205, %v6197
        %v7958 = vpack.c.b16 %v6206, %v6198
        %v7959 = vpack.c.b16 %v6207, %v6199
        %v7960 = vpack.c.b16 %v6208, %v6200
        %v7961 = vpack.c.b16 %v6209, %v6201
        %v7962 = vpack.c.b16 %v6210, %v6202
        %v7963 = vpack.c.b16 %v6219, %v6211
        %v7964 = vpack.c.b16 %v6220, %v6212
        %v7965 = vpack.c.b16 %v6221, %v6213
        %v7966 = vpack.c.b16 %v6222, %v6214
        %v7967 = vpack.c.b16 %v6223, %v6215
        %v7968 = vpack.c.b16 %v6224, %v6216
        %v7969 = vpack.c.b16 %v6225, %v6217
        %v7970 = vpack.c.b16 %v6226, %v6218
        %v7971 = vpack.c.b16 %v6235, %v6227
        %v7972 = vpack.c.b16 %v6236, %v6228
        %v7973 = vpack.c.b16 %v6237, %v6229
        %v7974 = vpack.c.b16 %v6238, %v6230
        %v7975 = vpack.c.b16 %v6239, %v6231
        %v7976 = vpack.c.b16 %v6240, %v6232
        %v7977 = vpack.c.b16 %v6241, %v6233
        %v7978 = vpack.c.b16 %v6242, %v6234
        %v7979 = vpack.c.b16 %v6251, %v6243
        %v7980 = vpack.c.b16 %v6252, %v6244
        %v7981 = vpack.c.b16 %v6253, %v6245
        %v7982 = vpack.c.b16 %v6254, %v6246
        %v7983 = vpack.c.b16 %v6255, %v6247
        %v7984 = vpack.c.b16 %v6256, %v6248
        %v7985 = vpack.c.b16 %v6257, %v6249
        %v7986 = vpack.c.b16 %v6258, %v6250
        %v7987 = vpack.c.b16 %v6267, %v6259
        %v7988 = vpack.c.b16 %v6268, %v6260
        %v7989 = vpack.c.b16 %v6269, %v6261
        %v7990 = vpack.c.b16 %v6270, %v6262
        %v7991 = vpack.c.b16 %v6271, %v6263
        %v7992 = vpack.c.b16 %v6272, %v6264
        %v7993 = vpack.c.b16 %v6273, %v6265
        %v7994 = vpack.c.b16 %v6274, %v6266
        %v7995 = vpack.c.b16 %v6283, %v6275
        %v7996 = vpack.c.b16 %v6284, %v6276
        %v7997 = vpack.c.b16 %v6285, %v6277
        %v7998 = vpack.c.b16 %v6286, %v6278
        %v7999 = vpack.c.b16 %v6287, %v6279
        %v8000 = vpack.c.b16 %v6288, %v6280
        %v8001 = vpack.c.b16 %v6289, %v6281
        %v8002 = vpack.c.b16 %v6290, %v6282
        %v8003 = vpack.c.b16 %v6299, %v6291
        %v8004 = vpack.c.b16 %v6300, %v6292
        %v8005 = vpack.c.b16 %v6301, %v6293
        %v8006 = vpack.c.b16 %v6302, %v6294
        %v8007 = vpack.c.b16 %v6303, %v6295
        %v8008 = vpack.c.b16 %v6304, %v6296
        %v8009 = vpack.c.b16 %v6305, %v6297
        %v8010 = vpack.c.b16 %v6306, %v6298
        %v8011 = vpack.c.b16 %v6315, %v6307
        %v8012 = vpack.c.b16 %v6316, %v6308
        %v8013 = vpack.c.b16 %v6317, %v6309
        %v8014 = vpack.c.b16 %v6318, %v6310
        %v8015 = vpack.c.b16 %v6319, %v6311
        %v8016 = vpack.c.b16 %v6320, %v6312
        %v8017 = vpack.c.b16 %v6321, %v6313
        %v8018 = vpack.c.b16 %v6322, %v6314
        %v8019 = vpack.c.b16 %v6331, %v6323
        %v8020 = vpack.c.b16 %v6332, %v6324
        %v8021 = vpack.c.b16 %v6333, %v6325
        %v8022 = vpack.c.b16 %v6334, %v6326
        %v8023 = vpack.c.b16 %v6335, %v6327
        %v8024 = vpack.c.b16 %v6336, %v6328
        %v8025 = vpack.c.b16 %v6337, %v6329
        %v8026 = vpack.c.b16 %v6338, %v6330
        %v8027 = vpack.c.b16 %v6347, %v6339
        %v8028 = vpack.c.b16 %v6348, %v6340
        %v8029 = vpack.c.b16 %v6349, %v6341
        %v8030 = vpack.c.b16 %v6350, %v6342
        %v8031 = vpack.c.b16 %v6351, %v6343
        %v8032 = vpack.c.b16 %v6352, %v6344
        %v8033 = vpack.c.b16 %v6353, %v6345
        %v8034 = vpack.c.b16 %v6354, %v6346
        %v8035 = vpack.c.b16 %v6363, %v6355
        %v8036 = vpack.c.b16 %v6364, %v6356
        %v8037 = vpack.c.b16 %v6365, %v6357
        %v8038 = vpack.c.b16 %v6366, %v6358
        %v8039 = vpack.c.b16 %v6367, %v6359
        %v8040 = vpack.c.b16 %v6368, %v6360
        %v8041 = vpack.c.b16 %v6369, %v6361
        %v8042 = vpack.c.b16 %v6370, %v6362
        %v8043 = vpack.c.b16 %v6379, %v6371
        %v8044 = vpack.c.b16 %v6380, %v6372
        %v8045 = vpack.c.b16 %v6381, %v6373
        %v8046 = vpack.c.b16 %v6382, %v6374
        %v8047 = vpack.c.b16 %v6383, %v6375
        %v8048 = vpack.c.b16 %v6384, %v6376
        %v8049 = vpack.c.b16 %v6385, %v6377
        %v8050 = vpack.c.b16 %v6386, %v6378
        %v8051 = vpack.c.b16 %v6395, %v6387
        %v8052 = vpack.c.b16 %v6396, %v6388
        %v8053 = vpack.c.b16 %v6397, %v6389
        %v8054 = vpack.c.b16 %v6398, %v6390
        %v8055 = vpack.c.b16 %v6399, %v6391
        %v8056 = vpack.c.b16 %v6400, %v6392
        %v8057 = vpack.c.b16 %v6401, %v6393
        %v8058 = vpack.c.b16 %v6402, %v6394
        %v8059 = vpack.c.b16 %v6411, %v6403
        %v8060 = vpack.c.b16 %v6412, %v6404
        %v8061 = vpack.c.b16 %v6413, %v6405
        %v8062 = vpack.c.b16 %v6414, %v6406
        %v8063 = vpack.c.b16 %v6415, %v6407
        %v8064 = vpack.c.b16 %v6416, %v6408
        %v8065 = vpack.c.b16 %v6417, %v6409
        %v8066 = vpack.c.b16 %v6418, %v6410
        %v8067 = vpack.c.b16 %v6427, %v6419
        %v8068 = vpack.c.b16 %v6428, %v6420
        %v8069 = vpack.c.b16 %v6429, %v6421
        %v8070 = vpack.c.b16 %v6430, %v6422
        %v8071 = vpack.c.b16 %v6431, %v6423
        %v8072 = vpack.c.b16 %v6432, %v6424
        %v8073 = vpack.c.b16 %v6433, %v6425
        %v8074 = vpack.c.b16 %v6434, %v6426
        %v8075 = vpack.c.b16 %v6443, %v6435
        %v8076 = vpack.c.b16 %v6444, %v6436
        %v8077 = vpack.c.b16 %v6445, %v6437
        %v8078 = vpack.c.b16 %v6446, %v6438
        %v8079 = vpack.c.b16 %v6447, %v6439
        %v8080 = vpack.c.b16 %v6448, %v6440
        %v8081 = vpack.c.b16 %v6449, %v6441
        %v8082 = vpack.c.b16 %v6450, %v6442
        %v8083 = vpack.c.b16 %v6459, %v6451
        %v8084 = vpack.c.b16 %v6460, %v6452
        %v8085 = vpack.c.b16 %v6461, %v6453
        %v8086 = vpack.c.b16 %v6462, %v6454
        %v8087 = vpack.c.b16 %v6463, %v6455
        %v8088 = vpack.c.b16 %v6464, %v6456
        %v8089 = vpack.c.b16 %v6465, %v6457
        %v8090 = vpack.c.b16 %v6466, %v6458
        %v8091 = vpack.c.b16 %v6475, %v6467
        %v8092 = vpack.c.b16 %v6476, %v6468
        %v8093 = vpack.c.b16 %v6477, %v6469
        %v8094 = vpack.c.b16 %v6478, %v6470
        %v8095 = vpack.c.b16 %v6479, %v6471
        %v8096 = vpack.c.b16 %v6480, %v6472
        %v8097 = vpack.c.b16 %v6481, %v6473
        %v8098 = vpack.c.b16 %v6482, %v6474
        %v8099 = vpack.c.b16 %v6491, %v6483
        %v8100 = vpack.c.b16 %v6492, %v6484
        %v8101 = vpack.c.b16 %v6493, %v6485
        %v8102 = vpack.c.b16 %v6494, %v6486
        %v8103 = vpack.c.b16 %v6495, %v6487
        %v8104 = vpack.c.b16 %v6496, %v6488
        %v8105 = vpack.c.b16 %v6497, %v6489
        %v8106 = vpack.c.b16 %v6498, %v6490
        %v8107 = vpack.c.b16 %v6507, %v6499
        %v8108 = vpack.c.b16 %v6508, %v6500
        %v8109 = vpack.c.b16 %v6509, %v6501
        %v8110 = vpack.c.b16 %v6510, %v6502
        %v8111 = vpack.c.b16 %v6511, %v6503
        %v8112 = vpack.c.b16 %v6512, %v6504
        %v8113 = vpack.c.b16 %v6513, %v6505
        %v8114 = vpack.c.b16 %v6514, %v6506
        %v8115 = vpack.c.b16 %v6523, %v6515
        %v8116 = vpack.c.b16 %v6524, %v6516
        %v8117 = vpack.c.b16 %v6525, %v6517
        %v8118 = vpack.c.b16 %v6526, %v6518
        %v8119 = vpack.c.b16 %v6527, %v6519
        %v8120 = vpack.c.b16 %v6528, %v6520
        %v8121 = vpack.c.b16 %v6529, %v6521
        %v8122 = vpack.c.b16 %v6530, %v6522
        %v8123 = vpack.c.b16 %v6539, %v6531
        %v8124 = vpack.c.b16 %v6540, %v6532
        %v8125 = vpack.c.b16 %v6541, %v6533
        %v8126 = vpack.c.b16 %v6542, %v6534
        %v8127 = vpack.c.b16 %v6543, %v6535
        %v8128 = vpack.c.b16 %v6544, %v6536
        %v8129 = vpack.c.b16 %v6545, %v6537
        %v8130 = vpack.c.b16 %v6546, %v6538
        %v8131 = vpack.c.b16 %v6555, %v6547
        %v8132 = vpack.c.b16 %v6556, %v6548
        %v8133 = vpack.c.b16 %v6557, %v6549
        %v8134 = vpack.c.b16 %v6558, %v6550
        %v8135 = vpack.c.b16 %v6559, %v6551
        %v8136 = vpack.c.b16 %v6560, %v6552
        %v8137 = vpack.c.b16 %v6561, %v6553
        %v8138 = vpack.c.b16 %v6562, %v6554
        %v8139 = vpack.c.b16 %v6571, %v6563
        %v8140 = vpack.c.b16 %v6572, %v6564
        %v8141 = vpack.c.b16 %v6573, %v6565
        %v8142 = vpack.c.b16 %v6574, %v6566
        %v8143 = vpack.c.b16 %v6575, %v6567
        %v8144 = vpack.c.b16 %v6576, %v6568
        %v8145 = vpack.c.b16 %v6577, %v6569
        %v8146 = vpack.c.b16 %v6578, %v6570
        %v8147 = vpack.c.b16 %v6587, %v6579
        %v8148 = vpack.c.b16 %v6588, %v6580
        %v8149 = vpack.c.b16 %v6589, %v6581
        %v8150 = vpack.c.b16 %v6590, %v6582
        %v8151 = vpack.c.b16 %v6591, %v6583
        %v8152 = vpack.c.b16 %v6592, %v6584
        %v8153 = vpack.c.b16 %v6593, %v6585
        %v8154 = vpack.c.b16 %v6594, %v6586
        %v8155 = vpack.c.b16 %v6603, %v6595
        %v8156 = vpack.c.b16 %v6604, %v6596
        %v8157 = vpack.c.b16 %v6605, %v6597
        %v8158 = vpack.c.b16 %v6606, %v6598
        %v8159 = vpack.c.b16 %v6607, %v6599
        %v8160 = vpack.c.b16 %v6608, %v6600
        %v8161 = vpack.c.b16 %v6609, %v6601
        %v8162 = vpack.c.b16 %v6610, %v6602
        %v8163 = vpack.c.b16 %v6619, %v6611
        %v8164 = vpack.c.b16 %v6620, %v6612
        %v8165 = vpack.c.b16 %v6621, %v6613
        %v8166 = vpack.c.b16 %v6622, %v6614
        %v8167 = vpack.c.b16 %v6623, %v6615
        %v8168 = vpack.c.b16 %v6624, %v6616
        %v8169 = vpack.c.b16 %v6625, %v6617
        %v8170 = vpack.c.b16 %v6626, %v6618
        %v8171 = vpack.c.b16 %v6635, %v6627
        %v8172 = vpack.c.b16 %v6636, %v6628
        %v8173 = vpack.c.b16 %v6637, %v6629
        %v8174 = vpack.c.b16 %v6638, %v6630
        %v8175 = vpack.c.b16 %v6639, %v6631
        %v8176 = vpack.c.b16 %v6640, %v6632
        %v8177 = vpack.c.b16 %v6641, %v6633
        %v8178 = vpack.c.b16 %v6642, %v6634
        %9715 = vmatprep.subr.bf16.mxu0 %v6644
        %9716 = vmatpush1.bf16.msra.mxu0 %v6643
        %9717 = vmatprep.subr.bf16.mxu0 %v6652
        %9718 = vmatpush1.bf16.msra.mxu0 %v6651
        %9719 = vmatprep.subr.bf16.mxu0 %v6660
        %9720 = vmatpush1.bf16.msra.mxu0 %v6659
        %9721 = vmatprep.subr.bf16.mxu0 %v6668
        %9722 = vmatpush1.bf16.msra.mxu0 %v6667
        %9723 = vmatprep.subr.bf16.mxu0 %v6676
        %9724 = vmatpush1.bf16.msra.mxu0 %v6675
        %9725 = vmatprep.subr.bf16.mxu0 %v6684
        %9726 = vmatpush1.bf16.msra.mxu0 %v6683
        %9727 = vmatprep.subr.bf16.mxu0 %v6692
        %9728 = vmatpush1.bf16.msra.mxu0 %v6691
        %9729 = vmatprep.subr.bf16.mxu0 %v6700
        %9730 = vmatpush1.bf16.msra.mxu0 %v6699
        %9731 = vmatprep.subr.bf16.mxu0 %v6708
        %9732 = vmatpush1.bf16.msra.mxu0 %v6707
        %9733 = vmatprep.subr.bf16.mxu0 %v6716
        %9734 = vmatpush1.bf16.msra.mxu0 %v6715
        %9735 = vmatprep.subr.bf16.mxu0 %v6724
        %9736 = vmatpush1.bf16.msra.mxu0 %v6723
        %9737 = vmatprep.subr.bf16.mxu0 %v6732
        %9738 = vmatpush1.bf16.msra.mxu0 %v6731
        %9739 = vmatprep.subr.bf16.mxu0 %v6740
        %9740 = vmatpush1.bf16.msra.mxu0 %v6739
        %9741 = vmatprep.subr.bf16.mxu0 %v6748
        %9742 = vmatpush1.bf16.msra.mxu0 %v6747
        %9743 = vmatprep.subr.bf16.mxu0 %v6756
        %9744 = vmatpush1.bf16.msra.mxu0 %v6755
        %9745 = vmatprep.subr.bf16.mxu0 %v6764
        %9746 = vmatpush1.bf16.msra.mxu0 %v6763
        %9747 = vmatprep.mubr.bf16.mxu0 %v1901
        %9748 = vmatmul.mubr.bf16.gmra.mrb[0].mxu0 %v1887
        %v9749 = vpop.f32.mrb[0].mxu0
        %v9750 = vadd.f32 0.0, %v9749
        %v9751 = vpop.f32.mrb[0].mxu0
        %v9752 = vadd.f32 0.0, %v9751
        %v9753 = vpop.f32.mrb[0].mxu0
        %v9754 = vpop.f32.mrb[0].mxu0
        %9755 = vdwg.mxu0
        %9756 = vmatprep.subr.bf16.mxu0 %v6772
        %9757 = vmatpush1.bf16.msra.mxu0 %v6771
        %9758 = vmatprep.subr.bf16.mxu0 %v6780
        %9759 = vmatpush1.bf16.msra.mxu0 %v6779
        %9760 = vmatprep.subr.bf16.mxu0 %v6788
        %9761 = vmatpush1.bf16.msra.mxu0 %v6787
        %9762 = vmatprep.subr.bf16.mxu0 %v6796
        %9763 = vmatpush1.bf16.msra.mxu0 %v6795
        %9764 = vmatprep.subr.bf16.mxu0 %v6804
        %9765 = vmatpush1.bf16.msra.mxu0 %v6803
        %9766 = vmatprep.subr.bf16.mxu0 %v6812
        %9767 = vmatpush1.bf16.msra.mxu0 %v6811
        %9768 = vmatprep.subr.bf16.mxu0 %v6820
        %9769 = vmatpush1.bf16.msra.mxu0 %v6819
        %9770 = vmatprep.subr.bf16.mxu0 %v6828
        %9771 = vmatpush1.bf16.msra.mxu0 %v6827
        %9772 = vmatprep.subr.bf16.mxu0 %v6836
        %9773 = vmatpush1.bf16.msra.mxu0 %v6835
        %9774 = vmatprep.subr.bf16.mxu0 %v6844
        %9775 = vmatpush1.bf16.msra.mxu0 %v6843
        %9776 = vmatprep.subr.bf16.mxu0 %v6852
        %9777 = vmatpush1.bf16.msra.mxu0 %v6851
        %9778 = vmatprep.subr.bf16.mxu0 %v6860
        %9779 = vmatpush1.bf16.msra.mxu0 %v6859
        %9780 = vmatprep.subr.bf16.mxu0 %v6868
        %9781 = vmatpush1.bf16.msra.mxu0 %v6867
        %9782 = vmatprep.subr.bf16.mxu0 %v6876
        %9783 = vmatpush1.bf16.msra.mxu0 %v6875
        %9784 = vmatprep.subr.bf16.mxu0 %v6884
        %9785 = vmatpush1.bf16.msra.mxu0 %v6883
        %9786 = vmatprep.subr.bf16.mxu0 %v6892
        %9787 = vmatpush1.bf16.msra.mxu0 %v6891
        %9788 = vmatprep.mubr.bf16.mxu0 %v1911
        %9789 = vmatmul.mubr.bf16.gmra.mrb[0].mxu0 %v1909
        %v9790 = vpop.f32.mrb[0].mxu0
        %v9791 = vadd.f32 %v9750, %v9790
        %v9792 = vpop.f32.mrb[0].mxu0
        %v9793 = vadd.f32 %v9752, %v9792
        %v9794 = vpop.f32.mrb[0].mxu0
        %v9795 = vpop.f32.mrb[0].mxu0
        %9796 = vdwg.mxu0
        %9797 = vmatprep.subr.bf16.mxu0 %v6900
        %9798 = vmatpush1.bf16.msra.mxu0 %v6899
        %9799 = vmatprep.subr.bf16.mxu0 %v6908
        %9800 = vmatpush1.bf16.msra.mxu0 %v6907
        %9801 = vmatprep.subr.bf16.mxu0 %v6916
        %9802 = vmatpush1.bf16.msra.mxu0 %v6915
        %9803 = vmatprep.subr.bf16.mxu0 %v6924
        %9804 = vmatpush1.bf16.msra.mxu0 %v6923
        %9805 = vmatprep.subr.bf16.mxu0 %v6932
        %9806 = vmatpush1.bf16.msra.mxu0 %v6931
        %9807 = vmatprep.subr.bf16.mxu0 %v6940
        %9808 = vmatpush1.bf16.msra.mxu0 %v6939
        %9809 = vmatprep.subr.bf16.mxu0 %v6948
        %9810 = vmatpush1.bf16.msra.mxu0 %v6947
        %9811 = vmatprep.subr.bf16.mxu0 %v6956
        %9812 = vmatpush1.bf16.msra.mxu0 %v6955
        %9813 = vmatprep.subr.bf16.mxu0 %v6964
        %9814 = vmatpush1.bf16.msra.mxu0 %v6963
        %9815 = vmatprep.subr.bf16.mxu0 %v6972
        %9816 = vmatpush1.bf16.msra.mxu0 %v6971
        %9817 = vmatprep.subr.bf16.mxu0 %v6980
        %9818 = vmatpush1.bf16.msra.mxu0 %v6979
        %9819 = vmatprep.subr.bf16.mxu0 %v6988
        %9820 = vmatpush1.bf16.msra.mxu0 %v6987
        %9821 = vmatprep.subr.bf16.mxu0 %v6996
        %9822 = vmatpush1.bf16.msra.mxu0 %v6995
        %9823 = vmatprep.subr.bf16.mxu0 %v7004
        %9824 = vmatpush1.bf16.msra.mxu0 %v7003
        %9825 = vmatprep.subr.bf16.mxu0 %v7012
        %9826 = vmatpush1.bf16.msra.mxu0 %v7011
        %9827 = vmatprep.subr.bf16.mxu0 %v7020
        %9828 = vmatpush1.bf16.msra.mxu0 %v7019
        %9829 = vmatprep.mubr.bf16.mxu0 %v1908
        %9830 = vmatmul.mubr.bf16.gmra.mrb[0].mxu0 %v1894
        %v9831 = vpop.f32.mrb[0].mxu0
        %v9832 = vadd.f32 %v9791, %v9831
        %v9833 = vpop.f32.mrb[0].mxu0
        %v9834 = vadd.f32 %v9793, %v9833
        %v9835 = vpop.f32.mrb[0].mxu0
        %v9836 = vpop.f32.mrb[0].mxu0
        %9837 = vdwg.mxu0
        %9838 = vmatprep.subr.bf16.mxu0 %v7028
        %9839 = vmatpush1.bf16.msra.mxu0 %v7027
        %9840 = vmatprep.subr.bf16.mxu0 %v7036
        %9841 = vmatpush1.bf16.msra.mxu0 %v7035
        %9842 = vmatprep.subr.bf16.mxu0 %v7044
        %9843 = vmatpush1.bf16.msra.mxu0 %v7043
        %9844 = vmatprep.subr.bf16.mxu0 %v7052
        %9845 = vmatpush1.bf16.msra.mxu0 %v7051
        %9846 = vmatprep.subr.bf16.mxu0 %v7060
        %9847 = vmatpush1.bf16.msra.mxu0 %v7059
        %9848 = vmatprep.subr.bf16.mxu0 %v7068
        %9849 = vmatpush1.bf16.msra.mxu0 %v7067
        %9850 = vmatprep.subr.bf16.mxu0 %v7076
        %9851 = vmatpush1.bf16.msra.mxu0 %v7075
        %9852 = vmatprep.subr.bf16.mxu0 %v7084
        %9853 = vmatpush1.bf16.msra.mxu0 %v7083
        %9854 = vmatprep.subr.bf16.mxu0 %v7092
        %9855 = vmatpush1.bf16.msra.mxu0 %v7091
        %9856 = vmatprep.subr.bf16.mxu0 %v7100
        %9857 = vmatpush1.bf16.msra.mxu0 %v7099
        %9858 = vmatprep.subr.bf16.mxu0 %v7108
        %9859 = vmatpush1.bf16.msra.mxu0 %v7107
        %9860 = vmatprep.subr.bf16.mxu0 %v7116
        %9861 = vmatpush1.bf16.msra.mxu0 %v7115
        %9862 = vmatprep.subr.bf16.mxu0 %v7124
        %9863 = vmatpush1.bf16.msra.mxu0 %v7123
        %9864 = vmatprep.subr.bf16.mxu0 %v7132
        %9865 = vmatpush1.bf16.msra.mxu0 %v7131
        %9866 = vmatprep.subr.bf16.mxu0 %v7140
        %9867 = vmatpush1.bf16.msra.mxu0 %v7139
        %9868 = vmatprep.subr.bf16.mxu0 %v7148
        %9869 = vmatpush1.bf16.msra.mxu0 %v7147
        %9870 = vmatprep.mubr.bf16.mxu0 %v1912
        %9871 = vmatmul.mubr.bf16.gmra.mrb[0].mxu0 %v1910
        %v9872 = vpop.f32.mrb[0].mxu0
        %v9873 = vadd.f32 %v9832, %v9872
        %v9874 = vpop.f32.mrb[0].mxu0
        %v9875 = vadd.f32 %v9834, %v9874
        %v9876 = vpop.f32.mrb[0].mxu0
        %v9877 = vpop.f32.mrb[0].mxu0
        %9878 = vdwg.mxu0
        %9879 = vmatprep.subr.bf16.mxu0 %v7156
        %9880 = vmatpush1.bf16.msra.mxu0 %v7155
        %9881 = vmatprep.subr.bf16.mxu0 %v7164
        %9882 = vmatpush1.bf16.msra.mxu0 %v7163
        %9883 = vmatprep.subr.bf16.mxu0 %v7172
        %9884 = vmatpush1.bf16.msra.mxu0 %v7171
        %9885 = vmatprep.subr.bf16.mxu0 %v7180
        %9886 = vmatpush1.bf16.msra.mxu0 %v7179
        %9887 = vmatprep.subr.bf16.mxu0 %v7188
        %9888 = vmatpush1.bf16.msra.mxu0 %v7187
        %9889 = vmatprep.subr.bf16.mxu0 %v7196
        %9890 = vmatpush1.bf16.msra.mxu0 %v7195
        %9891 = vmatprep.subr.bf16.mxu0 %v7204
        %9892 = vmatpush1.bf16.msra.mxu0 %v7203
        %9893 = vmatprep.subr.bf16.mxu0 %v7212
        %9894 = vmatpush1.bf16.msra.mxu0 %v7211
        %9895 = vmatprep.subr.bf16.mxu0 %v7220
        %9896 = vmatpush1.bf16.msra.mxu0 %v7219
        %9897 = vmatprep.subr.bf16.mxu0 %v7228
        %9898 = vmatpush1.bf16.msra.mxu0 %v7227
        %9899 = vmatprep.subr.bf16.mxu0 %v7236
        %9900 = vmatpush1.bf16.msra.mxu0 %v7235
        %9901 = vmatprep.subr.bf16.mxu0 %v7244
        %9902 = vmatpush1.bf16.msra.mxu0 %v7243
        %9903 = vmatprep.subr.bf16.mxu0 %v7252
        %9904 = vmatpush1.bf16.msra.mxu0 %v7251
        %9905 = vmatprep.subr.bf16.mxu0 %v7260
        %9906 = vmatpush1.bf16.msra.mxu0 %v7259
        %9907 = vmatprep.subr.bf16.mxu0 %v7268
        %9908 = vmatpush1.bf16.msra.mxu0 %v7267
        %9909 = vmatprep.subr.bf16.mxu0 %v7276
        %9910 = vmatpush1.bf16.msra.mxu0 %v7275
        %9911 = vmatprep.mubr.bf16.mxu0 %v1950
        %9912 = vmatmul.mubr.bf16.gmra.mrb[0].mxu0 %v1936
        %v9913 = vpop.f32.mrb[0].mxu0
        %v9914 = vadd.f32 %v9873, %v9913
        %v9915 = vpop.f32.mrb[0].mxu0
        %v9916 = vadd.f32 %v9875, %v9915
        %v9917 = vpop.f32.mrb[0].mxu0
        %v9918 = vpop.f32.mrb[0].mxu0
        %9919 = vdwg.mxu0
        %9920 = vmatprep.subr.bf16.mxu0 %v7284
        %9921 = vmatpush1.bf16.msra.mxu0 %v7283
        %9922 = vmatprep.subr.bf16.mxu0 %v7292
        %9923 = vmatpush1.bf16.msra.mxu0 %v7291
        %9924 = vmatprep.subr.bf16.mxu0 %v7300
        %9925 = vmatpush1.bf16.msra.mxu0 %v7299
        %9926 = vmatprep.subr.bf16.mxu0 %v7308
        %9927 = vmatpush1.bf16.msra.mxu0 %v7307
        %9928 = vmatprep.subr.bf16.mxu0 %v7316
        %9929 = vmatpush1.bf16.msra.mxu0 %v7315
        %9930 = vmatprep.subr.bf16.mxu0 %v7324
        %9931 = vmatpush1.bf16.msra.mxu0 %v7323
        %9932 = vmatprep.subr.bf16.mxu0 %v7332
        %9933 = vmatpush1.bf16.msra.mxu0 %v7331
        %9934 = vmatprep.subr.bf16.mxu0 %v7340
        %9935 = vmatpush1.bf16.msra.mxu0 %v7339
        %9936 = vmatprep.subr.bf16.mxu0 %v7348
        %9937 = vmatpush1.bf16.msra.mxu0 %v7347
        %9938 = vmatprep.subr.bf16.mxu0 %v7356
        %9939 = vmatpush1.bf16.msra.mxu0 %v7355
        %9940 = vmatprep.subr.bf16.mxu0 %v7364
        %9941 = vmatpush1.bf16.msra.mxu0 %v7363
        %9942 = vmatprep.subr.bf16.mxu0 %v7372
        %9943 = vmatpush1.bf16.msra.mxu0 %v7371
        %9944 = vmatprep.subr.bf16.mxu0 %v7380
        %9945 = vmatpush1.bf16.msra.mxu0 %v7379
        %9946 = vmatprep.subr.bf16.mxu0 %v7388
        %9947 = vmatpush1.bf16.msra.mxu0 %v7387
        %9948 = vmatprep.subr.bf16.mxu0 %v7396
        %9949 = vmatpush1.bf16.msra.mxu0 %v7395
        %9950 = vmatprep.subr.bf16.mxu0 %v7404
        %9951 = vmatpush1.bf16.msra.mxu0 %v7403
        %9952 = vmatprep.mubr.bf16.mxu0 %v1960
        %9953 = vmatmul.mubr.bf16.gmra.mrb[0].mxu0 %v1958
        %v9954 = vpop.f32.mrb[0].mxu0
        %v9955 = vadd.f32 %v9914, %v9954
        %v9956 = vpop.f32.mrb[0].mxu0
        %v9957 = vadd.f32 %v9916, %v9956
        %v9958 = vpop.f32.mrb[0].mxu0
        %v9959 = vpop.f32.mrb[0].mxu0
        %9960 = vdwg.mxu0
        %9961 = vmatprep.subr.bf16.mxu0 %v7412
        %9962 = vmatpush1.bf16.msra.mxu0 %v7411
        %9963 = vmatprep.subr.bf16.mxu0 %v7420
        %9964 = vmatpush1.bf16.msra.mxu0 %v7419
        %9965 = vmatprep.subr.bf16.mxu0 %v7428
        %9966 = vmatpush1.bf16.msra.mxu0 %v7427
        %9967 = vmatprep.subr.bf16.mxu0 %v7436
        %9968 = vmatpush1.bf16.msra.mxu0 %v7435
        %9969 = vmatprep.subr.bf16.mxu0 %v7444
        %9970 = vmatpush1.bf16.msra.mxu0 %v7443
        %9971 = vmatprep.subr.bf16.mxu0 %v7452
        %9972 = vmatpush1.bf16.msra.mxu0 %v7451
        %9973 = vmatprep.subr.bf16.mxu0 %v7460
        %9974 = vmatpush1.bf16.msra.mxu0 %v7459
        %9975 = vmatprep.subr.bf16.mxu0 %v7468
        %9976 = vmatpush1.bf16.msra.mxu0 %v7467
        %9977 = vmatprep.subr.bf16.mxu0 %v7476
        %9978 = vmatpush1.bf16.msra.mxu0 %v7475
        %9979 = vmatprep.subr.bf16.mxu0 %v7484
        %9980 = vmatpush1.bf16.msra.mxu0 %v7483
        %9981 = vmatprep.subr.bf16.mxu0 %v7492
        %9982 = vmatpush1.bf16.msra.mxu0 %v7491
        %9983 = vmatprep.subr.bf16.mxu0 %v7500
        %9984 = vmatpush1.bf16.msra.mxu0 %v7499
        %9985 = vmatprep.subr.bf16.mxu0 %v7508
        %9986 = vmatpush1.bf16.msra.mxu0 %v7507
        %9987 = vmatprep.subr.bf16.mxu0 %v7516
        %9988 = vmatpush1.bf16.msra.mxu0 %v7515
        %9989 = vmatprep.subr.bf16.mxu0 %v7524
        %9990 = vmatpush1.bf16.msra.mxu0 %v7523
        %9991 = vmatprep.subr.bf16.mxu0 %v7532
        %9992 = vmatpush1.bf16.msra.mxu0 %v7531
        %9993 = vmatprep.mubr.bf16.mxu0 %v1957
        %9994 = vmatmul.mubr.bf16.gmra.mrb[0].mxu0 %v1943
        %v9995 = vpop.f32.mrb[0].mxu0
        %v9996 = vadd.f32 %v9955, %v9995
        %v9997 = vpop.f32.mrb[0].mxu0
        %v9998 = vadd.f32 %v9957, %v9997
        %v9999 = vpop.f32.mrb[0].mxu0
        %v10000 = vpop.f32.mrb[0].mxu0
        %10001 = vdwg.mxu0
        %10002 = vmatprep.subr.bf16.mxu0 %v7540
        %10003 = vmatpush1.bf16.msra.mxu0 %v7539
        %10004 = vmatprep.subr.bf16.mxu0 %v7548
        %10005 = vmatpush1.bf16.msra.mxu0 %v7547
        %10006 = vmatprep.subr.bf16.mxu0 %v7556
        %10007 = vmatpush1.bf16.msra.mxu0 %v7555
        %10008 = vmatprep.subr.bf16.mxu0 %v7564
        %10009 = vmatpush1.bf16.msra.mxu0 %v7563
        %10010 = vmatprep.subr.bf16.mxu0 %v7572
        %10011 = vmatpush1.bf16.msra.mxu0 %v7571
        %10012 = vmatprep.subr.bf16.mxu0 %v7580
        %10013 = vmatpush1.bf16.msra.mxu0 %v7579
        %10014 = vmatprep.subr.bf16.mxu0 %v7588
        %10015 = vmatpush1.bf16.msra.mxu0 %v7587
        %10016 = vmatprep.subr.bf16.mxu0 %v7596
        %10017 = vmatpush1.bf16.msra.mxu0 %v7595
        %10018 = vmatprep.subr.bf16.mxu0 %v7604
        %10019 = vmatpush1.bf16.msra.mxu0 %v7603
        %10020 = vmatprep.subr.bf16.mxu0 %v7612
        %10021 = vmatpush1.bf16.msra.mxu0 %v7611
        %10022 = vmatprep.subr.bf16.mxu0 %v7620
        %10023 = vmatpush1.bf16.msra.mxu0 %v7619
        %10024 = vmatprep.subr.bf16.mxu0 %v7628
        %10025 = vmatpush1.bf16.msra.mxu0 %v7627
        %10026 = vmatprep.subr.bf16.mxu0 %v7636
        %10027 = vmatpush1.bf16.msra.mxu0 %v7635
        %10028 = vmatprep.subr.bf16.mxu0 %v7644
        %10029 = vmatpush1.bf16.msra.mxu0 %v7643
        %10030 = vmatprep.subr.bf16.mxu0 %v7652
        %10031 = vmatpush1.bf16.msra.mxu0 %v7651
        %10032 = vmatprep.subr.bf16.mxu0 %v7660
        %10033 = vmatpush1.bf16.msra.mxu0 %v7659
        %10034 = vmatprep.mubr.bf16.mxu0 %v1961
        %10035 = vmatmul.mubr.bf16.gmra.mrb[0].mxu0 %v1959
        %v10036 = vpop.f32.mrb[0].mxu0
        %v10037 = vadd.f32 %v9996, %v10036
        %v10038 = vpop.f32.mrb[0].mxu0
        %v10039 = vadd.f32 %v9998, %v10038
        %v10040 = vpop.f32.mrb[0].mxu0
        %v10041 = vpop.f32.mrb[0].mxu0
        %10042 = vdwg.mxu0
        %10043 = vmatprep.subr.bf16.mxu0 %v7668
        %10044 = vmatpush1.bf16.msra.mxu0 %v7667
        %10045 = vmatprep.subr.bf16.mxu0 %v7676
        %10046 = vmatpush1.bf16.msra.mxu0 %v7675
        %10047 = vmatprep.subr.bf16.mxu0 %v7684
        %10048 = vmatpush1.bf16.msra.mxu0 %v7683
        %10049 = vmatprep.subr.bf16.mxu0 %v7692
        %10050 = vmatpush1.bf16.msra.mxu0 %v7691
        %10051 = vmatprep.subr.bf16.mxu0 %v7700
        %10052 = vmatpush1.bf16.msra.mxu0 %v7699
        %10053 = vmatprep.subr.bf16.mxu0 %v7708
        %10054 = vmatpush1.bf16.msra.mxu0 %v7707
        %10055 = vmatprep.subr.bf16.mxu0 %v7716
        %10056 = vmatpush1.bf16.msra.mxu0 %v7715
        %10057 = vmatprep.subr.bf16.mxu0 %v7724
        %10058 = vmatpush1.bf16.msra.mxu0 %v7723
        %10059 = vmatprep.subr.bf16.mxu0 %v7732
        %10060 = vmatpush1.bf16.msra.mxu0 %v7731
        %10061 = vmatprep.subr.bf16.mxu0 %v7740
        %10062 = vmatpush1.bf16.msra.mxu0 %v7739
        %10063 = vmatprep.subr.bf16.mxu0 %v7748
        %10064 = vmatpush1.bf16.msra.mxu0 %v7747
        %10065 = vmatprep.subr.bf16.mxu0 %v7756
        %10066 = vmatpush1.bf16.msra.mxu0 %v7755
        %10067 = vmatprep.subr.bf16.mxu0 %v7764
        %10068 = vmatpush1.bf16.msra.mxu0 %v7763
        %10069 = vmatprep.subr.bf16.mxu0 %v7772
        %10070 = vmatpush1.bf16.msra.mxu0 %v7771
        %10071 = vmatprep.subr.bf16.mxu0 %v7780
        %10072 = vmatpush1.bf16.msra.mxu0 %v7779
        %10073 = vmatprep.subr.bf16.mxu0 %v7788
        %10074 = vmatpush1.bf16.msra.mxu0 %v7787
        %10075 = vmatprep.mubr.bf16.mxu0 %v1999
        %10076 = vmatmul.mubr.bf16.gmra.mrb[0].mxu0 %v1985
        %v10077 = vpop.f32.mrb[0].mxu0
        %v10078 = vadd.f32 %v10037, %v10077
        %v10079 = vpop.f32.mrb[0].mxu0
        %v10080 = vadd.f32 %v10039, %v10079
        %v10081 = vpop.f32.mrb[0].mxu0
        %v10082 = vpop.f32.mrb[0].mxu0
        %10083 = vdwg.mxu0
        %10084 = vmatprep.subr.bf16.mxu0 %v7796
        %10085 = vmatpush1.bf16.msra.mxu0 %v7795
        %10086 = vmatprep.subr.bf16.mxu0 %v7804
        %10087 = vmatpush1.bf16.msra.mxu0 %v7803
        %10088 = vmatprep.subr.bf16.mxu0 %v7812
        %10089 = vmatpush1.bf16.msra.mxu0 %v7811
        %10090 = vmatprep.subr.bf16.mxu0 %v7820
        %10091 = vmatpush1.bf16.msra.mxu0 %v7819
        %10092 = vmatprep.subr.bf16.mxu0 %v7828
        %10093 = vmatpush1.bf16.msra.mxu0 %v7827
        %10094 = vmatprep.subr.bf16.mxu0 %v7836
        %10095 = vmatpush1.bf16.msra.mxu0 %v7835
        %10096 = vmatprep.subr.bf16.mxu0 %v7844
        %10097 = vmatpush1.bf16.msra.mxu0 %v7843
        %10098 = vmatprep.subr.bf16.mxu0 %v7852
        %10099 = vmatpush1.bf16.msra.mxu0 %v7851
        %10100 = vmatprep.subr.bf16.mxu0 %v7860
        %10101 = vmatpush1.bf16.msra.mxu0 %v7859
        %10102 = vmatprep.subr.bf16.mxu0 %v7868
        %10103 = vmatpush1.bf16.msra.mxu0 %v7867
        %10104 = vmatprep.subr.bf16.mxu0 %v7876
        %10105 = vmatpush1.bf16.msra.mxu0 %v7875
        %10106 = vmatprep.subr.bf16.mxu0 %v7884
        %10107 = vmatpush1.bf16.msra.mxu0 %v7883
        %10108 = vmatprep.subr.bf16.mxu0 %v7892
        %10109 = vmatpush1.bf16.msra.mxu0 %v7891
        %10110 = vmatprep.subr.bf16.mxu0 %v7900
        %10111 = vmatpush1.bf16.msra.mxu0 %v7899
        %10112 = vmatprep.subr.bf16.mxu0 %v7908
        %10113 = vmatpush1.bf16.msra.mxu0 %v7907
        %10114 = vmatprep.subr.bf16.mxu0 %v7916
        %10115 = vmatpush1.bf16.msra.mxu0 %v7915
        %10116 = vmatprep.mubr.bf16.mxu0 %v2009
        %10117 = vmatmul.mubr.bf16.gmra.mrb[0].mxu0 %v2007
        %v10118 = vpop.f32.mrb[0].mxu0
        %v10119 = vadd.f32 %v10078, %v10118
        %v10120 = vpop.f32.mrb[0].mxu0
        %v10121 = vadd.f32 %v10080, %v10120
        %v10122 = vpop.f32.mrb[0].mxu0
        %v10123 = vpop.f32.mrb[0].mxu0
        %10124 = vdwg.mxu0
        %10125 = vmatprep.subr.bf16.mxu0 %v7924
        %10126 = vmatpush1.bf16.msra.mxu0 %v7923
        %10127 = vmatprep.subr.bf16.mxu0 %v7932
        %10128 = vmatpush1.bf16.msra.mxu0 %v7931
        %10129 = vmatprep.subr.bf16.mxu0 %v7940
        %10130 = vmatpush1.bf16.msra.mxu0 %v7939
        %10131 = vmatprep.subr.bf16.mxu0 %v7948
        %10132 = vmatpush1.bf16.msra.mxu0 %v7947
        %10133 = vmatprep.subr.bf16.mxu0 %v7956
        %10134 = vmatpush1.bf16.msra.mxu0 %v7955
        %10135 = vmatprep.subr.bf16.mxu0 %v7964
        %10136 = vmatpush1.bf16.msra.mxu0 %v7963
        %10137 = vmatprep.subr.bf16.mxu0 %v7972
        %10138 = vmatpush1.bf16.msra.mxu0 %v7971
        %10139 = vmatprep.subr.bf16.mxu0 %v7980
        %10140 = vmatpush1.bf16.msra.mxu0 %v7979
        %10141 = vmatprep.subr.bf16.mxu0 %v7988
        %10142 = vmatpush1.bf16.msra.mxu0 %v7987
        %10143 = vmatprep.subr.bf16.mxu0 %v7996
        %10144 = vmatpush1.bf16.msra.mxu0 %v7995
        %10145 = vmatprep.subr.bf16.mxu0 %v8004
        %10146 = vmatpush1.bf16.msra.mxu0 %v8003
        %10147 = vmatprep.subr.bf16.mxu0 %v8012
        %10148 = vmatpush1.bf16.msra.mxu0 %v8011
        %10149 = vmatprep.subr.bf16.mxu0 %v8020
        %10150 = vmatpush1.bf16.msra.mxu0 %v8019
        %10151 = vmatprep.subr.bf16.mxu0 %v8028
        %10152 = vmatpush1.bf16.msra.mxu0 %v8027
        %10153 = vmatprep.subr.bf16.mxu0 %v8036
        %10154 = vmatpush1.bf16.msra.mxu0 %v8035
        %10155 = vmatprep.subr.bf16.mxu0 %v8044
        %10156 = vmatpush1.bf16.msra.mxu0 %v8043
        %10157 = vmatprep.mubr.bf16.mxu0 %v2006
        %10158 = vmatmul.mubr.bf16.gmra.mrb[0].mxu0 %v1992
        %v10159 = vpop.f32.mrb[0].mxu0
        %v10160 = vadd.f32 %v10119, %v10159
        %v10161 = vpop.f32.mrb[0].mxu0
        %v10162 = vadd.f32 %v10121, %v10161
        %v10163 = vpop.f32.mrb[0].mxu0
        %v10164 = vpop.f32.mrb[0].mxu0
        %10165 = vdwg.mxu0
        %10166 = vmatprep.subr.bf16.mxu0 %v8052
        %10167 = vmatpush1.bf16.msra.mxu0 %v8051
        %10168 = vmatprep.subr.bf16.mxu0 %v8060
        %10169 = vmatpush1.bf16.msra.mxu0 %v8059
        %10170 = vmatprep.subr.bf16.mxu0 %v8068
        %10171 = vmatpush1.bf16.msra.mxu0 %v8067
        %10172 = vmatprep.subr.bf16.mxu0 %v8076
        %10173 = vmatpush1.bf16.msra.mxu0 %v8075
        %10174 = vmatprep.subr.bf16.mxu0 %v8084
        %10175 = vmatpush1.bf16.msra.mxu0 %v8083
        %10176 = vmatprep.subr.bf16.mxu0 %v8092
        %10177 = vmatpush1.bf16.msra.mxu0 %v8091
        %10178 = vmatprep.subr.bf16.mxu0 %v8100
        %10179 = vmatpush1.bf16.msra.mxu0 %v8099
        %10180 = vmatprep.subr.bf16.mxu0 %v8108
        %10181 = vmatpush1.bf16.msra.mxu0 %v8107
        %10182 = vmatprep.subr.bf16.mxu0 %v8116
        %10183 = vmatpush1.bf16.msra.mxu0 %v8115
        %10184 = vmatprep.subr.bf16.mxu0 %v8124
        %10185 = vmatpush1.bf16.msra.mxu0 %v8123
        %10186 = vmatprep.subr.bf16.mxu0 %v8132
        %10187 = vmatpush1.bf16.msra.mxu0 %v8131
        %10188 = vmatprep.subr.bf16.mxu0 %v8140
        %10189 = vmatpush1.bf16.msra.mxu0 %v8139
        %10190 = vmatprep.subr.bf16.mxu0 %v8148
        %10191 = vmatpush1.bf16.msra.mxu0 %v8147
        %10192 = vmatprep.subr.bf16.mxu0 %v8156
        %10193 = vmatpush1.bf16.msra.mxu0 %v8155
        %10194 = vmatprep.subr.bf16.mxu0 %v8164
        %10195 = vmatpush1.bf16.msra.mxu0 %v8163
        %10196 = vmatprep.subr.bf16.mxu0 %v8172
        %10197 = vmatpush1.bf16.msra.mxu0 %v8171
        %10198 = vmatprep.mubr.bf16.mxu0 %v2010
        %10199 = vmatmul.mubr.bf16.gmra.mrb[0].mxu0 %v2008
        %v10200 = vpop.f32.mrb[0].mxu0
        %v10201 = vadd.f32 %v10160, %v10200
        %v10202 = vpop.f32.mrb[0].mxu0
        %v10203 = vadd.f32 %v10162, %v10202
        %v10204 = vpop.f32.mrb[0].mxu0
        %v10205 = vpop.f32.mrb[0].mxu0
        %10206 = vdwg.mxu0
        %10207 = vmatprep.subr.bf16.mxu0 %v6646
        %10208 = vmatpush1.bf16.msra.mxu0 %v6645
        %10209 = vmatprep.subr.bf16.mxu0 %v6654
        %10210 = vmatpush1.bf16.msra.mxu0 %v6653
        %10211 = vmatprep.subr.bf16.mxu0 %v6662
        %10212 = vmatpush1.bf16.msra.mxu0 %v6661
        %10213 = vmatprep.subr.bf16.mxu0 %v6670
        %10214 = vmatpush1.bf16.msra.mxu0 %v6669
        %10215 = vmatprep.subr.bf16.mxu0 %v6678
        %10216 = vmatpush1.bf16.msra.mxu0 %v6677
        %10217 = vmatprep.subr.bf16.mxu0 %v6686
        %10218 = vmatpush1.bf16.msra.mxu0 %v6685
        %10219 = vmatprep.subr.bf16.mxu0 %v6694
        %10220 = vmatpush1.bf16.msra.mxu0 %v6693
        %10221 = vmatprep.subr.bf16.mxu0 %v6702
        %10222 = vmatpush1.bf16.msra.mxu0 %v6701
        %10223 = vmatprep.subr.bf16.mxu0 %v6710
        %10224 = vmatpush1.bf16.msra.mxu0 %v6709
        %10225 = vmatprep.subr.bf16.mxu0 %v6718
        %10226 = vmatpush1.bf16.msra.mxu0 %v6717
        %10227 = vmatprep.subr.bf16.mxu0 %v6726
        %10228 = vmatpush1.bf16.msra.mxu0 %v6725
        %10229 = vmatprep.subr.bf16.mxu0 %v6734
        %10230 = vmatpush1.bf16.msra.mxu0 %v6733
        %10231 = vmatprep.subr.bf16.mxu0 %v6742
        %10232 = vmatpush1.bf16.msra.mxu0 %v6741
        %10233 = vmatprep.subr.bf16.mxu0 %v6750
        %10234 = vmatpush1.bf16.msra.mxu0 %v6749
        %10235 = vmatprep.subr.bf16.mxu0 %v6758
        %10236 = vmatpush1.bf16.msra.mxu0 %v6757
        %10237 = vmatprep.subr.bf16.mxu0 %v6766
        %10238 = vmatpush1.bf16.msra.mxu0 %v6765
        %10239 = vmatprep.mubr.bf16.mxu0 %v1901
        %10240 = vmatmul.mubr.bf16.gmra.mrb[0].mxu0 %v1887
        %v10241 = vpop.f32.mrb[0].mxu0
        %v10242 = vadd.f32 0.0, %v10241
        %v10243 = vpop.f32.mrb[0].mxu0
        %v10244 = vadd.f32 0.0, %v10243
        %v10245 = vpop.f32.mrb[0].mxu0
        %v10246 = vpop.f32.mrb[0].mxu0
        %10247 = vdwg.mxu0
        %10248 = vmatprep.subr.bf16.mxu0 %v6774
        %10249 = vmatpush1.bf16.msra.mxu0 %v6773
        %10250 = vmatprep.subr.bf16.mxu0 %v6782
        %10251 = vmatpush1.bf16.msra.mxu0 %v6781
        %10252 = vmatprep.subr.bf16.mxu0 %v6790
        %10253 = vmatpush1.bf16.msra.mxu0 %v6789
        %10254 = vmatprep.subr.bf16.mxu0 %v6798
        %10255 = vmatpush1.bf16.msra.mxu0 %v6797
        %10256 = vmatprep.subr.bf16.mxu0 %v6806
        %10257 = vmatpush1.bf16.msra.mxu0 %v6805
        %10258 = vmatprep.subr.bf16.mxu0 %v6814
        %10259 = vmatpush1.bf16.msra.mxu0 %v6813
        %10260 = vmatprep.subr.bf16.mxu0 %v6822
        %10261 = vmatpush1.bf16.msra.mxu0 %v6821
        %10262 = vmatprep.subr.bf16.mxu0 %v6830
        %10263 = vmatpush1.bf16.msra.mxu0 %v6829
        %10264 = vmatprep.subr.bf16.mxu0 %v6838
        %10265 = vmatpush1.bf16.msra.mxu0 %v6837
        %10266 = vmatprep.subr.bf16.mxu0 %v6846
        %10267 = vmatpush1.bf16.msra.mxu0 %v6845
        %10268 = vmatprep.subr.bf16.mxu0 %v6854
        %10269 = vmatpush1.bf16.msra.mxu0 %v6853
        %10270 = vmatprep.subr.bf16.mxu0 %v6862
        %10271 = vmatpush1.bf16.msra.mxu0 %v6861
        %10272 = vmatprep.subr.bf16.mxu0 %v6870
        %10273 = vmatpush1.bf16.msra.mxu0 %v6869
        %10274 = vmatprep.subr.bf16.mxu0 %v6878
        %10275 = vmatpush1.bf16.msra.mxu0 %v6877
        %10276 = vmatprep.subr.bf16.mxu0 %v6886
        %10277 = vmatpush1.bf16.msra.mxu0 %v6885
        %10278 = vmatprep.subr.bf16.mxu0 %v6894
        %10279 = vmatpush1.bf16.msra.mxu0 %v6893
        %10280 = vmatprep.mubr.bf16.mxu0 %v1911
        %10281 = vmatmul.mubr.bf16.gmra.mrb[0].mxu0 %v1909
        %v10282 = vpop.f32.mrb[0].mxu0
        %v10283 = vadd.f32 %v10242, %v10282
        %v10284 = vpop.f32.mrb[0].mxu0
        %v10285 = vadd.f32 %v10244, %v10284
        %v10286 = vpop.f32.mrb[0].mxu0
        %v10287 = vpop.f32.mrb[0].mxu0
        %10288 = vdwg.mxu0
        %10289 = vmatprep.subr.bf16.mxu0 %v6902
        %10290 = vmatpush1.bf16.msra.mxu0 %v6901
        %10291 = vmatprep.subr.bf16.mxu0 %v6910
        %10292 = vmatpush1.bf16.msra.mxu0 %v6909
        %10293 = vmatprep.subr.bf16.mxu0 %v6918
        %10294 = vmatpush1.bf16.msra.mxu0 %v6917
        %10295 = vmatprep.subr.bf16.mxu0 %v6926
        %10296 = vmatpush1.bf16.msra.mxu0 %v6925
        %10297 = vmatprep.subr.bf16.mxu0 %v6934
        %10298 = vmatpush1.bf16.msra.mxu0 %v6933
        %10299 = vmatprep.subr.bf16.mxu0 %v6942
        %10300 = vmatpush1.bf16.msra.mxu0 %v6941
        %10301 = vmatprep.subr.bf16.mxu0 %v6950
        %10302 = vmatpush1.bf16.msra.mxu0 %v6949
        %10303 = vmatprep.subr.bf16.mxu0 %v6958
        %10304 = vmatpush1.bf16.msra.mxu0 %v6957
        %10305 = vmatprep.subr.bf16.mxu0 %v6966
        %10306 = vmatpush1.bf16.msra.mxu0 %v6965
        %10307 = vmatprep.subr.bf16.mxu0 %v6974
        %10308 = vmatpush1.bf16.msra.mxu0 %v6973
        %10309 = vmatprep.subr.bf16.mxu0 %v6982
        %10310 = vmatpush1.bf16.msra.mxu0 %v6981
        %10311 = vmatprep.subr.bf16.mxu0 %v6990
        %10312 = vmatpush1.bf16.msra.mxu0 %v6989
        %10313 = vmatprep.subr.bf16.mxu0 %v6998
        %10314 = vmatpush1.bf16.msra.mxu0 %v6997
        %10315 = vmatprep.subr.bf16.mxu0 %v7006
        %10316 = vmatpush1.bf16.msra.mxu0 %v7005
        %10317 = vmatprep.subr.bf16.mxu0 %v7014
        %10318 = vmatpush1.bf16.msra.mxu0 %v7013
        %10319 = vmatprep.subr.bf16.mxu0 %v7022
        %10320 = vmatpush1.bf16.msra.mxu0 %v7021
        %10321 = vmatprep.mubr.bf16.mxu0 %v1908
        %10322 = vmatmul.mubr.bf16.gmra.mrb[0].mxu0 %v1894
        %v10323 = vpop.f32.mrb[0].mxu0
        %v10324 = vadd.f32 %v10283, %v10323
        %v10325 = vpop.f32.mrb[0].mxu0
        %v10326 = vadd.f32 %v10285, %v10325
        %v10327 = vpop.f32.mrb[0].mxu0
        %v10328 = vpop.f32.mrb[0].mxu0
        %10329 = vdwg.mxu0
        %10330 = vmatprep.subr.bf16.mxu0 %v7030
        %10331 = vmatpush1.bf16.msra.mxu0 %v7029
        %10332 = vmatprep.subr.bf16.mxu0 %v7038
        %10333 = vmatpush1.bf16.msra.mxu0 %v7037
        %10334 = vmatprep.subr.bf16.mxu0 %v7046
        %10335 = vmatpush1.bf16.msra.mxu0 %v7045
        %10336 = vmatprep.subr.bf16.mxu0 %v7054
        %10337 = vmatpush1.bf16.msra.mxu0 %v7053
        %10338 = vmatprep.subr.bf16.mxu0 %v7062
        %10339 = vmatpush1.bf16.msra.mxu0 %v7061
        %10340 = vmatprep.subr.bf16.mxu0 %v7070
        %10341 = vmatpush1.bf16.msra.mxu0 %v7069
        %10342 = vmatprep.subr.bf16.mxu0 %v7078
        %10343 = vmatpush1.bf16.msra.mxu0 %v7077
        %10344 = vmatprep.subr.bf16.mxu0 %v7086
        %10345 = vmatpush1.bf16.msra.mxu0 %v7085
        %10346 = vmatprep.subr.bf16.mxu0 %v7094
        %10347 = vmatpush1.bf16.msra.mxu0 %v7093
        %10348 = vmatprep.subr.bf16.mxu0 %v7102
        %10349 = vmatpush1.bf16.msra.mxu0 %v7101
        %10350 = vmatprep.subr.bf16.mxu0 %v7110
        %10351 = vmatpush1.bf16.msra.mxu0 %v7109
        %10352 = vmatprep.subr.bf16.mxu0 %v7118
        %10353 = vmatpush1.bf16.msra.mxu0 %v7117
        %10354 = vmatprep.subr.bf16.mxu0 %v7126
        %10355 = vmatpush1.bf16.msra.mxu0 %v7125
        %10356 = vmatprep.subr.bf16.mxu0 %v7134
        %10357 = vmatpush1.bf16.msra.mxu0 %v7133
        %10358 = vmatprep.subr.bf16.mxu0 %v7142
        %10359 = vmatpush1.bf16.msra.mxu0 %v7141
        %10360 = vmatprep.subr.bf16.mxu0 %v7150
        %10361 = vmatpush1.bf16.msra.mxu0 %v7149
        %10362 = vmatprep.mubr.bf16.mxu0 %v1912
        %10363 = vmatmul.mubr.bf16.gmra.mrb[0].mxu0 %v1910
        %v10364 = vpop.f32.mrb[0].mxu0
        %v10365 = vadd.f32 %v10324, %v10364
        %v10366 = vpop.f32.mrb[0].mxu0
        %v10367 = vadd.f32 %v10326, %v10366
        %v10368 = vpop.f32.mrb[0].mxu0
        %v10369 = vpop.f32.mrb[0].mxu0
        %10370 = vdwg.mxu0
        %10371 = vmatprep.subr.bf16.mxu0 %v7158
        %10372 = vmatpush1.bf16.msra.mxu0 %v7157
        %10373 = vmatprep.subr.bf16.mxu0 %v7166
        %10374 = vmatpush1.bf16.msra.mxu0 %v7165
        %10375 = vmatprep.subr.bf16.mxu0 %v7174
        %10376 = vmatpush1.bf16.msra.mxu0 %v7173
        %10377 = vmatprep.subr.bf16.mxu0 %v7182
        %10378 = vmatpush1.bf16.msra.mxu0 %v7181
        %10379 = vmatprep.subr.bf16.mxu0 %v7190
        %10380 = vmatpush1.bf16.msra.mxu0 %v7189
        %10381 = vmatprep.subr.bf16.mxu0 %v7198
        %10382 = vmatpush1.bf16.msra.mxu0 %v7197
        %10383 = vmatprep.subr.bf16.mxu0 %v7206
        %10384 = vmatpush1.bf16.msra.mxu0 %v7205
        %10385 = vmatprep.subr.bf16.mxu0 %v7214
        %10386 = vmatpush1.bf16.msra.mxu0 %v7213
        %10387 = vmatprep.subr.bf16.mxu0 %v7222
        %10388 = vmatpush1.bf16.msra.mxu0 %v7221
        %10389 = vmatprep.subr.bf16.mxu0 %v7230
        %10390 = vmatpush1.bf16.msra.mxu0 %v7229
        %10391 = vmatprep.subr.bf16.mxu0 %v7238
        %10392 = vmatpush1.bf16.msra.mxu0 %v7237
        %10393 = vmatprep.subr.bf16.mxu0 %v7246
        %10394 = vmatpush1.bf16.msra.mxu0 %v7245
        %10395 = vmatprep.subr.bf16.mxu0 %v7254
        %10396 = vmatpush1.bf16.msra.mxu0 %v7253
        %10397 = vmatprep.subr.bf16.mxu0 %v7262
        %10398 = vmatpush1.bf16.msra.mxu0 %v7261
        %10399 = vmatprep.subr.bf16.mxu0 %v7270
        %10400 = vmatpush1.bf16.msra.mxu0 %v7269
        %10401 = vmatprep.subr.bf16.mxu0 %v7278
        %10402 = vmatpush1.bf16.msra.mxu0 %v7277
        %10403 = vmatprep.mubr.bf16.mxu0 %v1950
        %10404 = vmatmul.mubr.bf16.gmra.mrb[0].mxu0 %v1936
        %v10405 = vpop.f32.mrb[0].mxu0
        %v10406 = vadd.f32 %v10365, %v10405
        %v10407 = vpop.f32.mrb[0].mxu0
        %v10408 = vadd.f32 %v10367, %v10407
        %v10409 = vpop.f32.mrb[0].mxu0
        %v10410 = vpop.f32.mrb[0].mxu0
        %10411 = vdwg.mxu0
        %10412 = vmatprep.subr.bf16.mxu0 %v7286
        %10413 = vmatpush1.bf16.msra.mxu0 %v7285
        %10414 = vmatprep.subr.bf16.mxu0 %v7294
        %10415 = vmatpush1.bf16.msra.mxu0 %v7293
        %10416 = vmatprep.subr.bf16.mxu0 %v7302
        %10417 = vmatpush1.bf16.msra.mxu0 %v7301
        %10418 = vmatprep.subr.bf16.mxu0 %v7310
        %10419 = vmatpush1.bf16.msra.mxu0 %v7309
        %10420 = vmatprep.subr.bf16.mxu0 %v7318
        %10421 = vmatpush1.bf16.msra.mxu0 %v7317
        %10422 = vmatprep.subr.bf16.mxu0 %v7326
        %10423 = vmatpush1.bf16.msra.mxu0 %v7325
        %10424 = vmatprep.subr.bf16.mxu0 %v7334
        %10425 = vmatpush1.bf16.msra.mxu0 %v7333
        %10426 = vmatprep.subr.bf16.mxu0 %v7342
        %10427 = vmatpush1.bf16.msra.mxu0 %v7341
        %10428 = vmatprep.subr.bf16.mxu0 %v7350
        %10429 = vmatpush1.bf16.msra.mxu0 %v7349
        %10430 = vmatprep.subr.bf16.mxu0 %v7358
        %10431 = vmatpush1.bf16.msra.mxu0 %v7357
        %10432 = vmatprep.subr.bf16.mxu0 %v7366
        %10433 = vmatpush1.bf16.msra.mxu0 %v7365
        %10434 = vmatprep.subr.bf16.mxu0 %v7374
        %10435 = vmatpush1.bf16.msra.mxu0 %v7373
        %10436 = vmatprep.subr.bf16.mxu0 %v7382
        %10437 = vmatpush1.bf16.msra.mxu0 %v7381
        %10438 = vmatprep.subr.bf16.mxu0 %v7390
        %10439 = vmatpush1.bf16.msra.mxu0 %v7389
        %10440 = vmatprep.subr.bf16.mxu0 %v7398
        %10441 = vmatpush1.bf16.msra.mxu0 %v7397
        %10442 = vmatprep.subr.bf16.mxu0 %v7406
        %10443 = vmatpush1.bf16.msra.mxu0 %v7405
        %10444 = vmatprep.mubr.bf16.mxu0 %v1960
        %10445 = vmatmul.mubr.bf16.gmra.mrb[0].mxu0 %v1958
        %v10446 = vpop.f32.mrb[0].mxu0
        %v10447 = vadd.f32 %v10406, %v10446
        %v10448 = vpop.f32.mrb[0].mxu0
        %v10449 = vadd.f32 %v10408, %v10448
        %v10450 = vpop.f32.mrb[0].mxu0
        %v10451 = vpop.f32.mrb[0].mxu0
        %10452 = vdwg.mxu0
        %10453 = vmatprep.subr.bf16.mxu0 %v7414
        %10454 = vmatpush1.bf16.msra.mxu0 %v7413
        %10455 = vmatprep.subr.bf16.mxu0 %v7422
        %10456 = vmatpush1.bf16.msra.mxu0 %v7421
        %10457 = vmatprep.subr.bf16.mxu0 %v7430
        %10458 = vmatpush1.bf16.msra.mxu0 %v7429
        %10459 = vmatprep.subr.bf16.mxu0 %v7438
        %10460 = vmatpush1.bf16.msra.mxu0 %v7437
        %10461 = vmatprep.subr.bf16.mxu0 %v7446
        %10462 = vmatpush1.bf16.msra.mxu0 %v7445
        %10463 = vmatprep.subr.bf16.mxu0 %v7454
        %10464 = vmatpush1.bf16.msra.mxu0 %v7453
        %10465 = vmatprep.subr.bf16.mxu0 %v7462
        %10466 = vmatpush1.bf16.msra.mxu0 %v7461
        %10467 = vmatprep.subr.bf16.mxu0 %v7470
        %10468 = vmatpush1.bf16.msra.mxu0 %v7469
        %10469 = vmatprep.subr.bf16.mxu0 %v7478
        %10470 = vmatpush1.bf16.msra.mxu0 %v7477
        %10471 = vmatprep.subr.bf16.mxu0 %v7486
        %10472 = vmatpush1.bf16.msra.mxu0 %v7485
        %10473 = vmatprep.subr.bf16.mxu0 %v7494
        %10474 = vmatpush1.bf16.msra.mxu0 %v7493
        %10475 = vmatprep.subr.bf16.mxu0 %v7502
        %10476 = vmatpush1.bf16.msra.mxu0 %v7501
        %10477 = vmatprep.subr.bf16.mxu0 %v7510
        %10478 = vmatpush1.bf16.msra.mxu0 %v7509
        %10479 = vmatprep.subr.bf16.mxu0 %v7518
        %10480 = vmatpush1.bf16.msra.mxu0 %v7517
        %10481 = vmatprep.subr.bf16.mxu0 %v7526
        %10482 = vmatpush1.bf16.msra.mxu0 %v7525
        %10483 = vmatprep.subr.bf16.mxu0 %v7534
        %10484 = vmatpush1.bf16.msra.mxu0 %v7533
        %10485 = vmatprep.mubr.bf16.mxu0 %v1957
        %10486 = vmatmul.mubr.bf16.gmra.mrb[0].mxu0 %v1943
        %v10487 = vpop.f32.mrb[0].mxu0
        %v10488 = vadd.f32 %v10447, %v10487
        %v10489 = vpop.f32.mrb[0].mxu0
        %v10490 = vadd.f32 %v10449, %v10489
        %v10491 = vpop.f32.mrb[0].mxu0
        %v10492 = vpop.f32.mrb[0].mxu0
        %10493 = vdwg.mxu0
        %10494 = vmatprep.subr.bf16.mxu0 %v7542
        %10495 = vmatpush1.bf16.msra.mxu0 %v7541
        %10496 = vmatprep.subr.bf16.mxu0 %v7550
        %10497 = vmatpush1.bf16.msra.mxu0 %v7549
        %10498 = vmatprep.subr.bf16.mxu0 %v7558
        %10499 = vmatpush1.bf16.msra.mxu0 %v7557
        %10500 = vmatprep.subr.bf16.mxu0 %v7566
        %10501 = vmatpush1.bf16.msra.mxu0 %v7565
        %10502 = vmatprep.subr.bf16.mxu0 %v7574
        %10503 = vmatpush1.bf16.msra.mxu0 %v7573
        %10504 = vmatprep.subr.bf16.mxu0 %v7582
        %10505 = vmatpush1.bf16.msra.mxu0 %v7581
        %10506 = vmatprep.subr.bf16.mxu0 %v7590
        %10507 = vmatpush1.bf16.msra.mxu0 %v7589
        %10508 = vmatprep.subr.bf16.mxu0 %v7598
        %10509 = vmatpush1.bf16.msra.mxu0 %v7597
        %10510 = vmatprep.subr.bf16.mxu0 %v7606
        %10511 = vmatpush1.bf16.msra.mxu0 %v7605
        %10512 = vmatprep.subr.bf16.mxu0 %v7614
        %10513 = vmatpush1.bf16.msra.mxu0 %v7613
        %10514 = vmatprep.subr.bf16.mxu0 %v7622
        %10515 = vmatpush1.bf16.msra.mxu0 %v7621
        %10516 = vmatprep.subr.bf16.mxu0 %v7630
        %10517 = vmatpush1.bf16.msra.mxu0 %v7629
        %10518 = vmatprep.subr.bf16.mxu0 %v7638
        %10519 = vmatpush1.bf16.msra.mxu0 %v7637
        %10520 = vmatprep.subr.bf16.mxu0 %v7646
        %10521 = vmatpush1.bf16.msra.mxu0 %v7645
        %10522 = vmatprep.subr.bf16.mxu0 %v7654
        %10523 = vmatpush1.bf16.msra.mxu0 %v7653
        %10524 = vmatprep.subr.bf16.mxu0 %v7662
        %10525 = vmatpush1.bf16.msra.mxu0 %v7661
        %10526 = vmatprep.mubr.bf16.mxu0 %v1961
        %10527 = vmatmul.mubr.bf16.gmra.mrb[0].mxu0 %v1959
        %v10528 = vpop.f32.mrb[0].mxu0
        %v10529 = vadd.f32 %v10488, %v10528
        %v10530 = vpop.f32.mrb[0].mxu0
        %v10531 = vadd.f32 %v10490, %v10530
        %v10532 = vpop.f32.mrb[0].mxu0
        %v10533 = vpop.f32.mrb[0].mxu0
        %10534 = vdwg.mxu0
        %10535 = vmatprep.subr.bf16.mxu0 %v7670
        %10536 = vmatpush1.bf16.msra.mxu0 %v7669
        %10537 = vmatprep.subr.bf16.mxu0 %v7678
        %10538 = vmatpush1.bf16.msra.mxu0 %v7677
        %10539 = vmatprep.subr.bf16.mxu0 %v7686
        %10540 = vmatpush1.bf16.msra.mxu0 %v7685
        %10541 = vmatprep.subr.bf16.mxu0 %v7694
        %10542 = vmatpush1.bf16.msra.mxu0 %v7693
        %10543 = vmatprep.subr.bf16.mxu0 %v7702
        %10544 = vmatpush1.bf16.msra.mxu0 %v7701
        %10545 = vmatprep.subr.bf16.mxu0 %v7710
        %10546 = vmatpush1.bf16.msra.mxu0 %v7709
        %10547 = vmatprep.subr.bf16.mxu0 %v7718
        %10548 = vmatpush1.bf16.msra.mxu0 %v7717
        %10549 = vmatprep.subr.bf16.mxu0 %v7726
        %10550 = vmatpush1.bf16.msra.mxu0 %v7725
        %10551 = vmatprep.subr.bf16.mxu0 %v7734
        %10552 = vmatpush1.bf16.msra.mxu0 %v7733
        %10553 = vmatprep.subr.bf16.mxu0 %v7742
        %10554 = vmatpush1.bf16.msra.mxu0 %v7741
        %10555 = vmatprep.subr.bf16.mxu0 %v7750
        %10556 = vmatpush1.bf16.msra.mxu0 %v7749
        %10557 = vmatprep.subr.bf16.mxu0 %v7758
        %10558 = vmatpush1.bf16.msra.mxu0 %v7757
        %10559 = vmatprep.subr.bf16.mxu0 %v7766
        %10560 = vmatpush1.bf16.msra.mxu0 %v7765
        %10561 = vmatprep.subr.bf16.mxu0 %v7774
        %10562 = vmatpush1.bf16.msra.mxu0 %v7773
        %10563 = vmatprep.subr.bf16.mxu0 %v7782
        %10564 = vmatpush1.bf16.msra.mxu0 %v7781
        %10565 = vmatprep.subr.bf16.mxu0 %v7790
        %10566 = vmatpush1.bf16.msra.mxu0 %v7789
        %10567 = vmatprep.mubr.bf16.mxu0 %v1999
        %10568 = vmatmul.mubr.bf16.gmra.mrb[0].mxu0 %v1985
        %v10569 = vpop.f32.mrb[0].mxu0
        %v10570 = vadd.f32 %v10529, %v10569
        %v10571 = vpop.f32.mrb[0].mxu0
        %v10572 = vadd.f32 %v10531, %v10571
        %v10573 = vpop.f32.mrb[0].mxu0
        %v10574 = vpop.f32.mrb[0].mxu0
        %10575 = vdwg.mxu0
        %10576 = vmatprep.subr.bf16.mxu0 %v7798
        %10577 = vmatpush1.bf16.msra.mxu0 %v7797
        %10578 = vmatprep.subr.bf16.mxu0 %v7806
        %10579 = vmatpush1.bf16.msra.mxu0 %v7805
        %10580 = vmatprep.subr.bf16.mxu0 %v7814
        %10581 = vmatpush1.bf16.msra.mxu0 %v7813
        %10582 = vmatprep.subr.bf16.mxu0 %v7822
        %10583 = vmatpush1.bf16.msra.mxu0 %v7821
        %10584 = vmatprep.subr.bf16.mxu0 %v7830
        %10585 = vmatpush1.bf16.msra.mxu0 %v7829
        %10586 = vmatprep.subr.bf16.mxu0 %v7838
        %10587 = vmatpush1.bf16.msra.mxu0 %v7837
        %10588 = vmatprep.subr.bf16.mxu0 %v7846
        %10589 = vmatpush1.bf16.msra.mxu0 %v7845
        %10590 = vmatprep.subr.bf16.mxu0 %v7854
        %10591 = vmatpush1.bf16.msra.mxu0 %v7853
        %10592 = vmatprep.subr.bf16.mxu0 %v7862
        %10593 = vmatpush1.bf16.msra.mxu0 %v7861
        %10594 = vmatprep.subr.bf16.mxu0 %v7870
        %10595 = vmatpush1.bf16.msra.mxu0 %v7869
        %10596 = vmatprep.subr.bf16.mxu0 %v7878
        %10597 = vmatpush1.bf16.msra.mxu0 %v7877
        %10598 = vmatprep.subr.bf16.mxu0 %v7886
        %10599 = vmatpush1.bf16.msra.mxu0 %v7885
        %10600 = vmatprep.subr.bf16.mxu0 %v7894
        %10601 = vmatpush1.bf16.msra.mxu0 %v7893
        %10602 = vmatprep.subr.bf16.mxu0 %v7902
        %10603 = vmatpush1.bf16.msra.mxu0 %v7901
        %10604 = vmatprep.subr.bf16.mxu0 %v7910
        %10605 = vmatpush1.bf16.msra.mxu0 %v7909
        %10606 = vmatprep.subr.bf16.mxu0 %v7918
        %10607 = vmatpush1.bf16.msra.mxu0 %v7917
        %10608 = vmatprep.mubr.bf16.mxu0 %v2009
        %10609 = vmatmul.mubr.bf16.gmra.mrb[0].mxu0 %v2007
        %v10610 = vpop.f32.mrb[0].mxu0
        %v10611 = vadd.f32 %v10570, %v10610
        %v10612 = vpop.f32.mrb[0].mxu0
        %v10613 = vadd.f32 %v10572, %v10612
        %v10614 = vpop.f32.mrb[0].mxu0
        %v10615 = vpop.f32.mrb[0].mxu0
        %10616 = vdwg.mxu0
        %10617 = vmatprep.subr.bf16.mxu0 %v7926
        %10618 = vmatpush1.bf16.msra.mxu0 %v7925
        %10619 = vmatprep.subr.bf16.mxu0 %v7934
        %10620 = vmatpush1.bf16.msra.mxu0 %v7933
        %10621 = vmatprep.subr.bf16.mxu0 %v7942
        %10622 = vmatpush1.bf16.msra.mxu0 %v7941
        %10623 = vmatprep.subr.bf16.mxu0 %v7950
        %10624 = vmatpush1.bf16.msra.mxu0 %v7949
        %10625 = vmatprep.subr.bf16.mxu0 %v7958
        %10626 = vmatpush1.bf16.msra.mxu0 %v7957
        %10627 = vmatprep.subr.bf16.mxu0 %v7966
        %10628 = vmatpush1.bf16.msra.mxu0 %v7965
        %10629 = vmatprep.subr.bf16.mxu0 %v7974
        %10630 = vmatpush1.bf16.msra.mxu0 %v7973
        %10631 = vmatprep.subr.bf16.mxu0 %v7982
        %10632 = vmatpush1.bf16.msra.mxu0 %v7981
        %10633 = vmatprep.subr.bf16.mxu0 %v7990
        %10634 = vmatpush1.bf16.msra.mxu0 %v7989
        %10635 = vmatprep.subr.bf16.mxu0 %v7998
        %10636 = vmatpush1.bf16.msra.mxu0 %v7997
        %10637 = vmatprep.subr.bf16.mxu0 %v8006
        %10638 = vmatpush1.bf16.msra.mxu0 %v8005
        %10639 = vmatprep.subr.bf16.mxu0 %v8014
        %10640 = vmatpush1.bf16.msra.mxu0 %v8013
        %10641 = vmatprep.subr.bf16.mxu0 %v8022
        %10642 = vmatpush1.bf16.msra.mxu0 %v8021
        %10643 = vmatprep.subr.bf16.mxu0 %v8030
        %10644 = vmatpush1.bf16.msra.mxu0 %v8029
        %10645 = vmatprep.subr.bf16.mxu0 %v8038
        %10646 = vmatpush1.bf16.msra.mxu0 %v8037
        %10647 = vmatprep.subr.bf16.mxu0 %v8046
        %10648 = vmatpush1.bf16.msra.mxu0 %v8045
        %10649 = vmatprep.mubr.bf16.mxu0 %v2006
        %10650 = vmatmul.mubr.bf16.gmra.mrb[0].mxu0 %v1992
        %v10651 = vpop.f32.mrb[0].mxu0
        %v10652 = vadd.f32 %v10611, %v10651
        %v10653 = vpop.f32.mrb[0].mxu0
        %v10654 = vadd.f32 %v10613, %v10653
        %v10655 = vpop.f32.mrb[0].mxu0
        %v10656 = vpop.f32.mrb[0].mxu0
        %10657 = vdwg.mxu0
        %10658 = vmatprep.subr.bf16.mxu0 %v8054
        %10659 = vmatpush1.bf16.msra.mxu0 %v8053
        %10660 = vmatprep.subr.bf16.mxu0 %v8062
        %10661 = vmatpush1.bf16.msra.mxu0 %v8061
        %10662 = vmatprep.subr.bf16.mxu0 %v8070
        %10663 = vmatpush1.bf16.msra.mxu0 %v8069
        %10664 = vmatprep.subr.bf16.mxu0 %v8078
        %10665 = vmatpush1.bf16.msra.mxu0 %v8077
        %10666 = vmatprep.subr.bf16.mxu0 %v8086
        %10667 = vmatpush1.bf16.msra.mxu0 %v8085
        %10668 = vmatprep.subr.bf16.mxu0 %v8094
        %10669 = vmatpush1.bf16.msra.mxu0 %v8093
        %10670 = vmatprep.subr.bf16.mxu0 %v8102
        %10671 = vmatpush1.bf16.msra.mxu0 %v8101
        %10672 = vmatprep.subr.bf16.mxu0 %v8110
        %10673 = vmatpush1.bf16.msra.mxu0 %v8109
        %10674 = vmatprep.subr.bf16.mxu0 %v8118
        %10675 = vmatpush1.bf16.msra.mxu0 %v8117
        %10676 = vmatprep.subr.bf16.mxu0 %v8126
        %10677 = vmatpush1.bf16.msra.mxu0 %v8125
        %10678 = vmatprep.subr.bf16.mxu0 %v8134
        %10679 = vmatpush1.bf16.msra.mxu0 %v8133
        %10680 = vmatprep.subr.bf16.mxu0 %v8142
        %10681 = vmatpush1.bf16.msra.mxu0 %v8141
        %10682 = vmatprep.subr.bf16.mxu0 %v8150
        %10683 = vmatpush1.bf16.msra.mxu0 %v8149
        %10684 = vmatprep.subr.bf16.mxu0 %v8158
        %10685 = vmatpush1.bf16.msra.mxu0 %v8157
        %10686 = vmatprep.subr.bf16.mxu0 %v8166
        %10687 = vmatpush1.bf16.msra.mxu0 %v8165
        %10688 = vmatprep.subr.bf16.mxu0 %v8174
        %10689 = vmatpush1.bf16.msra.mxu0 %v8173
        %10690 = vmatprep.mubr.bf16.mxu0 %v2010
        %10691 = vmatmul.mubr.bf16.gmra.mrb[0].mxu0 %v2008
        %v10692 = vpop.f32.mrb[0].mxu0
        %v10693 = vadd.f32 %v10652, %v10692
        %v10694 = vpop.f32.mrb[0].mxu0
        %v10695 = vadd.f32 %v10654, %v10694
        %v10696 = vpop.f32.mrb[0].mxu0
        %v10697 = vpop.f32.mrb[0].mxu0
        %10698 = vdwg.mxu0
        %10699 = vmatprep.subr.bf16.mxu0 %v6648
        %10700 = vmatpush1.bf16.msra.mxu0 %v6647
        %10701 = vmatprep.subr.bf16.mxu0 %v6656
        %10702 = vmatpush1.bf16.msra.mxu0 %v6655
        %10703 = vmatprep.subr.bf16.mxu0 %v6664
        %10704 = vmatpush1.bf16.msra.mxu0 %v6663
        %10705 = vmatprep.subr.bf16.mxu0 %v6672
        %10706 = vmatpush1.bf16.msra.mxu0 %v6671
        %10707 = vmatprep.subr.bf16.mxu0 %v6680
        %10708 = vmatpush1.bf16.msra.mxu0 %v6679
        %10709 = vmatprep.subr.bf16.mxu0 %v6688
        %10710 = vmatpush1.bf16.msra.mxu0 %v6687
        %10711 = vmatprep.subr.bf16.mxu0 %v6696
        %10712 = vmatpush1.bf16.msra.mxu0 %v6695
        %10713 = vmatprep.subr.bf16.mxu0 %v6704
        %10714 = vmatpush1.bf16.msra.mxu0 %v6703
        %10715 = vmatprep.subr.bf16.mxu0 %v6712
        %10716 = vmatpush1.bf16.msra.mxu0 %v6711
        %10717 = vmatprep.subr.bf16.mxu0 %v6720
        %10718 = vmatpush1.bf16.msra.mxu0 %v6719
        %10719 = vmatprep.subr.bf16.mxu0 %v6728
        %10720 = vmatpush1.bf16.msra.mxu0 %v6727
        %10721 = vmatprep.subr.bf16.mxu0 %v6736
        %10722 = vmatpush1.bf16.msra.mxu0 %v6735
        %10723 = vmatprep.subr.bf16.mxu0 %v6744
        %10724 = vmatpush1.bf16.msra.mxu0 %v6743
        %10725 = vmatprep.subr.bf16.mxu0 %v6752
        %10726 = vmatpush1.bf16.msra.mxu0 %v6751
        %10727 = vmatprep.subr.bf16.mxu0 %v6760
        %10728 = vmatpush1.bf16.msra.mxu0 %v6759
        %10729 = vmatprep.subr.bf16.mxu0 %v6768
        %10730 = vmatpush1.bf16.msra.mxu0 %v6767
        %10731 = vmatprep.mubr.bf16.mxu0 %v1901
        %10732 = vmatmul.mubr.bf16.gmra.mrb[0].mxu0 %v1887
        %v10733 = vpop.f32.mrb[0].mxu0
        %v10734 = vadd.f32 0.0, %v10733
        %v10735 = vpop.f32.mrb[0].mxu0
        %v10736 = vadd.f32 0.0, %v10735
        %v10737 = vpop.f32.mrb[0].mxu0
        %v10738 = vpop.f32.mrb[0].mxu0
        %10739 = vdwg.mxu0
        %10740 = vmatprep.subr.bf16.mxu0 %v6776
        %10741 = vmatpush1.bf16.msra.mxu0 %v6775
        %10742 = vmatprep.subr.bf16.mxu0 %v6784
        %10743 = vmatpush1.bf16.msra.mxu0 %v6783
        %10744 = vmatprep.subr.bf16.mxu0 %v6792
        %10745 = vmatpush1.bf16.msra.mxu0 %v6791
        %10746 = vmatprep.subr.bf16.mxu0 %v6800
        %10747 = vmatpush1.bf16.msra.mxu0 %v6799
        %10748 = vmatprep.subr.bf16.mxu0 %v6808
        %10749 = vmatpush1.bf16.msra.mxu0 %v6807
        %10750 = vmatprep.subr.bf16.mxu0 %v6816
        %10751 = vmatpush1.bf16.msra.mxu0 %v6815
        %10752 = vmatprep.subr.bf16.mxu0 %v6824
        %10753 = vmatpush1.bf16.msra.mxu0 %v6823
        %10754 = vmatprep.subr.bf16.mxu0 %v6832
        %10755 = vmatpush1.bf16.msra.mxu0 %v6831
        %10756 = vmatprep.subr.bf16.mxu0 %v6840
        %10757 = vmatpush1.bf16.msra.mxu0 %v6839
        %10758 = vmatprep.subr.bf16.mxu0 %v6848
        %10759 = vmatpush1.bf16.msra.mxu0 %v6847
        %10760 = vmatprep.subr.bf16.mxu0 %v6856
        %10761 = vmatpush1.bf16.msra.mxu0 %v6855
        %10762 = vmatprep.subr.bf16.mxu0 %v6864
        %10763 = vmatpush1.bf16.msra.mxu0 %v6863
        %10764 = vmatprep.subr.bf16.mxu0 %v6872
        %10765 = vmatpush1.bf16.msra.mxu0 %v6871
        %10766 = vmatprep.subr.bf16.mxu0 %v6880
        %10767 = vmatpush1.bf16.msra.mxu0 %v6879
        %10768 = vmatprep.subr.bf16.mxu0 %v6888
        %10769 = vmatpush1.bf16.msra.mxu0 %v6887
        %10770 = vmatprep.subr.bf16.mxu0 %v6896
        %10771 = vmatpush1.bf16.msra.mxu0 %v6895
        %10772 = vmatprep.mubr.bf16.mxu0 %v1911
        %10773 = vmatmul.mubr.bf16.gmra.mrb[0].mxu0 %v1909
        %v10774 = vpop.f32.mrb[0].mxu0
        %v10775 = vadd.f32 %v10734, %v10774
        %v10776 = vpop.f32.mrb[0].mxu0
        %v10777 = vadd.f32 %v10736, %v10776
        %v10778 = vpop.f32.mrb[0].mxu0
        %v10779 = vpop.f32.mrb[0].mxu0
        %10780 = vdwg.mxu0
        %10781 = vmatprep.subr.bf16.mxu0 %v6904
        %10782 = vmatpush1.bf16.msra.mxu0 %v6903
        %10783 = vmatprep.subr.bf16.mxu0 %v6912
        %10784 = vmatpush1.bf16.msra.mxu0 %v6911
        %10785 = vmatprep.subr.bf16.mxu0 %v6920
        %10786 = vmatpush1.bf16.msra.mxu0 %v6919
        %10787 = vmatprep.subr.bf16.mxu0 %v6928
        %10788 = vmatpush1.bf16.msra.mxu0 %v6927
        %10789 = vmatprep.subr.bf16.mxu0 %v6936
        %10790 = vmatpush1.bf16.msra.mxu0 %v6935
        %10791 = vmatprep.subr.bf16.mxu0 %v6944
        %10792 = vmatpush1.bf16.msra.mxu0 %v6943
        %10793 = vmatprep.subr.bf16.mxu0 %v6952
        %10794 = vmatpush1.bf16.msra.mxu0 %v6951
        %10795 = vmatprep.subr.bf16.mxu0 %v6960
        %10796 = vmatpush1.bf16.msra.mxu0 %v6959
        %10797 = vmatprep.subr.bf16.mxu0 %v6968
        %10798 = vmatpush1.bf16.msra.mxu0 %v6967
        %10799 = vmatprep.subr.bf16.mxu0 %v6976
        %10800 = vmatpush1.bf16.msra.mxu0 %v6975
        %10801 = vmatprep.subr.bf16.mxu0 %v6984
        %10802 = vmatpush1.bf16.msra.mxu0 %v6983
        %10803 = vmatprep.subr.bf16.mxu0 %v6992
        %10804 = vmatpush1.bf16.msra.mxu0 %v6991
        %10805 = vmatprep.subr.bf16.mxu0 %v7000
        %10806 = vmatpush1.bf16.msra.mxu0 %v6999
        %10807 = vmatprep.subr.bf16.mxu0 %v7008
        %10808 = vmatpush1.bf16.msra.mxu0 %v7007
        %10809 = vmatprep.subr.bf16.mxu0 %v7016
        %10810 = vmatpush1.bf16.msra.mxu0 %v7015
        %10811 = vmatprep.subr.bf16.mxu0 %v7024
        %10812 = vmatpush1.bf16.msra.mxu0 %v7023
        %10813 = vmatprep.mubr.bf16.mxu0 %v1908
        %10814 = vmatmul.mubr.bf16.gmra.mrb[0].mxu0 %v1894
        %v10815 = vpop.f32.mrb[0].mxu0
        %v10816 = vadd.f32 %v10775, %v10815
        %v10817 = vpop.f32.mrb[0].mxu0
        %v10818 = vadd.f32 %v10777, %v10817
        %v10819 = vpop.f32.mrb[0].mxu0
        %v10820 = vpop.f32.mrb[0].mxu0
        %10821 = vdwg.mxu0
        %10822 = vmatprep.subr.bf16.mxu0 %v7032
        %10823 = vmatpush1.bf16.msra.mxu0 %v7031
        %10824 = vmatprep.subr.bf16.mxu0 %v7040
        %10825 = vmatpush1.bf16.msra.mxu0 %v7039
        %10826 = vmatprep.subr.bf16.mxu0 %v7048
        %10827 = vmatpush1.bf16.msra.mxu0 %v7047
        %10828 = vmatprep.subr.bf16.mxu0 %v7056
        %10829 = vmatpush1.bf16.msra.mxu0 %v7055
        %10830 = vmatprep.subr.bf16.mxu0 %v7064
        %10831 = vmatpush1.bf16.msra.mxu0 %v7063
        %10832 = vmatprep.subr.bf16.mxu0 %v7072
        %10833 = vmatpush1.bf16.msra.mxu0 %v7071
        %10834 = vmatprep.subr.bf16.mxu0 %v7080
        %10835 = vmatpush1.bf16.msra.mxu0 %v7079
        %10836 = vmatprep.subr.bf16.mxu0 %v7088
        %10837 = vmatpush1.bf16.msra.mxu0 %v7087
        %10838 = vmatprep.subr.bf16.mxu0 %v7096
        %10839 = vmatpush1.bf16.msra.mxu0 %v7095
        %10840 = vmatprep.subr.bf16.mxu0 %v7104
        %10841 = vmatpush1.bf16.msra.mxu0 %v7103
        %10842 = vmatprep.subr.bf16.mxu0 %v7112
        %10843 = vmatpush1.bf16.msra.mxu0 %v7111
        %10844 = vmatprep.subr.bf16.mxu0 %v7120
        %10845 = vmatpush1.bf16.msra.mxu0 %v7119
        %10846 = vmatprep.subr.bf16.mxu0 %v7128
        %10847 = vmatpush1.bf16.msra.mxu0 %v7127
        %10848 = vmatprep.subr.bf16.mxu0 %v7136
        %10849 = vmatpush1.bf16.msra.mxu0 %v7135
        %10850 = vmatprep.subr.bf16.mxu0 %v7144
        %10851 = vmatpush1.bf16.msra.mxu0 %v7143
        %10852 = vmatprep.subr.bf16.mxu0 %v7152
        %10853 = vmatpush1.bf16.msra.mxu0 %v7151
        %10854 = vmatprep.mubr.bf16.mxu0 %v1912
        %10855 = vmatmul.mubr.bf16.gmra.mrb[0].mxu0 %v1910
        %v10856 = vpop.f32.mrb[0].mxu0
        %v10857 = vadd.f32 %v10816, %v10856
        %v10858 = vpop.f32.mrb[0].mxu0
        %v10859 = vadd.f32 %v10818, %v10858
        %v10860 = vpop.f32.mrb[0].mxu0
        %v10861 = vpop.f32.mrb[0].mxu0
        %10862 = vdwg.mxu0
        %10863 = vmatprep.subr.bf16.mxu0 %v7160
        %10864 = vmatpush1.bf16.msra.mxu0 %v7159
        %10865 = vmatprep.subr.bf16.mxu0 %v7168
        %10866 = vmatpush1.bf16.msra.mxu0 %v7167
        %10867 = vmatprep.subr.bf16.mxu0 %v7176
        %10868 = vmatpush1.bf16.msra.mxu0 %v7175
        %10869 = vmatprep.subr.bf16.mxu0 %v7184
        %10870 = vmatpush1.bf16.msra.mxu0 %v7183
        %10871 = vmatprep.subr.bf16.mxu0 %v7192
        %10872 = vmatpush1.bf16.msra.mxu0 %v7191
        %10873 = vmatprep.subr.bf16.mxu0 %v7200
        %10874 = vmatpush1.bf16.msra.mxu0 %v7199
        %10875 = vmatprep.subr.bf16.mxu0 %v7208
        %10876 = vmatpush1.bf16.msra.mxu0 %v7207
        %10877 = vmatprep.subr.bf16.mxu0 %v7216
        %10878 = vmatpush1.bf16.msra.mxu0 %v7215
        %10879 = vmatprep.subr.bf16.mxu0 %v7224
        %10880 = vmatpush1.bf16.msra.mxu0 %v7223
        %10881 = vmatprep.subr.bf16.mxu0 %v7232
        %10882 = vmatpush1.bf16.msra.mxu0 %v7231
        %10883 = vmatprep.subr.bf16.mxu0 %v7240
        %10884 = vmatpush1.bf16.msra.mxu0 %v7239
        %10885 = vmatprep.subr.bf16.mxu0 %v7248
        %10886 = vmatpush1.bf16.msra.mxu0 %v7247
        %10887 = vmatprep.subr.bf16.mxu0 %v7256
        %10888 = vmatpush1.bf16.msra.mxu0 %v7255
        %10889 = vmatprep.subr.bf16.mxu0 %v7264
        %10890 = vmatpush1.bf16.msra.mxu0 %v7263
        %10891 = vmatprep.subr.bf16.mxu0 %v7272
        %10892 = vmatpush1.bf16.msra.mxu0 %v7271
        %10893 = vmatprep.subr.bf16.mxu0 %v7280
        %10894 = vmatpush1.bf16.msra.mxu0 %v7279
        %10895 = vmatprep.mubr.bf16.mxu0 %v1950
        %10896 = vmatmul.mubr.bf16.gmra.mrb[0].mxu0 %v1936
        %v10897 = vpop.f32.mrb[0].mxu0
        %v10898 = vadd.f32 %v10857, %v10897
        %v10899 = vpop.f32.mrb[0].mxu0
        %v10900 = vadd.f32 %v10859, %v10899
        %v10901 = vpop.f32.mrb[0].mxu0
        %v10902 = vpop.f32.mrb[0].mxu0
        %10903 = vdwg.mxu0
        %10904 = vmatprep.subr.bf16.mxu0 %v7288
        %10905 = vmatpush1.bf16.msra.mxu0 %v7287
        %10906 = vmatprep.subr.bf16.mxu0 %v7296
        %10907 = vmatpush1.bf16.msra.mxu0 %v7295
        %10908 = vmatprep.subr.bf16.mxu0 %v7304
        %10909 = vmatpush1.bf16.msra.mxu0 %v7303
        %10910 = vmatprep.subr.bf16.mxu0 %v7312
        %10911 = vmatpush1.bf16.msra.mxu0 %v7311
        %10912 = vmatprep.subr.bf16.mxu0 %v7320
        %10913 = vmatpush1.bf16.msra.mxu0 %v7319
        %10914 = vmatprep.subr.bf16.mxu0 %v7328
        %10915 = vmatpush1.bf16.msra.mxu0 %v7327
        %10916 = vmatprep.subr.bf16.mxu0 %v7336
        %10917 = vmatpush1.bf16.msra.mxu0 %v7335
        %10918 = vmatprep.subr.bf16.mxu0 %v7344
        %10919 = vmatpush1.bf16.msra.mxu0 %v7343
        %10920 = vmatprep.subr.bf16.mxu0 %v7352
        %10921 = vmatpush1.bf16.msra.mxu0 %v7351
        %10922 = vmatprep.subr.bf16.mxu0 %v7360
        %10923 = vmatpush1.bf16.msra.mxu0 %v7359
        %10924 = vmatprep.subr.bf16.mxu0 %v7368
        %10925 = vmatpush1.bf16.msra.mxu0 %v7367
        %10926 = vmatprep.subr.bf16.mxu0 %v7376
        %10927 = vmatpush1.bf16.msra.mxu0 %v7375
        %10928 = vmatprep.subr.bf16.mxu0 %v7384
        %10929 = vmatpush1.bf16.msra.mxu0 %v7383
        %10930 = vmatprep.subr.bf16.mxu0 %v7392
        %10931 = vmatpush1.bf16.msra.mxu0 %v7391
        %10932 = vmatprep.subr.bf16.mxu0 %v7400
        %10933 = vmatpush1.bf16.msra.mxu0 %v7399
        %10934 = vmatprep.subr.bf16.mxu0 %v7408
        %10935 = vmatpush1.bf16.msra.mxu0 %v7407
        %10936 = vmatprep.mubr.bf16.mxu0 %v1960
        %10937 = vmatmul.mubr.bf16.gmra.mrb[0].mxu0 %v1958
        %v10938 = vpop.f32.mrb[0].mxu0
        %v10939 = vadd.f32 %v10898, %v10938
        %v10940 = vpop.f32.mrb[0].mxu0
        %v10941 = vadd.f32 %v10900, %v10940
        %v10942 = vpop.f32.mrb[0].mxu0
        %v10943 = vpop.f32.mrb[0].mxu0
        %10944 = vdwg.mxu0
        %10945 = vmatprep.subr.bf16.mxu0 %v7416
        %10946 = vmatpush1.bf16.msra.mxu0 %v7415
        %10947 = vmatprep.subr.bf16.mxu0 %v7424
        %10948 = vmatpush1.bf16.msra.mxu0 %v7423
        %10949 = vmatprep.subr.bf16.mxu0 %v7432
        %10950 = vmatpush1.bf16.msra.mxu0 %v7431
        %10951 = vmatprep.subr.bf16.mxu0 %v7440
        %10952 = vmatpush1.bf16.msra.mxu0 %v7439
        %10953 = vmatprep.subr.bf16.mxu0 %v7448
        %10954 = vmatpush1.bf16.msra.mxu0 %v7447
        %10955 = vmatprep.subr.bf16.mxu0 %v7456
        %10956 = vmatpush1.bf16.msra.mxu0 %v7455
        %10957 = vmatprep.subr.bf16.mxu0 %v7464
        %10958 = vmatpush1.bf16.msra.mxu0 %v7463
        %10959 = vmatprep.subr.bf16.mxu0 %v7472
        %10960 = vmatpush1.bf16.msra.mxu0 %v7471
        %10961 = vmatprep.subr.bf16.mxu0 %v7480
        %10962 = vmatpush1.bf16.msra.mxu0 %v7479
        %10963 = vmatprep.subr.bf16.mxu0 %v7488
        %10964 = vmatpush1.bf16.msra.mxu0 %v7487
        %10965 = vmatprep.subr.bf16.mxu0 %v7496
        %10966 = vmatpush1.bf16.msra.mxu0 %v7495
        %10967 = vmatprep.subr.bf16.mxu0 %v7504
        %10968 = vmatpush1.bf16.msra.mxu0 %v7503
        %10969 = vmatprep.subr.bf16.mxu0 %v7512
        %10970 = vmatpush1.bf16.msra.mxu0 %v7511
        %10971 = vmatprep.subr.bf16.mxu0 %v7520
        %10972 = vmatpush1.bf16.msra.mxu0 %v7519
        %10973 = vmatprep.subr.bf16.mxu0 %v7528
        %10974 = vmatpush1.bf16.msra.mxu0 %v7527
        %10975 = vmatprep.subr.bf16.mxu0 %v7536
        %10976 = vmatpush1.bf16.msra.mxu0 %v7535
        %10977 = vmatprep.mubr.bf16.mxu0 %v1957
        %10978 = vmatmul.mubr.bf16.gmra.mrb[0].mxu0 %v1943
        %v10979 = vpop.f32.mrb[0].mxu0
        %v10980 = vadd.f32 %v10939, %v10979
        %v10981 = vpop.f32.mrb[0].mxu0
        %v10982 = vadd.f32 %v10941, %v10981
        %v10983 = vpop.f32.mrb[0].mxu0
        %v10984 = vpop.f32.mrb[0].mxu0
        %10985 = vdwg.mxu0
        %10986 = vmatprep.subr.bf16.mxu0 %v7544
        %10987 = vmatpush1.bf16.msra.mxu0 %v7543
        %10988 = vmatprep.subr.bf16.mxu0 %v7552
        %10989 = vmatpush1.bf16.msra.mxu0 %v7551
        %10990 = vmatprep.subr.bf16.mxu0 %v7560
        %10991 = vmatpush1.bf16.msra.mxu0 %v7559
        %10992 = vmatprep.subr.bf16.mxu0 %v7568
        %10993 = vmatpush1.bf16.msra.mxu0 %v7567
        %10994 = vmatprep.subr.bf16.mxu0 %v7576
        %10995 = vmatpush1.bf16.msra.mxu0 %v7575
        %10996 = vmatprep.subr.bf16.mxu0 %v7584
        %10997 = vmatpush1.bf16.msra.mxu0 %v7583
        %10998 = vmatprep.subr.bf16.mxu0 %v7592
        %10999 = vmatpush1.bf16.msra.mxu0 %v7591
        %11000 = vmatprep.subr.bf16.mxu0 %v7600
        %11001 = vmatpush1.bf16.msra.mxu0 %v7599
        %11002 = vmatprep.subr.bf16.mxu0 %v7608
        %11003 = vmatpush1.bf16.msra.mxu0 %v7607
        %11004 = vmatprep.subr.bf16.mxu0 %v7616
        %11005 = vmatpush1.bf16.msra.mxu0 %v7615
        %11006 = vmatprep.subr.bf16.mxu0 %v7624
        %11007 = vmatpush1.bf16.msra.mxu0 %v7623
        %11008 = vmatprep.subr.bf16.mxu0 %v7632
        %11009 = vmatpush1.bf16.msra.mxu0 %v7631
        %11010 = vmatprep.subr.bf16.mxu0 %v7640
        %11011 = vmatpush1.bf16.msra.mxu0 %v7639
        %11012 = vmatprep.subr.bf16.mxu0 %v7648
        %11013 = vmatpush1.bf16.msra.mxu0 %v7647
        %11014 = vmatprep.subr.bf16.mxu0 %v7656
        %11015 = vmatpush1.bf16.msra.mxu0 %v7655
        %11016 = vmatprep.subr.bf16.mxu0 %v7664
        %11017 = vmatpush1.bf16.msra.mxu0 %v7663
        %11018 = vmatprep.mubr.bf16.mxu0 %v1961
        %11019 = vmatmul.mubr.bf16.gmra.mrb[0].mxu0 %v1959
        %v11020 = vpop.f32.mrb[0].mxu0
        %v11021 = vadd.f32 %v10980, %v11020
        %v11022 = vpop.f32.mrb[0].mxu0
        %v11023 = vadd.f32 %v10982, %v11022
        %v11024 = vpop.f32.mrb[0].mxu0
        %v11025 = vpop.f32.mrb[0].mxu0
        %11026 = vdwg.mxu0
        %11027 = vmatprep.subr.bf16.mxu0 %v7672
        %11028 = vmatpush1.bf16.msra.mxu0 %v7671
        %11029 = vmatprep.subr.bf16.mxu0 %v7680
        %11030 = vmatpush1.bf16.msra.mxu0 %v7679
        %11031 = vmatprep.subr.bf16.mxu0 %v7688
        %11032 = vmatpush1.bf16.msra.mxu0 %v7687
        %11033 = vmatprep.subr.bf16.mxu0 %v7696
        %11034 = vmatpush1.bf16.msra.mxu0 %v7695
        %11035 = vmatprep.subr.bf16.mxu0 %v7704
        %11036 = vmatpush1.bf16.msra.mxu0 %v7703
        %11037 = vmatprep.subr.bf16.mxu0 %v7712
        %11038 = vmatpush1.bf16.msra.mxu0 %v7711
        %11039 = vmatprep.subr.bf16.mxu0 %v7720
        %11040 = vmatpush1.bf16.msra.mxu0 %v7719
        %11041 = vmatprep.subr.bf16.mxu0 %v7728
        %11042 = vmatpush1.bf16.msra.mxu0 %v7727
        %11043 = vmatprep.subr.bf16.mxu0 %v7736
        %11044 = vmatpush1.bf16.msra.mxu0 %v7735
        %11045 = vmatprep.subr.bf16.mxu0 %v7744
        %11046 = vmatpush1.bf16.msra.mxu0 %v7743
        %11047 = vmatprep.subr.bf16.mxu0 %v7752
        %11048 = vmatpush1.bf16.msra.mxu0 %v7751
        %11049 = vmatprep.subr.bf16.mxu0 %v7760
        %11050 = vmatpush1.bf16.msra.mxu0 %v7759
        %11051 = vmatprep.subr.bf16.mxu0 %v7768
        %11052 = vmatpush1.bf16.msra.mxu0 %v7767
        %11053 = vmatprep.subr.bf16.mxu0 %v7776
        %11054 = vmatpush1.bf16.msra.mxu0 %v7775
        %11055 = vmatprep.subr.bf16.mxu0 %v7784
        %11056 = vmatpush1.bf16.msra.mxu0 %v7783
        %11057 = vmatprep.subr.bf16.mxu0 %v7792
        %11058 = vmatpush1.bf16.msra.mxu0 %v7791
        %11059 = vmatprep.mubr.bf16.mxu0 %v1999
        %11060 = vmatmul.mubr.bf16.gmra.mrb[0].mxu0 %v1985
        %v11061 = vpop.f32.mrb[0].mxu0
        %v11062 = vadd.f32 %v11021, %v11061
        %v11063 = vpop.f32.mrb[0].mxu0
        %v11064 = vadd.f32 %v11023, %v11063
        %v11065 = vpop.f32.mrb[0].mxu0
        %v11066 = vpop.f32.mrb[0].mxu0
        %11067 = vdwg.mxu0
        %11068 = vmatprep.subr.bf16.mxu0 %v7800
        %11069 = vmatpush1.bf16.msra.mxu0 %v7799
        %11070 = vmatprep.subr.bf16.mxu0 %v7808
        %11071 = vmatpush1.bf16.msra.mxu0 %v7807
        %11072 = vmatprep.subr.bf16.mxu0 %v7816
        %11073 = vmatpush1.bf16.msra.mxu0 %v7815
        %11074 = vmatprep.subr.bf16.mxu0 %v7824
        %11075 = vmatpush1.bf16.msra.mxu0 %v7823
        %11076 = vmatprep.subr.bf16.mxu0 %v7832
        %11077 = vmatpush1.bf16.msra.mxu0 %v7831
        %11078 = vmatprep.subr.bf16.mxu0 %v7840
        %11079 = vmatpush1.bf16.msra.mxu0 %v7839
        %11080 = vmatprep.subr.bf16.mxu0 %v7848
        %11081 = vmatpush1.bf16.msra.mxu0 %v7847
        %11082 = vmatprep.subr.bf16.mxu0 %v7856
        %11083 = vmatpush1.bf16.msra.mxu0 %v7855
        %11084 = vmatprep.subr.bf16.mxu0 %v7864
        %11085 = vmatpush1.bf16.msra.mxu0 %v7863
        %11086 = vmatprep.subr.bf16.mxu0 %v7872
        %11087 = vmatpush1.bf16.msra.mxu0 %v7871
        %11088 = vmatprep.subr.bf16.mxu0 %v7880
        %11089 = vmatpush1.bf16.msra.mxu0 %v7879
        %11090 = vmatprep.subr.bf16.mxu0 %v7888
        %11091 = vmatpush1.bf16.msra.mxu0 %v7887
        %11092 = vmatprep.subr.bf16.mxu0 %v7896
        %11093 = vmatpush1.bf16.msra.mxu0 %v7895
        %11094 = vmatprep.subr.bf16.mxu0 %v7904
        %11095 = vmatpush1.bf16.msra.mxu0 %v7903
        %11096 = vmatprep.subr.bf16.mxu0 %v7912
        %11097 = vmatpush1.bf16.msra.mxu0 %v7911
        %11098 = vmatprep.subr.bf16.mxu0 %v7920
        %11099 = vmatpush1.bf16.msra.mxu0 %v7919
        %11100 = vmatprep.mubr.bf16.mxu0 %v2009
        %11101 = vmatmul.mubr.bf16.gmra.mrb[0].mxu0 %v2007
        %v11102 = vpop.f32.mrb[0].mxu0
        %v11103 = vadd.f32 %v11062, %v11102
        %v11104 = vpop.f32.mrb[0].mxu0
        %v11105 = vadd.f32 %v11064, %v11104
        %v11106 = vpop.f32.mrb[0].mxu0
        %v11107 = vpop.f32.mrb[0].mxu0
        %11108 = vdwg.mxu0
        %11109 = vmatprep.subr.bf16.mxu0 %v7928
        %11110 = vmatpush1.bf16.msra.mxu0 %v7927
        %11111 = vmatprep.subr.bf16.mxu0 %v7936
        %11112 = vmatpush1.bf16.msra.mxu0 %v7935
        %11113 = vmatprep.subr.bf16.mxu0 %v7944
        %11114 = vmatpush1.bf16.msra.mxu0 %v7943
        %11115 = vmatprep.subr.bf16.mxu0 %v7952
        %11116 = vmatpush1.bf16.msra.mxu0 %v7951
        %11117 = vmatprep.subr.bf16.mxu0 %v7960
        %11118 = vmatpush1.bf16.msra.mxu0 %v7959
        %11119 = vmatprep.subr.bf16.mxu0 %v7968
        %11120 = vmatpush1.bf16.msra.mxu0 %v7967
        %11121 = vmatprep.subr.bf16.mxu0 %v7976
        %11122 = vmatpush1.bf16.msra.mxu0 %v7975
        %11123 = vmatprep.subr.bf16.mxu0 %v7984
        %11124 = vmatpush1.bf16.msra.mxu0 %v7983
        %11125 = vmatprep.subr.bf16.mxu0 %v7992
        %11126 = vmatpush1.bf16.msra.mxu0 %v7991
        %11127 = vmatprep.subr.bf16.mxu0 %v8000
        %11128 = vmatpush1.bf16.msra.mxu0 %v7999
        %11129 = vmatprep.subr.bf16.mxu0 %v8008
        %11130 = vmatpush1.bf16.msra.mxu0 %v8007
        %11131 = vmatprep.subr.bf16.mxu0 %v8016
        %11132 = vmatpush1.bf16.msra.mxu0 %v8015
        %11133 = vmatprep.subr.bf16.mxu0 %v8024
        %11134 = vmatpush1.bf16.msra.mxu0 %v8023
        %11135 = vmatprep.subr.bf16.mxu0 %v8032
        %11136 = vmatpush1.bf16.msra.mxu0 %v8031
        %11137 = vmatprep.subr.bf16.mxu0 %v8040
        %11138 = vmatpush1.bf16.msra.mxu0 %v8039
        %11139 = vmatprep.subr.bf16.mxu0 %v8048
        %11140 = vmatpush1.bf16.msra.mxu0 %v8047
        %11141 = vmatprep.mubr.bf16.mxu0 %v2006
        %11142 = vmatmul.mubr.bf16.gmra.mrb[0].mxu0 %v1992
        %v11143 = vpop.f32.mrb[0].mxu0
        %v11144 = vadd.f32 %v11103, %v11143
        %v11145 = vpop.f32.mrb[0].mxu0
        %v11146 = vadd.f32 %v11105, %v11145
        %v11147 = vpop.f32.mrb[0].mxu0
        %v11148 = vpop.f32.mrb[0].mxu0
        %11149 = vdwg.mxu0
        %11150 = vmatprep.subr.bf16.mxu0 %v8056
        %11151 = vmatpush1.bf16.msra.mxu0 %v8055
        %11152 = vmatprep.subr.bf16.mxu0 %v8064
        %11153 = vmatpush1.bf16.msra.mxu0 %v8063
        %11154 = vmatprep.subr.bf16.mxu0 %v8072
        %11155 = vmatpush1.bf16.msra.mxu0 %v8071
        %11156 = vmatprep.subr.bf16.mxu0 %v8080
        %11157 = vmatpush1.bf16.msra.mxu0 %v8079
        %11158 = vmatprep.subr.bf16.mxu0 %v8088
        %11159 = vmatpush1.bf16.msra.mxu0 %v8087
        %11160 = vmatprep.subr.bf16.mxu0 %v8096
        %11161 = vmatpush1.bf16.msra.mxu0 %v8095
        %11162 = vmatprep.subr.bf16.mxu0 %v8104
        %11163 = vmatpush1.bf16.msra.mxu0 %v8103
        %11164 = vmatprep.subr.bf16.mxu0 %v8112
        %11165 = vmatpush1.bf16.msra.mxu0 %v8111
        %11166 = vmatprep.subr.bf16.mxu0 %v8120
        %11167 = vmatpush1.bf16.msra.mxu0 %v8119
        %11168 = vmatprep.subr.bf16.mxu0 %v8128
        %11169 = vmatpush1.bf16.msra.mxu0 %v8127
        %11170 = vmatprep.subr.bf16.mxu0 %v8136
        %11171 = vmatpush1.bf16.msra.mxu0 %v8135
        %11172 = vmatprep.subr.bf16.mxu0 %v8144
        %11173 = vmatpush1.bf16.msra.mxu0 %v8143
        %11174 = vmatprep.subr.bf16.mxu0 %v8152
        %11175 = vmatpush1.bf16.msra.mxu0 %v8151
        %11176 = vmatprep.subr.bf16.mxu0 %v8160
        %11177 = vmatpush1.bf16.msra.mxu0 %v8159
        %11178 = vmatprep.subr.bf16.mxu0 %v8168
        %11179 = vmatpush1.bf16.msra.mxu0 %v8167
        %11180 = vmatprep.subr.bf16.mxu0 %v8176
        %11181 = vmatpush1.bf16.msra.mxu0 %v8175
        %11182 = vmatprep.mubr.bf16.mxu0 %v2010
        %11183 = vmatmul.mubr.bf16.gmra.mrb[0].mxu0 %v2008
        %v11184 = vpop.f32.mrb[0].mxu0
        %v11185 = vadd.f32 %v11144, %v11184
        %v11186 = vpop.f32.mrb[0].mxu0
        %v11187 = vadd.f32 %v11146, %v11186
        %v11188 = vpop.f32.mrb[0].mxu0
        %v11189 = vpop.f32.mrb[0].mxu0
        %11190 = vdwg.mxu0
        %11191 = vmatprep.subr.bf16.mxu0 %v6650
        %11192 = vmatpush1.bf16.msra.mxu0 %v6649
        %11193 = vmatprep.subr.bf16.mxu0 %v6658
        %11194 = vmatpush1.bf16.msra.mxu0 %v6657
        %11195 = vmatprep.subr.bf16.mxu0 %v6666
        %11196 = vmatpush1.bf16.msra.mxu0 %v6665
        %11197 = vmatprep.subr.bf16.mxu0 %v6674
        %11198 = vmatpush1.bf16.msra.mxu0 %v6673
        %11199 = vmatprep.subr.bf16.mxu0 %v6682
        %11200 = vmatpush1.bf16.msra.mxu0 %v6681
        %11201 = vmatprep.subr.bf16.mxu0 %v6690
        %11202 = vmatpush1.bf16.msra.mxu0 %v6689
        %11203 = vmatprep.subr.bf16.mxu0 %v6698
        %11204 = vmatpush1.bf16.msra.mxu0 %v6697
        %11205 = vmatprep.subr.bf16.mxu0 %v6706
        %11206 = vmatpush1.bf16.msra.mxu0 %v6705
        %11207 = vmatprep.subr.bf16.mxu0 %v6714
        %11208 = vmatpush1.bf16.msra.mxu0 %v6713
        %11209 = vmatprep.subr.bf16.mxu0 %v6722
        %11210 = vmatpush1.bf16.msra.mxu0 %v6721
        %11211 = vmatprep.subr.bf16.mxu0 %v6730
        %11212 = vmatpush1.bf16.msra.mxu0 %v6729
        %11213 = vmatprep.subr.bf16.mxu0 %v6738
        %11214 = vmatpush1.bf16.msra.mxu0 %v6737
        %11215 = vmatprep.subr.bf16.mxu0 %v6746
        %11216 = vmatpush1.bf16.msra.mxu0 %v6745
        %11217 = vmatprep.subr.bf16.mxu0 %v6754
        %11218 = vmatpush1.bf16.msra.mxu0 %v6753
        %11219 = vmatprep.subr.bf16.mxu0 %v6762
        %11220 = vmatpush1.bf16.msra.mxu0 %v6761
        %11221 = vmatprep.subr.bf16.mxu0 %v6770
        %11222 = vmatpush1.bf16.msra.mxu0 %v6769
        %11223 = vmatprep.mubr.bf16.mxu0 %v1901
        %11224 = vmatmul.mubr.bf16.gmra.mrb[0].mxu0 %v1887
        %v11225 = vpop.f32.mrb[0].mxu0
        %v11226 = vadd.f32 0.0, %v11225
        %v11227 = vpop.f32.mrb[0].mxu0
        %v11228 = vadd.f32 0.0, %v11227
        %v11229 = vpop.f32.mrb[0].mxu0
        %v11230 = vpop.f32.mrb[0].mxu0
        %11231 = vdwg.mxu0
        %11232 = vmatprep.subr.bf16.mxu0 %v6778
        %11233 = vmatpush1.bf16.msra.mxu0 %v6777
        %11234 = vmatprep.subr.bf16.mxu0 %v6786
        %11235 = vmatpush1.bf16.msra.mxu0 %v6785
        %11236 = vmatprep.subr.bf16.mxu0 %v6794
        %11237 = vmatpush1.bf16.msra.mxu0 %v6793
        %11238 = vmatprep.subr.bf16.mxu0 %v6802
        %11239 = vmatpush1.bf16.msra.mxu0 %v6801
        %11240 = vmatprep.subr.bf16.mxu0 %v6810
        %11241 = vmatpush1.bf16.msra.mxu0 %v6809
        %11242 = vmatprep.subr.bf16.mxu0 %v6818
        %11243 = vmatpush1.bf16.msra.mxu0 %v6817
        %11244 = vmatprep.subr.bf16.mxu0 %v6826
        %11245 = vmatpush1.bf16.msra.mxu0 %v6825
        %11246 = vmatprep.subr.bf16.mxu0 %v6834
        %11247 = vmatpush1.bf16.msra.mxu0 %v6833
        %11248 = vmatprep.subr.bf16.mxu0 %v6842
        %11249 = vmatpush1.bf16.msra.mxu0 %v6841
        %11250 = vmatprep.subr.bf16.mxu0 %v6850
        %11251 = vmatpush1.bf16.msra.mxu0 %v6849
        %11252 = vmatprep.subr.bf16.mxu0 %v6858
        %11253 = vmatpush1.bf16.msra.mxu0 %v6857
        %11254 = vmatprep.subr.bf16.mxu0 %v6866
        %11255 = vmatpush1.bf16.msra.mxu0 %v6865
        %11256 = vmatprep.subr.bf16.mxu0 %v6874
        %11257 = vmatpush1.bf16.msra.mxu0 %v6873
        %11258 = vmatprep.subr.bf16.mxu0 %v6882
        %11259 = vmatpush1.bf16.msra.mxu0 %v6881
        %11260 = vmatprep.subr.bf16.mxu0 %v6890
        %11261 = vmatpush1.bf16.msra.mxu0 %v6889
        %11262 = vmatprep.subr.bf16.mxu0 %v6898
        %11263 = vmatpush1.bf16.msra.mxu0 %v6897
        %11264 = vmatprep.mubr.bf16.mxu0 %v1911
        %11265 = vmatmul.mubr.bf16.gmra.mrb[0].mxu0 %v1909
        %v11266 = vpop.f32.mrb[0].mxu0
        %v11267 = vadd.f32 %v11226, %v11266
        %v11268 = vpop.f32.mrb[0].mxu0
        %v11269 = vadd.f32 %v11228, %v11268
        %v11270 = vpop.f32.mrb[0].mxu0
        %v11271 = vpop.f32.mrb[0].mxu0
        %11272 = vdwg.mxu0
        %11273 = vmatprep.subr.bf16.mxu0 %v6906
        %11274 = vmatpush1.bf16.msra.mxu0 %v6905
        %11275 = vmatprep.subr.bf16.mxu0 %v6914
        %11276 = vmatpush1.bf16.msra.mxu0 %v6913
        %11277 = vmatprep.subr.bf16.mxu0 %v6922
        %11278 = vmatpush1.bf16.msra.mxu0 %v6921
        %11279 = vmatprep.subr.bf16.mxu0 %v6930
        %11280 = vmatpush1.bf16.msra.mxu0 %v6929
        %11281 = vmatprep.subr.bf16.mxu0 %v6938
        %11282 = vmatpush1.bf16.msra.mxu0 %v6937
        %11283 = vmatprep.subr.bf16.mxu0 %v6946
        %11284 = vmatpush1.bf16.msra.mxu0 %v6945
        %11285 = vmatprep.subr.bf16.mxu0 %v6954
        %11286 = vmatpush1.bf16.msra.mxu0 %v6953
        %11287 = vmatprep.subr.bf16.mxu0 %v6962
        %11288 = vmatpush1.bf16.msra.mxu0 %v6961
        %11289 = vmatprep.subr.bf16.mxu0 %v6970
        %11290 = vmatpush1.bf16.msra.mxu0 %v6969
        %11291 = vmatprep.subr.bf16.mxu0 %v6978
        %11292 = vmatpush1.bf16.msra.mxu0 %v6977
        %11293 = vmatprep.subr.bf16.mxu0 %v6986
        %11294 = vmatpush1.bf16.msra.mxu0 %v6985
        %11295 = vmatprep.subr.bf16.mxu0 %v6994
        %11296 = vmatpush1.bf16.msra.mxu0 %v6993
        %11297 = vmatprep.subr.bf16.mxu0 %v7002
        %11298 = vmatpush1.bf16.msra.mxu0 %v7001
        %11299 = vmatprep.subr.bf16.mxu0 %v7010
        %11300 = vmatpush1.bf16.msra.mxu0 %v7009
        %11301 = vmatprep.subr.bf16.mxu0 %v7018
        %11302 = vmatpush1.bf16.msra.mxu0 %v7017
        %11303 = vmatprep.subr.bf16.mxu0 %v7026
        %11304 = vmatpush1.bf16.msra.mxu0 %v7025
        %11305 = vmatprep.mubr.bf16.mxu0 %v1908
        %11306 = vmatmul.mubr.bf16.gmra.mrb[0].mxu0 %v1894
        %v11307 = vpop.f32.mrb[0].mxu0
        %v11308 = vadd.f32 %v11267, %v11307
        %v11309 = vpop.f32.mrb[0].mxu0
        %v11310 = vadd.f32 %v11269, %v11309
        %v11311 = vpop.f32.mrb[0].mxu0
        %v11312 = vpop.f32.mrb[0].mxu0
        %11313 = vdwg.mxu0
        %11314 = vmatprep.subr.bf16.mxu0 %v7034
        %11315 = vmatpush1.bf16.msra.mxu0 %v7033
        %11316 = vmatprep.subr.bf16.mxu0 %v7042
        %11317 = vmatpush1.bf16.msra.mxu0 %v7041
        %11318 = vmatprep.subr.bf16.mxu0 %v7050
        %11319 = vmatpush1.bf16.msra.mxu0 %v7049
        %11320 = vmatprep.subr.bf16.mxu0 %v7058
        %11321 = vmatpush1.bf16.msra.mxu0 %v7057
        %11322 = vmatprep.subr.bf16.mxu0 %v7066
        %11323 = vmatpush1.bf16.msra.mxu0 %v7065
        %11324 = vmatprep.subr.bf16.mxu0 %v7074
        %11325 = vmatpush1.bf16.msra.mxu0 %v7073
        %11326 = vmatprep.subr.bf16.mxu0 %v7082
        %11327 = vmatpush1.bf16.msra.mxu0 %v7081
        %11328 = vmatprep.subr.bf16.mxu0 %v7090
        %11329 = vmatpush1.bf16.msra.mxu0 %v7089
        %11330 = vmatprep.subr.bf16.mxu0 %v7098
        %11331 = vmatpush1.bf16.msra.mxu0 %v7097
        %11332 = vmatprep.subr.bf16.mxu0 %v7106
        %11333 = vmatpush1.bf16.msra.mxu0 %v7105
        %11334 = vmatprep.subr.bf16.mxu0 %v7114
        %11335 = vmatpush1.bf16.msra.mxu0 %v7113
        %11336 = vmatprep.subr.bf16.mxu0 %v7122
        %11337 = vmatpush1.bf16.msra.mxu0 %v7121
        %11338 = vmatprep.subr.bf16.mxu0 %v7130
        %11339 = vmatpush1.bf16.msra.mxu0 %v7129
        %11340 = vmatprep.subr.bf16.mxu0 %v7138
        %11341 = vmatpush1.bf16.msra.mxu0 %v7137
        %11342 = vmatprep.subr.bf16.mxu0 %v7146
        %11343 = vmatpush1.bf16.msra.mxu0 %v7145
        %11344 = vmatprep.subr.bf16.mxu0 %v7154
        %11345 = vmatpush1.bf16.msra.mxu0 %v7153
        %11346 = vmatprep.mubr.bf16.mxu0 %v1912
        %11347 = vmatmul.mubr.bf16.gmra.mrb[0].mxu0 %v1910
        %v11348 = vpop.f32.mrb[0].mxu0
        %v11349 = vadd.f32 %v11308, %v11348
        %v11350 = vpop.f32.mrb[0].mxu0
        %v11351 = vadd.f32 %v11310, %v11350
        %v11352 = vpop.f32.mrb[0].mxu0
        %v11353 = vpop.f32.mrb[0].mxu0
        %11354 = vdwg.mxu0
        %11355 = vmatprep.subr.bf16.mxu0 %v7162
        %11356 = vmatpush1.bf16.msra.mxu0 %v7161
        %11357 = vmatprep.subr.bf16.mxu0 %v7170
        %11358 = vmatpush1.bf16.msra.mxu0 %v7169
        %11359 = vmatprep.subr.bf16.mxu0 %v7178
        %11360 = vmatpush1.bf16.msra.mxu0 %v7177
        %11361 = vmatprep.subr.bf16.mxu0 %v7186
        %11362 = vmatpush1.bf16.msra.mxu0 %v7185
        %11363 = vmatprep.subr.bf16.mxu0 %v7194
        %11364 = vmatpush1.bf16.msra.mxu0 %v7193
        %11365 = vmatprep.subr.bf16.mxu0 %v7202
        %11366 = vmatpush1.bf16.msra.mxu0 %v7201
        %11367 = vmatprep.subr.bf16.mxu0 %v7210
        %11368 = vmatpush1.bf16.msra.mxu0 %v7209
        %11369 = vmatprep.subr.bf16.mxu0 %v7218
        %11370 = vmatpush1.bf16.msra.mxu0 %v7217
        %11371 = vmatprep.subr.bf16.mxu0 %v7226
        %11372 = vmatpush1.bf16.msra.mxu0 %v7225
        %11373 = vmatprep.subr.bf16.mxu0 %v7234
        %11374 = vmatpush1.bf16.msra.mxu0 %v7233
        %11375 = vmatprep.subr.bf16.mxu0 %v7242
        %11376 = vmatpush1.bf16.msra.mxu0 %v7241
        %11377 = vmatprep.subr.bf16.mxu0 %v7250
        %11378 = vmatpush1.bf16.msra.mxu0 %v7249
        %11379 = vmatprep.subr.bf16.mxu0 %v7258
        %11380 = vmatpush1.bf16.msra.mxu0 %v7257
        %11381 = vmatprep.subr.bf16.mxu0 %v7266
        %11382 = vmatpush1.bf16.msra.mxu0 %v7265
        %11383 = vmatprep.subr.bf16.mxu0 %v7274
        %11384 = vmatpush1.bf16.msra.mxu0 %v7273
        %11385 = vmatprep.subr.bf16.mxu0 %v7282
        %11386 = vmatpush1.bf16.msra.mxu0 %v7281
        %11387 = vmatprep.mubr.bf16.mxu0 %v1950
        %11388 = vmatmul.mubr.bf16.gmra.mrb[0].mxu0 %v1936
        %v11389 = vpop.f32.mrb[0].mxu0
        %v11390 = vadd.f32 %v11349, %v11389
        %v11391 = vpop.f32.mrb[0].mxu0
        %v11392 = vadd.f32 %v11351, %v11391
        %v11393 = vpop.f32.mrb[0].mxu0
        %v11394 = vpop.f32.mrb[0].mxu0
        %11395 = vdwg.mxu0
        %11396 = vmatprep.subr.bf16.mxu0 %v7290
        %11397 = vmatpush1.bf16.msra.mxu0 %v7289
        %11398 = vmatprep.subr.bf16.mxu0 %v7298
        %11399 = vmatpush1.bf16.msra.mxu0 %v7297
        %11400 = vmatprep.subr.bf16.mxu0 %v7306
        %11401 = vmatpush1.bf16.msra.mxu0 %v7305
        %11402 = vmatprep.subr.bf16.mxu0 %v7314
        %11403 = vmatpush1.bf16.msra.mxu0 %v7313
        %11404 = vmatprep.subr.bf16.mxu0 %v7322
        %11405 = vmatpush1.bf16.msra.mxu0 %v7321
        %11406 = vmatprep.subr.bf16.mxu0 %v7330
        %11407 = vmatpush1.bf16.msra.mxu0 %v7329
        %11408 = vmatprep.subr.bf16.mxu0 %v7338
        %11409 = vmatpush1.bf16.msra.mxu0 %v7337
        %11410 = vmatprep.subr.bf16.mxu0 %v7346
        %11411 = vmatpush1.bf16.msra.mxu0 %v7345
        %11412 = vmatprep.subr.bf16.mxu0 %v7354
        %11413 = vmatpush1.bf16.msra.mxu0 %v7353
        %11414 = vmatprep.subr.bf16.mxu0 %v7362
        %11415 = vmatpush1.bf16.msra.mxu0 %v7361
        %11416 = vmatprep.subr.bf16.mxu0 %v7370
        %11417 = vmatpush1.bf16.msra.mxu0 %v7369
        %11418 = vmatprep.subr.bf16.mxu0 %v7378
        %11419 = vmatpush1.bf16.msra.mxu0 %v7377
        %11420 = vmatprep.subr.bf16.mxu0 %v7386
        %11421 = vmatpush1.bf16.msra.mxu0 %v7385
        %11422 = vmatprep.subr.bf16.mxu0 %v7394
        %11423 = vmatpush1.bf16.msra.mxu0 %v7393
        %11424 = vmatprep.subr.bf16.mxu0 %v7402
        %11425 = vmatpush1.bf16.msra.mxu0 %v7401
        %11426 = vmatprep.subr.bf16.mxu0 %v7410
        %11427 = vmatpush1.bf16.msra.mxu0 %v7409
        %11428 = vmatprep.mubr.bf16.mxu0 %v1960
        %11429 = vmatmul.mubr.bf16.gmra.mrb[0].mxu0 %v1958
        %v11430 = vpop.f32.mrb[0].mxu0
        %v11431 = vadd.f32 %v11390, %v11430
        %v11432 = vpop.f32.mrb[0].mxu0
        %v11433 = vadd.f32 %v11392, %v11432
        %v11434 = vpop.f32.mrb[0].mxu0
        %v11435 = vpop.f32.mrb[0].mxu0
        %11436 = vdwg.mxu0
        %11437 = vmatprep.subr.bf16.mxu0 %v7418
        %11438 = vmatpush1.bf16.msra.mxu0 %v7417
        %11439 = vmatprep.subr.bf16.mxu0 %v7426
        %11440 = vmatpush1.bf16.msra.mxu0 %v7425
        %11441 = vmatprep.subr.bf16.mxu0 %v7434
        %11442 = vmatpush1.bf16.msra.mxu0 %v7433
        %11443 = vmatprep.subr.bf16.mxu0 %v7442
        %11444 = vmatpush1.bf16.msra.mxu0 %v7441
        %11445 = vmatprep.subr.bf16.mxu0 %v7450
        %11446 = vmatpush1.bf16.msra.mxu0 %v7449
        %11447 = vmatprep.subr.bf16.mxu0 %v7458
        %11448 = vmatpush1.bf16.msra.mxu0 %v7457
        %11449 = vmatprep.subr.bf16.mxu0 %v7466
        %11450 = vmatpush1.bf16.msra.mxu0 %v7465
        %11451 = vmatprep.subr.bf16.mxu0 %v7474
        %11452 = vmatpush1.bf16.msra.mxu0 %v7473
        %11453 = vmatprep.subr.bf16.mxu0 %v7482
        %11454 = vmatpush1.bf16.msra.mxu0 %v7481
        %11455 = vmatprep.subr.bf16.mxu0 %v7490
        %11456 = vmatpush1.bf16.msra.mxu0 %v7489
        %11457 = vmatprep.subr.bf16.mxu0 %v7498
        %11458 = vmatpush1.bf16.msra.mxu0 %v7497
        %11459 = vmatprep.subr.bf16.mxu0 %v7506
        %11460 = vmatpush1.bf16.msra.mxu0 %v7505
        %11461 = vmatprep.subr.bf16.mxu0 %v7514
        %11462 = vmatpush1.bf16.msra.mxu0 %v7513
        %11463 = vmatprep.subr.bf16.mxu0 %v7522
        %11464 = vmatpush1.bf16.msra.mxu0 %v7521
        %11465 = vmatprep.subr.bf16.mxu0 %v7530
        %11466 = vmatpush1.bf16.msra.mxu0 %v7529
        %11467 = vmatprep.subr.bf16.mxu0 %v7538
        %11468 = vmatpush1.bf16.msra.mxu0 %v7537
        %11469 = vmatprep.mubr.bf16.mxu0 %v1957
        %11470 = vmatmul.mubr.bf16.gmra.mrb[0].mxu0 %v1943
        %v11471 = vpop.f32.mrb[0].mxu0
        %v11472 = vadd.f32 %v11431, %v11471
        %v11473 = vpop.f32.mrb[0].mxu0
        %v11474 = vadd.f32 %v11433, %v11473
        %v11475 = vpop.f32.mrb[0].mxu0
        %v11476 = vpop.f32.mrb[0].mxu0
        %11477 = vdwg.mxu0
        %11478 = vmatprep.subr.bf16.mxu0 %v7546
        %11479 = vmatpush1.bf16.msra.mxu0 %v7545
        %11480 = vmatprep.subr.bf16.mxu0 %v7554
        %11481 = vmatpush1.bf16.msra.mxu0 %v7553
        %11482 = vmatprep.subr.bf16.mxu0 %v7562
        %11483 = vmatpush1.bf16.msra.mxu0 %v7561
        %11484 = vmatprep.subr.bf16.mxu0 %v7570
        %11485 = vmatpush1.bf16.msra.mxu0 %v7569
        %11486 = vmatprep.subr.bf16.mxu0 %v7578
        %11487 = vmatpush1.bf16.msra.mxu0 %v7577
        %11488 = vmatprep.subr.bf16.mxu0 %v7586
        %11489 = vmatpush1.bf16.msra.mxu0 %v7585
        %11490 = vmatprep.subr.bf16.mxu0 %v7594
        %11491 = vmatpush1.bf16.msra.mxu0 %v7593
        %11492 = vmatprep.subr.bf16.mxu0 %v7602
        %11493 = vmatpush1.bf16.msra.mxu0 %v7601
        %11494 = vmatprep.subr.bf16.mxu0 %v7610
        %11495 = vmatpush1.bf16.msra.mxu0 %v7609
        %11496 = vmatprep.subr.bf16.mxu0 %v7618
        %11497 = vmatpush1.bf16.msra.mxu0 %v7617
        %11498 = vmatprep.subr.bf16.mxu0 %v7626
        %11499 = vmatpush1.bf16.msra.mxu0 %v7625
        %11500 = vmatprep.subr.bf16.mxu0 %v7634
        %11501 = vmatpush1.bf16.msra.mxu0 %v7633
        %11502 = vmatprep.subr.bf16.mxu0 %v7642
        %11503 = vmatpush1.bf16.msra.mxu0 %v7641
        %11504 = vmatprep.subr.bf16.mxu0 %v7650
        %11505 = vmatpush1.bf16.msra.mxu0 %v7649
        %11506 = vmatprep.subr.bf16.mxu0 %v7658
        %11507 = vmatpush1.bf16.msra.mxu0 %v7657
        %11508 = vmatprep.subr.bf16.mxu0 %v7666
        %11509 = vmatpush1.bf16.msra.mxu0 %v7665
        %11510 = vmatprep.mubr.bf16.mxu0 %v1961
        %11511 = vmatmul.mubr.bf16.gmra.mrb[0].mxu0 %v1959
        %v11512 = vpop.f32.mrb[0].mxu0
        %v11513 = vadd.f32 %v11472, %v11512
        %v11514 = vpop.f32.mrb[0].mxu0
        %v11515 = vadd.f32 %v11474, %v11514
        %v11516 = vpop.f32.mrb[0].mxu0
        %v11517 = vpop.f32.mrb[0].mxu0
        %11518 = vdwg.mxu0
        %11519 = vmatprep.subr.bf16.mxu0 %v7674
        %11520 = vmatpush1.bf16.msra.mxu0 %v7673
        %11521 = vmatprep.subr.bf16.mxu0 %v7682
        %11522 = vmatpush1.bf16.msra.mxu0 %v7681
        %11523 = vmatprep.subr.bf16.mxu0 %v7690
        %11524 = vmatpush1.bf16.msra.mxu0 %v7689
        %11525 = vmatprep.subr.bf16.mxu0 %v7698
        %11526 = vmatpush1.bf16.msra.mxu0 %v7697
        %11527 = vmatprep.subr.bf16.mxu0 %v7706
        %11528 = vmatpush1.bf16.msra.mxu0 %v7705
        %11529 = vmatprep.subr.bf16.mxu0 %v7714
        %11530 = vmatpush1.bf16.msra.mxu0 %v7713
        %11531 = vmatprep.subr.bf16.mxu0 %v7722
        %11532 = vmatpush1.bf16.msra.mxu0 %v7721
        %11533 = vmatprep.subr.bf16.mxu0 %v7730
        %11534 = vmatpush1.bf16.msra.mxu0 %v7729
        %11535 = vmatprep.subr.bf16.mxu0 %v7738
        %11536 = vmatpush1.bf16.msra.mxu0 %v7737
        %11537 = vmatprep.subr.bf16.mxu0 %v7746
        %11538 = vmatpush1.bf16.msra.mxu0 %v7745
        %11539 = vmatprep.subr.bf16.mxu0 %v7754
        %11540 = vmatpush1.bf16.msra.mxu0 %v7753
        %11541 = vmatprep.subr.bf16.mxu0 %v7762
        %11542 = vmatpush1.bf16.msra.mxu0 %v7761
        %11543 = vmatprep.subr.bf16.mxu0 %v7770
        %11544 = vmatpush1.bf16.msra.mxu0 %v7769
        %11545 = vmatprep.subr.bf16.mxu0 %v7778
        %11546 = vmatpush1.bf16.msra.mxu0 %v7777
        %11547 = vmatprep.subr.bf16.mxu0 %v7786
        %11548 = vmatpush1.bf16.msra.mxu0 %v7785
        %11549 = vmatprep.subr.bf16.mxu0 %v7794
        %11550 = vmatpush1.bf16.msra.mxu0 %v7793
        %11551 = vmatprep.mubr.bf16.mxu0 %v1999
        %11552 = vmatmul.mubr.bf16.gmra.mrb[0].mxu0 %v1985
        %v11553 = vpop.f32.mrb[0].mxu0
        %v11554 = vadd.f32 %v11513, %v11553
        %v11555 = vpop.f32.mrb[0].mxu0
        %v11556 = vadd.f32 %v11515, %v11555
        %v11557 = vpop.f32.mrb[0].mxu0
        %v11558 = vpop.f32.mrb[0].mxu0
        %11559 = vdwg.mxu0
        %11560 = vmatprep.subr.bf16.mxu0 %v7802
        %11561 = vmatpush1.bf16.msra.mxu0 %v7801
        %11562 = vmatprep.subr.bf16.mxu0 %v7810
        %11563 = vmatpush1.bf16.msra.mxu0 %v7809
        %11564 = vmatprep.subr.bf16.mxu0 %v7818
        %11565 = vmatpush1.bf16.msra.mxu0 %v7817
        %11566 = vmatprep.subr.bf16.mxu0 %v7826
        %11567 = vmatpush1.bf16.msra.mxu0 %v7825
        %11568 = vmatprep.subr.bf16.mxu0 %v7834
        %11569 = vmatpush1.bf16.msra.mxu0 %v7833
        %11570 = vmatprep.subr.bf16.mxu0 %v7842
        %11571 = vmatpush1.bf16.msra.mxu0 %v7841
        %11572 = vmatprep.subr.bf16.mxu0 %v7850
        %11573 = vmatpush1.bf16.msra.mxu0 %v7849
        %11574 = vmatprep.subr.bf16.mxu0 %v7858
        %11575 = vmatpush1.bf16.msra.mxu0 %v7857
        %11576 = vmatprep.subr.bf16.mxu0 %v7866
        %11577 = vmatpush1.bf16.msra.mxu0 %v7865
        %11578 = vmatprep.subr.bf16.mxu0 %v7874
        %11579 = vmatpush1.bf16.msra.mxu0 %v7873
        %11580 = vmatprep.subr.bf16.mxu0 %v7882
        %11581 = vmatpush1.bf16.msra.mxu0 %v7881
        %11582 = vmatprep.subr.bf16.mxu0 %v7890
        %11583 = vmatpush1.bf16.msra.mxu0 %v7889
        %11584 = vmatprep.subr.bf16.mxu0 %v7898
        %11585 = vmatpush1.bf16.msra.mxu0 %v7897
        %11586 = vmatprep.subr.bf16.mxu0 %v7906
        %11587 = vmatpush1.bf16.msra.mxu0 %v7905
        %11588 = vmatprep.subr.bf16.mxu0 %v7914
        %11589 = vmatpush1.bf16.msra.mxu0 %v7913
        %11590 = vmatprep.subr.bf16.mxu0 %v7922
        %11591 = vmatpush1.bf16.msra.mxu0 %v7921
        %11592 = vmatprep.mubr.bf16.mxu0 %v2009
        %11593 = vmatmul.mubr.bf16.gmra.mrb[0].mxu0 %v2007
        %v11594 = vpop.f32.mrb[0].mxu0
        %v11595 = vadd.f32 %v11554, %v11594
        %v11596 = vpop.f32.mrb[0].mxu0
        %v11597 = vadd.f32 %v11556, %v11596
        %v11598 = vpop.f32.mrb[0].mxu0
        %v11599 = vpop.f32.mrb[0].mxu0
        %11600 = vdwg.mxu0
        %11601 = vmatprep.subr.bf16.mxu0 %v7930
        %11602 = vmatpush1.bf16.msra.mxu0 %v7929
        %11603 = vmatprep.subr.bf16.mxu0 %v7938
        %11604 = vmatpush1.bf16.msra.mxu0 %v7937
        %11605 = vmatprep.subr.bf16.mxu0 %v7946
        %11606 = vmatpush1.bf16.msra.mxu0 %v7945
        %11607 = vmatprep.subr.bf16.mxu0 %v7954
        %11608 = vmatpush1.bf16.msra.mxu0 %v7953
        %11609 = vmatprep.subr.bf16.mxu0 %v7962
        %11610 = vmatpush1.bf16.msra.mxu0 %v7961
        %11611 = vmatprep.subr.bf16.mxu0 %v7970
        %11612 = vmatpush1.bf16.msra.mxu0 %v7969
        %11613 = vmatprep.subr.bf16.mxu0 %v7978
        %11614 = vmatpush1.bf16.msra.mxu0 %v7977
        %11615 = vmatprep.subr.bf16.mxu0 %v7986
        %11616 = vmatpush1.bf16.msra.mxu0 %v7985
        %11617 = vmatprep.subr.bf16.mxu0 %v7994
        %11618 = vmatpush1.bf16.msra.mxu0 %v7993
        %11619 = vmatprep.subr.bf16.mxu0 %v8002
        %11620 = vmatpush1.bf16.msra.mxu0 %v8001
        %11621 = vmatprep.subr.bf16.mxu0 %v8010
        %11622 = vmatpush1.bf16.msra.mxu0 %v8009
        %11623 = vmatprep.subr.bf16.mxu0 %v8018
        %11624 = vmatpush1.bf16.msra.mxu0 %v8017
        %11625 = vmatprep.subr.bf16.mxu0 %v8026
        %11626 = vmatpush1.bf16.msra.mxu0 %v8025
        %11627 = vmatprep.subr.bf16.mxu0 %v8034
        %11628 = vmatpush1.bf16.msra.mxu0 %v8033
        %11629 = vmatprep.subr.bf16.mxu0 %v8042
        %11630 = vmatpush1.bf16.msra.mxu0 %v8041
        %11631 = vmatprep.subr.bf16.mxu0 %v8050
        %11632 = vmatpush1.bf16.msra.mxu0 %v8049
        %11633 = vmatprep.mubr.bf16.mxu0 %v2006
        %11634 = vmatmul.mubr.bf16.gmra.mrb[0].mxu0 %v1992
        %v11635 = vpop.f32.mrb[0].mxu0
        %v11636 = vadd.f32 %v11595, %v11635
        %v11637 = vpop.f32.mrb[0].mxu0
        %v11638 = vadd.f32 %v11597, %v11637
        %v11639 = vpop.f32.mrb[0].mxu0
        %v11640 = vpop.f32.mrb[0].mxu0
        %11641 = vdwg.mxu0
        %11642 = vmatprep.subr.bf16.mxu0 %v8058
        %11643 = vmatpush1.bf16.msra.mxu0 %v8057
        %11644 = vmatprep.subr.bf16.mxu0 %v8066
        %11645 = vmatpush1.bf16.msra.mxu0 %v8065
        %11646 = vmatprep.subr.bf16.mxu0 %v8074
        %11647 = vmatpush1.bf16.msra.mxu0 %v8073
        %11648 = vmatprep.subr.bf16.mxu0 %v8082
        %11649 = vmatpush1.bf16.msra.mxu0 %v8081
        %11650 = vmatprep.subr.bf16.mxu0 %v8090
        %11651 = vmatpush1.bf16.msra.mxu0 %v8089
        %11652 = vmatprep.subr.bf16.mxu0 %v8098
        %11653 = vmatpush1.bf16.msra.mxu0 %v8097
        %11654 = vmatprep.subr.bf16.mxu0 %v8106
        %11655 = vmatpush1.bf16.msra.mxu0 %v8105
        %11656 = vmatprep.subr.bf16.mxu0 %v8114
        %11657 = vmatpush1.bf16.msra.mxu0 %v8113
        %11658 = vmatprep.subr.bf16.mxu0 %v8122
        %11659 = vmatpush1.bf16.msra.mxu0 %v8121
        %11660 = vmatprep.subr.bf16.mxu0 %v8130
        %11661 = vmatpush1.bf16.msra.mxu0 %v8129
        %11662 = vmatprep.subr.bf16.mxu0 %v8138
        %11663 = vmatpush1.bf16.msra.mxu0 %v8137
        %11664 = vmatprep.subr.bf16.mxu0 %v8146
        %11665 = vmatpush1.bf16.msra.mxu0 %v8145
        %11666 = vmatprep.subr.bf16.mxu0 %v8154
        %11667 = vmatpush1.bf16.msra.mxu0 %v8153
        %11668 = vmatprep.subr.bf16.mxu0 %v8162
        %11669 = vmatpush1.bf16.msra.mxu0 %v8161
        %11670 = vmatprep.subr.bf16.mxu0 %v8170
        %11671 = vmatpush1.bf16.msra.mxu0 %v8169
        %11672 = vmatprep.subr.bf16.mxu0 %v8178
        %11673 = vmatpush1.bf16.msra.mxu0 %v8177
        %11674 = vmatprep.mubr.bf16.mxu0 %v2010
        %11675 = vmatmul.mubr.bf16.gmra.mrb[0].mxu0 %v2008
        %v11676 = vpop.f32.mrb[0].mxu0
        %v11677 = vadd.f32 %v11636, %v11676
        %v11678 = vpop.f32.mrb[0].mxu0
        %v11679 = vadd.f32 %v11638, %v11678
        %v11680 = vpop.f32.mrb[0].mxu0
        %v11681 = vpop.f32.mrb[0].mxu0
        %11682 = vdwg.mxu0
        %v11691 = vcombine.low %v10201, %v10203
        %v11692 = vcombine.low %v10693, %v10695
        %v11694 = vunpack.c.l.s4 1983009808
        %v11695 = vunpack.c.0.s8 %v11694
        %v11696 = vlaneseq
        %v11697 = vshrl.u32 %v11696, 7
        %v11698 = vsub.s32 %v11695, %v11697
        %v11699 = vrot.slane %v11691, %v11698
        %v11701 = vunpack.c.l.s4 1983009808
        %v11702 = vunpack.c.0.s8 %v11701
        %v11703 = vlaneseq
        %v11704 = vshrl.u32 %v11703, 7
        %v11705 = vsub.s32 %v11702, %v11704
        %v11706 = vrot.slane %v11692, %v11705
        %v11707 = vcombine.low %v11699, %v11706
        %v11708 = vcombine.low %v11185, %v11187
        %v11709 = vcombine.low %v11677, %v11679
        %v11711 = vunpack.c.l.s4 1983009808
        %v11712 = vunpack.c.0.s8 %v11711
        %v11713 = vlaneseq
        %v11714 = vshrl.u32 %v11713, 7
        %v11715 = vsub.s32 %v11712, %v11714
        %v11716 = vrot.slane %v11708, %v11715
        %v11718 = vunpack.c.l.s4 1983009808
        %v11719 = vunpack.c.0.s8 %v11718
        %v11720 = vlaneseq
        %v11721 = vshrl.u32 %v11720, 7
        %v11722 = vsub.s32 %v11719, %v11721
        %v11723 = vrot.slane %v11709, %v11722
        %v11724 = vcombine.low %v11716, %v11723
        %v11727 = vadd.f32 %v320, %v11707
        %v11728 = vadd.f32 %v321, %v11724
        %11729 = vst [vmem:[#allocation2] sm:$0xff] %v11727
        %11730 = vst [vmem:[#allocation2 + $0x8] sm:$0xff] %v11728
        %p11731 = scmp.eq.s32.totalorder %s26, 11
        // Predicated region
        $region49: #{dblanet_forward.1} parent=35 // pred_check
          %p11732 = pneg %p11731
        $region50: #{dblanet_forward.1} parent=35 // pred_check_branch
          %11734 = sbr.rel (%p11732) target = $region52
        $region51: #{dblanet_forward.1} parent=35 // pred_region
          %v11735 = vld [vmem:[#allocation2] sm:$0xff]
          %v11736 = vld [vmem:[#allocation2 + $0x8] sm:$0xff]
          %v11737 = vld [vmem:[%s258] sm:$0xff]
          %v11739 = vlaneseq
          %v11740 = vshrl.u32 %v11739, 7
          %v11741 = vsub.s32 0, %v11740
          %v11742 = vrot.slane %v11737, %v11741
          %v11743 = vlaneseq
          %v11744 = vshrl.u32 %v11743, 7
          %v11745 = vsub.s32 1, %v11744
          %v11746 = vrot.slane %v11737, %v11745
          %v11747 = vlaneseq
          %v11748 = vshrl.u32 %v11747, 7
          %v11749 = vsub.s32 2, %v11748
          %v11750 = vrot.slane %v11737, %v11749
          %v11751 = vlaneseq
          %v11752 = vshrl.u32 %v11751, 7
          %v11753 = vsub.s32 3, %v11752
          %v11754 = vrot.slane %v11737, %v11753
          %v11755 = vlaneseq
          %v11756 = vshrl.u32 %v11755, 7
          %v11757 = vsub.s32 4, %v11756
          %v11758 = vrot.slane %v11737, %v11757
          %v11759 = vlaneseq
          %v11760 = vshrl.u32 %v11759, 7
          %v11761 = vsub.s32 5, %v11760
          %v11762 = vrot.slane %v11737, %v11761
          %v11763 = vlaneseq
          %v11764 = vshrl.u32 %v11763, 7
          %v11765 = vsub.s32 6, %v11764
          %v11766 = vrot.slane %v11737, %v11765
          %v11767 = vlaneseq
          %v11768 = vshrl.u32 %v11767, 7
          %v11769 = vsub.s32 7, %v11768
          %v11770 = vrot.slane %v11737, %v11769
          %v11771 = vcombine.low %v11742, %v11746
          %v11772 = vcombine.low %v11750, %v11754
          %v11774 = vunpack.c.l.s4 1983009808
          %v11775 = vunpack.c.0.s8 %v11774
          %v11776 = vlaneseq
          %v11777 = vshrl.u32 %v11776, 7
          %v11778 = vsub.s32 %v11775, %v11777
          %v11779 = vrot.slane %v11771, %v11778
          %v11781 = vunpack.c.l.s4 1983009808
          %v11782 = vunpack.c.0.s8 %v11781
          %v11783 = vlaneseq
          %v11784 = vshrl.u32 %v11783, 7
          %v11785 = vsub.s32 %v11782, %v11784
          %v11786 = vrot.slane %v11772, %v11785
          %v11787 = vcombine.low %v11779, %v11786
          %v11788 = vcombine.low %v11758, %v11762
          %v11789 = vcombine.low %v11766, %v11770
          %v11791 = vunpack.c.l.s4 1983009808
          %v11792 = vunpack.c.0.s8 %v11791
          %v11793 = vlaneseq
          %v11794 = vshrl.u32 %v11793, 7
          %v11795 = vsub.s32 %v11792, %v11794
          %v11796 = vrot.slane %v11788, %v11795
          %v11798 = vunpack.c.l.s4 1983009808
          %v11799 = vunpack.c.0.s8 %v11798
          %v11800 = vlaneseq
          %v11801 = vshrl.u32 %v11800, 7
          %v11802 = vsub.s32 %v11799, %v11801
          %v11803 = vrot.slane %v11789, %v11802
          %v11804 = vcombine.low %v11796, %v11803
          %v11807 = vadd.f32 %v11735, %v11787
          %v11808 = vadd.f32 %v11736, %v11804
          %v11809 = vtanh.pop %v11807
          %v11810 = vtanh.pop %v11808
          %v11811 = vld [vmem:[%s306] sm:$0xff]
          %v11812 = vld [vmem:[%s306 + $0x8] sm:$0xff]
          %v11813 = vtanh.pop %v11811
          %v11814 = vtanh.pop %v11812
          %v11815 = vmul.f32 %v11809, %v11813
          %v11816 = vmul.f32 %v11810, %v11814
          %11817 = vst [vmem:[%s312] sm:$0xff] %v11815
          %11818 = vst [vmem:[%s312 + $0x8] sm:$0xff] %v11816
        $region52: #{dblanet_forward.1} parent=35 // pred_fallthru
          _
        %s11819 = smul.u32 8, %s25
        %p11820 = scmp.lt.s32.totalorder %s11819, 39
        %s11821 = scalar_select %p11820, %s11819, 39
        %s11822 = smul.addr %s11821, 2
        %s11823 = scalar_lea.vmem %s4, %s11822
        // Predicated region
        $region53: #{dblanet_forward.1} parent=35 // pred_check
          %p11824 = pneg %p157
        $region54: #{dblanet_forward.1} parent=35 // pred_check_branch
          %11826 = sbr.rel (%p11824) target = $region56
        $region55: #{dblanet_forward.1} parent=35 // pred_region
          %s11827 = smul.u32 8, %s25
        $region56: #{dblanet_forward.1} parent=35 // pred_fallthru
          _
      $region36: #{dblanet_forward.1} parent=5 // pred_fallthru
        _
      %p11828 = scmp.le.s32.totalorder 2, %s16
      // Predicated region
      $region57: #{dblanet_forward.1} parent=5 // pred_check
        %p11829 = pneg %p11828
      $region58: #{dblanet_forward.1} parent=5 // pred_check_branch
        %11831 = sbr.rel (%p11829) target = $region60
      $region59: #{dblanet_forward.1} parent=5 // pred_region
        %s11832 = ssub.s32 %s16, 2
        // Predicated region
        $region61: #{dblanet_forward.1} parent=59 // pred_check
          %p11833 = pneg %p163
        $region62: #{dblanet_forward.1} parent=59 // pred_check_branch
          %11835 = sbr.rel (%p11833) target = $region64
        $region63: #{dblanet_forward.1} parent=59 // pred_region
          %s11836 = smul.u32 8, %s27
          %p11837 = scmp.lt.s32.totalorder %s11836, 39
          %s11838 = scalar_select %p11837, %s11836, 39
          %s11839 = smul.addr %s11838, 2
          %s11840 = scalar_lea.vmem %s4, %s11839
        $region64: #{dblanet_forward.1} parent=59 // pred_fallthru
          _
      $region60: #{dblanet_forward.1} parent=5 // pred_fallthru
        _
    $region6: #{dblanet_forward.1} parent=1 // loop_footer
      %s20 = sadd.s32 1, %s16
    $region7: #{dblanet_forward.1} parent=1 // loop_footer_branch
      %15 = sbr.rel target = $region3
    $region8: #{dblanet_forward.1} parent=1 // loop_exit
      _
    %11841 = vsyncpa [#allocation4], 1
    %s11842 = scalar_lea.sflag [#allocation4], 1
    %11843 = vsyncpa %s11842, 1
    %11844 = vsyncpa [#allocation6], 1
    %s11845 = scalar_lea.sflag [#allocation6], 1
    %11846 = vsyncpa %s11845, 1

</llo_original>
